<compile_context>
chip_gen: v7x
topology: tpu7x:2x2x1
jax: 0.10.0
libtpu: 0.0.40
codegen_flags: <defaults>
</compile_context>

<pallas_src>
import jax
import jax.numpy as jnp
from jax.experimental import pallas as pl
from jax.experimental.pallas import tpu as pltpu


def stgcn_ts_forward(trajectories, actions, params, batch_block=None):
    """trajectories: [B, length, n_agents, state_dim]; actions: [B]."""
    B, T, V, C = trajectories.shape
    A = params["A"].astype(jnp.float32)          # (K, V, V) normalized adjacency
    K = A.shape[0]
    w_gcn = params["w_gcn"].astype(jnp.float32)  # (C, K*F)
    F = w_gcn.shape[1] // K
    w_tcn = params["w_tcn"].astype(jnp.float32)  # (Kt, F, F)  w[dt, cin, cout]
    Kt = w_tcn.shape[0]
    w_dec = params["w_dec"].astype(jnp.float32)  # (F, n_actions)
    n_actions = w_dec.shape[1]
    pad = (Kt - 1) // 2

    Vp = ((V + 7) // 8) * 8                      # agent rows padded to a sublane multiple
    TV = T * V                                   # unpadded rows (input layout)
    TVp = T * Vp                                 # padded rows (activation layout)
    TpVp = (T + 2 * pad) * Vp                    # time-padded rows

    if batch_block is None:
        batch_block = 2 if (B % 2 == 0 and B >= 4) else 1
    assert B % batch_block == 0, "batch_block must divide the batch size"
    Bb = batch_block
    nb = B // Bb

    bf16 = jnp.bfloat16

    # Input with rows = (t, v), channels on lanes; bf16 for the MXU.
    x2 = trajectories.astype(jnp.float32).reshape(B, TV, C).astype(bf16)

    # Rectangular Kronecker graph blocks mapping unpadded (t*V+v) rows to padded
    # (t*Vp+w) rows:  A_blk[k, t*Vp+w, s*V+v] = I_T[t,s] * A[k, v, w]
    A_T = jnp.transpose(A, (0, 2, 1))                           # A_T[k, w, v] = A[k, v, w]
    A_Tp = jnp.pad(A_T, ((0, 0), (0, Vp - V), (0, 0)))          # zero rows for padded agents
    eye_T = jnp.eye(T, dtype=jnp.float32)
    A_blk = jnp.einsum("ts,kwv->ktwsv", eye_T, A_Tp).reshape(K, TVp, TV).astype(bf16)

    # 1x1-conv weights per partition k: W_k[c, f] = w_gcn[c, k*F + f]
    w_k = w_gcn.reshape(C, K, F).transpose(1, 0, 2).astype(bf16)        # (K, C, F)

    # Graph-folded GCN bias (f32): b_eff[w, f] = sum_{k,v} A[k,v,w] * b_gcn[k,f]
    b_gcn = params["b_gcn"].astype(jnp.float32).reshape(K, F)
    b_eff = jnp.einsum("kvw,kf->wf", A, b_gcn)                          # (V, F)
    b_eff = jnp.tile(jnp.pad(b_eff, ((0, Vp - V), (0, 0))), (T, 1))     # (TVp, F)

    w_t = w_tcn.astype(bf16)                                            # (Kt, F, F)
    b_t = params["b_tcn"].astype(jnp.float32).reshape(1, F)

    # Row mask for the masked mean over the T*V valid (t, v) rows.
    mask_v = jnp.concatenate([jnp.ones((V,), jnp.float32), jnp.zeros((Vp - V,), jnp.float32)])
    mask_row = (jnp.tile(mask_v, (T,)) / float(T * V)).reshape(1, TVp)  # (1, TVp)

    b_dec = params["b_dec"].astype(jnp.float32).reshape(1, n_actions)

    def kernel(x_ref, a_ref, wk_ref, beff_ref, wt_ref, bt_ref, mask_ref,
               wd_ref, bd_ref, o_ref, ypad_ref):
        m_rows = []
        for b in range(Bb):                       # static unroll over stacked batches
            base = b * TpVp
            xb = x_ref[b]                                                 # (TV, C) bf16

            # ---- spatial GCN: graph first (depth-3 outputs), then 1x1 conv ----
            y = beff_ref[...]                                             # (TVp, F) f32 acc
            for k in range(K):
                xa = jnp.dot(a_ref[k], xb,
                             preferred_element_type=jnp.float32)          # (TVp, C)
                y = y + jnp.dot(xa.astype(bf16), wk_ref[k],
                                preferred_element_type=jnp.float32)       # (TVp, F)

            # ---- 'same' temporal padding into bf16 VMEM scratch ----
            zer = jnp.zeros((pad * Vp, F), bf16)
            ypad_ref[base:base + pad * Vp, :] = zer
            ypad_ref[base + (pad + T) * Vp:base + TpVp, :] = zer
            ypad_ref[base + pad * Vp:base + (pad + T) * Vp, :] = y.astype(bf16)

            # ---- temporal conv: Kt per-tap matmuls, sublane-aligned windows ----
            acc = jnp.zeros((TVp, F), jnp.float32)
            for dt in range(Kt):
                acc = acc + jnp.dot(
                    ypad_ref[base + dt * Vp:base + dt * Vp + TVp, :], wt_ref[dt],
                    preferred_element_type=jnp.float32)
            act = jnp.maximum(acc + bt_ref[...], 0.0)                     # (TVp, F) f32

            # ---- masked mean over (t, v) on the MXU ----
            m_rows.append(jnp.dot(mask_ref[...], act,
                                  preferred_element_type=jnp.float32))    # (1, F)

        m_all = jnp.concatenate(m_rows, axis=0) if Bb > 1 else m_rows[0]  # (Bb, F)
        o_ref[0] = jnp.dot(m_all, wd_ref[...],
                           preferred_element_type=jnp.float32) + bd_ref[...]

    out = pl.pallas_call(
        kernel,
        out_shape=jax.ShapeDtypeStruct((nb, Bb, n_actions), jnp.float32),
        grid=(nb,),
        in_specs=[
            pl.BlockSpec((Bb, TV, C), lambda i: (i, 0, 0)),     # trajectories (per step)
            pl.BlockSpec((K, TVp, TV), lambda i: (0, 0, 0)),    # A_blk      (VMEM-resident)
            pl.BlockSpec((K, C, F), lambda i: (0, 0, 0)),       # W_k
            pl.BlockSpec((TVp, F), lambda i: (0, 0)),           # b_eff (graph-folded bias)
            pl.BlockSpec((Kt, F, F), lambda i: (0, 0, 0)),      # w_tcn
            pl.BlockSpec((1, F), lambda i: (0, 0)),             # b_tcn
            pl.BlockSpec((1, TVp), lambda i: (0, 0)),           # mean mask row
            pl.BlockSpec((F, n_actions), lambda i: (0, 0)),     # w_dec
            pl.BlockSpec((1, n_actions), lambda i: (0, 0)),     # b_dec
        ],
        out_specs=pl.BlockSpec((1, Bb, n_actions), lambda i: (i, 0, 0)),
        scratch_shapes=[
            pltpu.VMEM((Bb * TpVp, F), bf16),   # time-padded activations (bf16)
        ],
        compiler_params=pltpu.CompilerParams(
            dimension_semantics=("parallel",),
            vmem_limit_bytes=32 * 1024 * 1024),
    )(x2, A_blk, w_k, b_eff, w_t, b_t, mask_row, w_dec, b_dec)

    logits = out.reshape(B, n_actions)
    return {
        "output": logits,                        # [B, n_actions]
        "target": actions,                       # [B]
        "loss": jnp.zeros((1,), jnp.float32),    # matches torch.zeros(1)
    }


if __name__ == "__main__":
    # Small shapes consistent with the module's forward:
    # trajectories [batch, n_frames, n_agents, state_dim], actions [batch]
    B, T, V, C = 4, 8, 13, 3        # batch, n_frames, n_agents, state_dim
    F = 32                          # n_features (reduced from 500 for the demo)
    n_actions = 19
    Kt, K = 9, 7                    # kernel_size = (temporal, spatial)
    pad = (Kt - 1) // 2

    key = jax.random.PRNGKey(0)
    ks = jax.random.split(key, 9)

    trajectories = jax.random.normal(ks[0], (B, T, V, C), jnp.float32)
    actions = jax.random.randint(ks[1], (B,), 0, n_actions)

    A = jax.random.uniform(ks[2], (K, V, V), jnp.float32)
    A = A / jnp.sum(A, axis=1, keepdims=True)          # D^{-1} A normalization

    params = {
        "A": A,
        "w_gcn": jax.random.normal(ks[3], (C, K * F), jnp.float32) * 0.1,
        "b_gcn": jax.random.normal(ks[4], (K * F,), jnp.float32) * 0.01,
        "w_tcn": jax.random.normal(ks[5], (Kt, F, F), jnp.float32) * 0.05,
        "b_tcn": jax.random.normal(ks[6], (F,), jnp.float32) * 0.01,
        "w_dec": jax.random.normal(ks[7], (F, n_actions), jnp.float32) * 0.1,
        "b_dec": jax.random.normal(ks[8], (n_actions,), jnp.float32) * 0.01,
    }

    out = stgcn_ts_forward(trajectories, actions, params)
    jax.block_until_ready(out["output"])

    # Pure-JAX reference of the same math, mirroring the kernel's bf16 roundings
    # of MXU operands (accumulation in f32), as a correctness guard.
    def bfq(a):
        return a.astype(jnp.bfloat16).astype(jnp.float32)

    traj_q = bfq(trajectories)
    A_q = bfq(A)
    wk_q = bfq(params["w_gcn"].reshape(C, K, F).transpose(1, 0, 2))      # (K, C, F)
    wt_q = bfq(params["w_tcn"])

    xa_ref = bfq(jnp.einsum("kvw,btvc->bktwc", A_q, traj_q))             # graph first
    b_eff_ref = jnp.einsum("kvw,kf->wf", A, params["b_gcn"].reshape(K, F))
    y_ref = bfq(jnp.einsum("bktwc,kcf->btwf", xa_ref, wk_q) + b_eff_ref)  # (B,T,V,F)
    yp_ref = jnp.pad(y_ref, ((0, 0), (pad, pad), (0, 0), (0, 0)))
    acc_ref = jnp.zeros((B, T, V, F), jnp.float32)
    for dt in range(Kt):
        acc_ref = acc_ref + jnp.einsum("btvf,fg->btvg", yp_ref[:, dt:dt + T], wt_q[dt])
    act_ref = jnp.maximum(acc_ref + params["b_tcn"], 0.0)
    logits_ref = jnp.mean(act_ref, axis=(1, 2)) @ params["w_dec"] + params["b_dec"]

    assert jnp.allclose(out["output"], logits_ref, atol=1e-2, rtol=1e-2), (
        out["output"], logits_ref)

    assert out["output"].shape == (B, n_actions)
    assert out["target"].shape == (B,)
    assert out["loss"].shape == (1,)
    print("KERNEL_OK")
</pallas_src>

<mosaic_0001>
module attributes {stable_mosaic.version = 11 : i64} {
  func.func @kernel(%arg0: i32, %arg1: memref<2x104x3xbf16, #tpu.memory_space<vmem>>, %arg2: memref<7x128x104xbf16, #tpu.memory_space<vmem>>, %arg3: memref<7x3x32xbf16, #tpu.memory_space<vmem>>, %arg4: memref<128x32xf32, #tpu.memory_space<vmem>>, %arg5: memref<9x32x32xbf16, #tpu.memory_space<vmem>>, %arg6: memref<1x32xf32, #tpu.memory_space<vmem>>, %arg7: memref<1x128xf32, #tpu.memory_space<vmem>>, %arg8: memref<32x19xf32, #tpu.memory_space<vmem>>, %arg9: memref<1x19xf32, #tpu.memory_space<vmem>>, %arg10: memref<1x2x19xf32, #tpu.memory_space<vmem>>, %arg11: memref<512x32xbf16, #tpu.memory_space<vmem>>) attributes {dimension_semantics = [#tpu.dimension_semantics<parallel>], iteration_bounds = array<i64: 2>, scalar_prefetch = 0 : i64, scratch_operands = 1 : i64, tpu.core_type = #tpu.core_type<tc>, window_params = [{transform_indices = @transform_0, window_bounds = array<i64: 2, 104, 3>}, {pipeline_mode = #tpu.pipeline_mode<synchronous>, transform_indices = @transform_1, window_bounds = array<i64: 7, 128, 104>}, {pipeline_mode = #tpu.pipeline_mode<synchronous>, transform_indices = @transform_2, window_bounds = array<i64: 7, 3, 32>}, {pipeline_mode = #tpu.pipeline_mode<synchronous>, transform_indices = @transform_3, window_bounds = array<i64: 128, 32>}, {pipeline_mode = #tpu.pipeline_mode<synchronous>, transform_indices = @transform_4, window_bounds = array<i64: 9, 32, 32>}, {pipeline_mode = #tpu.pipeline_mode<synchronous>, transform_indices = @transform_5, window_bounds = array<i64: 1, 32>}, {pipeline_mode = #tpu.pipeline_mode<synchronous>, transform_indices = @transform_6, window_bounds = array<i64: 1, 128>}, {pipeline_mode = #tpu.pipeline_mode<synchronous>, transform_indices = @transform_7, window_bounds = array<i64: 32, 19>}, {pipeline_mode = #tpu.pipeline_mode<synchronous>, transform_indices = @transform_8, window_bounds = array<i64: 1, 19>}, {transform_indices = @transform_9, window_bounds = array<i64: 1, 2, 19>}]} {
    %c0 = arith.constant 0 : index
    %c0_0 = arith.constant 0 : index
    %c0_1 = arith.constant 0 : index
    %0 = vector.load %arg1[%c0, %c0_0, %c0_1] : memref<2x104x3xbf16, #tpu.memory_space<vmem>>, vector<1x104x3xbf16>
    %1 = vector.shape_cast %0 : vector<1x104x3xbf16> to vector<104x3xbf16>
    %c0_2 = arith.constant 0 : index
    %c0_3 = arith.constant 0 : index
    %2 = vector.load %arg4[%c0_2, %c0_3] : memref<128x32xf32, #tpu.memory_space<vmem>>, vector<128x32xf32>
    %c0_4 = arith.constant 0 : index
    %c0_5 = arith.constant 0 : index
    %c0_6 = arith.constant 0 : index
    %3 = vector.load %arg2[%c0_4, %c0_5, %c0_6] : memref<7x128x104xbf16, #tpu.memory_space<vmem>>, vector<1x128x104xbf16>
    %4 = vector.shape_cast %3 : vector<1x128x104xbf16> to vector<128x104xbf16>
    %cst = arith.constant dense<0.000000e+00> : vector<128x3xf32>
    %5 = tpu.matmul %4, %1, %cst {dimension_numbers = #tpu.dot_dimension_numbers<[1], [0], [0], [1], [0, 0, 1, 1], [], []>} : vector<128x104xbf16>, vector<104x3xbf16>, vector<128x3xf32> -> vector<128x3xf32>
    %6 = arith.truncf %5 : vector<128x3xf32> to vector<128x3xbf16>
    %c0_7 = arith.constant 0 : index
    %c0_8 = arith.constant 0 : index
    %c0_9 = arith.constant 0 : index
    %7 = vector.load %arg3[%c0_7, %c0_8, %c0_9] : memref<7x3x32xbf16, #tpu.memory_space<vmem>>, vector<1x3x32xbf16>
    %8 = vector.shape_cast %7 : vector<1x3x32xbf16> to vector<3x32xbf16>
    %cst_10 = arith.constant dense<0.000000e+00> : vector<128x32xf32>
    %9 = tpu.matmul %6, %8, %cst_10 {dimension_numbers = #tpu.dot_dimension_numbers<[1], [0], [0], [1], [0, 0, 1, 1], [], []>} : vector<128x3xbf16>, vector<3x32xbf16>, vector<128x32xf32> -> vector<128x32xf32>
    %10 = arith.addf %2, %9 : vector<128x32xf32>
    %c1 = arith.constant 1 : index
    %c0_11 = arith.constant 0 : index
    %c0_12 = arith.constant 0 : index
    %11 = vector.load %arg2[%c1, %c0_11, %c0_12] : memref<7x128x104xbf16, #tpu.memory_space<vmem>>, vector<1x128x104xbf16>
    %12 = vector.shape_cast %11 : vector<1x128x104xbf16> to vector<128x104xbf16>
    %cst_13 = arith.constant dense<0.000000e+00> : vector<128x3xf32>
    %13 = tpu.matmul %12, %1, %cst_13 {dimension_numbers = #tpu.dot_dimension_numbers<[1], [0], [0], [1], [0, 0, 1, 1], [], []>} : vector<128x104xbf16>, vector<104x3xbf16>, vector<128x3xf32> -> vector<128x3xf32>
    %14 = arith.truncf %13 : vector<128x3xf32> to vector<128x3xbf16>
    %c1_14 = arith.constant 1 : index
    %c0_15 = arith.constant 0 : index
    %c0_16 = arith.constant 0 : index
    %15 = vector.load %arg3[%c1_14, %c0_15, %c0_16] : memref<7x3x32xbf16, #tpu.memory_space<vmem>>, vector<1x3x32xbf16>
    %16 = vector.shape_cast %15 : vector<1x3x32xbf16> to vector<3x32xbf16>
    %cst_17 = arith.constant dense<0.000000e+00> : vector<128x32xf32>
    %17 = tpu.matmul %14, %16, %cst_17 {dimension_numbers = #tpu.dot_dimension_numbers<[1], [0], [0], [1], [0, 0, 1, 1], [], []>} : vector<128x3xbf16>, vector<3x32xbf16>, vector<128x32xf32> -> vector<128x32xf32>
    %18 = arith.addf %10, %17 : vector<128x32xf32>
    %c2 = arith.constant 2 : index
    %c0_18 = arith.constant 0 : index
    %c0_19 = arith.constant 0 : index
    %19 = vector.load %arg2[%c2, %c0_18, %c0_19] : memref<7x128x104xbf16, #tpu.memory_space<vmem>>, vector<1x128x104xbf16>
    %20 = vector.shape_cast %19 : vector<1x128x104xbf16> to vector<128x104xbf16>
    %cst_20 = arith.constant dense<0.000000e+00> : vector<128x3xf32>
    %21 = tpu.matmul %20, %1, %cst_20 {dimension_numbers = #tpu.dot_dimension_numbers<[1], [0], [0], [1], [0, 0, 1, 1], [], []>} : vector<128x104xbf16>, vector<104x3xbf16>, vector<128x3xf32> -> vector<128x3xf32>
    %22 = arith.truncf %21 : vector<128x3xf32> to vector<128x3xbf16>
    %c2_21 = arith.constant 2 : index
    %c0_22 = arith.constant 0 : index
    %c0_23 = arith.constant 0 : index
    %23 = vector.load %arg3[%c2_21, %c0_22, %c0_23] : memref<7x3x32xbf16, #tpu.memory_space<vmem>>, vector<1x3x32xbf16>
    %24 = vector.shape_cast %23 : vector<1x3x32xbf16> to vector<3x32xbf16>
    %cst_24 = arith.constant dense<0.000000e+00> : vector<128x32xf32>
    %25 = tpu.matmul %22, %24, %cst_24 {dimension_numbers = #tpu.dot_dimension_numbers<[1], [0], [0], [1], [0, 0, 1, 1], [], []>} : vector<128x3xbf16>, vector<3x32xbf16>, vector<128x32xf32> -> vector<128x32xf32>
    %26 = arith.addf %18, %25 : vector<128x32xf32>
    %c3 = arith.constant 3 : index
    %c0_25 = arith.constant 0 : index
    %c0_26 = arith.constant 0 : index
    %27 = vector.load %arg2[%c3, %c0_25, %c0_26] : memref<7x128x104xbf16, #tpu.memory_space<vmem>>, vector<1x128x104xbf16>
    %28 = vector.shape_cast %27 : vector<1x128x104xbf16> to vector<128x104xbf16>
    %cst_27 = arith.constant dense<0.000000e+00> : vector<128x3xf32>
    %29 = tpu.matmul %28, %1, %cst_27 {dimension_numbers = #tpu.dot_dimension_numbers<[1], [0], [0], [1], [0, 0, 1, 1], [], []>} : vector<128x104xbf16>, vector<104x3xbf16>, vector<128x3xf32> -> vector<128x3xf32>
    %30 = arith.truncf %29 : vector<128x3xf32> to vector<128x3xbf16>
    %c3_28 = arith.constant 3 : index
    %c0_29 = arith.constant 0 : index
    %c0_30 = arith.constant 0 : index
    %31 = vector.load %arg3[%c3_28, %c0_29, %c0_30] : memref<7x3x32xbf16, #tpu.memory_space<vmem>>, vector<1x3x32xbf16>
    %32 = vector.shape_cast %31 : vector<1x3x32xbf16> to vector<3x32xbf16>
    %cst_31 = arith.constant dense<0.000000e+00> : vector<128x32xf32>
    %33 = tpu.matmul %30, %32, %cst_31 {dimension_numbers = #tpu.dot_dimension_numbers<[1], [0], [0], [1], [0, 0, 1, 1], [], []>} : vector<128x3xbf16>, vector<3x32xbf16>, vector<128x32xf32> -> vector<128x32xf32>
    %34 = arith.addf %26, %33 : vector<128x32xf32>
    %c4 = arith.constant 4 : index
    %c0_32 = arith.constant 0 : index
    %c0_33 = arith.constant 0 : index
    %35 = vector.load %arg2[%c4, %c0_32, %c0_33] : memref<7x128x104xbf16, #tpu.memory_space<vmem>>, vector<1x128x104xbf16>
    %36 = vector.shape_cast %35 : vector<1x128x104xbf16> to vector<128x104xbf16>
    %cst_34 = arith.constant dense<0.000000e+00> : vector<128x3xf32>
    %37 = tpu.matmul %36, %1, %cst_34 {dimension_numbers = #tpu.dot_dimension_numbers<[1], [0], [0], [1], [0, 0, 1, 1], [], []>} : vector<128x104xbf16>, vector<104x3xbf16>, vector<128x3xf32> -> vector<128x3xf32>
    %38 = arith.truncf %37 : vector<128x3xf32> to vector<128x3xbf16>
    %c4_35 = arith.constant 4 : index
    %c0_36 = arith.constant 0 : index
    %c0_37 = arith.constant 0 : index
    %39 = vector.load %arg3[%c4_35, %c0_36, %c0_37] : memref<7x3x32xbf16, #tpu.memory_space<vmem>>, vector<1x3x32xbf16>
    %40 = vector.shape_cast %39 : vector<1x3x32xbf16> to vector<3x32xbf16>
    %cst_38 = arith.constant dense<0.000000e+00> : vector<128x32xf32>
    %41 = tpu.matmul %38, %40, %cst_38 {dimension_numbers = #tpu.dot_dimension_numbers<[1], [0], [0], [1], [0, 0, 1, 1], [], []>} : vector<128x3xbf16>, vector<3x32xbf16>, vector<128x32xf32> -> vector<128x32xf32>
    %42 = arith.addf %34, %41 : vector<128x32xf32>
    %c5 = arith.constant 5 : index
    %c0_39 = arith.constant 0 : index
    %c0_40 = arith.constant 0 : index
    %43 = vector.load %arg2[%c5, %c0_39, %c0_40] : memref<7x128x104xbf16, #tpu.memory_space<vmem>>, vector<1x128x104xbf16>
    %44 = vector.shape_cast %43 : vector<1x128x104xbf16> to vector<128x104xbf16>
    %cst_41 = arith.constant dense<0.000000e+00> : vector<128x3xf32>
    %45 = tpu.matmul %44, %1, %cst_41 {dimension_numbers = #tpu.dot_dimension_numbers<[1], [0], [0], [1], [0, 0, 1, 1], [], []>} : vector<128x104xbf16>, vector<104x3xbf16>, vector<128x3xf32> -> vector<128x3xf32>
    %46 = arith.truncf %45 : vector<128x3xf32> to vector<128x3xbf16>
    %c5_42 = arith.constant 5 : index
    %c0_43 = arith.constant 0 : index
    %c0_44 = arith.constant 0 : index
    %47 = vector.load %arg3[%c5_42, %c0_43, %c0_44] : memref<7x3x32xbf16, #tpu.memory_space<vmem>>, vector<1x3x32xbf16>
    %48 = vector.shape_cast %47 : vector<1x3x32xbf16> to vector<3x32xbf16>
    %cst_45 = arith.constant dense<0.000000e+00> : vector<128x32xf32>
    %49 = tpu.matmul %46, %48, %cst_45 {dimension_numbers = #tpu.dot_dimension_numbers<[1], [0], [0], [1], [0, 0, 1, 1], [], []>} : vector<128x3xbf16>, vector<3x32xbf16>, vector<128x32xf32> -> vector<128x32xf32>
    %50 = arith.addf %42, %49 : vector<128x32xf32>
    %c6 = arith.constant 6 : index
    %c0_46 = arith.constant 0 : index
    %c0_47 = arith.constant 0 : index
    %51 = vector.load %arg2[%c6, %c0_46, %c0_47] : memref<7x128x104xbf16, #tpu.memory_space<vmem>>, vector<1x128x104xbf16>
    %52 = vector.shape_cast %51 : vector<1x128x104xbf16> to vector<128x104xbf16>
    %cst_48 = arith.constant dense<0.000000e+00> : vector<128x3xf32>
    %53 = tpu.matmul %52, %1, %cst_48 {dimension_numbers = #tpu.dot_dimension_numbers<[1], [0], [0], [1], [0, 0, 1, 1], [], []>} : vector<128x104xbf16>, vector<104x3xbf16>, vector<128x3xf32> -> vector<128x3xf32>
    %54 = arith.truncf %53 : vector<128x3xf32> to vector<128x3xbf16>
    %c6_49 = arith.constant 6 : index
    %c0_50 = arith.constant 0 : index
    %c0_51 = arith.constant 0 : index
    %55 = vector.load %arg3[%c6_49, %c0_50, %c0_51] : memref<7x3x32xbf16, #tpu.memory_space<vmem>>, vector<1x3x32xbf16>
    %56 = vector.shape_cast %55 : vector<1x3x32xbf16> to vector<3x32xbf16>
    %cst_52 = arith.constant dense<0.000000e+00> : vector<128x32xf32>
    %57 = tpu.matmul %54, %56, %cst_52 {dimension_numbers = #tpu.dot_dimension_numbers<[1], [0], [0], [1], [0, 0, 1, 1], [], []>} : vector<128x3xbf16>, vector<3x32xbf16>, vector<128x32xf32> -> vector<128x32xf32>
    %58 = arith.addf %50, %57 : vector<128x32xf32>
    %cst_53 = arith.constant 0.000000e+00 : bf16
    %59 = vector.broadcast %cst_53 : bf16 to vector<64x32xbf16>
    %c0_54 = arith.constant 0 : index
    %c0_55 = arith.constant 0 : index
    %60 = vector.load %arg11[%c0_54, %c0_55] : memref<512x32xbf16, #tpu.memory_space<vmem>>, vector<64x32xbf16>
    tpu.vector_store %arg11[%c0_54, %c0_55], %59 {strides = array<i32>} : memref<512x32xbf16, #tpu.memory_space<vmem>>, vector<64x32xbf16>,
    %c192 = arith.constant 192 : index
    %c0_56 = arith.constant 0 : index
    %61 = vector.load %arg11[%c192, %c0_56] : memref<512x32xbf16, #tpu.memory_space<vmem>>, vector<64x32xbf16>
    tpu.vector_store %arg11[%c192, %c0_56], %59 {strides = array<i32>} : memref<512x32xbf16, #tpu.memory_space<vmem>>, vector<64x32xbf16>,
    %62 = arith.truncf %58 : vector<128x32xf32> to vector<128x32xbf16>
    %c64 = arith.constant 64 : index
    %c0_57 = arith.constant 0 : index
    %63 = vector.load %arg11[%c64, %c0_57] : memref<512x32xbf16, #tpu.memory_space<vmem>>, vector<128x32xbf16>
    tpu.vector_store %arg11[%c64, %c0_57], %62 {strides = array<i32>} : memref<512x32xbf16, #tpu.memory_space<vmem>>, vector<128x32xbf16>,
    %cst_58 = arith.constant 0.000000e+00 : f32
    %64 = vector.broadcast %cst_58 : f32 to vector<128x32xf32>
    %c0_59 = arith.constant 0 : index
    %c0_60 = arith.constant 0 : index
    %65 = vector.load %arg11[%c0_59, %c0_60] : memref<512x32xbf16, #tpu.memory_space<vmem>>, vector<128x32xbf16>
    %c0_61 = arith.constant 0 : index
    %c0_62 = arith.constant 0 : index
    %c0_63 = arith.constant 0 : index
    %66 = vector.load %arg5[%c0_61, %c0_62, %c0_63] : memref<9x32x32xbf16, #tpu.memory_space<vmem>>, vector<1x32x32xbf16>
    %67 = vector.shape_cast %66 : vector<1x32x32xbf16> to vector<32x32xbf16>
    %cst_64 = arith.constant dense<0.000000e+00> : vector<128x32xf32>
    %68 = tpu.matmul %65, %67, %cst_64 {dimension_numbers = #tpu.dot_dimension_numbers<[1], [0], [0], [1], [0, 0, 1, 1], [], []>} : vector<128x32xbf16>, vector<32x32xbf16>, vector<128x32xf32> -> vector<128x32xf32>
    %69 = arith.addf %64, %68 : vector<128x32xf32>
    %c16 = arith.constant 16 : index
    %c0_65 = arith.constant 0 : index
    %70 = vector.load %arg11[%c16, %c0_65] : memref<512x32xbf16, #tpu.memory_space<vmem>>, vector<128x32xbf16>
    %c1_66 = arith.constant 1 : index
    %c0_67 = arith.constant 0 : index
    %c0_68 = arith.constant 0 : index
    %71 = vector.load %arg5[%c1_66, %c0_67, %c0_68] : memref<9x32x32xbf16, #tpu.memory_space<vmem>>, vector<1x32x32xbf16>
    %72 = vector.shape_cast %71 : vector<1x32x32xbf16> to vector<32x32xbf16>
    %cst_69 = arith.constant dense<0.000000e+00> : vector<128x32xf32>
    %73 = tpu.matmul %70, %72, %cst_69 {dimension_numbers = #tpu.dot_dimension_numbers<[1], [0], [0], [1], [0, 0, 1, 1], [], []>} : vector<128x32xbf16>, vector<32x32xbf16>, vector<128x32xf32> -> vector<128x32xf32>
    %74 = arith.addf %69, %73 : vector<128x32xf32>
    %c32 = arith.constant 32 : index
    %c0_70 = arith.constant 0 : index
    %75 = vector.load %arg11[%c32, %c0_70] : memref<512x32xbf16, #tpu.memory_space<vmem>>, vector<128x32xbf16>
    %c2_71 = arith.constant 2 : index
    %c0_72 = arith.constant 0 : index
    %c0_73 = arith.constant 0 : index
    %76 = vector.load %arg5[%c2_71, %c0_72, %c0_73] : memref<9x32x32xbf16, #tpu.memory_space<vmem>>, vector<1x32x32xbf16>
    %77 = vector.shape_cast %76 : vector<1x32x32xbf16> to vector<32x32xbf16>
    %cst_74 = arith.constant dense<0.000000e+00> : vector<128x32xf32>
    %78 = tpu.matmul %75, %77, %cst_74 {dimension_numbers = #tpu.dot_dimension_numbers<[1], [0], [0], [1], [0, 0, 1, 1], [], []>} : vector<128x32xbf16>, vector<32x32xbf16>, vector<128x32xf32> -> vector<128x32xf32>
    %79 = arith.addf %74, %78 : vector<128x32xf32>
    %c48 = arith.constant 48 : index
    %c0_75 = arith.constant 0 : index
    %80 = vector.load %arg11[%c48, %c0_75] : memref<512x32xbf16, #tpu.memory_space<vmem>>, vector<128x32xbf16>
    %c3_76 = arith.constant 3 : index
    %c0_77 = arith.constant 0 : index
    %c0_78 = arith.constant 0 : index
    %81 = vector.load %arg5[%c3_76, %c0_77, %c0_78] : memref<9x32x32xbf16, #tpu.memory_space<vmem>>, vector<1x32x32xbf16>
    %82 = vector.shape_cast %81 : vector<1x32x32xbf16> to vector<32x32xbf16>
    %cst_79 = arith.constant dense<0.000000e+00> : vector<128x32xf32>
    %83 = tpu.matmul %80, %82, %cst_79 {dimension_numbers = #tpu.dot_dimension_numbers<[1], [0], [0], [1], [0, 0, 1, 1], [], []>} : vector<128x32xbf16>, vector<32x32xbf16>, vector<128x32xf32> -> vector<128x32xf32>
    %84 = arith.addf %79, %83 : vector<128x32xf32>
    %c64_80 = arith.constant 64 : index
    %c0_81 = arith.constant 0 : index
    %85 = vector.load %arg11[%c64_80, %c0_81] : memref<512x32xbf16, #tpu.memory_space<vmem>>, vector<128x32xbf16>
    %c4_82 = arith.constant 4 : index
    %c0_83 = arith.constant 0 : index
    %c0_84 = arith.constant 0 : index
    %86 = vector.load %arg5[%c4_82, %c0_83, %c0_84] : memref<9x32x32xbf16, #tpu.memory_space<vmem>>, vector<1x32x32xbf16>
    %87 = vector.shape_cast %86 : vector<1x32x32xbf16> to vector<32x32xbf16>
    %cst_85 = arith.constant dense<0.000000e+00> : vector<128x32xf32>
    %88 = tpu.matmul %85, %87, %cst_85 {dimension_numbers = #tpu.dot_dimension_numbers<[1], [0], [0], [1], [0, 0, 1, 1], [], []>} : vector<128x32xbf16>, vector<32x32xbf16>, vector<128x32xf32> -> vector<128x32xf32>
    %89 = arith.addf %84, %88 : vector<128x32xf32>
    %c80 = arith.constant 80 : index
    %c0_86 = arith.constant 0 : index
    %90 = vector.load %arg11[%c80, %c0_86] : memref<512x32xbf16, #tpu.memory_space<vmem>>, vector<128x32xbf16>
    %c5_87 = arith.constant 5 : index
    %c0_88 = arith.constant 0 : index
    %c0_89 = arith.constant 0 : index
    %91 = vector.load %arg5[%c5_87, %c0_88, %c0_89] : memref<9x32x32xbf16, #tpu.memory_space<vmem>>, vector<1x32x32xbf16>
    %92 = vector.shape_cast %91 : vector<1x32x32xbf16> to vector<32x32xbf16>
    %cst_90 = arith.constant dense<0.000000e+00> : vector<128x32xf32>
    %93 = tpu.matmul %90, %92, %cst_90 {dimension_numbers = #tpu.dot_dimension_numbers<[1], [0], [0], [1], [0, 0, 1, 1], [], []>} : vector<128x32xbf16>, vector<32x32xbf16>, vector<128x32xf32> -> vector<128x32xf32>
    %94 = arith.addf %89, %93 : vector<128x32xf32>
    %c96 = arith.constant 96 : index
    %c0_91 = arith.constant 0 : index
    %95 = vector.load %arg11[%c96, %c0_91] : memref<512x32xbf16, #tpu.memory_space<vmem>>, vector<128x32xbf16>
    %c6_92 = arith.constant 6 : index
    %c0_93 = arith.constant 0 : index
    %c0_94 = arith.constant 0 : index
    %96 = vector.load %arg5[%c6_92, %c0_93, %c0_94] : memref<9x32x32xbf16, #tpu.memory_space<vmem>>, vector<1x32x32xbf16>
    %97 = vector.shape_cast %96 : vector<1x32x32xbf16> to vector<32x32xbf16>
    %cst_95 = arith.constant dense<0.000000e+00> : vector<128x32xf32>
    %98 = tpu.matmul %95, %97, %cst_95 {dimension_numbers = #tpu.dot_dimension_numbers<[1], [0], [0], [1], [0, 0, 1, 1], [], []>} : vector<128x32xbf16>, vector<32x32xbf16>, vector<128x32xf32> -> vector<128x32xf32>
    %99 = arith.addf %94, %98 : vector<128x32xf32>
    %c112 = arith.constant 112 : index
    %c0_96 = arith.constant 0 : index
    %100 = vector.load %arg11[%c112, %c0_96] : memref<512x32xbf16, #tpu.memory_space<vmem>>, vector<128x32xbf16>
    %c7 = arith.constant 7 : index
    %c0_97 = arith.constant 0 : index
    %c0_98 = arith.constant 0 : index
    %101 = vector.load %arg5[%c7, %c0_97, %c0_98] : memref<9x32x32xbf16, #tpu.memory_space<vmem>>, vector<1x32x32xbf16>
    %102 = vector.shape_cast %101 : vector<1x32x32xbf16> to vector<32x32xbf16>
    %cst_99 = arith.constant dense<0.000000e+00> : vector<128x32xf32>
    %103 = tpu.matmul %100, %102, %cst_99 {dimension_numbers = #tpu.dot_dimension_numbers<[1], [0], [0], [1], [0, 0, 1, 1], [], []>} : vector<128x32xbf16>, vector<32x32xbf16>, vector<128x32xf32> -> vector<128x32xf32>
    %104 = arith.addf %99, %103 : vector<128x32xf32>
    %c128 = arith.constant 128 : index
    %c0_100 = arith.constant 0 : index
    %105 = vector.load %arg11[%c128, %c0_100] : memref<512x32xbf16, #tpu.memory_space<vmem>>, vector<128x32xbf16>
    %c8 = arith.constant 8 : index
    %c0_101 = arith.constant 0 : index
    %c0_102 = arith.constant 0 : index
    %106 = vector.load %arg5[%c8, %c0_101, %c0_102] : memref<9x32x32xbf16, #tpu.memory_space<vmem>>, vector<1x32x32xbf16>
    %107 = vector.shape_cast %106 : vector<1x32x32xbf16> to vector<32x32xbf16>
    %cst_103 = arith.constant dense<0.000000e+00> : vector<128x32xf32>
    %108 = tpu.matmul %105, %107, %cst_103 {dimension_numbers = #tpu.dot_dimension_numbers<[1], [0], [0], [1], [0, 0, 1, 1], [], []>} : vector<128x32xbf16>, vector<32x32xbf16>, vector<128x32xf32> -> vector<128x32xf32>
    %109 = arith.addf %104, %108 : vector<128x32xf32>
    %c0_104 = arith.constant 0 : index
    %c0_105 = arith.constant 0 : index
    %110 = vector.load %arg6[%c0_104, %c0_105] : memref<1x32xf32, #tpu.memory_space<vmem>>, vector<1x32xf32>
    %111 = vector.broadcast %110 : vector<1x32xf32> to vector<128x32xf32>
    %112 = arith.addf %109, %111 : vector<128x32xf32>
    %cst_106 = arith.constant 0.000000e+00 : f32
    %113 = vector.broadcast %cst_106 : f32 to vector<128x32xf32>
    %114 = arith.maximumf %112, %113 : vector<128x32xf32>
    %c0_107 = arith.constant 0 : index
    %c0_108 = arith.constant 0 : index
    %115 = vector.load %arg7[%c0_107, %c0_108] : memref<1x128xf32, #tpu.memory_space<vmem>>, vector<1x128xf32>
    %cst_109 = arith.constant dense<0.000000e+00> : vector<1x32xf32>
    %116 = tpu.matmul %115, %114, %cst_109 {dimension_numbers = #tpu.dot_dimension_numbers<[1], [0], [0], [1], [0, 0, 1, 1], [], []>} : vector<1x128xf32>, vector<128x32xf32>, vector<1x32xf32> -> vector<1x32xf32>
    %c1_110 = arith.constant 1 : index
    %c0_111 = arith.constant 0 : index
    %c0_112 = arith.constant 0 : index
    %117 = vector.load %arg1[%c1_110, %c0_111, %c0_112] : memref<2x104x3xbf16, #tpu.memory_space<vmem>>, vector<1x104x3xbf16>
    %118 = vector.shape_cast %117 : vector<1x104x3xbf16> to vector<104x3xbf16>
    %c0_113 = arith.constant 0 : index
    %c0_114 = arith.constant 0 : index
    %119 = vector.load %arg4[%c0_113, %c0_114] : memref<128x32xf32, #tpu.memory_space<vmem>>, vector<128x32xf32>
    %c0_115 = arith.constant 0 : index
    %c0_116 = arith.constant 0 : index
    %c0_117 = arith.constant 0 : index
    %120 = vector.load %arg2[%c0_115, %c0_116, %c0_117] : memref<7x128x104xbf16, #tpu.memory_space<vmem>>, vector<1x128x104xbf16>
    %121 = vector.shape_cast %120 : vector<1x128x104xbf16> to vector<128x104xbf16>
    %cst_118 = arith.constant dense<0.000000e+00> : vector<128x3xf32>
    %122 = tpu.matmul %121, %118, %cst_118 {dimension_numbers = #tpu.dot_dimension_numbers<[1], [0], [0], [1], [0, 0, 1, 1], [], []>} : vector<128x104xbf16>, vector<104x3xbf16>, vector<128x3xf32> -> vector<128x3xf32>
    %123 = arith.truncf %122 : vector<128x3xf32> to vector<128x3xbf16>
    %c0_119 = arith.constant 0 : index
    %c0_120 = arith.constant 0 : index
    %c0_121 = arith.constant 0 : index
    %124 = vector.load %arg3[%c0_119, %c0_120, %c0_121] : memref<7x3x32xbf16, #tpu.memory_space<vmem>>, vector<1x3x32xbf16>
    %125 = vector.shape_cast %124 : vector<1x3x32xbf16> to vector<3x32xbf16>
    %cst_122 = arith.constant dense<0.000000e+00> : vector<128x32xf32>
    %126 = tpu.matmul %123, %125, %cst_122 {dimension_numbers = #tpu.dot_dimension_numbers<[1], [0], [0], [1], [0, 0, 1, 1], [], []>} : vector<128x3xbf16>, vector<3x32xbf16>, vector<128x32xf32> -> vector<128x32xf32>
    %127 = arith.addf %119, %126 : vector<128x32xf32>
    %c1_123 = arith.constant 1 : index
    %c0_124 = arith.constant 0 : index
    %c0_125 = arith.constant 0 : index
    %128 = vector.load %arg2[%c1_123, %c0_124, %c0_125] : memref<7x128x104xbf16, #tpu.memory_space<vmem>>, vector<1x128x104xbf16>
    %129 = vector.shape_cast %128 : vector<1x128x104xbf16> to vector<128x104xbf16>
    %cst_126 = arith.constant dense<0.000000e+00> : vector<128x3xf32>
    %130 = tpu.matmul %129, %118, %cst_126 {dimension_numbers = #tpu.dot_dimension_numbers<[1], [0], [0], [1], [0, 0, 1, 1], [], []>} : vector<128x104xbf16>, vector<104x3xbf16>, vector<128x3xf32> -> vector<128x3xf32>
    %131 = arith.truncf %130 : vector<128x3xf32> to vector<128x3xbf16>
    %c1_127 = arith.constant 1 : index
    %c0_128 = arith.constant 0 : index
    %c0_129 = arith.constant 0 : index
    %132 = vector.load %arg3[%c1_127, %c0_128, %c0_129] : memref<7x3x32xbf16, #tpu.memory_space<vmem>>, vector<1x3x32xbf16>
    %133 = vector.shape_cast %132 : vector<1x3x32xbf16> to vector<3x32xbf16>
    %cst_130 = arith.constant dense<0.000000e+00> : vector<128x32xf32>
    %134 = tpu.matmul %131, %133, %cst_130 {dimension_numbers = #tpu.dot_dimension_numbers<[1], [0], [0], [1], [0, 0, 1, 1], [], []>} : vector<128x3xbf16>, vector<3x32xbf16>, vector<128x32xf32> -> vector<128x32xf32>
    %135 = arith.addf %127, %134 : vector<128x32xf32>
    %c2_131 = arith.constant 2 : index
    %c0_132 = arith.constant 0 : index
    %c0_133 = arith.constant 0 : index
    %136 = vector.load %arg2[%c2_131, %c0_132, %c0_133] : memref<7x128x104xbf16, #tpu.memory_space<vmem>>, vector<1x128x104xbf16>
    %137 = vector.shape_cast %136 : vector<1x128x104xbf16> to vector<128x104xbf16>
    %cst_134 = arith.constant dense<0.000000e+00> : vector<128x3xf32>
    %138 = tpu.matmul %137, %118, %cst_134 {dimension_numbers = #tpu.dot_dimension_numbers<[1], [0], [0], [1], [0, 0, 1, 1], [], []>} : vector<128x104xbf16>, vector<104x3xbf16>, vector<128x3xf32> -> vector<128x3xf32>
    %139 = arith.truncf %138 : vector<128x3xf32> to vector<128x3xbf16>
    %c2_135 = arith.constant 2 : index
    %c0_136 = arith.constant 0 : index
    %c0_137 = arith.constant 0 : index
    %140 = vector.load %arg3[%c2_135, %c0_136, %c0_137] : memref<7x3x32xbf16, #tpu.memory_space<vmem>>, vector<1x3x32xbf16>
    %141 = vector.shape_cast %140 : vector<1x3x32xbf16> to vector<3x32xbf16>
    %cst_138 = arith.constant dense<0.000000e+00> : vector<128x32xf32>
    %142 = tpu.matmul %139, %141, %cst_138 {dimension_numbers = #tpu.dot_dimension_numbers<[1], [0], [0], [1], [0, 0, 1, 1], [], []>} : vector<128x3xbf16>, vector<3x32xbf16>, vector<128x32xf32> -> vector<128x32xf32>
    %143 = arith.addf %135, %142 : vector<128x32xf32>
    %c3_139 = arith.constant 3 : index
    %c0_140 = arith.constant 0 : index
    %c0_141 = arith.constant 0 : index
    %144 = vector.load %arg2[%c3_139, %c0_140, %c0_141] : memref<7x128x104xbf16, #tpu.memory_space<vmem>>, vector<1x128x104xbf16>
    %145 = vector.shape_cast %144 : vector<1x128x104xbf16> to vector<128x104xbf16>
    %cst_142 = arith.constant dense<0.000000e+00> : vector<128x3xf32>
    %146 = tpu.matmul %145, %118, %cst_142 {dimension_numbers = #tpu.dot_dimension_numbers<[1], [0], [0], [1], [0, 0, 1, 1], [], []>} : vector<128x104xbf16>, vector<104x3xbf16>, vector<128x3xf32> -> vector<128x3xf32>
    %147 = arith.truncf %146 : vector<128x3xf32> to vector<128x3xbf16>
    %c3_143 = arith.constant 3 : index
    %c0_144 = arith.constant 0 : index
    %c0_145 = arith.constant 0 : index
    %148 = vector.load %arg3[%c3_143, %c0_144, %c0_145] : memref<7x3x32xbf16, #tpu.memory_space<vmem>>, vector<1x3x32xbf16>
    %149 = vector.shape_cast %148 : vector<1x3x32xbf16> to vector<3x32xbf16>
    %cst_146 = arith.constant dense<0.000000e+00> : vector<128x32xf32>
    %150 = tpu.matmul %147, %149, %cst_146 {dimension_numbers = #tpu.dot_dimension_numbers<[1], [0], [0], [1], [0, 0, 1, 1], [], []>} : vector<128x3xbf16>, vector<3x32xbf16>, vector<128x32xf32> -> vector<128x32xf32>
    %151 = arith.addf %143, %150 : vector<128x32xf32>
    %c4_147 = arith.constant 4 : index
    %c0_148 = arith.constant 0 : index
    %c0_149 = arith.constant 0 : index
    %152 = vector.load %arg2[%c4_147, %c0_148, %c0_149] : memref<7x128x104xbf16, #tpu.memory_space<vmem>>, vector<1x128x104xbf16>
    %153 = vector.shape_cast %152 : vector<1x128x104xbf16> to vector<128x104xbf16>
    %cst_150 = arith.constant dense<0.000000e+00> : vector<128x3xf32>
    %154 = tpu.matmul %153, %118, %cst_150 {dimension_numbers = #tpu.dot_dimension_numbers<[1], [0], [0], [1], [0, 0, 1, 1], [], []>} : vector<128x104xbf16>, vector<104x3xbf16>, vector<128x3xf32> -> vector<128x3xf32>
    %155 = arith.truncf %154 : vector<128x3xf32> to vector<128x3xbf16>
    %c4_151 = arith.constant 4 : index
    %c0_152 = arith.constant 0 : index
    %c0_153 = arith.constant 0 : index
    %156 = vector.load %arg3[%c4_151, %c0_152, %c0_153] : memref<7x3x32xbf16, #tpu.memory_space<vmem>>, vector<1x3x32xbf16>
    %157 = vector.shape_cast %156 : vector<1x3x32xbf16> to vector<3x32xbf16>
    %cst_154 = arith.constant dense<0.000000e+00> : vector<128x32xf32>
    %158 = tpu.matmul %155, %157, %cst_154 {dimension_numbers = #tpu.dot_dimension_numbers<[1], [0], [0], [1], [0, 0, 1, 1], [], []>} : vector<128x3xbf16>, vector<3x32xbf16>, vector<128x32xf32> -> vector<128x32xf32>
    %159 = arith.addf %151, %158 : vector<128x32xf32>
    %c5_155 = arith.constant 5 : index
    %c0_156 = arith.constant 0 : index
    %c0_157 = arith.constant 0 : index
    %160 = vector.load %arg2[%c5_155, %c0_156, %c0_157] : memref<7x128x104xbf16, #tpu.memory_space<vmem>>, vector<1x128x104xbf16>
    %161 = vector.shape_cast %160 : vector<1x128x104xbf16> to vector<128x104xbf16>
    %cst_158 = arith.constant dense<0.000000e+00> : vector<128x3xf32>
    %162 = tpu.matmul %161, %118, %cst_158 {dimension_numbers = #tpu.dot_dimension_numbers<[1], [0], [0], [1], [0, 0, 1, 1], [], []>} : vector<128x104xbf16>, vector<104x3xbf16>, vector<128x3xf32> -> vector<128x3xf32>
    %163 = arith.truncf %162 : vector<128x3xf32> to vector<128x3xbf16>
    %c5_159 = arith.constant 5 : index
    %c0_160 = arith.constant 0 : index
    %c0_161 = arith.constant 0 : index
    %164 = vector.load %arg3[%c5_159, %c0_160, %c0_161] : memref<7x3x32xbf16, #tpu.memory_space<vmem>>, vector<1x3x32xbf16>
    %165 = vector.shape_cast %164 : vector<1x3x32xbf16> to vector<3x32xbf16>
    %cst_162 = arith.constant dense<0.000000e+00> : vector<128x32xf32>
    %166 = tpu.matmul %163, %165, %cst_162 {dimension_numbers = #tpu.dot_dimension_numbers<[1], [0], [0], [1], [0, 0, 1, 1], [], []>} : vector<128x3xbf16>, vector<3x32xbf16>, vector<128x32xf32> -> vector<128x32xf32>
    %167 = arith.addf %159, %166 : vector<128x32xf32>
    %c6_163 = arith.constant 6 : index
    %c0_164 = arith.constant 0 : index
    %c0_165 = arith.constant 0 : index
    %168 = vector.load %arg2[%c6_163, %c0_164, %c0_165] : memref<7x128x104xbf16, #tpu.memory_space<vmem>>, vector<1x128x104xbf16>
    %169 = vector.shape_cast %168 : vector<1x128x104xbf16> to vector<128x104xbf16>
    %cst_166 = arith.constant dense<0.000000e+00> : vector<128x3xf32>
    %170 = tpu.matmul %169, %118, %cst_166 {dimension_numbers = #tpu.dot_dimension_numbers<[1], [0], [0], [1], [0, 0, 1, 1], [], []>} : vector<128x104xbf16>, vector<104x3xbf16>, vector<128x3xf32> -> vector<128x3xf32>
    %171 = arith.truncf %170 : vector<128x3xf32> to vector<128x3xbf16>
    %c6_167 = arith.constant 6 : index
    %c0_168 = arith.constant 0 : index
    %c0_169 = arith.constant 0 : index
    %172 = vector.load %arg3[%c6_167, %c0_168, %c0_169] : memref<7x3x32xbf16, #tpu.memory_space<vmem>>, vector<1x3x32xbf16>
    %173 = vector.shape_cast %172 : vector<1x3x32xbf16> to vector<3x32xbf16>
    %cst_170 = arith.constant dense<0.000000e+00> : vector<128x32xf32>
    %174 = tpu.matmul %171, %173, %cst_170 {dimension_numbers = #tpu.dot_dimension_numbers<[1], [0], [0], [1], [0, 0, 1, 1], [], []>} : vector<128x3xbf16>, vector<3x32xbf16>, vector<128x32xf32> -> vector<128x32xf32>
    %175 = arith.addf %167, %174 : vector<128x32xf32>
    %cst_171 = arith.constant 0.000000e+00 : bf16
    %176 = vector.broadcast %cst_171 : bf16 to vector<64x32xbf16>
    %c256 = arith.constant 256 : index
    %c0_172 = arith.constant 0 : index
    %177 = vector.load %arg11[%c256, %c0_172] : memref<512x32xbf16, #tpu.memory_space<vmem>>, vector<64x32xbf16>
    tpu.vector_store %arg11[%c256, %c0_172], %176 {strides = array<i32>} : memref<512x32xbf16, #tpu.memory_space<vmem>>, vector<64x32xbf16>,
    %c448 = arith.constant 448 : index
    %c0_173 = arith.constant 0 : index
    %178 = vector.load %arg11[%c448, %c0_173] : memref<512x32xbf16, #tpu.memory_space<vmem>>, vector<64x32xbf16>
    tpu.vector_store %arg11[%c448, %c0_173], %176 {strides = array<i32>} : memref<512x32xbf16, #tpu.memory_space<vmem>>, vector<64x32xbf16>,
    %179 = arith.truncf %175 : vector<128x32xf32> to vector<128x32xbf16>
    %c320 = arith.constant 320 : index
    %c0_174 = arith.constant 0 : index
    %180 = vector.load %arg11[%c320, %c0_174] : memref<512x32xbf16, #tpu.memory_space<vmem>>, vector<128x32xbf16>
    tpu.vector_store %arg11[%c320, %c0_174], %179 {strides = array<i32>} : memref<512x32xbf16, #tpu.memory_space<vmem>>, vector<128x32xbf16>,
    %cst_175 = arith.constant 0.000000e+00 : f32
    %181 = vector.broadcast %cst_175 : f32 to vector<128x32xf32>
    %c256_176 = arith.constant 256 : index
    %c0_177 = arith.constant 0 : index
    %182 = vector.load %arg11[%c256_176, %c0_177] : memref<512x32xbf16, #tpu.memory_space<vmem>>, vector<128x32xbf16>
    %c0_178 = arith.constant 0 : index
    %c0_179 = arith.constant 0 : index
    %c0_180 = arith.constant 0 : index
    %183 = vector.load %arg5[%c0_178, %c0_179, %c0_180] : memref<9x32x32xbf16, #tpu.memory_space<vmem>>, vector<1x32x32xbf16>
    %184 = vector.shape_cast %183 : vector<1x32x32xbf16> to vector<32x32xbf16>
    %cst_181 = arith.constant dense<0.000000e+00> : vector<128x32xf32>
    %185 = tpu.matmul %182, %184, %cst_181 {dimension_numbers = #tpu.dot_dimension_numbers<[1], [0], [0], [1], [0, 0, 1, 1], [], []>} : vector<128x32xbf16>, vector<32x32xbf16>, vector<128x32xf32> -> vector<128x32xf32>
    %186 = arith.addf %181, %185 : vector<128x32xf32>
    %c272 = arith.constant 272 : index
    %c0_182 = arith.constant 0 : index
    %187 = vector.load %arg11[%c272, %c0_182] : memref<512x32xbf16, #tpu.memory_space<vmem>>, vector<128x32xbf16>
    %c1_183 = arith.constant 1 : index
    %c0_184 = arith.constant 0 : index
    %c0_185 = arith.constant 0 : index
    %188 = vector.load %arg5[%c1_183, %c0_184, %c0_185] : memref<9x32x32xbf16, #tpu.memory_space<vmem>>, vector<1x32x32xbf16>
    %189 = vector.shape_cast %188 : vector<1x32x32xbf16> to vector<32x32xbf16>
    %cst_186 = arith.constant dense<0.000000e+00> : vector<128x32xf32>
    %190 = tpu.matmul %187, %189, %cst_186 {dimension_numbers = #tpu.dot_dimension_numbers<[1], [0], [0], [1], [0, 0, 1, 1], [], []>} : vector<128x32xbf16>, vector<32x32xbf16>, vector<128x32xf32> -> vector<128x32xf32>
    %191 = arith.addf %186, %190 : vector<128x32xf32>
    %c288 = arith.constant 288 : index
    %c0_187 = arith.constant 0 : index
    %192 = vector.load %arg11[%c288, %c0_187] : memref<512x32xbf16, #tpu.memory_space<vmem>>, vector<128x32xbf16>
    %c2_188 = arith.constant 2 : index
    %c0_189 = arith.constant 0 : index
    %c0_190 = arith.constant 0 : index
    %193 = vector.load %arg5[%c2_188, %c0_189, %c0_190] : memref<9x32x32xbf16, #tpu.memory_space<vmem>>, vector<1x32x32xbf16>
    %194 = vector.shape_cast %193 : vector<1x32x32xbf16> to vector<32x32xbf16>
    %cst_191 = arith.constant dense<0.000000e+00> : vector<128x32xf32>
    %195 = tpu.matmul %192, %194, %cst_191 {dimension_numbers = #tpu.dot_dimension_numbers<[1], [0], [0], [1], [0, 0, 1, 1], [], []>} : vector<128x32xbf16>, vector<32x32xbf16>, vector<128x32xf32> -> vector<128x32xf32>
    %196 = arith.addf %191, %195 : vector<128x32xf32>
    %c304 = arith.constant 304 : index
    %c0_192 = arith.constant 0 : index
    %197 = vector.load %arg11[%c304, %c0_192] : memref<512x32xbf16, #tpu.memory_space<vmem>>, vector<128x32xbf16>
    %c3_193 = arith.constant 3 : index
    %c0_194 = arith.constant 0 : index
    %c0_195 = arith.constant 0 : index
    %198 = vector.load %arg5[%c3_193, %c0_194, %c0_195] : memref<9x32x32xbf16, #tpu.memory_space<vmem>>, vector<1x32x32xbf16>
    %199 = vector.shape_cast %198 : vector<1x32x32xbf16> to vector<32x32xbf16>
    %cst_196 = arith.constant dense<0.000000e+00> : vector<128x32xf32>
    %200 = tpu.matmul %197, %199, %cst_196 {dimension_numbers = #tpu.dot_dimension_numbers<[1], [0], [0], [1], [0, 0, 1, 1], [], []>} : vector<128x32xbf16>, vector<32x32xbf16>, vector<128x32xf32> -> vector<128x32xf32>
    %201 = arith.addf %196, %200 : vector<128x32xf32>
    %c320_197 = arith.constant 320 : index
    %c0_198 = arith.constant 0 : index
    %202 = vector.load %arg11[%c320_197, %c0_198] : memref<512x32xbf16, #tpu.memory_space<vmem>>, vector<128x32xbf16>
    %c4_199 = arith.constant 4 : index
    %c0_200 = arith.constant 0 : index
    %c0_201 = arith.constant 0 : index
    %203 = vector.load %arg5[%c4_199, %c0_200, %c0_201] : memref<9x32x32xbf16, #tpu.memory_space<vmem>>, vector<1x32x32xbf16>
    %204 = vector.shape_cast %203 : vector<1x32x32xbf16> to vector<32x32xbf16>
    %cst_202 = arith.constant dense<0.000000e+00> : vector<128x32xf32>
    %205 = tpu.matmul %202, %204, %cst_202 {dimension_numbers = #tpu.dot_dimension_numbers<[1], [0], [0], [1], [0, 0, 1, 1], [], []>} : vector<128x32xbf16>, vector<32x32xbf16>, vector<128x32xf32> -> vector<128x32xf32>
    %206 = arith.addf %201, %205 : vector<128x32xf32>
    %c336 = arith.constant 336 : index
    %c0_203 = arith.constant 0 : index
    %207 = vector.load %arg11[%c336, %c0_203] : memref<512x32xbf16, #tpu.memory_space<vmem>>, vector<128x32xbf16>
    %c5_204 = arith.constant 5 : index
    %c0_205 = arith.constant 0 : index
    %c0_206 = arith.constant 0 : index
    %208 = vector.load %arg5[%c5_204, %c0_205, %c0_206] : memref<9x32x32xbf16, #tpu.memory_space<vmem>>, vector<1x32x32xbf16>
    %209 = vector.shape_cast %208 : vector<1x32x32xbf16> to vector<32x32xbf16>
    %cst_207 = arith.constant dense<0.000000e+00> : vector<128x32xf32>
    %210 = tpu.matmul %207, %209, %cst_207 {dimension_numbers = #tpu.dot_dimension_numbers<[1], [0], [0], [1], [0, 0, 1, 1], [], []>} : vector<128x32xbf16>, vector<32x32xbf16>, vector<128x32xf32> -> vector<128x32xf32>
    %211 = arith.addf %206, %210 : vector<128x32xf32>
    %c352 = arith.constant 352 : index
    %c0_208 = arith.constant 0 : index
    %212 = vector.load %arg11[%c352, %c0_208] : memref<512x32xbf16, #tpu.memory_space<vmem>>, vector<128x32xbf16>
    %c6_209 = arith.constant 6 : index
    %c0_210 = arith.constant 0 : index
    %c0_211 = arith.constant 0 : index
    %213 = vector.load %arg5[%c6_209, %c0_210, %c0_211] : memref<9x32x32xbf16, #tpu.memory_space<vmem>>, vector<1x32x32xbf16>
    %214 = vector.shape_cast %213 : vector<1x32x32xbf16> to vector<32x32xbf16>
    %cst_212 = arith.constant dense<0.000000e+00> : vector<128x32xf32>
    %215 = tpu.matmul %212, %214, %cst_212 {dimension_numbers = #tpu.dot_dimension_numbers<[1], [0], [0], [1], [0, 0, 1, 1], [], []>} : vector<128x32xbf16>, vector<32x32xbf16>, vector<128x32xf32> -> vector<128x32xf32>
    %216 = arith.addf %211, %215 : vector<128x32xf32>
    %c368 = arith.constant 368 : index
    %c0_213 = arith.constant 0 : index
    %217 = vector.load %arg11[%c368, %c0_213] : memref<512x32xbf16, #tpu.memory_space<vmem>>, vector<128x32xbf16>
    %c7_214 = arith.constant 7 : index
    %c0_215 = arith.constant 0 : index
    %c0_216 = arith.constant 0 : index
    %218 = vector.load %arg5[%c7_214, %c0_215, %c0_216] : memref<9x32x32xbf16, #tpu.memory_space<vmem>>, vector<1x32x32xbf16>
    %219 = vector.shape_cast %218 : vector<1x32x32xbf16> to vector<32x32xbf16>
    %cst_217 = arith.constant dense<0.000000e+00> : vector<128x32xf32>
    %220 = tpu.matmul %217, %219, %cst_217 {dimension_numbers = #tpu.dot_dimension_numbers<[1], [0], [0], [1], [0, 0, 1, 1], [], []>} : vector<128x32xbf16>, vector<32x32xbf16>, vector<128x32xf32> -> vector<128x32xf32>
    %221 = arith.addf %216, %220 : vector<128x32xf32>
    %c384 = arith.constant 384 : index
    %c0_218 = arith.constant 0 : index
    %222 = vector.load %arg11[%c384, %c0_218] : memref<512x32xbf16, #tpu.memory_space<vmem>>, vector<128x32xbf16>
    %c8_219 = arith.constant 8 : index
    %c0_220 = arith.constant 0 : index
    %c0_221 = arith.constant 0 : index
    %223 = vector.load %arg5[%c8_219, %c0_220, %c0_221] : memref<9x32x32xbf16, #tpu.memory_space<vmem>>, vector<1x32x32xbf16>
    %224 = vector.shape_cast %223 : vector<1x32x32xbf16> to vector<32x32xbf16>
    %cst_222 = arith.constant dense<0.000000e+00> : vector<128x32xf32>
    %225 = tpu.matmul %222, %224, %cst_222 {dimension_numbers = #tpu.dot_dimension_numbers<[1], [0], [0], [1], [0, 0, 1, 1], [], []>} : vector<128x32xbf16>, vector<32x32xbf16>, vector<128x32xf32> -> vector<128x32xf32>
    %226 = arith.addf %221, %225 : vector<128x32xf32>
    %c0_223 = arith.constant 0 : index
    %c0_224 = arith.constant 0 : index
    %227 = vector.load %arg6[%c0_223, %c0_224] : memref<1x32xf32, #tpu.memory_space<vmem>>, vector<1x32xf32>
    %228 = vector.broadcast %227 : vector<1x32xf32> to vector<128x32xf32>
    %229 = arith.addf %226, %228 : vector<128x32xf32>
    %cst_225 = arith.constant 0.000000e+00 : f32
    %230 = vector.broadcast %cst_225 : f32 to vector<128x32xf32>
    %231 = arith.maximumf %229, %230 : vector<128x32xf32>
    %c0_226 = arith.constant 0 : index
    %c0_227 = arith.constant 0 : index
    %232 = vector.load %arg7[%c0_226, %c0_227] : memref<1x128xf32, #tpu.memory_space<vmem>>, vector<1x128xf32>
    %cst_228 = arith.constant dense<0.000000e+00> : vector<1x32xf32>
    %233 = tpu.matmul %232, %231, %cst_228 {dimension_numbers = #tpu.dot_dimension_numbers<[1], [0], [0], [1], [0, 0, 1, 1], [], []>} : vector<1x128xf32>, vector<128x32xf32>, vector<1x32xf32> -> vector<1x32xf32>
    %234 = tpu.concatenate %116, %233 in 0 : vector<1x32xf32>, vector<1x32xf32> -> vector<2x32xf32>
    %c0_229 = arith.constant 0 : index
    %c0_230 = arith.constant 0 : index
    %235 = vector.load %arg8[%c0_229, %c0_230] : memref<32x19xf32, #tpu.memory_space<vmem>>, vector<32x19xf32>
    %cst_231 = arith.constant dense<0.000000e+00> : vector<2x19xf32>
    %236 = tpu.matmul %234, %235, %cst_231 {dimension_numbers = #tpu.dot_dimension_numbers<[1], [0], [0], [1], [0, 0, 1, 1], [], []>} : vector<2x32xf32>, vector<32x19xf32>, vector<2x19xf32> -> vector<2x19xf32>
    %c0_232 = arith.constant 0 : index
    %c0_233 = arith.constant 0 : index
    %237 = vector.load %arg9[%c0_232, %c0_233] : memref<1x19xf32, #tpu.memory_space<vmem>>, vector<1x19xf32>
    %238 = vector.broadcast %237 : vector<1x19xf32> to vector<2x19xf32>
    %239 = arith.addf %236, %238 : vector<2x19xf32>
    %c0_234 = arith.constant 0 : index
    %c0_235 = arith.constant 0 : index
    %c0_236 = arith.constant 0 : index
    %240 = vector.load %arg10[%c0_234, %c0_235, %c0_236] : memref<1x2x19xf32, #tpu.memory_space<vmem>>, vector<1x2x19xf32>
    %241 = vector.shape_cast %240 : vector<1x2x19xf32> to vector<2x19xf32>
    %242 = vector.shape_cast %239 : vector<2x19xf32> to vector<1x2x19xf32>
    tpu.vector_store %arg10[%c0_234, %c0_235, %c0_236], %242 {strides = array<i32>} : memref<1x2x19xf32, #tpu.memory_space<vmem>>, vector<1x2x19xf32>,
    return
  }
  func.func @transform_0(%arg0: i32) -> (i32, i32, i32) {
    %c0_i32 = arith.constant 0 : i32
    %c0_i32_0 = arith.constant 0 : i32
    %c0_i32_1 = arith.constant 0 : i32
    return %arg0, %c0_i32, %c0_i32_0 : i32, i32, i32
  }
  func.func @transform_1(%arg0: i32) -> (i32, i32, i32) {
    %c0_i32 = arith.constant 0 : i32
    %c0_i32_0 = arith.constant 0 : i32
    %c0_i32_1 = arith.constant 0 : i32
    %c0_i32_2 = arith.constant 0 : i32
    return %c0_i32, %c0_i32_0, %c0_i32_1 : i32, i32, i32
  }
  func.func @transform_2(%arg0: i32) -> (i32, i32, i32) {
    %c0_i32 = arith.constant 0 : i32
    %c0_i32_0 = arith.constant 0 : i32
    %c0_i32_1 = arith.constant 0 : i32
    %c0_i32_2 = arith.constant 0 : i32
    return %c0_i32, %c0_i32_0, %c0_i32_1 : i32, i32, i32
  }
  func.func @transform_3(%arg0: i32) -> (i32, i32) {
    %c0_i32 = arith.constant 0 : i32
    %c0_i32_0 = arith.constant 0 : i32
    %c0_i32_1 = arith.constant 0 : i32
    return %c0_i32, %c0_i32_0 : i32, i32
  }
  func.func @transform_4(%arg0: i32) -> (i32, i32, i32) {
    %c0_i32 = arith.constant 0 : i32
    %c0_i32_0 = arith.constant 0 : i32
    %c0_i32_1 = arith.constant 0 : i32
    %c0_i32_2 = arith.constant 0 : i32
    return %c0_i32, %c0_i32_0, %c0_i32_1 : i32, i32, i32
  }
  func.func @transform_5(%arg0: i32) -> (i32, i32) {
    %c0_i32 = arith.constant 0 : i32
    %c0_i32_0 = arith.constant 0 : i32
    %c0_i32_1 = arith.constant 0 : i32
    return %c0_i32, %c0_i32_0 : i32, i32
  }
  func.func @transform_6(%arg0: i32) -> (i32, i32) {
    %c0_i32 = arith.constant 0 : i32
    %c0_i32_0 = arith.constant 0 : i32
    %c0_i32_1 = arith.constant 0 : i32
    return %c0_i32, %c0_i32_0 : i32, i32
  }
  func.func @transform_7(%arg0: i32) -> (i32, i32) {
    %c0_i32 = arith.constant 0 : i32
    %c0_i32_0 = arith.constant 0 : i32
    %c0_i32_1 = arith.constant 0 : i32
    return %c0_i32, %c0_i32_0 : i32, i32
  }
  func.func @transform_8(%arg0: i32) -> (i32, i32) {
    %c0_i32 = arith.constant 0 : i32
    %c0_i32_0 = arith.constant 0 : i32
    %c0_i32_1 = arith.constant 0 : i32
    return %c0_i32, %c0_i32_0 : i32, i32
  }
  func.func @transform_9(%arg0: i32) -> (i32, i32, i32) {
    %c0_i32 = arith.constant 0 : i32
    %c0_i32_0 = arith.constant 0 : i32
    %c0_i32_1 = arith.constant 0 : i32
    return %arg0, %c0_i32, %c0_i32_0 : i32, i32, i32
  }
}

</mosaic_0001>

<llo_original>
// kernel: tpu_custom_call.1
$region0: #{tpu_custom_call.1}
  #allocation0 [shape = 'u32[]', space=smem, size = 0x4, offset = 0x4, fixed_abs, tag = 'smem constant byte address 0x4 - core index']
  #allocation1 [shape = 'u32[144,128]{1,0:T(1,128)}', space=vmem, size = 0x12000, scoped, tag = 'internal scratch']
  #allocation2 [shape = 'bf16[512,32]{1,0:T(16,128)(2,1)}', space=vmem, size = 0x20000, scoped, tag = 'scratch operand']
  %s0 = inlined_call_operand.vmem [shape: bf16[4,104,3], index: 0, kind: input, shape index: {}]
  %s1 = inlined_call_operand.vmem [shape: bf16[7,128,104], index: 1, kind: input, shape index: {}]
  %s2 = inlined_call_operand.vmem [shape: bf16[7,3,32], index: 2, kind: input, shape index: {}]
  %s3 = inlined_call_operand.vmem [shape: f32[128,32], index: 3, kind: input, shape index: {}]
  %s4 = inlined_call_operand.vmem [shape: bf16[9,32,32], index: 4, kind: input, shape index: {}]
  %s5 = inlined_call_operand.vmem [shape: f32[1,32], index: 5, kind: input, shape index: {}]
  %s6 = inlined_call_operand.vmem [shape: f32[1,128], index: 6, kind: input, shape index: {}]
  %s7 = inlined_call_operand.vmem [shape: f32[32,19], index: 7, kind: input, shape index: {}]
  %s8 = inlined_call_operand.vmem [shape: f32[1,19], index: 8, kind: input, shape index: {}]
  %s9 = inlined_call_operand.hbm [shape: f32[2,2,19], index: 9, kind: output, shape index: {}]
  %s10 = sld [smem:[#allocation0]]
  $region69: #{tpu_custom_call.1} parent=0
    _
  %s12 = ssub.s32 1, %s10
  %s13 = scalar_select 0, %s12, %s10
  $region1: #{tpu_custom_call.1} parent=0
    #allocation3 [shape = 'u8[2048]{0}', space=vmem, size = 0x800, scoped, tag = 'output window, operand 0']
    #allocation4 [shape = 's32[2]{0}', space=sflag, size = 0x8, scoped, tag = 'scoped memory for tpu_custom_call.1']
    %14 = vsyncpa [#allocation4], 0
    %s15 = scalar_lea.sflag [#allocation4], 1
    %16 = vsyncpa %s15, 0
    loop: start=0, step=1, limit=4
    $region2: #{tpu_custom_call.1} parent=1 // loop_pre_header
      _
    $region3: #{tpu_custom_call.1} parent=1 // loop_header
      %s18 = sphi 0, %s22
      %p19 = scmp.ge.s32.totalorder %s18, 4
      %s28 = sphi 0, %s30
      %s31 = sphi 0, %s28
      %s32 = sphi 0, %s31
      %s48 = sphi 0, %s32
      %s52 = sphi 0, %s52
      %s54 = sphi 0, %s52
      %s55 = sphi 0, %s54
      %s69 = sphi 0, %s55
      %s73 = sphi 0, %s73
      %s75 = sphi 0, %s73
      %s76 = sphi 0, %s75
      %s90 = sphi 0, %s76
      %s94 = sphi 0, %s94
      %s96 = sphi 0, %s94
      %s97 = sphi 0, %s96
      %s111 = sphi 0, %s97
      %s115 = sphi 0, %s115
      %s117 = sphi 0, %s115
      %s118 = sphi 0, %s117
      %s132 = sphi 0, %s118
      %s136 = sphi 0, %s136
      %s138 = sphi 0, %s136
      %s139 = sphi 0, %s138
      %s153 = sphi 0, %s139
      %s157 = sphi 0, %s157
      %s159 = sphi 0, %s157
      %s160 = sphi 0, %s159
      %s174 = sphi 0, %s160
      %s178 = sphi 0, %s178
      %s180 = sphi 0, %s178
      %s181 = sphi 0, %s180
      %s195 = sphi 0, %s181
      %s199 = sphi 0, %s199
      %s201 = sphi 0, %s199
      %s202 = sphi 0, %s201
      %s216 = sphi 0, %s202
      %s222 = sphi 0, %s224
      %s225 = sphi 0, %s222
      %s226 = sphi 0, %s225
      %s242 = sphi 0, %s226
    $region4: #{tpu_custom_call.1} parent=1 // loop_header_branch
      %21 = sbr.rel (%p19) target = $region8
    $region5: #{tpu_custom_call.1} parent=1 // loop_body
      %s23 = ssub.s32 %s18, 1
      %s24 = ssub.s32 %s18, 2
      %s25 = sadd.s32 %s18, 1
      %s26 = ssub.s32 %s18, %s25
      %p27 = scmp.eq.s32.totalorder %s26, 0
      %s29 = sadd.s32 %s28, 1
      %s30 = scalar_select %p27, %s28, %s29
      %p33 = pneg %p27
      %p34 = scmp.eq.s32.totalorder %s18, 1
      %p35 = por %p33, %p34
      %p36 = scmp.ne.s32.totalorder %s28, %s31
      %p37 = scmp.eq.s32.totalorder %s18, 0
      %p38 = por %p36, %p37
      %p39 = scmp.ne.s32.totalorder %s28, %s31
      %p40 = scmp.eq.s32.totalorder %s23, 1
      %p41 = por %p39, %p40
      %p42 = scmp.ne.s32.totalorder %s31, %s32
      %p43 = scmp.eq.s32.totalorder %s23, 0
      %p44 = por %p42, %p43
      %p45 = scmp.ne.s32.totalorder %s31, %s32
      %p46 = scmp.eq.s32.totalorder %s24, 1
      %p47 = por %p45, %p46
      %p49 = scmp.ne.s32.totalorder %s32, %s48
      %p50 = scmp.eq.s32.totalorder %s24, 0
      %p51 = por %p49, %p50
      %s53 = sadd.s32 %s52, 1
      %p56 = scmp.eq.s32.totalorder %s18, 1
      %p57 = scmp.ne.s32.totalorder %s52, %s54
      %p58 = scmp.eq.s32.totalorder %s18, 0
      %p59 = por %p57, %p58
      %p60 = scmp.ne.s32.totalorder %s52, %s54
      %p61 = scmp.eq.s32.totalorder %s23, 1
      %p62 = por %p60, %p61
      %p63 = scmp.ne.s32.totalorder %s54, %s55
      %p64 = scmp.eq.s32.totalorder %s23, 0
      %p65 = por %p63, %p64
      %p66 = scmp.ne.s32.totalorder %s54, %s55
      %p67 = scmp.eq.s32.totalorder %s24, 1
      %p68 = por %p66, %p67
      %p70 = scmp.ne.s32.totalorder %s55, %s69
      %p71 = scmp.eq.s32.totalorder %s24, 0
      %p72 = por %p70, %p71
      %s74 = sadd.s32 %s73, 1
      %p77 = scmp.eq.s32.totalorder %s18, 1
      %p78 = scmp.ne.s32.totalorder %s73, %s75
      %p79 = scmp.eq.s32.totalorder %s18, 0
      %p80 = por %p78, %p79
      %p81 = scmp.ne.s32.totalorder %s73, %s75
      %p82 = scmp.eq.s32.totalorder %s23, 1
      %p83 = por %p81, %p82
      %p84 = scmp.ne.s32.totalorder %s75, %s76
      %p85 = scmp.eq.s32.totalorder %s23, 0
      %p86 = por %p84, %p85
      %p87 = scmp.ne.s32.totalorder %s75, %s76
      %p88 = scmp.eq.s32.totalorder %s24, 1
      %p89 = por %p87, %p88
      %p91 = scmp.ne.s32.totalorder %s76, %s90
      %p92 = scmp.eq.s32.totalorder %s24, 0
      %p93 = por %p91, %p92
      %s95 = sadd.s32 %s94, 1
      %p98 = scmp.eq.s32.totalorder %s18, 1
      %p99 = scmp.ne.s32.totalorder %s94, %s96
      %p100 = scmp.eq.s32.totalorder %s18, 0
      %p101 = por %p99, %p100
      %p102 = scmp.ne.s32.totalorder %s94, %s96
      %p103 = scmp.eq.s32.totalorder %s23, 1
      %p104 = por %p102, %p103
      %p105 = scmp.ne.s32.totalorder %s96, %s97
      %p106 = scmp.eq.s32.totalorder %s23, 0
      %p107 = por %p105, %p106
      %p108 = scmp.ne.s32.totalorder %s96, %s97
      %p109 = scmp.eq.s32.totalorder %s24, 1
      %p110 = por %p108, %p109
      %p112 = scmp.ne.s32.totalorder %s97, %s111
      %p113 = scmp.eq.s32.totalorder %s24, 0
      %p114 = por %p112, %p113
      %s116 = sadd.s32 %s115, 1
      %p119 = scmp.eq.s32.totalorder %s18, 1
      %p120 = scmp.ne.s32.totalorder %s115, %s117
      %p121 = scmp.eq.s32.totalorder %s18, 0
      %p122 = por %p120, %p121
      %p123 = scmp.ne.s32.totalorder %s115, %s117
      %p124 = scmp.eq.s32.totalorder %s23, 1
      %p125 = por %p123, %p124
      %p126 = scmp.ne.s32.totalorder %s117, %s118
      %p127 = scmp.eq.s32.totalorder %s23, 0
      %p128 = por %p126, %p127
      %p129 = scmp.ne.s32.totalorder %s117, %s118
      %p130 = scmp.eq.s32.totalorder %s24, 1
      %p131 = por %p129, %p130
      %p133 = scmp.ne.s32.totalorder %s118, %s132
      %p134 = scmp.eq.s32.totalorder %s24, 0
      %p135 = por %p133, %p134
      %s137 = sadd.s32 %s136, 1
      %p140 = scmp.eq.s32.totalorder %s18, 1
      %p141 = scmp.ne.s32.totalorder %s136, %s138
      %p142 = scmp.eq.s32.totalorder %s18, 0
      %p143 = por %p141, %p142
      %p144 = scmp.ne.s32.totalorder %s136, %s138
      %p145 = scmp.eq.s32.totalorder %s23, 1
      %p146 = por %p144, %p145
      %p147 = scmp.ne.s32.totalorder %s138, %s139
      %p148 = scmp.eq.s32.totalorder %s23, 0
      %p149 = por %p147, %p148
      %p150 = scmp.ne.s32.totalorder %s138, %s139
      %p151 = scmp.eq.s32.totalorder %s24, 1
      %p152 = por %p150, %p151
      %p154 = scmp.ne.s32.totalorder %s139, %s153
      %p155 = scmp.eq.s32.totalorder %s24, 0
      %p156 = por %p154, %p155
      %s158 = sadd.s32 %s157, 1
      %p161 = scmp.eq.s32.totalorder %s18, 1
      %p162 = scmp.ne.s32.totalorder %s157, %s159
      %p163 = scmp.eq.s32.totalorder %s18, 0
      %p164 = por %p162, %p163
      %p165 = scmp.ne.s32.totalorder %s157, %s159
      %p166 = scmp.eq.s32.totalorder %s23, 1
      %p167 = por %p165, %p166
      %p168 = scmp.ne.s32.totalorder %s159, %s160
      %p169 = scmp.eq.s32.totalorder %s23, 0
      %p170 = por %p168, %p169
      %p171 = scmp.ne.s32.totalorder %s159, %s160
      %p172 = scmp.eq.s32.totalorder %s24, 1
      %p173 = por %p171, %p172
      %p175 = scmp.ne.s32.totalorder %s160, %s174
      %p176 = scmp.eq.s32.totalorder %s24, 0
      %p177 = por %p175, %p176
      %s179 = sadd.s32 %s178, 1
      %p182 = scmp.eq.s32.totalorder %s18, 1
      %p183 = scmp.ne.s32.totalorder %s178, %s180
      %p184 = scmp.eq.s32.totalorder %s18, 0
      %p185 = por %p183, %p184
      %p186 = scmp.ne.s32.totalorder %s178, %s180
      %p187 = scmp.eq.s32.totalorder %s23, 1
      %p188 = por %p186, %p187
      %p189 = scmp.ne.s32.totalorder %s180, %s181
      %p190 = scmp.eq.s32.totalorder %s23, 0
      %p191 = por %p189, %p190
      %p192 = scmp.ne.s32.totalorder %s180, %s181
      %p193 = scmp.eq.s32.totalorder %s24, 1
      %p194 = por %p192, %p193
      %p196 = scmp.ne.s32.totalorder %s181, %s195
      %p197 = scmp.eq.s32.totalorder %s24, 0
      %p198 = por %p196, %p197
      %s200 = sadd.s32 %s199, 1
      %p203 = scmp.eq.s32.totalorder %s18, 1
      %p204 = scmp.ne.s32.totalorder %s199, %s201
      %p205 = scmp.eq.s32.totalorder %s18, 0
      %p206 = por %p204, %p205
      %p207 = scmp.ne.s32.totalorder %s199, %s201
      %p208 = scmp.eq.s32.totalorder %s23, 1
      %p209 = por %p207, %p208
      %p210 = scmp.ne.s32.totalorder %s201, %s202
      %p211 = scmp.eq.s32.totalorder %s23, 0
      %p212 = por %p210, %p211
      %p213 = scmp.ne.s32.totalorder %s201, %s202
      %p214 = scmp.eq.s32.totalorder %s24, 1
      %p215 = por %p213, %p214
      %p217 = scmp.ne.s32.totalorder %s202, %s216
      %p218 = scmp.eq.s32.totalorder %s24, 0
      %p219 = por %p217, %p218
      %s220 = ssub.s32 %s18, %s25
      %p221 = scmp.eq.s32.totalorder %s220, 0
      %s223 = sadd.s32 %s222, 1
      %s224 = scalar_select %p221, %s222, %s223
      %p227 = pneg %p221
      %p228 = scmp.eq.s32.totalorder %s18, 1
      %p229 = por %p227, %p228
      %p230 = scmp.ne.s32.totalorder %s222, %s225
      %p231 = scmp.eq.s32.totalorder %s18, 0
      %p232 = por %p230, %p231
      %p233 = scmp.ne.s32.totalorder %s222, %s225
      %p234 = scmp.eq.s32.totalorder %s23, 1
      %p235 = por %p233, %p234
      %p236 = scmp.ne.s32.totalorder %s225, %s226
      %p237 = scmp.eq.s32.totalorder %s23, 0
      %p238 = por %p236, %p237
      %p239 = scmp.ne.s32.totalorder %s225, %s226
      %p240 = scmp.eq.s32.totalorder %s24, 1
      %p241 = por %p239, %p240
      %p243 = scmp.ne.s32.totalorder %s226, %s242
      %p244 = scmp.eq.s32.totalorder %s24, 0
      %p245 = por %p243, %p244
      %p246 = scmp.le.s32.totalorder 1, %s18
      %p247 = scmp.lt.s32.totalorder %s18, 3
      %p248 = pnand %p246, %p247
      %p249 = pneg %p248
      // Predicated region
      $region9: #{tpu_custom_call.1} parent=5 // pred_check
        _
      $region10: #{tpu_custom_call.1} parent=5 // pred_check_branch
        %251 = sbr.rel (%p248) target = $region12
      $region11: #{tpu_custom_call.1} parent=5 // pred_region
        %s252 = ssub.s32 %s18, 1
        // Predicated region
        $region13: #{tpu_custom_call.1} parent=11 // pred_check
          %p253 = pneg %p65
        $region14: #{tpu_custom_call.1} parent=11 // pred_check_branch
          %255 = sbr.rel (%p253) target = $region16
        $region15: #{tpu_custom_call.1} parent=11 // pred_region
          _
        $region16: #{tpu_custom_call.1} parent=11 // pred_fallthru
          _
        // Predicated region
        $region17: #{tpu_custom_call.1} parent=11 // pred_check
          %p256 = pneg %p86
        $region18: #{tpu_custom_call.1} parent=11 // pred_check_branch
          %258 = sbr.rel (%p256) target = $region20
        $region19: #{tpu_custom_call.1} parent=11 // pred_region
          _
        $region20: #{tpu_custom_call.1} parent=11 // pred_fallthru
          _
        // Predicated region
        $region21: #{tpu_custom_call.1} parent=11 // pred_check
          %p259 = pneg %p107
        $region22: #{tpu_custom_call.1} parent=11 // pred_check_branch
          %261 = sbr.rel (%p259) target = $region24
        $region23: #{tpu_custom_call.1} parent=11 // pred_region
          _
        $region24: #{tpu_custom_call.1} parent=11 // pred_fallthru
          _
        // Predicated region
        $region25: #{tpu_custom_call.1} parent=11 // pred_check
          %p262 = pneg %p128
        $region26: #{tpu_custom_call.1} parent=11 // pred_check_branch
          %264 = sbr.rel (%p262) target = $region28
        $region27: #{tpu_custom_call.1} parent=11 // pred_region
          _
        $region28: #{tpu_custom_call.1} parent=11 // pred_fallthru
          _
        // Predicated region
        $region29: #{tpu_custom_call.1} parent=11 // pred_check
          %p265 = pneg %p149
        $region30: #{tpu_custom_call.1} parent=11 // pred_check_branch
          %267 = sbr.rel (%p265) target = $region32
        $region31: #{tpu_custom_call.1} parent=11 // pred_region
          _
        $region32: #{tpu_custom_call.1} parent=11 // pred_fallthru
          _
        // Predicated region
        $region33: #{tpu_custom_call.1} parent=11 // pred_check
          %p268 = pneg %p170
        $region34: #{tpu_custom_call.1} parent=11 // pred_check_branch
          %270 = sbr.rel (%p268) target = $region36
        $region35: #{tpu_custom_call.1} parent=11 // pred_region
          _
        $region36: #{tpu_custom_call.1} parent=11 // pred_fallthru
          _
        // Predicated region
        $region37: #{tpu_custom_call.1} parent=11 // pred_check
          %p271 = pneg %p191
        $region38: #{tpu_custom_call.1} parent=11 // pred_check_branch
          %273 = sbr.rel (%p271) target = $region40
        $region39: #{tpu_custom_call.1} parent=11 // pred_region
          _
        $region40: #{tpu_custom_call.1} parent=11 // pred_fallthru
          _
        // Predicated region
        $region41: #{tpu_custom_call.1} parent=11 // pred_check
          %p274 = pneg %p212
        $region42: #{tpu_custom_call.1} parent=11 // pred_check_branch
          %276 = sbr.rel (%p274) target = $region44
        $region43: #{tpu_custom_call.1} parent=11 // pred_region
          _
        $region44: #{tpu_custom_call.1} parent=11 // pred_fallthru
          _
      $region12: #{tpu_custom_call.1} parent=5 // pred_fallthru
        _
      %p277 = scmp.lt.s32.totalorder %s18, 2
      // Predicated region
      $region45: #{tpu_custom_call.1} parent=5 // pred_check
        %p278 = pneg %p277
      $region46: #{tpu_custom_call.1} parent=5 // pred_check_branch
        %280 = sbr.rel (%p278) target = $region48
      $region47: #{tpu_custom_call.1} parent=5 // pred_region
        // Predicated region
        $region49: #{tpu_custom_call.1} parent=47 // pred_check
          %p281 = pneg %p38
        $region50: #{tpu_custom_call.1} parent=47 // pred_check_branch
          %283 = sbr.rel (%p281) target = $region52
        $region51: #{tpu_custom_call.1} parent=47 // pred_region
          %s284 = smul.u32 2, %s18
          %p285 = scmp.lt.s32.totalorder %s284, 3
          %s286 = scalar_select %p285, %s284, 3
          %s287 = smul.addr %s286, 13
          %s288 = smul.addr %s287, 4
          %s289 = scalar_lea.vmem %s0, %s288
          %s290 = smul.u32 2, %s18
        $region52: #{tpu_custom_call.1} parent=47 // pred_fallthru
          _
      $region48: #{tpu_custom_call.1} parent=5 // pred_fallthru
        _
      %p291 = scmp.le.s32.totalorder 1, %s18
      %p292 = scmp.lt.s32.totalorder %s18, 3
      %p293 = pnand %p291, %p292
      %p294 = pneg %p293
      // Predicated region
      $region53: #{tpu_custom_call.1} parent=5 // pred_check
        _
      $region54: #{tpu_custom_call.1} parent=5 // pred_check_branch
        %296 = sbr.rel (%p293) target = $region56
      $region55: #{tpu_custom_call.1} parent=5 // pred_region
        %s297 = ssub.s32 %s18, 1
        %s298 = smul.u32 2, %s23
        %p299 = scmp.lt.s32.totalorder %s298, 3
        %s300 = scalar_select %p299, %s298, 3
        %s301 = smul.addr %s300, 13
        %s302 = smul.addr %s301, 4
        %s303 = scalar_lea.vmem %s0, %s302
        %p304 = pneg %p44
        %p305 = pneg %p41
        %p306 = pneg %p65
        %p307 = pneg %p62
        %p308 = pneg %p86
        %p309 = pneg %p83
        %p310 = pneg %p107
        %p311 = pneg %p104
        %p312 = pneg %p128
        %p313 = pneg %p125
        %p314 = pneg %p149
        %p315 = pneg %p146
        %p316 = pneg %p170
        %p317 = pneg %p167
        %p318 = pneg %p191
        %p319 = pneg %p188
        %p320 = pneg %p212
        %p321 = pneg %p209
        %p322 = pneg %p238
        %p323 = pneg %p235
        %s324 = sand.u32 %s225, 1
        %s325 = scalar_lea.sflag [#allocation4], %s324
        %s326 = sand.u32 %s225, 1
        %s327 = smul.addr %s326, 2
        %s328 = scalar_lea.vmem [#allocation3], %s327
        %s329 = smul.u32 2, %s23
        %p330 = scmp.lt.s32.totalorder %s329, 3
        %s331 = scalar_select %p330, %s329, 3
        %s332 = smul.addr %s331, 13
        %s333 = smul.addr %s332, 4
        %s334 = scalar_lea.vmem %s0, %s333
        %s335 = smul.u32 2, %s23
        %v337 = vld [vmem:[%s334] sm:$0xf]
        %v338 = vld [vmem:[%s334 + $0x4] sm:$0xf]
        %v339 = vld [vmem:[%s334 + $0x8] sm:$0xf]
        %v340 = vld [vmem:[%s334 + $0xc] sm:$0xf]
        %v341 = vld [vmem:[%s334 + $0x10] sm:$0xf]
        %v342 = vld [vmem:[%s334 + $0x14] sm:$0xf]
        %v343 = vld [vmem:[%s334 + $0x18] sm:$0xf]
        %v344 = vld [vmem:[%s334 + $0x1c] sm:$0xf]
        %v345 = vld [vmem:[%s334 + $0x20] sm:$0xf]
        %v346 = vld [vmem:[%s334 + $0x24] sm:$0xf]
        %v347 = vld [vmem:[%s334 + $0x28] sm:$0xf]
        %v348 = vld [vmem:[%s334 + $0x2c] sm:$0xf]
        %v349 = vld [vmem:[%s334 + $0x30] sm:$0xf]
        %v350 = vld [vmem:[%s3] sm:$0xff]
        %v351 = vld [vmem:[%s3 + $0x8] sm:$0xff]
        %v352 = vld [vmem:[%s3 + $0x10] sm:$0xff]
        %v353 = vld [vmem:[%s3 + $0x18] sm:$0xff]
        %v354 = vld [vmem:[%s3 + $0x20] sm:$0xff]
        %v355 = vld [vmem:[%s3 + $0x28] sm:$0xff]
        %v356 = vld [vmem:[%s3 + $0x30] sm:$0xff]
        %v357 = vld [vmem:[%s3 + $0x38] sm:$0xff]
        %v358 = vld [vmem:[%s3 + $0x40] sm:$0xff]
        %v359 = vld [vmem:[%s3 + $0x48] sm:$0xff]
        %v360 = vld [vmem:[%s3 + $0x50] sm:$0xff]
        %v361 = vld [vmem:[%s3 + $0x58] sm:$0xff]
        %v362 = vld [vmem:[%s3 + $0x60] sm:$0xff]
        %v363 = vld [vmem:[%s3 + $0x68] sm:$0xff]
        %v364 = vld [vmem:[%s3 + $0x70] sm:$0xff]
        %v365 = vld [vmem:[%s3 + $0x78] sm:$0xff]
        %v366 = vld [vmem:[%s1] sm:$0xf]
        %v367 = vld [vmem:[%s1 + $0x4] sm:$0xf]
        %v368 = vld [vmem:[%s1 + $0x8] sm:$0xf]
        %v369 = vld [vmem:[%s1 + $0xc] sm:$0xf]
        %v370 = vld [vmem:[%s1 + $0x10] sm:$0xf]
        %v371 = vld [vmem:[%s1 + $0x14] sm:$0xf]
        %v372 = vld [vmem:[%s1 + $0x18] sm:$0xf]
        %v373 = vld [vmem:[%s1 + $0x1c] sm:$0xf]
        %v374 = vld [vmem:[%s1 + $0x20] sm:$0xf]
        %v375 = vld [vmem:[%s1 + $0x24] sm:$0xf]
        %v376 = vld [vmem:[%s1 + $0x28] sm:$0xf]
        %v377 = vld [vmem:[%s1 + $0x2c] sm:$0xf]
        %v378 = vld [vmem:[%s1 + $0x30] sm:$0xf]
        %v379 = vld [vmem:[%s1 + $0x34] sm:$0xf]
        %v380 = vld [vmem:[%s1 + $0x38] sm:$0xf]
        %v381 = vld [vmem:[%s1 + $0x3c] sm:$0xf]
        %v398 = vunpack.c.l.b16 %v366
        %v399 = vunpack.c.l.b16 %v367
        %v400 = vunpack.c.l.b16 %v368
        %v401 = vunpack.c.l.b16 %v369
        %v402 = vunpack.c.l.b16 %v370
        %v403 = vunpack.c.l.b16 %v371
        %v404 = vunpack.c.l.b16 %v372
        %v405 = vunpack.c.l.b16 %v373
        %v406 = vunpack.c.l.b16 %v374
        %v407 = vunpack.c.l.b16 %v375
        %v408 = vunpack.c.l.b16 %v376
        %v409 = vunpack.c.l.b16 %v377
        %v410 = vunpack.c.l.b16 %v378
        %v411 = vunpack.c.l.b16 %v379
        %v412 = vunpack.c.l.b16 %v380
        %v413 = vunpack.c.l.b16 %v381
        %v414 = vpack.c.b16 %v399, %v398
        %v415 = vpack.c.b16 %v401, %v400
        %v416 = vpack.c.b16 %v403, %v402
        %v417 = vpack.c.b16 %v405, %v404
        %v418 = vpack.c.b16 %v407, %v406
        %v419 = vpack.c.b16 %v409, %v408
        %v420 = vpack.c.b16 %v411, %v410
        %v421 = vpack.c.b16 %v413, %v412
        %v435 = vunpack.c.l.b16 %v337
        %v436 = vunpack.c.l.b16 %v338
        %v437 = vunpack.c.l.b16 %v339
        %v438 = vunpack.c.l.b16 %v340
        %v439 = vunpack.c.l.b16 %v341
        %v440 = vunpack.c.l.b16 %v342
        %v441 = vunpack.c.l.b16 %v343
        %v442 = vunpack.c.l.b16 %v344
        %v443 = vunpack.c.l.b16 %v345
        %v444 = vunpack.c.l.b16 %v346
        %v445 = vunpack.c.l.b16 %v347
        %v446 = vunpack.c.l.b16 %v348
        %v447 = vunpack.c.l.b16 %v349
        %v448 = vpack.c.b16 %v436, %v435
        %v449 = vpack.c.b16 %v438, %v437
        %v450 = vpack.c.b16 %v440, %v439
        %v451 = vpack.c.b16 %v442, %v441
        %v452 = vpack.c.b16 %v444, %v443
        %v453 = vpack.c.b16 %v446, %v445
        %v454 = vpack.c.b16 %v447, %v447
        %vm461 = vcmask 850944
        %v463 = vsel %vm461, %v414, 0
        %v466 = vsel %vm461, %v415, 0
        %v469 = vsel %vm461, %v416, 0
        %v472 = vsel %vm461, %v417, 0
        %v475 = vsel %vm461, %v418, 0
        %v478 = vsel %vm461, %v419, 0
        %v481 = vsel %vm461, %v420, 0
        %v484 = vsel %vm461, %v421, 0
        %vm486 = vcmask 1043456
        %v488 = vsel %vm486, %v454, 0
        %490 = vmatprep.subr.bf16.mxu0 0
        %491 = vmatpush1.bf16.msra.mxu0 %v448
        %492 = vmatprep.subr.bf16.mxu0 0
        %493 = vmatpush1.bf16.msra.mxu0 %v449
        %494 = vmatprep.subr.bf16.mxu0 0
        %495 = vmatpush1.bf16.msra.mxu0 %v450
        %496 = vmatprep.subr.bf16.mxu0 0
        %497 = vmatpush1.bf16.msra.mxu0 %v451
        %498 = vmatprep.subr.bf16.mxu0 0
        %499 = vmatpush1.bf16.msra.mxu0 %v452
        %500 = vmatprep.subr.bf16.mxu0 0
        %501 = vmatpush1.bf16.msra.mxu0 %v453
        %502 = vmatprep.subr.bf16.mxu0 0
        %503 = vmatpush1.bf16.msra.mxu0 %v488
        %504 = vmatprep.subr.bf16.mxu0 0
        %505 = vmatpush1.bf16.msra.mxu0 0
        %506 = vmatprep.subr.bf16.mxu0 0
        %507 = vmatpush1.bf16.msra.mxu0 0
        %508 = vmatprep.subr.bf16.mxu0 0
        %509 = vmatpush1.bf16.msra.mxu0 0
        %510 = vmatprep.subr.bf16.mxu0 0
        %511 = vmatpush1.bf16.msra.mxu0 0
        %512 = vmatprep.subr.bf16.mxu0 0
        %513 = vmatpush1.bf16.msra.mxu0 0
        %514 = vmatprep.subr.bf16.mxu0 0
        %515 = vmatpush1.bf16.msra.mxu0 0
        %516 = vmatprep.subr.bf16.mxu0 0
        %517 = vmatpush1.bf16.msra.mxu0 0
        %518 = vmatprep.subr.bf16.mxu0 0
        %519 = vmatpush1.bf16.msra.mxu0 0
        %520 = vmatprep.subr.bf16.mxu0 0
        %521 = vmatpush1.bf16.msra.mxu0 0
        %522 = vmatprep.mubr.bf16.mxu0 0
        %523 = vmatmul.mubr.bf16.gmra.mrb[0].mxu0 %v463
        %v524 = vpop.f32.mrb[0].mxu0
        %v525 = vadd.f32 0.0, %v524
        %v526 = vpop.f32.mrb[0].mxu0
        %v527 = vpop.f32.mrb[0].mxu0
        %v528 = vadd.f32 0.0, %v527
        %v529 = vpop.f32.mrb[0].mxu0
        %530 = vmatprep.mubr.bf16.mxu0 0
        %531 = vmatmul.mubr.bf16.gmra.mrb[0].mxu0 %v466
        %v532 = vpop.f32.mrb[0].mxu0
        %v533 = vadd.f32 0.0, %v532
        %v534 = vpop.f32.mrb[0].mxu0
        %v535 = vpop.f32.mrb[0].mxu0
        %v536 = vadd.f32 0.0, %v535
        %v537 = vpop.f32.mrb[0].mxu0
        %538 = vmatprep.mubr.bf16.mxu0 0
        %539 = vmatmul.mubr.bf16.gmra.mrb[0].mxu0 %v469
        %v540 = vpop.f32.mrb[0].mxu0
        %v541 = vadd.f32 0.0, %v540
        %v542 = vpop.f32.mrb[0].mxu0
        %v543 = vpop.f32.mrb[0].mxu0
        %v544 = vadd.f32 0.0, %v543
        %v545 = vpop.f32.mrb[0].mxu0
        %546 = vmatprep.mubr.bf16.mxu0 0
        %547 = vmatmul.mubr.bf16.gmra.mrb[0].mxu0 %v472
        %v548 = vpop.f32.mrb[0].mxu0
        %v549 = vadd.f32 0.0, %v548
        %v550 = vpop.f32.mrb[0].mxu0
        %v551 = vpop.f32.mrb[0].mxu0
        %v552 = vadd.f32 0.0, %v551
        %v553 = vpop.f32.mrb[0].mxu0
        %554 = vmatprep.mubr.bf16.mxu0 0
        %555 = vmatmul.mubr.bf16.gmra.mrb[0].mxu0 %v475
        %v556 = vpop.f32.mrb[0].mxu0
        %v557 = vadd.f32 0.0, %v556
        %v558 = vpop.f32.mrb[0].mxu0
        %v559 = vpop.f32.mrb[0].mxu0
        %v560 = vadd.f32 0.0, %v559
        %v561 = vpop.f32.mrb[0].mxu0
        %562 = vmatprep.mubr.bf16.mxu0 0
        %563 = vmatmul.mubr.bf16.gmra.mrb[0].mxu0 %v478
        %v564 = vpop.f32.mrb[0].mxu0
        %v565 = vadd.f32 0.0, %v564
        %v566 = vpop.f32.mrb[0].mxu0
        %v567 = vpop.f32.mrb[0].mxu0
        %v568 = vadd.f32 0.0, %v567
        %v569 = vpop.f32.mrb[0].mxu0
        %570 = vmatprep.mubr.bf16.mxu0 0
        %571 = vmatmul.mubr.bf16.gmra.mrb[0].mxu0 %v481
        %v572 = vpop.f32.mrb[0].mxu0
        %v573 = vadd.f32 0.0, %v572
        %v574 = vpop.f32.mrb[0].mxu0
        %v575 = vpop.f32.mrb[0].mxu0
        %v576 = vadd.f32 0.0, %v575
        %v577 = vpop.f32.mrb[0].mxu0
        %578 = vmatprep.mubr.bf16.mxu0 0
        %579 = vmatmul.mubr.bf16.gmra.mrb[0].mxu0 %v484
        %v580 = vpop.f32.mrb[0].mxu0
        %v581 = vadd.f32 0.0, %v580
        %v582 = vpop.f32.mrb[0].mxu0
        %v583 = vpop.f32.mrb[0].mxu0
        %v584 = vadd.f32 0.0, %v583
        %v585 = vpop.f32.mrb[0].mxu0
        %586 = vdwg.mxu0
        %v587 = vpack.c.bf16 %v528, %v525
        %v588 = vpack.c.bf16 %v536, %v533
        %v589 = vpack.c.bf16 %v544, %v541
        %v590 = vpack.c.bf16 %v552, %v549
        %v591 = vpack.c.bf16 %v560, %v557
        %v592 = vpack.c.bf16 %v568, %v565
        %v593 = vpack.c.bf16 %v576, %v573
        %v594 = vpack.c.bf16 %v584, %v581
        %v595 = vld [vmem:[%s2] sm:$0x3]
        %vm596 = vcmask 23552
        %v598 = vsel %vm596, %v587, 0
        %v601 = vsel %vm596, %v588, 0
        %v604 = vsel %vm596, %v589, 0
        %v607 = vsel %vm596, %v590, 0
        %v610 = vsel %vm596, %v591, 0
        %v613 = vsel %vm596, %v592, 0
        %v616 = vsel %vm596, %v593, 0
        %v619 = vsel %vm596, %v594, 0
        %vm621 = vcmask 1040384
        %vm622 = vcmask 1041408
        %v623 = vsel %vm621, 4294967295, 65535
        %v624 = vsel %vm622, %v623, 0
        %v626 = vand.u32 %v595, %v624
        %628 = vmatprep.subr.bf16.mxu0 0
        %629 = vmatpush1.bf16.msra.mxu0 %v626
        %630 = vmatprep.subr.bf16.mxu0 0
        %631 = vmatpush1.bf16.msra.mxu0 0
        %632 = vmatprep.subr.bf16.mxu0 0
        %633 = vmatpush1.bf16.msra.mxu0 0
        %634 = vmatprep.subr.bf16.mxu0 0
        %635 = vmatpush1.bf16.msra.mxu0 0
        %636 = vmatprep.subr.bf16.mxu0 0
        %637 = vmatpush1.bf16.msra.mxu0 0
        %638 = vmatprep.subr.bf16.mxu0 0
        %639 = vmatpush1.bf16.msra.mxu0 0
        %640 = vmatprep.subr.bf16.mxu0 0
        %641 = vmatpush1.bf16.msra.mxu0 0
        %642 = vmatprep.subr.bf16.mxu0 0
        %643 = vmatpush1.bf16.msra.mxu0 0
        %644 = vmatprep.subr.bf16.mxu0 0
        %645 = vmatpush1.bf16.msra.mxu0 0
        %646 = vmatprep.subr.bf16.mxu0 0
        %647 = vmatpush1.bf16.msra.mxu0 0
        %648 = vmatprep.subr.bf16.mxu0 0
        %649 = vmatpush1.bf16.msra.mxu0 0
        %650 = vmatprep.subr.bf16.mxu0 0
        %651 = vmatpush1.bf16.msra.mxu0 0
        %652 = vmatprep.subr.bf16.mxu0 0
        %653 = vmatpush1.bf16.msra.mxu0 0
        %654 = vmatprep.subr.bf16.mxu0 0
        %655 = vmatpush1.bf16.msra.mxu0 0
        %656 = vmatprep.subr.bf16.mxu0 0
        %657 = vmatpush1.bf16.msra.mxu0 0
        %658 = vmatprep.subr.bf16.mxu0 0
        %659 = vmatpush1.bf16.msra.mxu0 0
        %660 = vmatprep.mubr.bf16.mxu0 0
        %661 = vmatmul.mubr.bf16.gmra.mrb[0].mxu0 %v598
        %v662 = vpop.f32.mrb[0].mxu0
        %v663 = vadd.f32 0.0, %v662
        %v664 = vpop.f32.mrb[0].mxu0
        %v665 = vpop.f32.mrb[0].mxu0
        %v666 = vadd.f32 0.0, %v665
        %v667 = vpop.f32.mrb[0].mxu0
        %668 = vmatprep.mubr.bf16.mxu0 0
        %669 = vmatmul.mubr.bf16.gmra.mrb[0].mxu0 %v601
        %v670 = vpop.f32.mrb[0].mxu0
        %v671 = vadd.f32 0.0, %v670
        %v672 = vpop.f32.mrb[0].mxu0
        %v673 = vpop.f32.mrb[0].mxu0
        %v674 = vadd.f32 0.0, %v673
        %v675 = vpop.f32.mrb[0].mxu0
        %676 = vmatprep.mubr.bf16.mxu0 0
        %677 = vmatmul.mubr.bf16.gmra.mrb[0].mxu0 %v604
        %v678 = vpop.f32.mrb[0].mxu0
        %v679 = vadd.f32 0.0, %v678
        %v680 = vpop.f32.mrb[0].mxu0
        %v681 = vpop.f32.mrb[0].mxu0
        %v682 = vadd.f32 0.0, %v681
        %v683 = vpop.f32.mrb[0].mxu0
        %684 = vmatprep.mubr.bf16.mxu0 0
        %685 = vmatmul.mubr.bf16.gmra.mrb[0].mxu0 %v607
        %v686 = vpop.f32.mrb[0].mxu0
        %v687 = vadd.f32 0.0, %v686
        %v688 = vpop.f32.mrb[0].mxu0
        %v689 = vpop.f32.mrb[0].mxu0
        %v690 = vadd.f32 0.0, %v689
        %v691 = vpop.f32.mrb[0].mxu0
        %692 = vmatprep.mubr.bf16.mxu0 0
        %693 = vmatmul.mubr.bf16.gmra.mrb[0].mxu0 %v610
        %v694 = vpop.f32.mrb[0].mxu0
        %v695 = vadd.f32 0.0, %v694
        %v696 = vpop.f32.mrb[0].mxu0
        %v697 = vpop.f32.mrb[0].mxu0
        %v698 = vadd.f32 0.0, %v697
        %v699 = vpop.f32.mrb[0].mxu0
        %700 = vmatprep.mubr.bf16.mxu0 0
        %701 = vmatmul.mubr.bf16.gmra.mrb[0].mxu0 %v613
        %v702 = vpop.f32.mrb[0].mxu0
        %v703 = vadd.f32 0.0, %v702
        %v704 = vpop.f32.mrb[0].mxu0
        %v705 = vpop.f32.mrb[0].mxu0
        %v706 = vadd.f32 0.0, %v705
        %v707 = vpop.f32.mrb[0].mxu0
        %708 = vmatprep.mubr.bf16.mxu0 0
        %709 = vmatmul.mubr.bf16.gmra.mrb[0].mxu0 %v616
        %v710 = vpop.f32.mrb[0].mxu0
        %v711 = vadd.f32 0.0, %v710
        %v712 = vpop.f32.mrb[0].mxu0
        %v713 = vpop.f32.mrb[0].mxu0
        %v714 = vadd.f32 0.0, %v713
        %v715 = vpop.f32.mrb[0].mxu0
        %716 = vmatprep.mubr.bf16.mxu0 0
        %717 = vmatmul.mubr.bf16.gmra.mrb[0].mxu0 %v619
        %v718 = vpop.f32.mrb[0].mxu0
        %v719 = vadd.f32 0.0, %v718
        %v720 = vpop.f32.mrb[0].mxu0
        %v721 = vpop.f32.mrb[0].mxu0
        %v722 = vadd.f32 0.0, %v721
        %v723 = vpop.f32.mrb[0].mxu0
        %724 = vdwg.mxu0
        %v725 = vadd.f32 %v350, %v663
        %v726 = vadd.f32 %v351, %v666
        %v727 = vadd.f32 %v352, %v671
        %v728 = vadd.f32 %v353, %v674
        %v729 = vadd.f32 %v354, %v679
        %v730 = vadd.f32 %v355, %v682
        %v731 = vadd.f32 %v356, %v687
        %v732 = vadd.f32 %v357, %v690
        %v733 = vadd.f32 %v358, %v695
        %v734 = vadd.f32 %v359, %v698
        %v735 = vadd.f32 %v360, %v703
        %v736 = vadd.f32 %v361, %v706
        %v737 = vadd.f32 %v362, %v711
        %v738 = vadd.f32 %v363, %v714
        %v739 = vadd.f32 %v364, %v719
        %v740 = vadd.f32 %v365, %v722
        %s741 = scalar_lea.vmem %s1, 64
        %v742 = vld [vmem:[%s741] sm:$0xf]
        %v743 = vld [vmem:[%s741 + $0x4] sm:$0xf]
        %v744 = vld [vmem:[%s741 + $0x8] sm:$0xf]
        %v745 = vld [vmem:[%s741 + $0xc] sm:$0xf]
        %v746 = vld [vmem:[%s741 + $0x10] sm:$0xf]
        %v747 = vld [vmem:[%s741 + $0x14] sm:$0xf]
        %v748 = vld [vmem:[%s741 + $0x18] sm:$0xf]
        %v749 = vld [vmem:[%s741 + $0x1c] sm:$0xf]
        %v750 = vld [vmem:[%s741 + $0x20] sm:$0xf]
        %v751 = vld [vmem:[%s741 + $0x24] sm:$0xf]
        %v752 = vld [vmem:[%s741 + $0x28] sm:$0xf]
        %v753 = vld [vmem:[%s741 + $0x2c] sm:$0xf]
        %v754 = vld [vmem:[%s741 + $0x30] sm:$0xf]
        %v755 = vld [vmem:[%s741 + $0x34] sm:$0xf]
        %v756 = vld [vmem:[%s741 + $0x38] sm:$0xf]
        %v757 = vld [vmem:[%s741 + $0x3c] sm:$0xf]
        %v774 = vunpack.c.l.b16 %v742
        %v775 = vunpack.c.l.b16 %v743
        %v776 = vunpack.c.l.b16 %v744
        %v777 = vunpack.c.l.b16 %v745
        %v778 = vunpack.c.l.b16 %v746
        %v779 = vunpack.c.l.b16 %v747
        %v780 = vunpack.c.l.b16 %v748
        %v781 = vunpack.c.l.b16 %v749
        %v782 = vunpack.c.l.b16 %v750
        %v783 = vunpack.c.l.b16 %v751
        %v784 = vunpack.c.l.b16 %v752
        %v785 = vunpack.c.l.b16 %v753
        %v786 = vunpack.c.l.b16 %v754
        %v787 = vunpack.c.l.b16 %v755
        %v788 = vunpack.c.l.b16 %v756
        %v789 = vunpack.c.l.b16 %v757
        %v790 = vpack.c.b16 %v775, %v774
        %v791 = vpack.c.b16 %v777, %v776
        %v792 = vpack.c.b16 %v779, %v778
        %v793 = vpack.c.b16 %v781, %v780
        %v794 = vpack.c.b16 %v783, %v782
        %v795 = vpack.c.b16 %v785, %v784
        %v796 = vpack.c.b16 %v787, %v786
        %v797 = vpack.c.b16 %v789, %v788
        %v799 = vsel %vm461, %v790, 0
        %v802 = vsel %vm461, %v791, 0
        %v805 = vsel %vm461, %v792, 0
        %v808 = vsel %vm461, %v793, 0
        %v811 = vsel %vm461, %v794, 0
        %v814 = vsel %vm461, %v795, 0
        %v817 = vsel %vm461, %v796, 0
        %v820 = vsel %vm461, %v797, 0
        %822 = vmatprep.subr.bf16.mxu0 0
        %823 = vmatpush1.bf16.msra.mxu0 %v448
        %824 = vmatprep.subr.bf16.mxu0 0
        %825 = vmatpush1.bf16.msra.mxu0 %v449
        %826 = vmatprep.subr.bf16.mxu0 0
        %827 = vmatpush1.bf16.msra.mxu0 %v450
        %828 = vmatprep.subr.bf16.mxu0 0
        %829 = vmatpush1.bf16.msra.mxu0 %v451
        %830 = vmatprep.subr.bf16.mxu0 0
        %831 = vmatpush1.bf16.msra.mxu0 %v452
        %832 = vmatprep.subr.bf16.mxu0 0
        %833 = vmatpush1.bf16.msra.mxu0 %v453
        %834 = vmatprep.subr.bf16.mxu0 0
        %835 = vmatpush1.bf16.msra.mxu0 %v488
        %836 = vmatprep.subr.bf16.mxu0 0
        %837 = vmatpush1.bf16.msra.mxu0 0
        %838 = vmatprep.subr.bf16.mxu0 0
        %839 = vmatpush1.bf16.msra.mxu0 0
        %840 = vmatprep.subr.bf16.mxu0 0
        %841 = vmatpush1.bf16.msra.mxu0 0
        %842 = vmatprep.subr.bf16.mxu0 0
        %843 = vmatpush1.bf16.msra.mxu0 0
        %844 = vmatprep.subr.bf16.mxu0 0
        %845 = vmatpush1.bf16.msra.mxu0 0
        %846 = vmatprep.subr.bf16.mxu0 0
        %847 = vmatpush1.bf16.msra.mxu0 0
        %848 = vmatprep.subr.bf16.mxu0 0
        %849 = vmatpush1.bf16.msra.mxu0 0
        %850 = vmatprep.subr.bf16.mxu0 0
        %851 = vmatpush1.bf16.msra.mxu0 0
        %852 = vmatprep.subr.bf16.mxu0 0
        %853 = vmatpush1.bf16.msra.mxu0 0
        %854 = vmatprep.mubr.bf16.mxu0 0
        %855 = vmatmul.mubr.bf16.gmra.mrb[0].mxu0 %v799
        %v856 = vpop.f32.mrb[0].mxu0
        %v857 = vadd.f32 0.0, %v856
        %v858 = vpop.f32.mrb[0].mxu0
        %v859 = vpop.f32.mrb[0].mxu0
        %v860 = vadd.f32 0.0, %v859
        %v861 = vpop.f32.mrb[0].mxu0
        %862 = vmatprep.mubr.bf16.mxu0 0
        %863 = vmatmul.mubr.bf16.gmra.mrb[0].mxu0 %v802
        %v864 = vpop.f32.mrb[0].mxu0
        %v865 = vadd.f32 0.0, %v864
        %v866 = vpop.f32.mrb[0].mxu0
        %v867 = vpop.f32.mrb[0].mxu0
        %v868 = vadd.f32 0.0, %v867
        %v869 = vpop.f32.mrb[0].mxu0
        %870 = vmatprep.mubr.bf16.mxu0 0
        %871 = vmatmul.mubr.bf16.gmra.mrb[0].mxu0 %v805
        %v872 = vpop.f32.mrb[0].mxu0
        %v873 = vadd.f32 0.0, %v872
        %v874 = vpop.f32.mrb[0].mxu0
        %v875 = vpop.f32.mrb[0].mxu0
        %v876 = vadd.f32 0.0, %v875
        %v877 = vpop.f32.mrb[0].mxu0
        %878 = vmatprep.mubr.bf16.mxu0 0
        %879 = vmatmul.mubr.bf16.gmra.mrb[0].mxu0 %v808
        %v880 = vpop.f32.mrb[0].mxu0
        %v881 = vadd.f32 0.0, %v880
        %v882 = vpop.f32.mrb[0].mxu0
        %v883 = vpop.f32.mrb[0].mxu0
        %v884 = vadd.f32 0.0, %v883
        %v885 = vpop.f32.mrb[0].mxu0
        %886 = vmatprep.mubr.bf16.mxu0 0
        %887 = vmatmul.mubr.bf16.gmra.mrb[0].mxu0 %v811
        %v888 = vpop.f32.mrb[0].mxu0
        %v889 = vadd.f32 0.0, %v888
        %v890 = vpop.f32.mrb[0].mxu0
        %v891 = vpop.f32.mrb[0].mxu0
        %v892 = vadd.f32 0.0, %v891
        %v893 = vpop.f32.mrb[0].mxu0
        %894 = vmatprep.mubr.bf16.mxu0 0
        %895 = vmatmul.mubr.bf16.gmra.mrb[0].mxu0 %v814
        %v896 = vpop.f32.mrb[0].mxu0
        %v897 = vadd.f32 0.0, %v896
        %v898 = vpop.f32.mrb[0].mxu0
        %v899 = vpop.f32.mrb[0].mxu0
        %v900 = vadd.f32 0.0, %v899
        %v901 = vpop.f32.mrb[0].mxu0
        %902 = vmatprep.mubr.bf16.mxu0 0
        %903 = vmatmul.mubr.bf16.gmra.mrb[0].mxu0 %v817
        %v904 = vpop.f32.mrb[0].mxu0
        %v905 = vadd.f32 0.0, %v904
        %v906 = vpop.f32.mrb[0].mxu0
        %v907 = vpop.f32.mrb[0].mxu0
        %v908 = vadd.f32 0.0, %v907
        %v909 = vpop.f32.mrb[0].mxu0
        %910 = vmatprep.mubr.bf16.mxu0 0
        %911 = vmatmul.mubr.bf16.gmra.mrb[0].mxu0 %v820
        %v912 = vpop.f32.mrb[0].mxu0
        %v913 = vadd.f32 0.0, %v912
        %v914 = vpop.f32.mrb[0].mxu0
        %v915 = vpop.f32.mrb[0].mxu0
        %v916 = vadd.f32 0.0, %v915
        %v917 = vpop.f32.mrb[0].mxu0
        %918 = vdwg.mxu0
        %v919 = vpack.c.bf16 %v860, %v857
        %v920 = vpack.c.bf16 %v868, %v865
        %v921 = vpack.c.bf16 %v876, %v873
        %v922 = vpack.c.bf16 %v884, %v881
        %v923 = vpack.c.bf16 %v892, %v889
        %v924 = vpack.c.bf16 %v900, %v897
        %v925 = vpack.c.bf16 %v908, %v905
        %v926 = vpack.c.bf16 %v916, %v913
        %s927 = scalar_lea.vmem %s2, 2
        %v928 = vld [vmem:[%s927] sm:$0x3]
        %v930 = vsel %vm596, %v919, 0
        %v933 = vsel %vm596, %v920, 0
        %v936 = vsel %vm596, %v921, 0
        %v939 = vsel %vm596, %v922, 0
        %v942 = vsel %vm596, %v923, 0
        %v945 = vsel %vm596, %v924, 0
        %v948 = vsel %vm596, %v925, 0
        %v951 = vsel %vm596, %v926, 0
        %v954 = vand.u32 %v928, %v624
        %956 = vmatprep.subr.bf16.mxu0 0
        %957 = vmatpush1.bf16.msra.mxu0 %v954
        %958 = vmatprep.subr.bf16.mxu0 0
        %959 = vmatpush1.bf16.msra.mxu0 0
        %960 = vmatprep.subr.bf16.mxu0 0
        %961 = vmatpush1.bf16.msra.mxu0 0
        %962 = vmatprep.subr.bf16.mxu0 0
        %963 = vmatpush1.bf16.msra.mxu0 0
        %964 = vmatprep.subr.bf16.mxu0 0
        %965 = vmatpush1.bf16.msra.mxu0 0
        %966 = vmatprep.subr.bf16.mxu0 0
        %967 = vmatpush1.bf16.msra.mxu0 0
        %968 = vmatprep.subr.bf16.mxu0 0
        %969 = vmatpush1.bf16.msra.mxu0 0
        %970 = vmatprep.subr.bf16.mxu0 0
        %971 = vmatpush1.bf16.msra.mxu0 0
        %972 = vmatprep.subr.bf16.mxu0 0
        %973 = vmatpush1.bf16.msra.mxu0 0
        %974 = vmatprep.subr.bf16.mxu0 0
        %975 = vmatpush1.bf16.msra.mxu0 0
        %976 = vmatprep.subr.bf16.mxu0 0
        %977 = vmatpush1.bf16.msra.mxu0 0
        %978 = vmatprep.subr.bf16.mxu0 0
        %979 = vmatpush1.bf16.msra.mxu0 0
        %980 = vmatprep.subr.bf16.mxu0 0
        %981 = vmatpush1.bf16.msra.mxu0 0
        %982 = vmatprep.subr.bf16.mxu0 0
        %983 = vmatpush1.bf16.msra.mxu0 0
        %984 = vmatprep.subr.bf16.mxu0 0
        %985 = vmatpush1.bf16.msra.mxu0 0
        %986 = vmatprep.subr.bf16.mxu0 0
        %987 = vmatpush1.bf16.msra.mxu0 0
        %988 = vmatprep.mubr.bf16.mxu0 0
        %989 = vmatmul.mubr.bf16.gmra.mrb[0].mxu0 %v930
        %v990 = vpop.f32.mrb[0].mxu0
        %v991 = vadd.f32 0.0, %v990
        %v992 = vpop.f32.mrb[0].mxu0
        %v993 = vpop.f32.mrb[0].mxu0
        %v994 = vadd.f32 0.0, %v993
        %v995 = vpop.f32.mrb[0].mxu0
        %996 = vmatprep.mubr.bf16.mxu0 0
        %997 = vmatmul.mubr.bf16.gmra.mrb[0].mxu0 %v933
        %v998 = vpop.f32.mrb[0].mxu0
        %v999 = vadd.f32 0.0, %v998
        %v1000 = vpop.f32.mrb[0].mxu0
        %v1001 = vpop.f32.mrb[0].mxu0
        %v1002 = vadd.f32 0.0, %v1001
        %v1003 = vpop.f32.mrb[0].mxu0
        %1004 = vmatprep.mubr.bf16.mxu0 0
        %1005 = vmatmul.mubr.bf16.gmra.mrb[0].mxu0 %v936
        %v1006 = vpop.f32.mrb[0].mxu0
        %v1007 = vadd.f32 0.0, %v1006
        %v1008 = vpop.f32.mrb[0].mxu0
        %v1009 = vpop.f32.mrb[0].mxu0
        %v1010 = vadd.f32 0.0, %v1009
        %v1011 = vpop.f32.mrb[0].mxu0
        %1012 = vmatprep.mubr.bf16.mxu0 0
        %1013 = vmatmul.mubr.bf16.gmra.mrb[0].mxu0 %v939
        %v1014 = vpop.f32.mrb[0].mxu0
        %v1015 = vadd.f32 0.0, %v1014
        %v1016 = vpop.f32.mrb[0].mxu0
        %v1017 = vpop.f32.mrb[0].mxu0
        %v1018 = vadd.f32 0.0, %v1017
        %v1019 = vpop.f32.mrb[0].mxu0
        %1020 = vmatprep.mubr.bf16.mxu0 0
        %1021 = vmatmul.mubr.bf16.gmra.mrb[0].mxu0 %v942
        %v1022 = vpop.f32.mrb[0].mxu0
        %v1023 = vadd.f32 0.0, %v1022
        %v1024 = vpop.f32.mrb[0].mxu0
        %v1025 = vpop.f32.mrb[0].mxu0
        %v1026 = vadd.f32 0.0, %v1025
        %v1027 = vpop.f32.mrb[0].mxu0
        %1028 = vmatprep.mubr.bf16.mxu0 0
        %1029 = vmatmul.mubr.bf16.gmra.mrb[0].mxu0 %v945
        %v1030 = vpop.f32.mrb[0].mxu0
        %v1031 = vadd.f32 0.0, %v1030
        %v1032 = vpop.f32.mrb[0].mxu0
        %v1033 = vpop.f32.mrb[0].mxu0
        %v1034 = vadd.f32 0.0, %v1033
        %v1035 = vpop.f32.mrb[0].mxu0
        %1036 = vmatprep.mubr.bf16.mxu0 0
        %1037 = vmatmul.mubr.bf16.gmra.mrb[0].mxu0 %v948
        %v1038 = vpop.f32.mrb[0].mxu0
        %v1039 = vadd.f32 0.0, %v1038
        %v1040 = vpop.f32.mrb[0].mxu0
        %v1041 = vpop.f32.mrb[0].mxu0
        %v1042 = vadd.f32 0.0, %v1041
        %v1043 = vpop.f32.mrb[0].mxu0
        %1044 = vmatprep.mubr.bf16.mxu0 0
        %1045 = vmatmul.mubr.bf16.gmra.mrb[0].mxu0 %v951
        %v1046 = vpop.f32.mrb[0].mxu0
        %v1047 = vadd.f32 0.0, %v1046
        %v1048 = vpop.f32.mrb[0].mxu0
        %v1049 = vpop.f32.mrb[0].mxu0
        %v1050 = vadd.f32 0.0, %v1049
        %v1051 = vpop.f32.mrb[0].mxu0
        %1052 = vdwg.mxu0
        %v1053 = vadd.f32 %v725, %v991
        %v1054 = vadd.f32 %v726, %v994
        %v1055 = vadd.f32 %v727, %v999
        %v1056 = vadd.f32 %v728, %v1002
        %v1057 = vadd.f32 %v729, %v1007
        %v1058 = vadd.f32 %v730, %v1010
        %v1059 = vadd.f32 %v731, %v1015
        %v1060 = vadd.f32 %v732, %v1018
        %v1061 = vadd.f32 %v733, %v1023
        %v1062 = vadd.f32 %v734, %v1026
        %v1063 = vadd.f32 %v735, %v1031
        %v1064 = vadd.f32 %v736, %v1034
        %v1065 = vadd.f32 %v737, %v1039
        %v1066 = vadd.f32 %v738, %v1042
        %v1067 = vadd.f32 %v739, %v1047
        %v1068 = vadd.f32 %v740, %v1050
        %s1069 = scalar_lea.vmem %s1, 128
        %v1070 = vld [vmem:[%s1069] sm:$0xf]
        %v1071 = vld [vmem:[%s1069 + $0x4] sm:$0xf]
        %v1072 = vld [vmem:[%s1069 + $0x8] sm:$0xf]
        %v1073 = vld [vmem:[%s1069 + $0xc] sm:$0xf]
        %v1074 = vld [vmem:[%s1069 + $0x10] sm:$0xf]
        %v1075 = vld [vmem:[%s1069 + $0x14] sm:$0xf]
        %v1076 = vld [vmem:[%s1069 + $0x18] sm:$0xf]
        %v1077 = vld [vmem:[%s1069 + $0x1c] sm:$0xf]
        %v1078 = vld [vmem:[%s1069 + $0x20] sm:$0xf]
        %v1079 = vld [vmem:[%s1069 + $0x24] sm:$0xf]
        %v1080 = vld [vmem:[%s1069 + $0x28] sm:$0xf]
        %v1081 = vld [vmem:[%s1069 + $0x2c] sm:$0xf]
        %v1082 = vld [vmem:[%s1069 + $0x30] sm:$0xf]
        %v1083 = vld [vmem:[%s1069 + $0x34] sm:$0xf]
        %v1084 = vld [vmem:[%s1069 + $0x38] sm:$0xf]
        %v1085 = vld [vmem:[%s1069 + $0x3c] sm:$0xf]
        %v1102 = vunpack.c.l.b16 %v1070
        %v1103 = vunpack.c.l.b16 %v1071
        %v1104 = vunpack.c.l.b16 %v1072
        %v1105 = vunpack.c.l.b16 %v1073
        %v1106 = vunpack.c.l.b16 %v1074
        %v1107 = vunpack.c.l.b16 %v1075
        %v1108 = vunpack.c.l.b16 %v1076
        %v1109 = vunpack.c.l.b16 %v1077
        %v1110 = vunpack.c.l.b16 %v1078
        %v1111 = vunpack.c.l.b16 %v1079
        %v1112 = vunpack.c.l.b16 %v1080
        %v1113 = vunpack.c.l.b16 %v1081
        %v1114 = vunpack.c.l.b16 %v1082
        %v1115 = vunpack.c.l.b16 %v1083
        %v1116 = vunpack.c.l.b16 %v1084
        %v1117 = vunpack.c.l.b16 %v1085
        %v1118 = vpack.c.b16 %v1103, %v1102
        %v1119 = vpack.c.b16 %v1105, %v1104
        %v1120 = vpack.c.b16 %v1107, %v1106
        %v1121 = vpack.c.b16 %v1109, %v1108
        %v1122 = vpack.c.b16 %v1111, %v1110
        %v1123 = vpack.c.b16 %v1113, %v1112
        %v1124 = vpack.c.b16 %v1115, %v1114
        %v1125 = vpack.c.b16 %v1117, %v1116
        %v1127 = vsel %vm461, %v1118, 0
        %v1130 = vsel %vm461, %v1119, 0
        %v1133 = vsel %vm461, %v1120, 0
        %v1136 = vsel %vm461, %v1121, 0
        %v1139 = vsel %vm461, %v1122, 0
        %v1142 = vsel %vm461, %v1123, 0
        %v1145 = vsel %vm461, %v1124, 0
        %v1148 = vsel %vm461, %v1125, 0
        %1150 = vmatprep.subr.bf16.mxu0 0
        %1151 = vmatpush1.bf16.msra.mxu0 %v448
        %1152 = vmatprep.subr.bf16.mxu0 0
        %1153 = vmatpush1.bf16.msra.mxu0 %v449
        %1154 = vmatprep.subr.bf16.mxu0 0
        %1155 = vmatpush1.bf16.msra.mxu0 %v450
        %1156 = vmatprep.subr.bf16.mxu0 0
        %1157 = vmatpush1.bf16.msra.mxu0 %v451
        %1158 = vmatprep.subr.bf16.mxu0 0
        %1159 = vmatpush1.bf16.msra.mxu0 %v452
        %1160 = vmatprep.subr.bf16.mxu0 0
        %1161 = vmatpush1.bf16.msra.mxu0 %v453
        %1162 = vmatprep.subr.bf16.mxu0 0
        %1163 = vmatpush1.bf16.msra.mxu0 %v488
        %1164 = vmatprep.subr.bf16.mxu0 0
        %1165 = vmatpush1.bf16.msra.mxu0 0
        %1166 = vmatprep.subr.bf16.mxu0 0
        %1167 = vmatpush1.bf16.msra.mxu0 0
        %1168 = vmatprep.subr.bf16.mxu0 0
        %1169 = vmatpush1.bf16.msra.mxu0 0
        %1170 = vmatprep.subr.bf16.mxu0 0
        %1171 = vmatpush1.bf16.msra.mxu0 0
        %1172 = vmatprep.subr.bf16.mxu0 0
        %1173 = vmatpush1.bf16.msra.mxu0 0
        %1174 = vmatprep.subr.bf16.mxu0 0
        %1175 = vmatpush1.bf16.msra.mxu0 0
        %1176 = vmatprep.subr.bf16.mxu0 0
        %1177 = vmatpush1.bf16.msra.mxu0 0
        %1178 = vmatprep.subr.bf16.mxu0 0
        %1179 = vmatpush1.bf16.msra.mxu0 0
        %1180 = vmatprep.subr.bf16.mxu0 0
        %1181 = vmatpush1.bf16.msra.mxu0 0
        %1182 = vmatprep.mubr.bf16.mxu0 0
        %1183 = vmatmul.mubr.bf16.gmra.mrb[0].mxu0 %v1127
        %v1184 = vpop.f32.mrb[0].mxu0
        %v1185 = vadd.f32 0.0, %v1184
        %v1186 = vpop.f32.mrb[0].mxu0
        %v1187 = vpop.f32.mrb[0].mxu0
        %v1188 = vadd.f32 0.0, %v1187
        %v1189 = vpop.f32.mrb[0].mxu0
        %1190 = vmatprep.mubr.bf16.mxu0 0
        %1191 = vmatmul.mubr.bf16.gmra.mrb[0].mxu0 %v1130
        %v1192 = vpop.f32.mrb[0].mxu0
        %v1193 = vadd.f32 0.0, %v1192
        %v1194 = vpop.f32.mrb[0].mxu0
        %v1195 = vpop.f32.mrb[0].mxu0
        %v1196 = vadd.f32 0.0, %v1195
        %v1197 = vpop.f32.mrb[0].mxu0
        %1198 = vmatprep.mubr.bf16.mxu0 0
        %1199 = vmatmul.mubr.bf16.gmra.mrb[0].mxu0 %v1133
        %v1200 = vpop.f32.mrb[0].mxu0
        %v1201 = vadd.f32 0.0, %v1200
        %v1202 = vpop.f32.mrb[0].mxu0
        %v1203 = vpop.f32.mrb[0].mxu0
        %v1204 = vadd.f32 0.0, %v1203
        %v1205 = vpop.f32.mrb[0].mxu0
        %1206 = vmatprep.mubr.bf16.mxu0 0
        %1207 = vmatmul.mubr.bf16.gmra.mrb[0].mxu0 %v1136
        %v1208 = vpop.f32.mrb[0].mxu0
        %v1209 = vadd.f32 0.0, %v1208
        %v1210 = vpop.f32.mrb[0].mxu0
        %v1211 = vpop.f32.mrb[0].mxu0
        %v1212 = vadd.f32 0.0, %v1211
        %v1213 = vpop.f32.mrb[0].mxu0
        %1214 = vmatprep.mubr.bf16.mxu0 0
        %1215 = vmatmul.mubr.bf16.gmra.mrb[0].mxu0 %v1139
        %v1216 = vpop.f32.mrb[0].mxu0
        %v1217 = vadd.f32 0.0, %v1216
        %v1218 = vpop.f32.mrb[0].mxu0
        %v1219 = vpop.f32.mrb[0].mxu0
        %v1220 = vadd.f32 0.0, %v1219
        %v1221 = vpop.f32.mrb[0].mxu0
        %1222 = vmatprep.mubr.bf16.mxu0 0
        %1223 = vmatmul.mubr.bf16.gmra.mrb[0].mxu0 %v1142
        %v1224 = vpop.f32.mrb[0].mxu0
        %v1225 = vadd.f32 0.0, %v1224
        %v1226 = vpop.f32.mrb[0].mxu0
        %v1227 = vpop.f32.mrb[0].mxu0
        %v1228 = vadd.f32 0.0, %v1227
        %v1229 = vpop.f32.mrb[0].mxu0
        %1230 = vmatprep.mubr.bf16.mxu0 0
        %1231 = vmatmul.mubr.bf16.gmra.mrb[0].mxu0 %v1145
        %v1232 = vpop.f32.mrb[0].mxu0
        %v1233 = vadd.f32 0.0, %v1232
        %v1234 = vpop.f32.mrb[0].mxu0
        %v1235 = vpop.f32.mrb[0].mxu0
        %v1236 = vadd.f32 0.0, %v1235
        %v1237 = vpop.f32.mrb[0].mxu0
        %1238 = vmatprep.mubr.bf16.mxu0 0
        %1239 = vmatmul.mubr.bf16.gmra.mrb[0].mxu0 %v1148
        %v1240 = vpop.f32.mrb[0].mxu0
        %v1241 = vadd.f32 0.0, %v1240
        %v1242 = vpop.f32.mrb[0].mxu0
        %v1243 = vpop.f32.mrb[0].mxu0
        %v1244 = vadd.f32 0.0, %v1243
        %v1245 = vpop.f32.mrb[0].mxu0
        %1246 = vdwg.mxu0
        %v1247 = vpack.c.bf16 %v1188, %v1185
        %v1248 = vpack.c.bf16 %v1196, %v1193
        %v1249 = vpack.c.bf16 %v1204, %v1201
        %v1250 = vpack.c.bf16 %v1212, %v1209
        %v1251 = vpack.c.bf16 %v1220, %v1217
        %v1252 = vpack.c.bf16 %v1228, %v1225
        %v1253 = vpack.c.bf16 %v1236, %v1233
        %v1254 = vpack.c.bf16 %v1244, %v1241
        %s1255 = scalar_lea.vmem %s2, 4
        %v1256 = vld [vmem:[%s1255] sm:$0x3]
        %v1258 = vsel %vm596, %v1247, 0
        %v1261 = vsel %vm596, %v1248, 0
        %v1264 = vsel %vm596, %v1249, 0
        %v1267 = vsel %vm596, %v1250, 0
        %v1270 = vsel %vm596, %v1251, 0
        %v1273 = vsel %vm596, %v1252, 0
        %v1276 = vsel %vm596, %v1253, 0
        %v1279 = vsel %vm596, %v1254, 0
        %v1282 = vand.u32 %v1256, %v624
        %1284 = vmatprep.subr.bf16.mxu0 0
        %1285 = vmatpush1.bf16.msra.mxu0 %v1282
        %1286 = vmatprep.subr.bf16.mxu0 0
        %1287 = vmatpush1.bf16.msra.mxu0 0
        %1288 = vmatprep.subr.bf16.mxu0 0
        %1289 = vmatpush1.bf16.msra.mxu0 0
        %1290 = vmatprep.subr.bf16.mxu0 0
        %1291 = vmatpush1.bf16.msra.mxu0 0
        %1292 = vmatprep.subr.bf16.mxu0 0
        %1293 = vmatpush1.bf16.msra.mxu0 0
        %1294 = vmatprep.subr.bf16.mxu0 0
        %1295 = vmatpush1.bf16.msra.mxu0 0
        %1296 = vmatprep.subr.bf16.mxu0 0
        %1297 = vmatpush1.bf16.msra.mxu0 0
        %1298 = vmatprep.subr.bf16.mxu0 0
        %1299 = vmatpush1.bf16.msra.mxu0 0
        %1300 = vmatprep.subr.bf16.mxu0 0
        %1301 = vmatpush1.bf16.msra.mxu0 0
        %1302 = vmatprep.subr.bf16.mxu0 0
        %1303 = vmatpush1.bf16.msra.mxu0 0
        %1304 = vmatprep.subr.bf16.mxu0 0
        %1305 = vmatpush1.bf16.msra.mxu0 0
        %1306 = vmatprep.subr.bf16.mxu0 0
        %1307 = vmatpush1.bf16.msra.mxu0 0
        %1308 = vmatprep.subr.bf16.mxu0 0
        %1309 = vmatpush1.bf16.msra.mxu0 0
        %1310 = vmatprep.subr.bf16.mxu0 0
        %1311 = vmatpush1.bf16.msra.mxu0 0
        %1312 = vmatprep.subr.bf16.mxu0 0
        %1313 = vmatpush1.bf16.msra.mxu0 0
        %1314 = vmatprep.subr.bf16.mxu0 0
        %1315 = vmatpush1.bf16.msra.mxu0 0
        %1316 = vmatprep.mubr.bf16.mxu0 0
        %1317 = vmatmul.mubr.bf16.gmra.mrb[0].mxu0 %v1258
        %v1318 = vpop.f32.mrb[0].mxu0
        %v1319 = vadd.f32 0.0, %v1318
        %v1320 = vpop.f32.mrb[0].mxu0
        %v1321 = vpop.f32.mrb[0].mxu0
        %v1322 = vadd.f32 0.0, %v1321
        %v1323 = vpop.f32.mrb[0].mxu0
        %1324 = vmatprep.mubr.bf16.mxu0 0
        %1325 = vmatmul.mubr.bf16.gmra.mrb[0].mxu0 %v1261
        %v1326 = vpop.f32.mrb[0].mxu0
        %v1327 = vadd.f32 0.0, %v1326
        %v1328 = vpop.f32.mrb[0].mxu0
        %v1329 = vpop.f32.mrb[0].mxu0
        %v1330 = vadd.f32 0.0, %v1329
        %v1331 = vpop.f32.mrb[0].mxu0
        %1332 = vmatprep.mubr.bf16.mxu0 0
        %1333 = vmatmul.mubr.bf16.gmra.mrb[0].mxu0 %v1264
        %v1334 = vpop.f32.mrb[0].mxu0
        %v1335 = vadd.f32 0.0, %v1334
        %v1336 = vpop.f32.mrb[0].mxu0
        %v1337 = vpop.f32.mrb[0].mxu0
        %v1338 = vadd.f32 0.0, %v1337
        %v1339 = vpop.f32.mrb[0].mxu0
        %1340 = vmatprep.mubr.bf16.mxu0 0
        %1341 = vmatmul.mubr.bf16.gmra.mrb[0].mxu0 %v1267
        %v1342 = vpop.f32.mrb[0].mxu0
        %v1343 = vadd.f32 0.0, %v1342
        %v1344 = vpop.f32.mrb[0].mxu0
        %v1345 = vpop.f32.mrb[0].mxu0
        %v1346 = vadd.f32 0.0, %v1345
        %v1347 = vpop.f32.mrb[0].mxu0
        %1348 = vmatprep.mubr.bf16.mxu0 0
        %1349 = vmatmul.mubr.bf16.gmra.mrb[0].mxu0 %v1270
        %v1350 = vpop.f32.mrb[0].mxu0
        %v1351 = vadd.f32 0.0, %v1350
        %v1352 = vpop.f32.mrb[0].mxu0
        %v1353 = vpop.f32.mrb[0].mxu0
        %v1354 = vadd.f32 0.0, %v1353
        %v1355 = vpop.f32.mrb[0].mxu0
        %1356 = vmatprep.mubr.bf16.mxu0 0
        %1357 = vmatmul.mubr.bf16.gmra.mrb[0].mxu0 %v1273
        %v1358 = vpop.f32.mrb[0].mxu0
        %v1359 = vadd.f32 0.0, %v1358
        %v1360 = vpop.f32.mrb[0].mxu0
        %v1361 = vpop.f32.mrb[0].mxu0
        %v1362 = vadd.f32 0.0, %v1361
        %v1363 = vpop.f32.mrb[0].mxu0
        %1364 = vmatprep.mubr.bf16.mxu0 0
        %1365 = vmatmul.mubr.bf16.gmra.mrb[0].mxu0 %v1276
        %v1366 = vpop.f32.mrb[0].mxu0
        %v1367 = vadd.f32 0.0, %v1366
        %v1368 = vpop.f32.mrb[0].mxu0
        %v1369 = vpop.f32.mrb[0].mxu0
        %v1370 = vadd.f32 0.0, %v1369
        %v1371 = vpop.f32.mrb[0].mxu0
        %1372 = vmatprep.mubr.bf16.mxu0 0
        %1373 = vmatmul.mubr.bf16.gmra.mrb[0].mxu0 %v1279
        %v1374 = vpop.f32.mrb[0].mxu0
        %v1375 = vadd.f32 0.0, %v1374
        %v1376 = vpop.f32.mrb[0].mxu0
        %v1377 = vpop.f32.mrb[0].mxu0
        %v1378 = vadd.f32 0.0, %v1377
        %v1379 = vpop.f32.mrb[0].mxu0
        %1380 = vdwg.mxu0
        %v1381 = vadd.f32 %v1053, %v1319
        %v1382 = vadd.f32 %v1054, %v1322
        %v1383 = vadd.f32 %v1055, %v1327
        %v1384 = vadd.f32 %v1056, %v1330
        %v1385 = vadd.f32 %v1057, %v1335
        %v1386 = vadd.f32 %v1058, %v1338
        %v1387 = vadd.f32 %v1059, %v1343
        %v1388 = vadd.f32 %v1060, %v1346
        %v1389 = vadd.f32 %v1061, %v1351
        %v1390 = vadd.f32 %v1062, %v1354
        %v1391 = vadd.f32 %v1063, %v1359
        %v1392 = vadd.f32 %v1064, %v1362
        %v1393 = vadd.f32 %v1065, %v1367
        %v1394 = vadd.f32 %v1066, %v1370
        %v1395 = vadd.f32 %v1067, %v1375
        %v1396 = vadd.f32 %v1068, %v1378
        %s1397 = scalar_lea.vmem %s1, 192
        %v1398 = vld [vmem:[%s1397] sm:$0xf]
        %v1399 = vld [vmem:[%s1397 + $0x4] sm:$0xf]
        %v1400 = vld [vmem:[%s1397 + $0x8] sm:$0xf]
        %v1401 = vld [vmem:[%s1397 + $0xc] sm:$0xf]
        %v1402 = vld [vmem:[%s1397 + $0x10] sm:$0xf]
        %v1403 = vld [vmem:[%s1397 + $0x14] sm:$0xf]
        %v1404 = vld [vmem:[%s1397 + $0x18] sm:$0xf]
        %v1405 = vld [vmem:[%s1397 + $0x1c] sm:$0xf]
        %v1406 = vld [vmem:[%s1397 + $0x20] sm:$0xf]
        %v1407 = vld [vmem:[%s1397 + $0x24] sm:$0xf]
        %v1408 = vld [vmem:[%s1397 + $0x28] sm:$0xf]
        %v1409 = vld [vmem:[%s1397 + $0x2c] sm:$0xf]
        %v1410 = vld [vmem:[%s1397 + $0x30] sm:$0xf]
        %v1411 = vld [vmem:[%s1397 + $0x34] sm:$0xf]
        %v1412 = vld [vmem:[%s1397 + $0x38] sm:$0xf]
        %v1413 = vld [vmem:[%s1397 + $0x3c] sm:$0xf]
        %v1430 = vunpack.c.l.b16 %v1398
        %v1431 = vunpack.c.l.b16 %v1399
        %v1432 = vunpack.c.l.b16 %v1400
        %v1433 = vunpack.c.l.b16 %v1401
        %v1434 = vunpack.c.l.b16 %v1402
        %v1435 = vunpack.c.l.b16 %v1403
        %v1436 = vunpack.c.l.b16 %v1404
        %v1437 = vunpack.c.l.b16 %v1405
        %v1438 = vunpack.c.l.b16 %v1406
        %v1439 = vunpack.c.l.b16 %v1407
        %v1440 = vunpack.c.l.b16 %v1408
        %v1441 = vunpack.c.l.b16 %v1409
        %v1442 = vunpack.c.l.b16 %v1410
        %v1443 = vunpack.c.l.b16 %v1411
        %v1444 = vunpack.c.l.b16 %v1412
        %v1445 = vunpack.c.l.b16 %v1413
        %v1446 = vpack.c.b16 %v1431, %v1430
        %v1447 = vpack.c.b16 %v1433, %v1432
        %v1448 = vpack.c.b16 %v1435, %v1434
        %v1449 = vpack.c.b16 %v1437, %v1436
        %v1450 = vpack.c.b16 %v1439, %v1438
        %v1451 = vpack.c.b16 %v1441, %v1440
        %v1452 = vpack.c.b16 %v1443, %v1442
        %v1453 = vpack.c.b16 %v1445, %v1444
        %v1455 = vsel %vm461, %v1446, 0
        %v1458 = vsel %vm461, %v1447, 0
        %v1461 = vsel %vm461, %v1448, 0
        %v1464 = vsel %vm461, %v1449, 0
        %v1467 = vsel %vm461, %v1450, 0
        %v1470 = vsel %vm461, %v1451, 0
        %v1473 = vsel %vm461, %v1452, 0
        %v1476 = vsel %vm461, %v1453, 0
        %1478 = vmatprep.subr.bf16.mxu0 0
        %1479 = vmatpush1.bf16.msra.mxu0 %v448
        %1480 = vmatprep.subr.bf16.mxu0 0
        %1481 = vmatpush1.bf16.msra.mxu0 %v449
        %1482 = vmatprep.subr.bf16.mxu0 0
        %1483 = vmatpush1.bf16.msra.mxu0 %v450
        %1484 = vmatprep.subr.bf16.mxu0 0
        %1485 = vmatpush1.bf16.msra.mxu0 %v451
        %1486 = vmatprep.subr.bf16.mxu0 0
        %1487 = vmatpush1.bf16.msra.mxu0 %v452
        %1488 = vmatprep.subr.bf16.mxu0 0
        %1489 = vmatpush1.bf16.msra.mxu0 %v453
        %1490 = vmatprep.subr.bf16.mxu0 0
        %1491 = vmatpush1.bf16.msra.mxu0 %v488
        %1492 = vmatprep.subr.bf16.mxu0 0
        %1493 = vmatpush1.bf16.msra.mxu0 0
        %1494 = vmatprep.subr.bf16.mxu0 0
        %1495 = vmatpush1.bf16.msra.mxu0 0
        %1496 = vmatprep.subr.bf16.mxu0 0
        %1497 = vmatpush1.bf16.msra.mxu0 0
        %1498 = vmatprep.subr.bf16.mxu0 0
        %1499 = vmatpush1.bf16.msra.mxu0 0
        %1500 = vmatprep.subr.bf16.mxu0 0
        %1501 = vmatpush1.bf16.msra.mxu0 0
        %1502 = vmatprep.subr.bf16.mxu0 0
        %1503 = vmatpush1.bf16.msra.mxu0 0
        %1504 = vmatprep.subr.bf16.mxu0 0
        %1505 = vmatpush1.bf16.msra.mxu0 0
        %1506 = vmatprep.subr.bf16.mxu0 0
        %1507 = vmatpush1.bf16.msra.mxu0 0
        %1508 = vmatprep.subr.bf16.mxu0 0
        %1509 = vmatpush1.bf16.msra.mxu0 0
        %1510 = vmatprep.mubr.bf16.mxu0 0
        %1511 = vmatmul.mubr.bf16.gmra.mrb[0].mxu0 %v1455
        %v1512 = vpop.f32.mrb[0].mxu0
        %v1513 = vadd.f32 0.0, %v1512
        %v1514 = vpop.f32.mrb[0].mxu0
        %v1515 = vpop.f32.mrb[0].mxu0
        %v1516 = vadd.f32 0.0, %v1515
        %v1517 = vpop.f32.mrb[0].mxu0
        %1518 = vmatprep.mubr.bf16.mxu0 0
        %1519 = vmatmul.mubr.bf16.gmra.mrb[0].mxu0 %v1458
        %v1520 = vpop.f32.mrb[0].mxu0
        %v1521 = vadd.f32 0.0, %v1520
        %v1522 = vpop.f32.mrb[0].mxu0
        %v1523 = vpop.f32.mrb[0].mxu0
        %v1524 = vadd.f32 0.0, %v1523
        %v1525 = vpop.f32.mrb[0].mxu0
        %1526 = vmatprep.mubr.bf16.mxu0 0
        %1527 = vmatmul.mubr.bf16.gmra.mrb[0].mxu0 %v1461
        %v1528 = vpop.f32.mrb[0].mxu0
        %v1529 = vadd.f32 0.0, %v1528
        %v1530 = vpop.f32.mrb[0].mxu0
        %v1531 = vpop.f32.mrb[0].mxu0
        %v1532 = vadd.f32 0.0, %v1531
        %v1533 = vpop.f32.mrb[0].mxu0
        %1534 = vmatprep.mubr.bf16.mxu0 0
        %1535 = vmatmul.mubr.bf16.gmra.mrb[0].mxu0 %v1464
        %v1536 = vpop.f32.mrb[0].mxu0
        %v1537 = vadd.f32 0.0, %v1536
        %v1538 = vpop.f32.mrb[0].mxu0
        %v1539 = vpop.f32.mrb[0].mxu0
        %v1540 = vadd.f32 0.0, %v1539
        %v1541 = vpop.f32.mrb[0].mxu0
        %1542 = vmatprep.mubr.bf16.mxu0 0
        %1543 = vmatmul.mubr.bf16.gmra.mrb[0].mxu0 %v1467
        %v1544 = vpop.f32.mrb[0].mxu0
        %v1545 = vadd.f32 0.0, %v1544
        %v1546 = vpop.f32.mrb[0].mxu0
        %v1547 = vpop.f32.mrb[0].mxu0
        %v1548 = vadd.f32 0.0, %v1547
        %v1549 = vpop.f32.mrb[0].mxu0
        %1550 = vmatprep.mubr.bf16.mxu0 0
        %1551 = vmatmul.mubr.bf16.gmra.mrb[0].mxu0 %v1470
        %v1552 = vpop.f32.mrb[0].mxu0
        %v1553 = vadd.f32 0.0, %v1552
        %v1554 = vpop.f32.mrb[0].mxu0
        %v1555 = vpop.f32.mrb[0].mxu0
        %v1556 = vadd.f32 0.0, %v1555
        %v1557 = vpop.f32.mrb[0].mxu0
        %1558 = vmatprep.mubr.bf16.mxu0 0
        %1559 = vmatmul.mubr.bf16.gmra.mrb[0].mxu0 %v1473
        %v1560 = vpop.f32.mrb[0].mxu0
        %v1561 = vadd.f32 0.0, %v1560
        %v1562 = vpop.f32.mrb[0].mxu0
        %v1563 = vpop.f32.mrb[0].mxu0
        %v1564 = vadd.f32 0.0, %v1563
        %v1565 = vpop.f32.mrb[0].mxu0
        %1566 = vmatprep.mubr.bf16.mxu0 0
        %1567 = vmatmul.mubr.bf16.gmra.mrb[0].mxu0 %v1476
        %v1568 = vpop.f32.mrb[0].mxu0
        %v1569 = vadd.f32 0.0, %v1568
        %v1570 = vpop.f32.mrb[0].mxu0
        %v1571 = vpop.f32.mrb[0].mxu0
        %v1572 = vadd.f32 0.0, %v1571
        %v1573 = vpop.f32.mrb[0].mxu0
        %1574 = vdwg.mxu0
        %v1575 = vpack.c.bf16 %v1516, %v1513
        %v1576 = vpack.c.bf16 %v1524, %v1521
        %v1577 = vpack.c.bf16 %v1532, %v1529
        %v1578 = vpack.c.bf16 %v1540, %v1537
        %v1579 = vpack.c.bf16 %v1548, %v1545
        %v1580 = vpack.c.bf16 %v1556, %v1553
        %v1581 = vpack.c.bf16 %v1564, %v1561
        %v1582 = vpack.c.bf16 %v1572, %v1569
        %s1583 = scalar_lea.vmem %s2, 6
        %v1584 = vld [vmem:[%s1583] sm:$0x3]
        %v1586 = vsel %vm596, %v1575, 0
        %v1589 = vsel %vm596, %v1576, 0
        %v1592 = vsel %vm596, %v1577, 0
        %v1595 = vsel %vm596, %v1578, 0
        %v1598 = vsel %vm596, %v1579, 0
        %v1601 = vsel %vm596, %v1580, 0
        %v1604 = vsel %vm596, %v1581, 0
        %v1607 = vsel %vm596, %v1582, 0
        %v1610 = vand.u32 %v1584, %v624
        %1612 = vmatprep.subr.bf16.mxu0 0
        %1613 = vmatpush1.bf16.msra.mxu0 %v1610
        %1614 = vmatprep.subr.bf16.mxu0 0
        %1615 = vmatpush1.bf16.msra.mxu0 0
        %1616 = vmatprep.subr.bf16.mxu0 0
        %1617 = vmatpush1.bf16.msra.mxu0 0
        %1618 = vmatprep.subr.bf16.mxu0 0
        %1619 = vmatpush1.bf16.msra.mxu0 0
        %1620 = vmatprep.subr.bf16.mxu0 0
        %1621 = vmatpush1.bf16.msra.mxu0 0
        %1622 = vmatprep.subr.bf16.mxu0 0
        %1623 = vmatpush1.bf16.msra.mxu0 0
        %1624 = vmatprep.subr.bf16.mxu0 0
        %1625 = vmatpush1.bf16.msra.mxu0 0
        %1626 = vmatprep.subr.bf16.mxu0 0
        %1627 = vmatpush1.bf16.msra.mxu0 0
        %1628 = vmatprep.subr.bf16.mxu0 0
        %1629 = vmatpush1.bf16.msra.mxu0 0
        %1630 = vmatprep.subr.bf16.mxu0 0
        %1631 = vmatpush1.bf16.msra.mxu0 0
        %1632 = vmatprep.subr.bf16.mxu0 0
        %1633 = vmatpush1.bf16.msra.mxu0 0
        %1634 = vmatprep.subr.bf16.mxu0 0
        %1635 = vmatpush1.bf16.msra.mxu0 0
        %1636 = vmatprep.subr.bf16.mxu0 0
        %1637 = vmatpush1.bf16.msra.mxu0 0
        %1638 = vmatprep.subr.bf16.mxu0 0
        %1639 = vmatpush1.bf16.msra.mxu0 0
        %1640 = vmatprep.subr.bf16.mxu0 0
        %1641 = vmatpush1.bf16.msra.mxu0 0
        %1642 = vmatprep.subr.bf16.mxu0 0
        %1643 = vmatpush1.bf16.msra.mxu0 0
        %1644 = vmatprep.mubr.bf16.mxu0 0
        %1645 = vmatmul.mubr.bf16.gmra.mrb[0].mxu0 %v1586
        %v1646 = vpop.f32.mrb[0].mxu0
        %v1647 = vadd.f32 0.0, %v1646
        %v1648 = vpop.f32.mrb[0].mxu0
        %v1649 = vpop.f32.mrb[0].mxu0
        %v1650 = vadd.f32 0.0, %v1649
        %v1651 = vpop.f32.mrb[0].mxu0
        %1652 = vmatprep.mubr.bf16.mxu0 0
        %1653 = vmatmul.mubr.bf16.gmra.mrb[0].mxu0 %v1589
        %v1654 = vpop.f32.mrb[0].mxu0
        %v1655 = vadd.f32 0.0, %v1654
        %v1656 = vpop.f32.mrb[0].mxu0
        %v1657 = vpop.f32.mrb[0].mxu0
        %v1658 = vadd.f32 0.0, %v1657
        %v1659 = vpop.f32.mrb[0].mxu0
        %1660 = vmatprep.mubr.bf16.mxu0 0
        %1661 = vmatmul.mubr.bf16.gmra.mrb[0].mxu0 %v1592
        %v1662 = vpop.f32.mrb[0].mxu0
        %v1663 = vadd.f32 0.0, %v1662
        %v1664 = vpop.f32.mrb[0].mxu0
        %v1665 = vpop.f32.mrb[0].mxu0
        %v1666 = vadd.f32 0.0, %v1665
        %v1667 = vpop.f32.mrb[0].mxu0
        %1668 = vmatprep.mubr.bf16.mxu0 0
        %1669 = vmatmul.mubr.bf16.gmra.mrb[0].mxu0 %v1595
        %v1670 = vpop.f32.mrb[0].mxu0
        %v1671 = vadd.f32 0.0, %v1670
        %v1672 = vpop.f32.mrb[0].mxu0
        %v1673 = vpop.f32.mrb[0].mxu0
        %v1674 = vadd.f32 0.0, %v1673
        %v1675 = vpop.f32.mrb[0].mxu0
        %1676 = vmatprep.mubr.bf16.mxu0 0
        %1677 = vmatmul.mubr.bf16.gmra.mrb[0].mxu0 %v1598
        %v1678 = vpop.f32.mrb[0].mxu0
        %v1679 = vadd.f32 0.0, %v1678
        %v1680 = vpop.f32.mrb[0].mxu0
        %v1681 = vpop.f32.mrb[0].mxu0
        %v1682 = vadd.f32 0.0, %v1681
        %v1683 = vpop.f32.mrb[0].mxu0
        %1684 = vmatprep.mubr.bf16.mxu0 0
        %1685 = vmatmul.mubr.bf16.gmra.mrb[0].mxu0 %v1601
        %v1686 = vpop.f32.mrb[0].mxu0
        %v1687 = vadd.f32 0.0, %v1686
        %v1688 = vpop.f32.mrb[0].mxu0
        %v1689 = vpop.f32.mrb[0].mxu0
        %v1690 = vadd.f32 0.0, %v1689
        %v1691 = vpop.f32.mrb[0].mxu0
        %1692 = vmatprep.mubr.bf16.mxu0 0
        %1693 = vmatmul.mubr.bf16.gmra.mrb[0].mxu0 %v1604
        %v1694 = vpop.f32.mrb[0].mxu0
        %v1695 = vadd.f32 0.0, %v1694
        %v1696 = vpop.f32.mrb[0].mxu0
        %v1697 = vpop.f32.mrb[0].mxu0
        %v1698 = vadd.f32 0.0, %v1697
        %v1699 = vpop.f32.mrb[0].mxu0
        %1700 = vmatprep.mubr.bf16.mxu0 0
        %1701 = vmatmul.mubr.bf16.gmra.mrb[0].mxu0 %v1607
        %v1702 = vpop.f32.mrb[0].mxu0
        %v1703 = vadd.f32 0.0, %v1702
        %v1704 = vpop.f32.mrb[0].mxu0
        %v1705 = vpop.f32.mrb[0].mxu0
        %v1706 = vadd.f32 0.0, %v1705
        %v1707 = vpop.f32.mrb[0].mxu0
        %1708 = vdwg.mxu0
        %v1709 = vadd.f32 %v1381, %v1647
        %v1710 = vadd.f32 %v1382, %v1650
        %v1711 = vadd.f32 %v1383, %v1655
        %v1712 = vadd.f32 %v1384, %v1658
        %v1713 = vadd.f32 %v1385, %v1663
        %v1714 = vadd.f32 %v1386, %v1666
        %v1715 = vadd.f32 %v1387, %v1671
        %v1716 = vadd.f32 %v1388, %v1674
        %v1717 = vadd.f32 %v1389, %v1679
        %v1718 = vadd.f32 %v1390, %v1682
        %v1719 = vadd.f32 %v1391, %v1687
        %v1720 = vadd.f32 %v1392, %v1690
        %v1721 = vadd.f32 %v1393, %v1695
        %v1722 = vadd.f32 %v1394, %v1698
        %v1723 = vadd.f32 %v1395, %v1703
        %v1724 = vadd.f32 %v1396, %v1706
        %s1725 = scalar_lea.vmem %s1, 256
        %v1726 = vld [vmem:[%s1725] sm:$0xf]
        %v1727 = vld [vmem:[%s1725 + $0x4] sm:$0xf]
        %v1728 = vld [vmem:[%s1725 + $0x8] sm:$0xf]
        %v1729 = vld [vmem:[%s1725 + $0xc] sm:$0xf]
        %v1730 = vld [vmem:[%s1725 + $0x10] sm:$0xf]
        %v1731 = vld [vmem:[%s1725 + $0x14] sm:$0xf]
        %v1732 = vld [vmem:[%s1725 + $0x18] sm:$0xf]
        %v1733 = vld [vmem:[%s1725 + $0x1c] sm:$0xf]
        %v1734 = vld [vmem:[%s1725 + $0x20] sm:$0xf]
        %v1735 = vld [vmem:[%s1725 + $0x24] sm:$0xf]
        %v1736 = vld [vmem:[%s1725 + $0x28] sm:$0xf]
        %v1737 = vld [vmem:[%s1725 + $0x2c] sm:$0xf]
        %v1738 = vld [vmem:[%s1725 + $0x30] sm:$0xf]
        %v1739 = vld [vmem:[%s1725 + $0x34] sm:$0xf]
        %v1740 = vld [vmem:[%s1725 + $0x38] sm:$0xf]
        %v1741 = vld [vmem:[%s1725 + $0x3c] sm:$0xf]
        %v1758 = vunpack.c.l.b16 %v1726
        %v1759 = vunpack.c.l.b16 %v1727
        %v1760 = vunpack.c.l.b16 %v1728
        %v1761 = vunpack.c.l.b16 %v1729
        %v1762 = vunpack.c.l.b16 %v1730
        %v1763 = vunpack.c.l.b16 %v1731
        %v1764 = vunpack.c.l.b16 %v1732
        %v1765 = vunpack.c.l.b16 %v1733
        %v1766 = vunpack.c.l.b16 %v1734
        %v1767 = vunpack.c.l.b16 %v1735
        %v1768 = vunpack.c.l.b16 %v1736
        %v1769 = vunpack.c.l.b16 %v1737
        %v1770 = vunpack.c.l.b16 %v1738
        %v1771 = vunpack.c.l.b16 %v1739
        %v1772 = vunpack.c.l.b16 %v1740
        %v1773 = vunpack.c.l.b16 %v1741
        %v1774 = vpack.c.b16 %v1759, %v1758
        %v1775 = vpack.c.b16 %v1761, %v1760
        %v1776 = vpack.c.b16 %v1763, %v1762
        %v1777 = vpack.c.b16 %v1765, %v1764
        %v1778 = vpack.c.b16 %v1767, %v1766
        %v1779 = vpack.c.b16 %v1769, %v1768
        %v1780 = vpack.c.b16 %v1771, %v1770
        %v1781 = vpack.c.b16 %v1773, %v1772
        %v1783 = vsel %vm461, %v1774, 0
        %v1786 = vsel %vm461, %v1775, 0
        %v1789 = vsel %vm461, %v1776, 0
        %v1792 = vsel %vm461, %v1777, 0
        %v1795 = vsel %vm461, %v1778, 0
        %v1798 = vsel %vm461, %v1779, 0
        %v1801 = vsel %vm461, %v1780, 0
        %v1804 = vsel %vm461, %v1781, 0
        %1806 = vmatprep.subr.bf16.mxu0 0
        %1807 = vmatpush1.bf16.msra.mxu0 %v448
        %1808 = vmatprep.subr.bf16.mxu0 0
        %1809 = vmatpush1.bf16.msra.mxu0 %v449
        %1810 = vmatprep.subr.bf16.mxu0 0
        %1811 = vmatpush1.bf16.msra.mxu0 %v450
        %1812 = vmatprep.subr.bf16.mxu0 0
        %1813 = vmatpush1.bf16.msra.mxu0 %v451
        %1814 = vmatprep.subr.bf16.mxu0 0
        %1815 = vmatpush1.bf16.msra.mxu0 %v452
        %1816 = vmatprep.subr.bf16.mxu0 0
        %1817 = vmatpush1.bf16.msra.mxu0 %v453
        %1818 = vmatprep.subr.bf16.mxu0 0
        %1819 = vmatpush1.bf16.msra.mxu0 %v488
        %1820 = vmatprep.subr.bf16.mxu0 0
        %1821 = vmatpush1.bf16.msra.mxu0 0
        %1822 = vmatprep.subr.bf16.mxu0 0
        %1823 = vmatpush1.bf16.msra.mxu0 0
        %1824 = vmatprep.subr.bf16.mxu0 0
        %1825 = vmatpush1.bf16.msra.mxu0 0
        %1826 = vmatprep.subr.bf16.mxu0 0
        %1827 = vmatpush1.bf16.msra.mxu0 0
        %1828 = vmatprep.subr.bf16.mxu0 0
        %1829 = vmatpush1.bf16.msra.mxu0 0
        %1830 = vmatprep.subr.bf16.mxu0 0
        %1831 = vmatpush1.bf16.msra.mxu0 0
        %1832 = vmatprep.subr.bf16.mxu0 0
        %1833 = vmatpush1.bf16.msra.mxu0 0
        %1834 = vmatprep.subr.bf16.mxu0 0
        %1835 = vmatpush1.bf16.msra.mxu0 0
        %1836 = vmatprep.subr.bf16.mxu0 0
        %1837 = vmatpush1.bf16.msra.mxu0 0
        %1838 = vmatprep.mubr.bf16.mxu0 0
        %1839 = vmatmul.mubr.bf16.gmra.mrb[0].mxu0 %v1783
        %v1840 = vpop.f32.mrb[0].mxu0
        %v1841 = vadd.f32 0.0, %v1840
        %v1842 = vpop.f32.mrb[0].mxu0
        %v1843 = vpop.f32.mrb[0].mxu0
        %v1844 = vadd.f32 0.0, %v1843
        %v1845 = vpop.f32.mrb[0].mxu0
        %1846 = vmatprep.mubr.bf16.mxu0 0
        %1847 = vmatmul.mubr.bf16.gmra.mrb[0].mxu0 %v1786
        %v1848 = vpop.f32.mrb[0].mxu0
        %v1849 = vadd.f32 0.0, %v1848
        %v1850 = vpop.f32.mrb[0].mxu0
        %v1851 = vpop.f32.mrb[0].mxu0
        %v1852 = vadd.f32 0.0, %v1851
        %v1853 = vpop.f32.mrb[0].mxu0
        %1854 = vmatprep.mubr.bf16.mxu0 0
        %1855 = vmatmul.mubr.bf16.gmra.mrb[0].mxu0 %v1789
        %v1856 = vpop.f32.mrb[0].mxu0
        %v1857 = vadd.f32 0.0, %v1856
        %v1858 = vpop.f32.mrb[0].mxu0
        %v1859 = vpop.f32.mrb[0].mxu0
        %v1860 = vadd.f32 0.0, %v1859
        %v1861 = vpop.f32.mrb[0].mxu0
        %1862 = vmatprep.mubr.bf16.mxu0 0
        %1863 = vmatmul.mubr.bf16.gmra.mrb[0].mxu0 %v1792
        %v1864 = vpop.f32.mrb[0].mxu0
        %v1865 = vadd.f32 0.0, %v1864
        %v1866 = vpop.f32.mrb[0].mxu0
        %v1867 = vpop.f32.mrb[0].mxu0
        %v1868 = vadd.f32 0.0, %v1867
        %v1869 = vpop.f32.mrb[0].mxu0
        %1870 = vmatprep.mubr.bf16.mxu0 0
        %1871 = vmatmul.mubr.bf16.gmra.mrb[0].mxu0 %v1795
        %v1872 = vpop.f32.mrb[0].mxu0
        %v1873 = vadd.f32 0.0, %v1872
        %v1874 = vpop.f32.mrb[0].mxu0
        %v1875 = vpop.f32.mrb[0].mxu0
        %v1876 = vadd.f32 0.0, %v1875
        %v1877 = vpop.f32.mrb[0].mxu0
        %1878 = vmatprep.mubr.bf16.mxu0 0
        %1879 = vmatmul.mubr.bf16.gmra.mrb[0].mxu0 %v1798
        %v1880 = vpop.f32.mrb[0].mxu0
        %v1881 = vadd.f32 0.0, %v1880
        %v1882 = vpop.f32.mrb[0].mxu0
        %v1883 = vpop.f32.mrb[0].mxu0
        %v1884 = vadd.f32 0.0, %v1883
        %v1885 = vpop.f32.mrb[0].mxu0
        %1886 = vmatprep.mubr.bf16.mxu0 0
        %1887 = vmatmul.mubr.bf16.gmra.mrb[0].mxu0 %v1801
        %v1888 = vpop.f32.mrb[0].mxu0
        %v1889 = vadd.f32 0.0, %v1888
        %v1890 = vpop.f32.mrb[0].mxu0
        %v1891 = vpop.f32.mrb[0].mxu0
        %v1892 = vadd.f32 0.0, %v1891
        %v1893 = vpop.f32.mrb[0].mxu0
        %1894 = vmatprep.mubr.bf16.mxu0 0
        %1895 = vmatmul.mubr.bf16.gmra.mrb[0].mxu0 %v1804
        %v1896 = vpop.f32.mrb[0].mxu0
        %v1897 = vadd.f32 0.0, %v1896
        %v1898 = vpop.f32.mrb[0].mxu0
        %v1899 = vpop.f32.mrb[0].mxu0
        %v1900 = vadd.f32 0.0, %v1899
        %v1901 = vpop.f32.mrb[0].mxu0
        %1902 = vdwg.mxu0
        %v1903 = vpack.c.bf16 %v1844, %v1841
        %v1904 = vpack.c.bf16 %v1852, %v1849
        %v1905 = vpack.c.bf16 %v1860, %v1857
        %v1906 = vpack.c.bf16 %v1868, %v1865
        %v1907 = vpack.c.bf16 %v1876, %v1873
        %v1908 = vpack.c.bf16 %v1884, %v1881
        %v1909 = vpack.c.bf16 %v1892, %v1889
        %v1910 = vpack.c.bf16 %v1900, %v1897
        %s1911 = scalar_lea.vmem %s2, 8
        %v1912 = vld [vmem:[%s1911] sm:$0x3]
        %v1914 = vsel %vm596, %v1903, 0
        %v1917 = vsel %vm596, %v1904, 0
        %v1920 = vsel %vm596, %v1905, 0
        %v1923 = vsel %vm596, %v1906, 0
        %v1926 = vsel %vm596, %v1907, 0
        %v1929 = vsel %vm596, %v1908, 0
        %v1932 = vsel %vm596, %v1909, 0
        %v1935 = vsel %vm596, %v1910, 0
        %v1938 = vand.u32 %v1912, %v624
        %1940 = vmatprep.subr.bf16.mxu0 0
        %1941 = vmatpush1.bf16.msra.mxu0 %v1938
        %1942 = vmatprep.subr.bf16.mxu0 0
        %1943 = vmatpush1.bf16.msra.mxu0 0
        %1944 = vmatprep.subr.bf16.mxu0 0
        %1945 = vmatpush1.bf16.msra.mxu0 0
        %1946 = vmatprep.subr.bf16.mxu0 0
        %1947 = vmatpush1.bf16.msra.mxu0 0
        %1948 = vmatprep.subr.bf16.mxu0 0
        %1949 = vmatpush1.bf16.msra.mxu0 0
        %1950 = vmatprep.subr.bf16.mxu0 0
        %1951 = vmatpush1.bf16.msra.mxu0 0
        %1952 = vmatprep.subr.bf16.mxu0 0
        %1953 = vmatpush1.bf16.msra.mxu0 0
        %1954 = vmatprep.subr.bf16.mxu0 0
        %1955 = vmatpush1.bf16.msra.mxu0 0
        %1956 = vmatprep.subr.bf16.mxu0 0
        %1957 = vmatpush1.bf16.msra.mxu0 0
        %1958 = vmatprep.subr.bf16.mxu0 0
        %1959 = vmatpush1.bf16.msra.mxu0 0
        %1960 = vmatprep.subr.bf16.mxu0 0
        %1961 = vmatpush1.bf16.msra.mxu0 0
        %1962 = vmatprep.subr.bf16.mxu0 0
        %1963 = vmatpush1.bf16.msra.mxu0 0
        %1964 = vmatprep.subr.bf16.mxu0 0
        %1965 = vmatpush1.bf16.msra.mxu0 0
        %1966 = vmatprep.subr.bf16.mxu0 0
        %1967 = vmatpush1.bf16.msra.mxu0 0
        %1968 = vmatprep.subr.bf16.mxu0 0
        %1969 = vmatpush1.bf16.msra.mxu0 0
        %1970 = vmatprep.subr.bf16.mxu0 0
        %1971 = vmatpush1.bf16.msra.mxu0 0
        %1972 = vmatprep.mubr.bf16.mxu0 0
        %1973 = vmatmul.mubr.bf16.gmra.mrb[0].mxu0 %v1914
        %v1974 = vpop.f32.mrb[0].mxu0
        %v1975 = vadd.f32 0.0, %v1974
        %v1976 = vpop.f32.mrb[0].mxu0
        %v1977 = vpop.f32.mrb[0].mxu0
        %v1978 = vadd.f32 0.0, %v1977
        %v1979 = vpop.f32.mrb[0].mxu0
        %1980 = vmatprep.mubr.bf16.mxu0 0
        %1981 = vmatmul.mubr.bf16.gmra.mrb[0].mxu0 %v1917
        %v1982 = vpop.f32.mrb[0].mxu0
        %v1983 = vadd.f32 0.0, %v1982
        %v1984 = vpop.f32.mrb[0].mxu0
        %v1985 = vpop.f32.mrb[0].mxu0
        %v1986 = vadd.f32 0.0, %v1985
        %v1987 = vpop.f32.mrb[0].mxu0
        %1988 = vmatprep.mubr.bf16.mxu0 0
        %1989 = vmatmul.mubr.bf16.gmra.mrb[0].mxu0 %v1920
        %v1990 = vpop.f32.mrb[0].mxu0
        %v1991 = vadd.f32 0.0, %v1990
        %v1992 = vpop.f32.mrb[0].mxu0
        %v1993 = vpop.f32.mrb[0].mxu0
        %v1994 = vadd.f32 0.0, %v1993
        %v1995 = vpop.f32.mrb[0].mxu0
        %1996 = vmatprep.mubr.bf16.mxu0 0
        %1997 = vmatmul.mubr.bf16.gmra.mrb[0].mxu0 %v1923
        %v1998 = vpop.f32.mrb[0].mxu0
        %v1999 = vadd.f32 0.0, %v1998
        %v2000 = vpop.f32.mrb[0].mxu0
        %v2001 = vpop.f32.mrb[0].mxu0
        %v2002 = vadd.f32 0.0, %v2001
        %v2003 = vpop.f32.mrb[0].mxu0
        %2004 = vmatprep.mubr.bf16.mxu0 0
        %2005 = vmatmul.mubr.bf16.gmra.mrb[0].mxu0 %v1926
        %v2006 = vpop.f32.mrb[0].mxu0
        %v2007 = vadd.f32 0.0, %v2006
        %v2008 = vpop.f32.mrb[0].mxu0
        %v2009 = vpop.f32.mrb[0].mxu0
        %v2010 = vadd.f32 0.0, %v2009
        %v2011 = vpop.f32.mrb[0].mxu0
        %2012 = vmatprep.mubr.bf16.mxu0 0
        %2013 = vmatmul.mubr.bf16.gmra.mrb[0].mxu0 %v1929
        %v2014 = vpop.f32.mrb[0].mxu0
        %v2015 = vadd.f32 0.0, %v2014
        %v2016 = vpop.f32.mrb[0].mxu0
        %v2017 = vpop.f32.mrb[0].mxu0
        %v2018 = vadd.f32 0.0, %v2017
        %v2019 = vpop.f32.mrb[0].mxu0
        %2020 = vmatprep.mubr.bf16.mxu0 0
        %2021 = vmatmul.mubr.bf16.gmra.mrb[0].mxu0 %v1932
        %v2022 = vpop.f32.mrb[0].mxu0
        %v2023 = vadd.f32 0.0, %v2022
        %v2024 = vpop.f32.mrb[0].mxu0
        %v2025 = vpop.f32.mrb[0].mxu0
        %v2026 = vadd.f32 0.0, %v2025
        %v2027 = vpop.f32.mrb[0].mxu0
        %2028 = vmatprep.mubr.bf16.mxu0 0
        %2029 = vmatmul.mubr.bf16.gmra.mrb[0].mxu0 %v1935
        %v2030 = vpop.f32.mrb[0].mxu0
        %v2031 = vadd.f32 0.0, %v2030
        %v2032 = vpop.f32.mrb[0].mxu0
        %v2033 = vpop.f32.mrb[0].mxu0
        %v2034 = vadd.f32 0.0, %v2033
        %v2035 = vpop.f32.mrb[0].mxu0
        %2036 = vdwg.mxu0
        %v2037 = vadd.f32 %v1709, %v1975
        %v2038 = vadd.f32 %v1710, %v1978
        %v2039 = vadd.f32 %v1711, %v1983
        %v2040 = vadd.f32 %v1712, %v1986
        %v2041 = vadd.f32 %v1713, %v1991
        %v2042 = vadd.f32 %v1714, %v1994
        %v2043 = vadd.f32 %v1715, %v1999
        %v2044 = vadd.f32 %v1716, %v2002
        %v2045 = vadd.f32 %v1717, %v2007
        %v2046 = vadd.f32 %v1718, %v2010
        %v2047 = vadd.f32 %v1719, %v2015
        %v2048 = vadd.f32 %v1720, %v2018
        %v2049 = vadd.f32 %v1721, %v2023
        %v2050 = vadd.f32 %v1722, %v2026
        %v2051 = vadd.f32 %v1723, %v2031
        %v2052 = vadd.f32 %v1724, %v2034
        %s2053 = scalar_lea.vmem %s1, 320
        %v2054 = vld [vmem:[%s2053] sm:$0xf]
        %v2055 = vld [vmem:[%s2053 + $0x4] sm:$0xf]
        %v2056 = vld [vmem:[%s2053 + $0x8] sm:$0xf]
        %v2057 = vld [vmem:[%s2053 + $0xc] sm:$0xf]
        %v2058 = vld [vmem:[%s2053 + $0x10] sm:$0xf]
        %v2059 = vld [vmem:[%s2053 + $0x14] sm:$0xf]
        %v2060 = vld [vmem:[%s2053 + $0x18] sm:$0xf]
        %v2061 = vld [vmem:[%s2053 + $0x1c] sm:$0xf]
        %v2062 = vld [vmem:[%s2053 + $0x20] sm:$0xf]
        %v2063 = vld [vmem:[%s2053 + $0x24] sm:$0xf]
        %v2064 = vld [vmem:[%s2053 + $0x28] sm:$0xf]
        %v2065 = vld [vmem:[%s2053 + $0x2c] sm:$0xf]
        %v2066 = vld [vmem:[%s2053 + $0x30] sm:$0xf]
        %v2067 = vld [vmem:[%s2053 + $0x34] sm:$0xf]
        %v2068 = vld [vmem:[%s2053 + $0x38] sm:$0xf]
        %v2069 = vld [vmem:[%s2053 + $0x3c] sm:$0xf]
        %v2086 = vunpack.c.l.b16 %v2054
        %v2087 = vunpack.c.l.b16 %v2055
        %v2088 = vunpack.c.l.b16 %v2056
        %v2089 = vunpack.c.l.b16 %v2057
        %v2090 = vunpack.c.l.b16 %v2058
        %v2091 = vunpack.c.l.b16 %v2059
        %v2092 = vunpack.c.l.b16 %v2060
        %v2093 = vunpack.c.l.b16 %v2061
        %v2094 = vunpack.c.l.b16 %v2062
        %v2095 = vunpack.c.l.b16 %v2063
        %v2096 = vunpack.c.l.b16 %v2064
        %v2097 = vunpack.c.l.b16 %v2065
        %v2098 = vunpack.c.l.b16 %v2066
        %v2099 = vunpack.c.l.b16 %v2067
        %v2100 = vunpack.c.l.b16 %v2068
        %v2101 = vunpack.c.l.b16 %v2069
        %v2102 = vpack.c.b16 %v2087, %v2086
        %v2103 = vpack.c.b16 %v2089, %v2088
        %v2104 = vpack.c.b16 %v2091, %v2090
        %v2105 = vpack.c.b16 %v2093, %v2092
        %v2106 = vpack.c.b16 %v2095, %v2094
        %v2107 = vpack.c.b16 %v2097, %v2096
        %v2108 = vpack.c.b16 %v2099, %v2098
        %v2109 = vpack.c.b16 %v2101, %v2100
        %v2111 = vsel %vm461, %v2102, 0
        %v2114 = vsel %vm461, %v2103, 0
        %v2117 = vsel %vm461, %v2104, 0
        %v2120 = vsel %vm461, %v2105, 0
        %v2123 = vsel %vm461, %v2106, 0
        %v2126 = vsel %vm461, %v2107, 0
        %v2129 = vsel %vm461, %v2108, 0
        %v2132 = vsel %vm461, %v2109, 0
        %2134 = vmatprep.subr.bf16.mxu0 0
        %2135 = vmatpush1.bf16.msra.mxu0 %v448
        %2136 = vmatprep.subr.bf16.mxu0 0
        %2137 = vmatpush1.bf16.msra.mxu0 %v449
        %2138 = vmatprep.subr.bf16.mxu0 0
        %2139 = vmatpush1.bf16.msra.mxu0 %v450
        %2140 = vmatprep.subr.bf16.mxu0 0
        %2141 = vmatpush1.bf16.msra.mxu0 %v451
        %2142 = vmatprep.subr.bf16.mxu0 0
        %2143 = vmatpush1.bf16.msra.mxu0 %v452
        %2144 = vmatprep.subr.bf16.mxu0 0
        %2145 = vmatpush1.bf16.msra.mxu0 %v453
        %2146 = vmatprep.subr.bf16.mxu0 0
        %2147 = vmatpush1.bf16.msra.mxu0 %v488
        %2148 = vmatprep.subr.bf16.mxu0 0
        %2149 = vmatpush1.bf16.msra.mxu0 0
        %2150 = vmatprep.subr.bf16.mxu0 0
        %2151 = vmatpush1.bf16.msra.mxu0 0
        %2152 = vmatprep.subr.bf16.mxu0 0
        %2153 = vmatpush1.bf16.msra.mxu0 0
        %2154 = vmatprep.subr.bf16.mxu0 0
        %2155 = vmatpush1.bf16.msra.mxu0 0
        %2156 = vmatprep.subr.bf16.mxu0 0
        %2157 = vmatpush1.bf16.msra.mxu0 0
        %2158 = vmatprep.subr.bf16.mxu0 0
        %2159 = vmatpush1.bf16.msra.mxu0 0
        %2160 = vmatprep.subr.bf16.mxu0 0
        %2161 = vmatpush1.bf16.msra.mxu0 0
        %2162 = vmatprep.subr.bf16.mxu0 0
        %2163 = vmatpush1.bf16.msra.mxu0 0
        %2164 = vmatprep.subr.bf16.mxu0 0
        %2165 = vmatpush1.bf16.msra.mxu0 0
        %2166 = vmatprep.mubr.bf16.mxu0 0
        %2167 = vmatmul.mubr.bf16.gmra.mrb[0].mxu0 %v2111
        %v2168 = vpop.f32.mrb[0].mxu0
        %v2169 = vadd.f32 0.0, %v2168
        %v2170 = vpop.f32.mrb[0].mxu0
        %v2171 = vpop.f32.mrb[0].mxu0
        %v2172 = vadd.f32 0.0, %v2171
        %v2173 = vpop.f32.mrb[0].mxu0
        %2174 = vmatprep.mubr.bf16.mxu0 0
        %2175 = vmatmul.mubr.bf16.gmra.mrb[0].mxu0 %v2114
        %v2176 = vpop.f32.mrb[0].mxu0
        %v2177 = vadd.f32 0.0, %v2176
        %v2178 = vpop.f32.mrb[0].mxu0
        %v2179 = vpop.f32.mrb[0].mxu0
        %v2180 = vadd.f32 0.0, %v2179
        %v2181 = vpop.f32.mrb[0].mxu0
        %2182 = vmatprep.mubr.bf16.mxu0 0
        %2183 = vmatmul.mubr.bf16.gmra.mrb[0].mxu0 %v2117
        %v2184 = vpop.f32.mrb[0].mxu0
        %v2185 = vadd.f32 0.0, %v2184
        %v2186 = vpop.f32.mrb[0].mxu0
        %v2187 = vpop.f32.mrb[0].mxu0
        %v2188 = vadd.f32 0.0, %v2187
        %v2189 = vpop.f32.mrb[0].mxu0
        %2190 = vmatprep.mubr.bf16.mxu0 0
        %2191 = vmatmul.mubr.bf16.gmra.mrb[0].mxu0 %v2120
        %v2192 = vpop.f32.mrb[0].mxu0
        %v2193 = vadd.f32 0.0, %v2192
        %v2194 = vpop.f32.mrb[0].mxu0
        %v2195 = vpop.f32.mrb[0].mxu0
        %v2196 = vadd.f32 0.0, %v2195
        %v2197 = vpop.f32.mrb[0].mxu0
        %2198 = vmatprep.mubr.bf16.mxu0 0
        %2199 = vmatmul.mubr.bf16.gmra.mrb[0].mxu0 %v2123
        %v2200 = vpop.f32.mrb[0].mxu0
        %v2201 = vadd.f32 0.0, %v2200
        %v2202 = vpop.f32.mrb[0].mxu0
        %v2203 = vpop.f32.mrb[0].mxu0
        %v2204 = vadd.f32 0.0, %v2203
        %v2205 = vpop.f32.mrb[0].mxu0
        %2206 = vmatprep.mubr.bf16.mxu0 0
        %2207 = vmatmul.mubr.bf16.gmra.mrb[0].mxu0 %v2126
        %v2208 = vpop.f32.mrb[0].mxu0
        %v2209 = vadd.f32 0.0, %v2208
        %v2210 = vpop.f32.mrb[0].mxu0
        %v2211 = vpop.f32.mrb[0].mxu0
        %v2212 = vadd.f32 0.0, %v2211
        %v2213 = vpop.f32.mrb[0].mxu0
        %2214 = vmatprep.mubr.bf16.mxu0 0
        %2215 = vmatmul.mubr.bf16.gmra.mrb[0].mxu0 %v2129
        %v2216 = vpop.f32.mrb[0].mxu0
        %v2217 = vadd.f32 0.0, %v2216
        %v2218 = vpop.f32.mrb[0].mxu0
        %v2219 = vpop.f32.mrb[0].mxu0
        %v2220 = vadd.f32 0.0, %v2219
        %v2221 = vpop.f32.mrb[0].mxu0
        %2222 = vmatprep.mubr.bf16.mxu0 0
        %2223 = vmatmul.mubr.bf16.gmra.mrb[0].mxu0 %v2132
        %v2224 = vpop.f32.mrb[0].mxu0
        %v2225 = vadd.f32 0.0, %v2224
        %v2226 = vpop.f32.mrb[0].mxu0
        %v2227 = vpop.f32.mrb[0].mxu0
        %v2228 = vadd.f32 0.0, %v2227
        %v2229 = vpop.f32.mrb[0].mxu0
        %2230 = vdwg.mxu0
        %v2231 = vpack.c.bf16 %v2172, %v2169
        %v2232 = vpack.c.bf16 %v2180, %v2177
        %v2233 = vpack.c.bf16 %v2188, %v2185
        %v2234 = vpack.c.bf16 %v2196, %v2193
        %v2235 = vpack.c.bf16 %v2204, %v2201
        %v2236 = vpack.c.bf16 %v2212, %v2209
        %v2237 = vpack.c.bf16 %v2220, %v2217
        %v2238 = vpack.c.bf16 %v2228, %v2225
        %s2239 = scalar_lea.vmem %s2, 10
        %v2240 = vld [vmem:[%s2239] sm:$0x3]
        %v2242 = vsel %vm596, %v2231, 0
        %v2245 = vsel %vm596, %v2232, 0
        %v2248 = vsel %vm596, %v2233, 0
        %v2251 = vsel %vm596, %v2234, 0
        %v2254 = vsel %vm596, %v2235, 0
        %v2257 = vsel %vm596, %v2236, 0
        %v2260 = vsel %vm596, %v2237, 0
        %v2263 = vsel %vm596, %v2238, 0
        %v2266 = vand.u32 %v2240, %v624
        %2268 = vmatprep.subr.bf16.mxu0 0
        %2269 = vmatpush1.bf16.msra.mxu0 %v2266
        %2270 = vmatprep.subr.bf16.mxu0 0
        %2271 = vmatpush1.bf16.msra.mxu0 0
        %2272 = vmatprep.subr.bf16.mxu0 0
        %2273 = vmatpush1.bf16.msra.mxu0 0
        %2274 = vmatprep.subr.bf16.mxu0 0
        %2275 = vmatpush1.bf16.msra.mxu0 0
        %2276 = vmatprep.subr.bf16.mxu0 0
        %2277 = vmatpush1.bf16.msra.mxu0 0
        %2278 = vmatprep.subr.bf16.mxu0 0
        %2279 = vmatpush1.bf16.msra.mxu0 0
        %2280 = vmatprep.subr.bf16.mxu0 0
        %2281 = vmatpush1.bf16.msra.mxu0 0
        %2282 = vmatprep.subr.bf16.mxu0 0
        %2283 = vmatpush1.bf16.msra.mxu0 0
        %2284 = vmatprep.subr.bf16.mxu0 0
        %2285 = vmatpush1.bf16.msra.mxu0 0
        %2286 = vmatprep.subr.bf16.mxu0 0
        %2287 = vmatpush1.bf16.msra.mxu0 0
        %2288 = vmatprep.subr.bf16.mxu0 0
        %2289 = vmatpush1.bf16.msra.mxu0 0
        %2290 = vmatprep.subr.bf16.mxu0 0
        %2291 = vmatpush1.bf16.msra.mxu0 0
        %2292 = vmatprep.subr.bf16.mxu0 0
        %2293 = vmatpush1.bf16.msra.mxu0 0
        %2294 = vmatprep.subr.bf16.mxu0 0
        %2295 = vmatpush1.bf16.msra.mxu0 0
        %2296 = vmatprep.subr.bf16.mxu0 0
        %2297 = vmatpush1.bf16.msra.mxu0 0
        %2298 = vmatprep.subr.bf16.mxu0 0
        %2299 = vmatpush1.bf16.msra.mxu0 0
        %2300 = vmatprep.mubr.bf16.mxu0 0
        %2301 = vmatmul.mubr.bf16.gmra.mrb[0].mxu0 %v2242
        %v2302 = vpop.f32.mrb[0].mxu0
        %v2303 = vadd.f32 0.0, %v2302
        %v2304 = vpop.f32.mrb[0].mxu0
        %v2305 = vpop.f32.mrb[0].mxu0
        %v2306 = vadd.f32 0.0, %v2305
        %v2307 = vpop.f32.mrb[0].mxu0
        %2308 = vmatprep.mubr.bf16.mxu0 0
        %2309 = vmatmul.mubr.bf16.gmra.mrb[0].mxu0 %v2245
        %v2310 = vpop.f32.mrb[0].mxu0
        %v2311 = vadd.f32 0.0, %v2310
        %v2312 = vpop.f32.mrb[0].mxu0
        %v2313 = vpop.f32.mrb[0].mxu0
        %v2314 = vadd.f32 0.0, %v2313
        %v2315 = vpop.f32.mrb[0].mxu0
        %2316 = vmatprep.mubr.bf16.mxu0 0
        %2317 = vmatmul.mubr.bf16.gmra.mrb[0].mxu0 %v2248
        %v2318 = vpop.f32.mrb[0].mxu0
        %v2319 = vadd.f32 0.0, %v2318
        %v2320 = vpop.f32.mrb[0].mxu0
        %v2321 = vpop.f32.mrb[0].mxu0
        %v2322 = vadd.f32 0.0, %v2321
        %v2323 = vpop.f32.mrb[0].mxu0
        %2324 = vmatprep.mubr.bf16.mxu0 0
        %2325 = vmatmul.mubr.bf16.gmra.mrb[0].mxu0 %v2251
        %v2326 = vpop.f32.mrb[0].mxu0
        %v2327 = vadd.f32 0.0, %v2326
        %v2328 = vpop.f32.mrb[0].mxu0
        %v2329 = vpop.f32.mrb[0].mxu0
        %v2330 = vadd.f32 0.0, %v2329
        %v2331 = vpop.f32.mrb[0].mxu0
        %2332 = vmatprep.mubr.bf16.mxu0 0
        %2333 = vmatmul.mubr.bf16.gmra.mrb[0].mxu0 %v2254
        %v2334 = vpop.f32.mrb[0].mxu0
        %v2335 = vadd.f32 0.0, %v2334
        %v2336 = vpop.f32.mrb[0].mxu0
        %v2337 = vpop.f32.mrb[0].mxu0
        %v2338 = vadd.f32 0.0, %v2337
        %v2339 = vpop.f32.mrb[0].mxu0
        %2340 = vmatprep.mubr.bf16.mxu0 0
        %2341 = vmatmul.mubr.bf16.gmra.mrb[0].mxu0 %v2257
        %v2342 = vpop.f32.mrb[0].mxu0
        %v2343 = vadd.f32 0.0, %v2342
        %v2344 = vpop.f32.mrb[0].mxu0
        %v2345 = vpop.f32.mrb[0].mxu0
        %v2346 = vadd.f32 0.0, %v2345
        %v2347 = vpop.f32.mrb[0].mxu0
        %2348 = vmatprep.mubr.bf16.mxu0 0
        %2349 = vmatmul.mubr.bf16.gmra.mrb[0].mxu0 %v2260
        %v2350 = vpop.f32.mrb[0].mxu0
        %v2351 = vadd.f32 0.0, %v2350
        %v2352 = vpop.f32.mrb[0].mxu0
        %v2353 = vpop.f32.mrb[0].mxu0
        %v2354 = vadd.f32 0.0, %v2353
        %v2355 = vpop.f32.mrb[0].mxu0
        %2356 = vmatprep.mubr.bf16.mxu0 0
        %2357 = vmatmul.mubr.bf16.gmra.mrb[0].mxu0 %v2263
        %v2358 = vpop.f32.mrb[0].mxu0
        %v2359 = vadd.f32 0.0, %v2358
        %v2360 = vpop.f32.mrb[0].mxu0
        %v2361 = vpop.f32.mrb[0].mxu0
        %v2362 = vadd.f32 0.0, %v2361
        %v2363 = vpop.f32.mrb[0].mxu0
        %2364 = vdwg.mxu0
        %v2365 = vadd.f32 %v2037, %v2303
        %v2366 = vadd.f32 %v2038, %v2306
        %v2367 = vadd.f32 %v2039, %v2311
        %v2368 = vadd.f32 %v2040, %v2314
        %v2369 = vadd.f32 %v2041, %v2319
        %v2370 = vadd.f32 %v2042, %v2322
        %v2371 = vadd.f32 %v2043, %v2327
        %v2372 = vadd.f32 %v2044, %v2330
        %v2373 = vadd.f32 %v2045, %v2335
        %v2374 = vadd.f32 %v2046, %v2338
        %v2375 = vadd.f32 %v2047, %v2343
        %v2376 = vadd.f32 %v2048, %v2346
        %v2377 = vadd.f32 %v2049, %v2351
        %v2378 = vadd.f32 %v2050, %v2354
        %v2379 = vadd.f32 %v2051, %v2359
        %v2380 = vadd.f32 %v2052, %v2362
        %s2381 = scalar_lea.vmem %s1, 384
        %v2382 = vld [vmem:[%s2381] sm:$0xf]
        %v2383 = vld [vmem:[%s2381 + $0x4] sm:$0xf]
        %v2384 = vld [vmem:[%s2381 + $0x8] sm:$0xf]
        %v2385 = vld [vmem:[%s2381 + $0xc] sm:$0xf]
        %v2386 = vld [vmem:[%s2381 + $0x10] sm:$0xf]
        %v2387 = vld [vmem:[%s2381 + $0x14] sm:$0xf]
        %v2388 = vld [vmem:[%s2381 + $0x18] sm:$0xf]
        %v2389 = vld [vmem:[%s2381 + $0x1c] sm:$0xf]
        %v2390 = vld [vmem:[%s2381 + $0x20] sm:$0xf]
        %v2391 = vld [vmem:[%s2381 + $0x24] sm:$0xf]
        %v2392 = vld [vmem:[%s2381 + $0x28] sm:$0xf]
        %v2393 = vld [vmem:[%s2381 + $0x2c] sm:$0xf]
        %v2394 = vld [vmem:[%s2381 + $0x30] sm:$0xf]
        %v2395 = vld [vmem:[%s2381 + $0x34] sm:$0xf]
        %v2396 = vld [vmem:[%s2381 + $0x38] sm:$0xf]
        %v2397 = vld [vmem:[%s2381 + $0x3c] sm:$0xf]
        %v2414 = vunpack.c.l.b16 %v2382
        %v2415 = vunpack.c.l.b16 %v2383
        %v2416 = vunpack.c.l.b16 %v2384
        %v2417 = vunpack.c.l.b16 %v2385
        %v2418 = vunpack.c.l.b16 %v2386
        %v2419 = vunpack.c.l.b16 %v2387
        %v2420 = vunpack.c.l.b16 %v2388
        %v2421 = vunpack.c.l.b16 %v2389
        %v2422 = vunpack.c.l.b16 %v2390
        %v2423 = vunpack.c.l.b16 %v2391
        %v2424 = vunpack.c.l.b16 %v2392
        %v2425 = vunpack.c.l.b16 %v2393
        %v2426 = vunpack.c.l.b16 %v2394
        %v2427 = vunpack.c.l.b16 %v2395
        %v2428 = vunpack.c.l.b16 %v2396
        %v2429 = vunpack.c.l.b16 %v2397
        %v2430 = vpack.c.b16 %v2415, %v2414
        %v2431 = vpack.c.b16 %v2417, %v2416
        %v2432 = vpack.c.b16 %v2419, %v2418
        %v2433 = vpack.c.b16 %v2421, %v2420
        %v2434 = vpack.c.b16 %v2423, %v2422
        %v2435 = vpack.c.b16 %v2425, %v2424
        %v2436 = vpack.c.b16 %v2427, %v2426
        %v2437 = vpack.c.b16 %v2429, %v2428
        %v2439 = vsel %vm461, %v2430, 0
        %v2442 = vsel %vm461, %v2431, 0
        %v2445 = vsel %vm461, %v2432, 0
        %v2448 = vsel %vm461, %v2433, 0
        %v2451 = vsel %vm461, %v2434, 0
        %v2454 = vsel %vm461, %v2435, 0
        %v2457 = vsel %vm461, %v2436, 0
        %v2460 = vsel %vm461, %v2437, 0
        %2462 = vmatprep.subr.bf16.mxu0 0
        %2463 = vmatpush1.bf16.msra.mxu0 %v448
        %2464 = vmatprep.subr.bf16.mxu0 0
        %2465 = vmatpush1.bf16.msra.mxu0 %v449
        %2466 = vmatprep.subr.bf16.mxu0 0
        %2467 = vmatpush1.bf16.msra.mxu0 %v450
        %2468 = vmatprep.subr.bf16.mxu0 0
        %2469 = vmatpush1.bf16.msra.mxu0 %v451
        %2470 = vmatprep.subr.bf16.mxu0 0
        %2471 = vmatpush1.bf16.msra.mxu0 %v452
        %2472 = vmatprep.subr.bf16.mxu0 0
        %2473 = vmatpush1.bf16.msra.mxu0 %v453
        %2474 = vmatprep.subr.bf16.mxu0 0
        %2475 = vmatpush1.bf16.msra.mxu0 %v488
        %2476 = vmatprep.subr.bf16.mxu0 0
        %2477 = vmatpush1.bf16.msra.mxu0 0
        %2478 = vmatprep.subr.bf16.mxu0 0
        %2479 = vmatpush1.bf16.msra.mxu0 0
        %2480 = vmatprep.subr.bf16.mxu0 0
        %2481 = vmatpush1.bf16.msra.mxu0 0
        %2482 = vmatprep.subr.bf16.mxu0 0
        %2483 = vmatpush1.bf16.msra.mxu0 0
        %2484 = vmatprep.subr.bf16.mxu0 0
        %2485 = vmatpush1.bf16.msra.mxu0 0
        %2486 = vmatprep.subr.bf16.mxu0 0
        %2487 = vmatpush1.bf16.msra.mxu0 0
        %2488 = vmatprep.subr.bf16.mxu0 0
        %2489 = vmatpush1.bf16.msra.mxu0 0
        %2490 = vmatprep.subr.bf16.mxu0 0
        %2491 = vmatpush1.bf16.msra.mxu0 0
        %2492 = vmatprep.subr.bf16.mxu0 0
        %2493 = vmatpush1.bf16.msra.mxu0 0
        %2494 = vmatprep.mubr.bf16.mxu0 0
        %2495 = vmatmul.mubr.bf16.gmra.mrb[0].mxu0 %v2439
        %v2496 = vpop.f32.mrb[0].mxu0
        %v2497 = vadd.f32 0.0, %v2496
        %v2498 = vpop.f32.mrb[0].mxu0
        %v2499 = vpop.f32.mrb[0].mxu0
        %v2500 = vadd.f32 0.0, %v2499
        %v2501 = vpop.f32.mrb[0].mxu0
        %2502 = vmatprep.mubr.bf16.mxu0 0
        %2503 = vmatmul.mubr.bf16.gmra.mrb[0].mxu0 %v2442
        %v2504 = vpop.f32.mrb[0].mxu0
        %v2505 = vadd.f32 0.0, %v2504
        %v2506 = vpop.f32.mrb[0].mxu0
        %v2507 = vpop.f32.mrb[0].mxu0
        %v2508 = vadd.f32 0.0, %v2507
        %v2509 = vpop.f32.mrb[0].mxu0
        %2510 = vmatprep.mubr.bf16.mxu0 0
        %2511 = vmatmul.mubr.bf16.gmra.mrb[0].mxu0 %v2445
        %v2512 = vpop.f32.mrb[0].mxu0
        %v2513 = vadd.f32 0.0, %v2512
        %v2514 = vpop.f32.mrb[0].mxu0
        %v2515 = vpop.f32.mrb[0].mxu0
        %v2516 = vadd.f32 0.0, %v2515
        %v2517 = vpop.f32.mrb[0].mxu0
        %2518 = vmatprep.mubr.bf16.mxu0 0
        %2519 = vmatmul.mubr.bf16.gmra.mrb[0].mxu0 %v2448
        %v2520 = vpop.f32.mrb[0].mxu0
        %v2521 = vadd.f32 0.0, %v2520
        %v2522 = vpop.f32.mrb[0].mxu0
        %v2523 = vpop.f32.mrb[0].mxu0
        %v2524 = vadd.f32 0.0, %v2523
        %v2525 = vpop.f32.mrb[0].mxu0
        %2526 = vmatprep.mubr.bf16.mxu0 0
        %2527 = vmatmul.mubr.bf16.gmra.mrb[0].mxu0 %v2451
        %v2528 = vpop.f32.mrb[0].mxu0
        %v2529 = vadd.f32 0.0, %v2528
        %v2530 = vpop.f32.mrb[0].mxu0
        %v2531 = vpop.f32.mrb[0].mxu0
        %v2532 = vadd.f32 0.0, %v2531
        %v2533 = vpop.f32.mrb[0].mxu0
        %2534 = vmatprep.mubr.bf16.mxu0 0
        %2535 = vmatmul.mubr.bf16.gmra.mrb[0].mxu0 %v2454
        %v2536 = vpop.f32.mrb[0].mxu0
        %v2537 = vadd.f32 0.0, %v2536
        %v2538 = vpop.f32.mrb[0].mxu0
        %v2539 = vpop.f32.mrb[0].mxu0
        %v2540 = vadd.f32 0.0, %v2539
        %v2541 = vpop.f32.mrb[0].mxu0
        %2542 = vmatprep.mubr.bf16.mxu0 0
        %2543 = vmatmul.mubr.bf16.gmra.mrb[0].mxu0 %v2457
        %v2544 = vpop.f32.mrb[0].mxu0
        %v2545 = vadd.f32 0.0, %v2544
        %v2546 = vpop.f32.mrb[0].mxu0
        %v2547 = vpop.f32.mrb[0].mxu0
        %v2548 = vadd.f32 0.0, %v2547
        %v2549 = vpop.f32.mrb[0].mxu0
        %2550 = vmatprep.mubr.bf16.mxu0 0
        %2551 = vmatmul.mubr.bf16.gmra.mrb[0].mxu0 %v2460
        %v2552 = vpop.f32.mrb[0].mxu0
        %v2553 = vadd.f32 0.0, %v2552
        %v2554 = vpop.f32.mrb[0].mxu0
        %v2555 = vpop.f32.mrb[0].mxu0
        %v2556 = vadd.f32 0.0, %v2555
        %v2557 = vpop.f32.mrb[0].mxu0
        %2558 = vdwg.mxu0
        %v2559 = vpack.c.bf16 %v2500, %v2497
        %v2560 = vpack.c.bf16 %v2508, %v2505
        %v2561 = vpack.c.bf16 %v2516, %v2513
        %v2562 = vpack.c.bf16 %v2524, %v2521
        %v2563 = vpack.c.bf16 %v2532, %v2529
        %v2564 = vpack.c.bf16 %v2540, %v2537
        %v2565 = vpack.c.bf16 %v2548, %v2545
        %v2566 = vpack.c.bf16 %v2556, %v2553
        %s2567 = scalar_lea.vmem %s2, 12
        %v2568 = vld [vmem:[%s2567] sm:$0x3]
        %v2570 = vsel %vm596, %v2559, 0
        %v2573 = vsel %vm596, %v2560, 0
        %v2576 = vsel %vm596, %v2561, 0
        %v2579 = vsel %vm596, %v2562, 0
        %v2582 = vsel %vm596, %v2563, 0
        %v2585 = vsel %vm596, %v2564, 0
        %v2588 = vsel %vm596, %v2565, 0
        %v2591 = vsel %vm596, %v2566, 0
        %v2594 = vand.u32 %v2568, %v624
        %2596 = vmatprep.subr.bf16.mxu0 0
        %2597 = vmatpush1.bf16.msra.mxu0 %v2594
        %2598 = vmatprep.subr.bf16.mxu0 0
        %2599 = vmatpush1.bf16.msra.mxu0 0
        %2600 = vmatprep.subr.bf16.mxu0 0
        %2601 = vmatpush1.bf16.msra.mxu0 0
        %2602 = vmatprep.subr.bf16.mxu0 0
        %2603 = vmatpush1.bf16.msra.mxu0 0
        %2604 = vmatprep.subr.bf16.mxu0 0
        %2605 = vmatpush1.bf16.msra.mxu0 0
        %2606 = vmatprep.subr.bf16.mxu0 0
        %2607 = vmatpush1.bf16.msra.mxu0 0
        %2608 = vmatprep.subr.bf16.mxu0 0
        %2609 = vmatpush1.bf16.msra.mxu0 0
        %2610 = vmatprep.subr.bf16.mxu0 0
        %2611 = vmatpush1.bf16.msra.mxu0 0
        %2612 = vmatprep.subr.bf16.mxu0 0
        %2613 = vmatpush1.bf16.msra.mxu0 0
        %2614 = vmatprep.subr.bf16.mxu0 0
        %2615 = vmatpush1.bf16.msra.mxu0 0
        %2616 = vmatprep.subr.bf16.mxu0 0
        %2617 = vmatpush1.bf16.msra.mxu0 0
        %2618 = vmatprep.subr.bf16.mxu0 0
        %2619 = vmatpush1.bf16.msra.mxu0 0
        %2620 = vmatprep.subr.bf16.mxu0 0
        %2621 = vmatpush1.bf16.msra.mxu0 0
        %2622 = vmatprep.subr.bf16.mxu0 0
        %2623 = vmatpush1.bf16.msra.mxu0 0
        %2624 = vmatprep.subr.bf16.mxu0 0
        %2625 = vmatpush1.bf16.msra.mxu0 0
        %2626 = vmatprep.subr.bf16.mxu0 0
        %2627 = vmatpush1.bf16.msra.mxu0 0
        %2628 = vmatprep.mubr.bf16.mxu0 0
        %2629 = vmatmul.mubr.bf16.gmra.mrb[0].mxu0 %v2570
        %v2630 = vpop.f32.mrb[0].mxu0
        %v2631 = vadd.f32 0.0, %v2630
        %v2632 = vpop.f32.mrb[0].mxu0
        %v2633 = vpop.f32.mrb[0].mxu0
        %v2634 = vadd.f32 0.0, %v2633
        %v2635 = vpop.f32.mrb[0].mxu0
        %2636 = vmatprep.mubr.bf16.mxu0 0
        %2637 = vmatmul.mubr.bf16.gmra.mrb[0].mxu0 %v2573
        %v2638 = vpop.f32.mrb[0].mxu0
        %v2639 = vadd.f32 0.0, %v2638
        %v2640 = vpop.f32.mrb[0].mxu0
        %v2641 = vpop.f32.mrb[0].mxu0
        %v2642 = vadd.f32 0.0, %v2641
        %v2643 = vpop.f32.mrb[0].mxu0
        %2644 = vmatprep.mubr.bf16.mxu0 0
        %2645 = vmatmul.mubr.bf16.gmra.mrb[0].mxu0 %v2576
        %v2646 = vpop.f32.mrb[0].mxu0
        %v2647 = vadd.f32 0.0, %v2646
        %v2648 = vpop.f32.mrb[0].mxu0
        %v2649 = vpop.f32.mrb[0].mxu0
        %v2650 = vadd.f32 0.0, %v2649
        %v2651 = vpop.f32.mrb[0].mxu0
        %2652 = vmatprep.mubr.bf16.mxu0 0
        %2653 = vmatmul.mubr.bf16.gmra.mrb[0].mxu0 %v2579
        %v2654 = vpop.f32.mrb[0].mxu0
        %v2655 = vadd.f32 0.0, %v2654
        %v2656 = vpop.f32.mrb[0].mxu0
        %v2657 = vpop.f32.mrb[0].mxu0
        %v2658 = vadd.f32 0.0, %v2657
        %v2659 = vpop.f32.mrb[0].mxu0
        %2660 = vmatprep.mubr.bf16.mxu0 0
        %2661 = vmatmul.mubr.bf16.gmra.mrb[0].mxu0 %v2582
        %v2662 = vpop.f32.mrb[0].mxu0
        %v2663 = vadd.f32 0.0, %v2662
        %v2664 = vpop.f32.mrb[0].mxu0
        %v2665 = vpop.f32.mrb[0].mxu0
        %v2666 = vadd.f32 0.0, %v2665
        %v2667 = vpop.f32.mrb[0].mxu0
        %2668 = vmatprep.mubr.bf16.mxu0 0
        %2669 = vmatmul.mubr.bf16.gmra.mrb[0].mxu0 %v2585
        %v2670 = vpop.f32.mrb[0].mxu0
        %v2671 = vadd.f32 0.0, %v2670
        %v2672 = vpop.f32.mrb[0].mxu0
        %v2673 = vpop.f32.mrb[0].mxu0
        %v2674 = vadd.f32 0.0, %v2673
        %v2675 = vpop.f32.mrb[0].mxu0
        %2676 = vmatprep.mubr.bf16.mxu0 0
        %2677 = vmatmul.mubr.bf16.gmra.mrb[0].mxu0 %v2588
        %v2678 = vpop.f32.mrb[0].mxu0
        %v2679 = vadd.f32 0.0, %v2678
        %v2680 = vpop.f32.mrb[0].mxu0
        %v2681 = vpop.f32.mrb[0].mxu0
        %v2682 = vadd.f32 0.0, %v2681
        %v2683 = vpop.f32.mrb[0].mxu0
        %2684 = vmatprep.mubr.bf16.mxu0 0
        %2685 = vmatmul.mubr.bf16.gmra.mrb[0].mxu0 %v2591
        %v2686 = vpop.f32.mrb[0].mxu0
        %v2687 = vadd.f32 0.0, %v2686
        %v2688 = vpop.f32.mrb[0].mxu0
        %v2689 = vpop.f32.mrb[0].mxu0
        %v2690 = vadd.f32 0.0, %v2689
        %v2691 = vpop.f32.mrb[0].mxu0
        %2692 = vdwg.mxu0
        %v2693 = vadd.f32 %v2365, %v2631
        %v2694 = vadd.f32 %v2366, %v2634
        %v2695 = vadd.f32 %v2367, %v2639
        %v2696 = vadd.f32 %v2368, %v2642
        %v2697 = vadd.f32 %v2369, %v2647
        %v2698 = vadd.f32 %v2370, %v2650
        %v2699 = vadd.f32 %v2371, %v2655
        %v2700 = vadd.f32 %v2372, %v2658
        %v2701 = vadd.f32 %v2373, %v2663
        %v2702 = vadd.f32 %v2374, %v2666
        %v2703 = vadd.f32 %v2375, %v2671
        %v2704 = vadd.f32 %v2376, %v2674
        %v2705 = vadd.f32 %v2377, %v2679
        %v2706 = vadd.f32 %v2378, %v2682
        %v2707 = vadd.f32 %v2379, %v2687
        %v2708 = vadd.f32 %v2380, %v2690
        %vm2709 = vcmask 261120
        %2710 = vst.msk [vmem:[#allocation2] sm:$0xff] %vm2709, 0
        %2711 = vst.msk [vmem:[#allocation2 + $0x8] sm:$0xff] %vm2709, 0
        %2712 = vst.msk [vmem:[#allocation2 + $0x10] sm:$0xff] %vm2709, 0
        %2713 = vst.msk [vmem:[#allocation2 + $0x18] sm:$0xff] %vm2709, 0
        %2714 = vst.msk [vmem:[#allocation2 + $0x60] sm:$0xff] %vm2709, 0
        %2715 = vst.msk [vmem:[#allocation2 + $0x68] sm:$0xff] %vm2709, 0
        %2716 = vst.msk [vmem:[#allocation2 + $0x70] sm:$0xff] %vm2709, 0
        %2717 = vst.msk [vmem:[#allocation2 + $0x78] sm:$0xff] %vm2709, 0
        %v2718 = vpack.c.bf16 %v2694, %v2693
        %v2719 = vpack.c.bf16 %v2696, %v2695
        %v2720 = vpack.c.bf16 %v2698, %v2697
        %v2721 = vpack.c.bf16 %v2700, %v2699
        %v2722 = vpack.c.bf16 %v2702, %v2701
        %v2723 = vpack.c.bf16 %v2704, %v2703
        %v2724 = vpack.c.bf16 %v2706, %v2705
        %v2725 = vpack.c.bf16 %v2708, %v2707
        %2726 = vst.msk [vmem:[#allocation2 + $0x20] sm:$0xff] %vm2709, %v2718
        %2727 = vst.msk [vmem:[#allocation2 + $0x28] sm:$0xff] %vm2709, %v2719
        %2728 = vst.msk [vmem:[#allocation2 + $0x30] sm:$0xff] %vm2709, %v2720
        %2729 = vst.msk [vmem:[#allocation2 + $0x38] sm:$0xff] %vm2709, %v2721
        %2730 = vst.msk [vmem:[#allocation2 + $0x40] sm:$0xff] %vm2709, %v2722
        %2731 = vst.msk [vmem:[#allocation2 + $0x48] sm:$0xff] %vm2709, %v2723
        %2732 = vst.msk [vmem:[#allocation2 + $0x50] sm:$0xff] %vm2709, %v2724
        %2733 = vst.msk [vmem:[#allocation2 + $0x58] sm:$0xff] %vm2709, %v2725
        %v2734 = vld [vmem:[#allocation2] sm:$0xff]
        %v2735 = vld [vmem:[#allocation2 + $0x8] sm:$0xff]
        %v2736 = vld [vmem:[#allocation2 + $0x10] sm:$0xff]
        %v2737 = vld [vmem:[#allocation2 + $0x18] sm:$0xff]
        %v2738 = vld [vmem:[#allocation2 + $0x20] sm:$0xff]
        %v2739 = vld [vmem:[#allocation2 + $0x28] sm:$0xff]
        %v2740 = vld [vmem:[#allocation2 + $0x30] sm:$0xff]
        %v2741 = vld [vmem:[#allocation2 + $0x38] sm:$0xff]
        %v2742 = vld [vmem:[%s4] sm:$0xf]
        %v2743 = vld [vmem:[%s4 + $0x4] sm:$0xf]
        %v2744 = vld [vmem:[%s4 + $0x8] sm:$0xf]
        %v2745 = vld [vmem:[%s4 + $0xc] sm:$0xf]
        %v2746 = vld [vmem:[#allocation2 + $0x40] sm:$0xff]
        %s2747 = scalar_lea.vmem %s4, 16
        %v2748 = vld [vmem:[%s2747] sm:$0xf]
        %v2749 = vld [vmem:[%s2747 + $0x4] sm:$0xf]
        %v2750 = vld [vmem:[%s2747 + $0x8] sm:$0xf]
        %v2751 = vld [vmem:[%s2747 + $0xc] sm:$0xf]
        %v2756 = vunpack.c.l.b16 %v2748
        %v2757 = vunpack.c.l.b16 %v2749
        %v2758 = vunpack.c.l.b16 %v2750
        %v2759 = vunpack.c.l.b16 %v2751
        %v2760 = vpack.c.b16 %v2757, %v2756
        %v2761 = vpack.c.b16 %v2759, %v2758
        %v2765 = vsel %vm2709, %v2735, 0
        %v2768 = vsel %vm2709, %v2736, 0
        %v2771 = vsel %vm2709, %v2737, 0
        %v2774 = vsel %vm2709, %v2738, 0
        %v2777 = vsel %vm2709, %v2739, 0
        %v2780 = vsel %vm2709, %v2740, 0
        %v2783 = vsel %vm2709, %v2741, 0
        %v2786 = vsel %vm2709, %v2746, 0
        %2788 = vmatprep.subr.bf16.mxu0 0
        %2789 = vmatpush1.bf16.msra.mxu0 %v2760
        %2790 = vmatprep.subr.bf16.mxu0 0
        %2791 = vmatpush1.bf16.msra.mxu0 %v2761
        %2792 = vmatprep.subr.bf16.mxu0 0
        %2793 = vmatpush1.bf16.msra.mxu0 0
        %2794 = vmatprep.subr.bf16.mxu0 0
        %2795 = vmatpush1.bf16.msra.mxu0 0
        %2796 = vmatprep.subr.bf16.mxu0 0
        %2797 = vmatpush1.bf16.msra.mxu0 0
        %2798 = vmatprep.subr.bf16.mxu0 0
        %2799 = vmatpush1.bf16.msra.mxu0 0
        %2800 = vmatprep.subr.bf16.mxu0 0
        %2801 = vmatpush1.bf16.msra.mxu0 0
        %2802 = vmatprep.subr.bf16.mxu0 0
        %2803 = vmatpush1.bf16.msra.mxu0 0
        %2804 = vmatprep.subr.bf16.mxu0 0
        %2805 = vmatpush1.bf16.msra.mxu0 0
        %2806 = vmatprep.subr.bf16.mxu0 0
        %2807 = vmatpush1.bf16.msra.mxu0 0
        %2808 = vmatprep.subr.bf16.mxu0 0
        %2809 = vmatpush1.bf16.msra.mxu0 0
        %2810 = vmatprep.subr.bf16.mxu0 0
        %2811 = vmatpush1.bf16.msra.mxu0 0
        %2812 = vmatprep.subr.bf16.mxu0 0
        %2813 = vmatpush1.bf16.msra.mxu0 0
        %2814 = vmatprep.subr.bf16.mxu0 0
        %2815 = vmatpush1.bf16.msra.mxu0 0
        %2816 = vmatprep.subr.bf16.mxu0 0
        %2817 = vmatpush1.bf16.msra.mxu0 0
        %2818 = vmatprep.subr.bf16.mxu0 0
        %2819 = vmatpush1.bf16.msra.mxu0 0
        %2820 = vmatprep.mubr.bf16.mxu0 0
        %2821 = vmatmul.mubr.bf16.gmra.mrb[0].mxu0 %v2765
        %v2822 = vpop.f32.mrb[0].mxu0
        %v2823 = vadd.f32 0.0, %v2822
        %v2824 = vpop.f32.mrb[0].mxu0
        %v2825 = vpop.f32.mrb[0].mxu0
        %v2826 = vadd.f32 0.0, %v2825
        %v2827 = vpop.f32.mrb[0].mxu0
        %2828 = vmatprep.mubr.bf16.mxu0 0
        %2829 = vmatmul.mubr.bf16.gmra.mrb[0].mxu0 %v2768
        %v2830 = vpop.f32.mrb[0].mxu0
        %v2831 = vadd.f32 0.0, %v2830
        %v2832 = vpop.f32.mrb[0].mxu0
        %v2833 = vpop.f32.mrb[0].mxu0
        %v2834 = vadd.f32 0.0, %v2833
        %v2835 = vpop.f32.mrb[0].mxu0
        %2836 = vmatprep.mubr.bf16.mxu0 0
        %2837 = vmatmul.mubr.bf16.gmra.mrb[0].mxu0 %v2771
        %v2838 = vpop.f32.mrb[0].mxu0
        %v2839 = vadd.f32 0.0, %v2838
        %v2840 = vpop.f32.mrb[0].mxu0
        %v2841 = vpop.f32.mrb[0].mxu0
        %v2842 = vadd.f32 0.0, %v2841
        %v2843 = vpop.f32.mrb[0].mxu0
        %2844 = vmatprep.mubr.bf16.mxu0 0
        %2845 = vmatmul.mubr.bf16.gmra.mrb[0].mxu0 %v2774
        %v2846 = vpop.f32.mrb[0].mxu0
        %v2847 = vadd.f32 0.0, %v2846
        %v2848 = vpop.f32.mrb[0].mxu0
        %v2849 = vpop.f32.mrb[0].mxu0
        %v2850 = vadd.f32 0.0, %v2849
        %v2851 = vpop.f32.mrb[0].mxu0
        %2852 = vmatprep.mubr.bf16.mxu0 0
        %2853 = vmatmul.mubr.bf16.gmra.mrb[0].mxu0 %v2777
        %v2854 = vpop.f32.mrb[0].mxu0
        %v2855 = vadd.f32 0.0, %v2854
        %v2856 = vpop.f32.mrb[0].mxu0
        %v2857 = vpop.f32.mrb[0].mxu0
        %v2858 = vadd.f32 0.0, %v2857
        %v2859 = vpop.f32.mrb[0].mxu0
        %2860 = vmatprep.mubr.bf16.mxu0 0
        %2861 = vmatmul.mubr.bf16.gmra.mrb[0].mxu0 %v2780
        %v2862 = vpop.f32.mrb[0].mxu0
        %v2863 = vadd.f32 0.0, %v2862
        %v2864 = vpop.f32.mrb[0].mxu0
        %v2865 = vpop.f32.mrb[0].mxu0
        %v2866 = vadd.f32 0.0, %v2865
        %v2867 = vpop.f32.mrb[0].mxu0
        %2868 = vmatprep.mubr.bf16.mxu0 0
        %2869 = vmatmul.mubr.bf16.gmra.mrb[0].mxu0 %v2783
        %v2870 = vpop.f32.mrb[0].mxu0
        %v2871 = vadd.f32 0.0, %v2870
        %v2872 = vpop.f32.mrb[0].mxu0
        %v2873 = vpop.f32.mrb[0].mxu0
        %v2874 = vadd.f32 0.0, %v2873
        %v2875 = vpop.f32.mrb[0].mxu0
        %2876 = vmatprep.mubr.bf16.mxu0 0
        %2877 = vmatmul.mubr.bf16.gmra.mrb[0].mxu0 %v2786
        %v2878 = vpop.f32.mrb[0].mxu0
        %v2879 = vadd.f32 0.0, %v2878
        %v2880 = vpop.f32.mrb[0].mxu0
        %v2881 = vpop.f32.mrb[0].mxu0
        %v2882 = vadd.f32 0.0, %v2881
        %v2883 = vpop.f32.mrb[0].mxu0
        %2884 = vdwg.mxu0
        %v2889 = vunpack.c.l.b16 %v2742
        %v2890 = vunpack.c.l.b16 %v2743
        %v2891 = vunpack.c.l.b16 %v2744
        %v2892 = vunpack.c.l.b16 %v2745
        %v2893 = vpack.c.b16 %v2890, %v2889
        %v2894 = vpack.c.b16 %v2892, %v2891
        %v2898 = vsel %vm2709, %v2734, 0
        %2900 = vmatprep.subr.bf16.mxu0 0
        %2901 = vmatpush1.bf16.msra.mxu0 %v2893
        %2902 = vmatprep.subr.bf16.mxu0 0
        %2903 = vmatpush1.bf16.msra.mxu0 %v2894
        %2904 = vmatprep.subr.bf16.mxu0 0
        %2905 = vmatpush1.bf16.msra.mxu0 0
        %2906 = vmatprep.subr.bf16.mxu0 0
        %2907 = vmatpush1.bf16.msra.mxu0 0
        %2908 = vmatprep.subr.bf16.mxu0 0
        %2909 = vmatpush1.bf16.msra.mxu0 0
        %2910 = vmatprep.subr.bf16.mxu0 0
        %2911 = vmatpush1.bf16.msra.mxu0 0
        %2912 = vmatprep.subr.bf16.mxu0 0
        %2913 = vmatpush1.bf16.msra.mxu0 0
        %2914 = vmatprep.subr.bf16.mxu0 0
        %2915 = vmatpush1.bf16.msra.mxu0 0
        %2916 = vmatprep.subr.bf16.mxu0 0
        %2917 = vmatpush1.bf16.msra.mxu0 0
        %2918 = vmatprep.subr.bf16.mxu0 0
        %2919 = vmatpush1.bf16.msra.mxu0 0
        %2920 = vmatprep.subr.bf16.mxu0 0
        %2921 = vmatpush1.bf16.msra.mxu0 0
        %2922 = vmatprep.subr.bf16.mxu0 0
        %2923 = vmatpush1.bf16.msra.mxu0 0
        %2924 = vmatprep.subr.bf16.mxu0 0
        %2925 = vmatpush1.bf16.msra.mxu0 0
        %2926 = vmatprep.subr.bf16.mxu0 0
        %2927 = vmatpush1.bf16.msra.mxu0 0
        %2928 = vmatprep.subr.bf16.mxu0 0
        %2929 = vmatpush1.bf16.msra.mxu0 0
        %2930 = vmatprep.subr.bf16.mxu0 0
        %2931 = vmatpush1.bf16.msra.mxu0 0
        %2932 = vmatprep.mubr.bf16.mxu0 0
        %2933 = vmatmul.mubr.bf16.gmra.mrb[0].mxu0 %v2898
        %v2934 = vpop.f32.mrb[0].mxu0
        %v2935 = vadd.f32 %v2823, %v2934
        %v2936 = vpop.f32.mrb[0].mxu0
        %v2937 = vpop.f32.mrb[0].mxu0
        %v2938 = vadd.f32 %v2826, %v2937
        %v2939 = vpop.f32.mrb[0].mxu0
        %2940 = vmatprep.mubr.bf16.mxu0 0
        %2941 = vmatmul.mubr.bf16.gmra.mrb[0].mxu0 %v2765
        %v2942 = vpop.f32.mrb[0].mxu0
        %v2943 = vadd.f32 %v2831, %v2942
        %v2944 = vpop.f32.mrb[0].mxu0
        %v2945 = vpop.f32.mrb[0].mxu0
        %v2946 = vadd.f32 %v2834, %v2945
        %v2947 = vpop.f32.mrb[0].mxu0
        %2948 = vmatprep.mubr.bf16.mxu0 0
        %2949 = vmatmul.mubr.bf16.gmra.mrb[0].mxu0 %v2768
        %v2950 = vpop.f32.mrb[0].mxu0
        %v2951 = vadd.f32 %v2839, %v2950
        %v2952 = vpop.f32.mrb[0].mxu0
        %v2953 = vpop.f32.mrb[0].mxu0
        %v2954 = vadd.f32 %v2842, %v2953
        %v2955 = vpop.f32.mrb[0].mxu0
        %2956 = vmatprep.mubr.bf16.mxu0 0
        %2957 = vmatmul.mubr.bf16.gmra.mrb[0].mxu0 %v2771
        %v2958 = vpop.f32.mrb[0].mxu0
        %v2959 = vadd.f32 %v2847, %v2958
        %v2960 = vpop.f32.mrb[0].mxu0
        %v2961 = vpop.f32.mrb[0].mxu0
        %v2962 = vadd.f32 %v2850, %v2961
        %v2963 = vpop.f32.mrb[0].mxu0
        %2964 = vmatprep.mubr.bf16.mxu0 0
        %2965 = vmatmul.mubr.bf16.gmra.mrb[0].mxu0 %v2774
        %v2966 = vpop.f32.mrb[0].mxu0
        %v2967 = vadd.f32 %v2855, %v2966
        %v2968 = vpop.f32.mrb[0].mxu0
        %v2969 = vpop.f32.mrb[0].mxu0
        %v2970 = vadd.f32 %v2858, %v2969
        %v2971 = vpop.f32.mrb[0].mxu0
        %2972 = vmatprep.mubr.bf16.mxu0 0
        %2973 = vmatmul.mubr.bf16.gmra.mrb[0].mxu0 %v2777
        %v2974 = vpop.f32.mrb[0].mxu0
        %v2975 = vadd.f32 %v2863, %v2974
        %v2976 = vpop.f32.mrb[0].mxu0
        %v2977 = vpop.f32.mrb[0].mxu0
        %v2978 = vadd.f32 %v2866, %v2977
        %v2979 = vpop.f32.mrb[0].mxu0
        %2980 = vmatprep.mubr.bf16.mxu0 0
        %2981 = vmatmul.mubr.bf16.gmra.mrb[0].mxu0 %v2780
        %v2982 = vpop.f32.mrb[0].mxu0
        %v2983 = vadd.f32 %v2871, %v2982
        %v2984 = vpop.f32.mrb[0].mxu0
        %v2985 = vpop.f32.mrb[0].mxu0
        %v2986 = vadd.f32 %v2874, %v2985
        %v2987 = vpop.f32.mrb[0].mxu0
        %2988 = vmatprep.mubr.bf16.mxu0 0
        %2989 = vmatmul.mubr.bf16.gmra.mrb[0].mxu0 %v2783
        %v2990 = vpop.f32.mrb[0].mxu0
        %v2991 = vadd.f32 %v2879, %v2990
        %v2992 = vpop.f32.mrb[0].mxu0
        %v2993 = vpop.f32.mrb[0].mxu0
        %v2994 = vadd.f32 %v2882, %v2993
        %v2995 = vpop.f32.mrb[0].mxu0
        %2996 = vdwg.mxu0
        %v2997 = vld [vmem:[#allocation2 + $0x10] sm:$0xff]
        %v2998 = vld [vmem:[#allocation2 + $0x18] sm:$0xff]
        %v2999 = vld [vmem:[#allocation2 + $0x20] sm:$0xff]
        %v3000 = vld [vmem:[#allocation2 + $0x28] sm:$0xff]
        %v3001 = vld [vmem:[#allocation2 + $0x30] sm:$0xff]
        %v3002 = vld [vmem:[#allocation2 + $0x38] sm:$0xff]
        %v3003 = vld [vmem:[#allocation2 + $0x40] sm:$0xff]
        %v3004 = vld [vmem:[#allocation2 + $0x48] sm:$0xff]
        %s3005 = scalar_lea.vmem %s4, 32
        %v3006 = vld [vmem:[%s3005] sm:$0xf]
        %v3007 = vld [vmem:[%s3005 + $0x4] sm:$0xf]
        %v3008 = vld [vmem:[%s3005 + $0x8] sm:$0xf]
        %v3009 = vld [vmem:[%s3005 + $0xc] sm:$0xf]
        %v3014 = vunpack.c.l.b16 %v3006
        %v3015 = vunpack.c.l.b16 %v3007
        %v3016 = vunpack.c.l.b16 %v3008
        %v3017 = vunpack.c.l.b16 %v3009
        %v3018 = vpack.c.b16 %v3015, %v3014
        %v3019 = vpack.c.b16 %v3017, %v3016
        %v3023 = vsel %vm2709, %v2997, 0
        %v3026 = vsel %vm2709, %v2998, 0
        %v3029 = vsel %vm2709, %v2999, 0
        %v3032 = vsel %vm2709, %v3000, 0
        %v3035 = vsel %vm2709, %v3001, 0
        %v3038 = vsel %vm2709, %v3002, 0
        %v3041 = vsel %vm2709, %v3003, 0
        %v3044 = vsel %vm2709, %v3004, 0
        %3046 = vmatprep.subr.bf16.mxu0 0
        %3047 = vmatpush1.bf16.msra.mxu0 %v3018
        %3048 = vmatprep.subr.bf16.mxu0 0
        %3049 = vmatpush1.bf16.msra.mxu0 %v3019
        %3050 = vmatprep.subr.bf16.mxu0 0
        %3051 = vmatpush1.bf16.msra.mxu0 0
        %3052 = vmatprep.subr.bf16.mxu0 0
        %3053 = vmatpush1.bf16.msra.mxu0 0
        %3054 = vmatprep.subr.bf16.mxu0 0
        %3055 = vmatpush1.bf16.msra.mxu0 0
        %3056 = vmatprep.subr.bf16.mxu0 0
        %3057 = vmatpush1.bf16.msra.mxu0 0
        %3058 = vmatprep.subr.bf16.mxu0 0
        %3059 = vmatpush1.bf16.msra.mxu0 0
        %3060 = vmatprep.subr.bf16.mxu0 0
        %3061 = vmatpush1.bf16.msra.mxu0 0
        %3062 = vmatprep.subr.bf16.mxu0 0
        %3063 = vmatpush1.bf16.msra.mxu0 0
        %3064 = vmatprep.subr.bf16.mxu0 0
        %3065 = vmatpush1.bf16.msra.mxu0 0
        %3066 = vmatprep.subr.bf16.mxu0 0
        %3067 = vmatpush1.bf16.msra.mxu0 0
        %3068 = vmatprep.subr.bf16.mxu0 0
        %3069 = vmatpush1.bf16.msra.mxu0 0
        %3070 = vmatprep.subr.bf16.mxu0 0
        %3071 = vmatpush1.bf16.msra.mxu0 0
        %3072 = vmatprep.subr.bf16.mxu0 0
        %3073 = vmatpush1.bf16.msra.mxu0 0
        %3074 = vmatprep.subr.bf16.mxu0 0
        %3075 = vmatpush1.bf16.msra.mxu0 0
        %3076 = vmatprep.subr.bf16.mxu0 0
        %3077 = vmatpush1.bf16.msra.mxu0 0
        %3078 = vmatprep.mubr.bf16.mxu0 0
        %3079 = vmatmul.mubr.bf16.gmra.mrb[0].mxu0 %v3023
        %v3080 = vpop.f32.mrb[0].mxu0
        %v3081 = vadd.f32 0.0, %v3080
        %v3082 = vpop.f32.mrb[0].mxu0
        %v3083 = vpop.f32.mrb[0].mxu0
        %v3084 = vadd.f32 0.0, %v3083
        %v3085 = vpop.f32.mrb[0].mxu0
        %3086 = vmatprep.mubr.bf16.mxu0 0
        %3087 = vmatmul.mubr.bf16.gmra.mrb[0].mxu0 %v3026
        %v3088 = vpop.f32.mrb[0].mxu0
        %v3089 = vadd.f32 0.0, %v3088
        %v3090 = vpop.f32.mrb[0].mxu0
        %v3091 = vpop.f32.mrb[0].mxu0
        %v3092 = vadd.f32 0.0, %v3091
        %v3093 = vpop.f32.mrb[0].mxu0
        %3094 = vmatprep.mubr.bf16.mxu0 0
        %3095 = vmatmul.mubr.bf16.gmra.mrb[0].mxu0 %v3029
        %v3096 = vpop.f32.mrb[0].mxu0
        %v3097 = vadd.f32 0.0, %v3096
        %v3098 = vpop.f32.mrb[0].mxu0
        %v3099 = vpop.f32.mrb[0].mxu0
        %v3100 = vadd.f32 0.0, %v3099
        %v3101 = vpop.f32.mrb[0].mxu0
        %3102 = vmatprep.mubr.bf16.mxu0 0
        %3103 = vmatmul.mubr.bf16.gmra.mrb[0].mxu0 %v3032
        %v3104 = vpop.f32.mrb[0].mxu0
        %v3105 = vadd.f32 0.0, %v3104
        %v3106 = vpop.f32.mrb[0].mxu0
        %v3107 = vpop.f32.mrb[0].mxu0
        %v3108 = vadd.f32 0.0, %v3107
        %v3109 = vpop.f32.mrb[0].mxu0
        %3110 = vmatprep.mubr.bf16.mxu0 0
        %3111 = vmatmul.mubr.bf16.gmra.mrb[0].mxu0 %v3035
        %v3112 = vpop.f32.mrb[0].mxu0
        %v3113 = vadd.f32 0.0, %v3112
        %v3114 = vpop.f32.mrb[0].mxu0
        %v3115 = vpop.f32.mrb[0].mxu0
        %v3116 = vadd.f32 0.0, %v3115
        %v3117 = vpop.f32.mrb[0].mxu0
        %3118 = vmatprep.mubr.bf16.mxu0 0
        %3119 = vmatmul.mubr.bf16.gmra.mrb[0].mxu0 %v3038
        %v3120 = vpop.f32.mrb[0].mxu0
        %v3121 = vadd.f32 0.0, %v3120
        %v3122 = vpop.f32.mrb[0].mxu0
        %v3123 = vpop.f32.mrb[0].mxu0
        %v3124 = vadd.f32 0.0, %v3123
        %v3125 = vpop.f32.mrb[0].mxu0
        %3126 = vmatprep.mubr.bf16.mxu0 0
        %3127 = vmatmul.mubr.bf16.gmra.mrb[0].mxu0 %v3041
        %v3128 = vpop.f32.mrb[0].mxu0
        %v3129 = vadd.f32 0.0, %v3128
        %v3130 = vpop.f32.mrb[0].mxu0
        %v3131 = vpop.f32.mrb[0].mxu0
        %v3132 = vadd.f32 0.0, %v3131
        %v3133 = vpop.f32.mrb[0].mxu0
        %3134 = vmatprep.mubr.bf16.mxu0 0
        %3135 = vmatmul.mubr.bf16.gmra.mrb[0].mxu0 %v3044
        %v3136 = vpop.f32.mrb[0].mxu0
        %v3137 = vadd.f32 0.0, %v3136
        %v3138 = vpop.f32.mrb[0].mxu0
        %v3139 = vpop.f32.mrb[0].mxu0
        %v3140 = vadd.f32 0.0, %v3139
        %v3141 = vpop.f32.mrb[0].mxu0
        %3142 = vdwg.mxu0
        %v3143 = vadd.f32 %v2935, %v3081
        %v3144 = vadd.f32 %v2938, %v3084
        %v3145 = vadd.f32 %v2943, %v3089
        %v3146 = vadd.f32 %v2946, %v3092
        %v3147 = vadd.f32 %v2951, %v3097
        %v3148 = vadd.f32 %v2954, %v3100
        %v3149 = vadd.f32 %v2959, %v3105
        %v3150 = vadd.f32 %v2962, %v3108
        %v3151 = vadd.f32 %v2967, %v3113
        %v3152 = vadd.f32 %v2970, %v3116
        %v3153 = vadd.f32 %v2975, %v3121
        %v3154 = vadd.f32 %v2978, %v3124
        %v3155 = vadd.f32 %v2983, %v3129
        %v3156 = vadd.f32 %v2986, %v3132
        %v3157 = vadd.f32 %v2991, %v3137
        %v3158 = vadd.f32 %v2994, %v3140
        %v3159 = vld [vmem:[#allocation2 + $0x18] sm:$0xff]
        %v3160 = vld [vmem:[#allocation2 + $0x20] sm:$0xff]
        %v3161 = vld [vmem:[#allocation2 + $0x28] sm:$0xff]
        %v3162 = vld [vmem:[#allocation2 + $0x30] sm:$0xff]
        %v3163 = vld [vmem:[#allocation2 + $0x38] sm:$0xff]
        %v3164 = vld [vmem:[#allocation2 + $0x40] sm:$0xff]
        %v3165 = vld [vmem:[#allocation2 + $0x48] sm:$0xff]
        %v3166 = vld [vmem:[#allocation2 + $0x50] sm:$0xff]
        %s3167 = scalar_lea.vmem %s4, 48
        %v3168 = vld [vmem:[%s3167] sm:$0xf]
        %v3169 = vld [vmem:[%s3167 + $0x4] sm:$0xf]
        %v3170 = vld [vmem:[%s3167 + $0x8] sm:$0xf]
        %v3171 = vld [vmem:[%s3167 + $0xc] sm:$0xf]
        %v3176 = vunpack.c.l.b16 %v3168
        %v3177 = vunpack.c.l.b16 %v3169
        %v3178 = vunpack.c.l.b16 %v3170
        %v3179 = vunpack.c.l.b16 %v3171
        %v3180 = vpack.c.b16 %v3177, %v3176
        %v3181 = vpack.c.b16 %v3179, %v3178
        %v3185 = vsel %vm2709, %v3159, 0
        %v3188 = vsel %vm2709, %v3160, 0
        %v3191 = vsel %vm2709, %v3161, 0
        %v3194 = vsel %vm2709, %v3162, 0
        %v3197 = vsel %vm2709, %v3163, 0
        %v3200 = vsel %vm2709, %v3164, 0
        %v3203 = vsel %vm2709, %v3165, 0
        %v3206 = vsel %vm2709, %v3166, 0
        %3208 = vmatprep.subr.bf16.mxu0 0
        %3209 = vmatpush1.bf16.msra.mxu0 %v3180
        %3210 = vmatprep.subr.bf16.mxu0 0
        %3211 = vmatpush1.bf16.msra.mxu0 %v3181
        %3212 = vmatprep.subr.bf16.mxu0 0
        %3213 = vmatpush1.bf16.msra.mxu0 0
        %3214 = vmatprep.subr.bf16.mxu0 0
        %3215 = vmatpush1.bf16.msra.mxu0 0
        %3216 = vmatprep.subr.bf16.mxu0 0
        %3217 = vmatpush1.bf16.msra.mxu0 0
        %3218 = vmatprep.subr.bf16.mxu0 0
        %3219 = vmatpush1.bf16.msra.mxu0 0
        %3220 = vmatprep.subr.bf16.mxu0 0
        %3221 = vmatpush1.bf16.msra.mxu0 0
        %3222 = vmatprep.subr.bf16.mxu0 0
        %3223 = vmatpush1.bf16.msra.mxu0 0
        %3224 = vmatprep.subr.bf16.mxu0 0
        %3225 = vmatpush1.bf16.msra.mxu0 0
        %3226 = vmatprep.subr.bf16.mxu0 0
        %3227 = vmatpush1.bf16.msra.mxu0 0
        %3228 = vmatprep.subr.bf16.mxu0 0
        %3229 = vmatpush1.bf16.msra.mxu0 0
        %3230 = vmatprep.subr.bf16.mxu0 0
        %3231 = vmatpush1.bf16.msra.mxu0 0
        %3232 = vmatprep.subr.bf16.mxu0 0
        %3233 = vmatpush1.bf16.msra.mxu0 0
        %3234 = vmatprep.subr.bf16.mxu0 0
        %3235 = vmatpush1.bf16.msra.mxu0 0
        %3236 = vmatprep.subr.bf16.mxu0 0
        %3237 = vmatpush1.bf16.msra.mxu0 0
        %3238 = vmatprep.subr.bf16.mxu0 0
        %3239 = vmatpush1.bf16.msra.mxu0 0
        %3240 = vmatprep.mubr.bf16.mxu0 0
        %3241 = vmatmul.mubr.bf16.gmra.mrb[0].mxu0 %v3185
        %v3242 = vpop.f32.mrb[0].mxu0
        %v3243 = vadd.f32 0.0, %v3242
        %v3244 = vpop.f32.mrb[0].mxu0
        %v3245 = vpop.f32.mrb[0].mxu0
        %v3246 = vadd.f32 0.0, %v3245
        %v3247 = vpop.f32.mrb[0].mxu0
        %3248 = vmatprep.mubr.bf16.mxu0 0
        %3249 = vmatmul.mubr.bf16.gmra.mrb[0].mxu0 %v3188
        %v3250 = vpop.f32.mrb[0].mxu0
        %v3251 = vadd.f32 0.0, %v3250
        %v3252 = vpop.f32.mrb[0].mxu0
        %v3253 = vpop.f32.mrb[0].mxu0
        %v3254 = vadd.f32 0.0, %v3253
        %v3255 = vpop.f32.mrb[0].mxu0
        %3256 = vmatprep.mubr.bf16.mxu0 0
        %3257 = vmatmul.mubr.bf16.gmra.mrb[0].mxu0 %v3191
        %v3258 = vpop.f32.mrb[0].mxu0
        %v3259 = vadd.f32 0.0, %v3258
        %v3260 = vpop.f32.mrb[0].mxu0
        %v3261 = vpop.f32.mrb[0].mxu0
        %v3262 = vadd.f32 0.0, %v3261
        %v3263 = vpop.f32.mrb[0].mxu0
        %3264 = vmatprep.mubr.bf16.mxu0 0
        %3265 = vmatmul.mubr.bf16.gmra.mrb[0].mxu0 %v3194
        %v3266 = vpop.f32.mrb[0].mxu0
        %v3267 = vadd.f32 0.0, %v3266
        %v3268 = vpop.f32.mrb[0].mxu0
        %v3269 = vpop.f32.mrb[0].mxu0
        %v3270 = vadd.f32 0.0, %v3269
        %v3271 = vpop.f32.mrb[0].mxu0
        %3272 = vmatprep.mubr.bf16.mxu0 0
        %3273 = vmatmul.mubr.bf16.gmra.mrb[0].mxu0 %v3197
        %v3274 = vpop.f32.mrb[0].mxu0
        %v3275 = vadd.f32 0.0, %v3274
        %v3276 = vpop.f32.mrb[0].mxu0
        %v3277 = vpop.f32.mrb[0].mxu0
        %v3278 = vadd.f32 0.0, %v3277
        %v3279 = vpop.f32.mrb[0].mxu0
        %3280 = vmatprep.mubr.bf16.mxu0 0
        %3281 = vmatmul.mubr.bf16.gmra.mrb[0].mxu0 %v3200
        %v3282 = vpop.f32.mrb[0].mxu0
        %v3283 = vadd.f32 0.0, %v3282
        %v3284 = vpop.f32.mrb[0].mxu0
        %v3285 = vpop.f32.mrb[0].mxu0
        %v3286 = vadd.f32 0.0, %v3285
        %v3287 = vpop.f32.mrb[0].mxu0
        %3288 = vmatprep.mubr.bf16.mxu0 0
        %3289 = vmatmul.mubr.bf16.gmra.mrb[0].mxu0 %v3203
        %v3290 = vpop.f32.mrb[0].mxu0
        %v3291 = vadd.f32 0.0, %v3290
        %v3292 = vpop.f32.mrb[0].mxu0
        %v3293 = vpop.f32.mrb[0].mxu0
        %v3294 = vadd.f32 0.0, %v3293
        %v3295 = vpop.f32.mrb[0].mxu0
        %3296 = vmatprep.mubr.bf16.mxu0 0
        %3297 = vmatmul.mubr.bf16.gmra.mrb[0].mxu0 %v3206
        %v3298 = vpop.f32.mrb[0].mxu0
        %v3299 = vadd.f32 0.0, %v3298
        %v3300 = vpop.f32.mrb[0].mxu0
        %v3301 = vpop.f32.mrb[0].mxu0
        %v3302 = vadd.f32 0.0, %v3301
        %v3303 = vpop.f32.mrb[0].mxu0
        %3304 = vdwg.mxu0
        %v3305 = vadd.f32 %v3143, %v3243
        %v3306 = vadd.f32 %v3144, %v3246
        %v3307 = vadd.f32 %v3145, %v3251
        %v3308 = vadd.f32 %v3146, %v3254
        %v3309 = vadd.f32 %v3147, %v3259
        %v3310 = vadd.f32 %v3148, %v3262
        %v3311 = vadd.f32 %v3149, %v3267
        %v3312 = vadd.f32 %v3150, %v3270
        %v3313 = vadd.f32 %v3151, %v3275
        %v3314 = vadd.f32 %v3152, %v3278
        %v3315 = vadd.f32 %v3153, %v3283
        %v3316 = vadd.f32 %v3154, %v3286
        %v3317 = vadd.f32 %v3155, %v3291
        %v3318 = vadd.f32 %v3156, %v3294
        %v3319 = vadd.f32 %v3157, %v3299
        %v3320 = vadd.f32 %v3158, %v3302
        %v3321 = vld [vmem:[#allocation2 + $0x20] sm:$0xff]
        %v3322 = vld [vmem:[#allocation2 + $0x28] sm:$0xff]
        %v3323 = vld [vmem:[#allocation2 + $0x30] sm:$0xff]
        %v3324 = vld [vmem:[#allocation2 + $0x38] sm:$0xff]
        %v3325 = vld [vmem:[#allocation2 + $0x40] sm:$0xff]
        %v3326 = vld [vmem:[#allocation2 + $0x48] sm:$0xff]
        %v3327 = vld [vmem:[#allocation2 + $0x50] sm:$0xff]
        %v3328 = vld [vmem:[#allocation2 + $0x58] sm:$0xff]
        %s3329 = scalar_lea.vmem %s4, 64
        %v3330 = vld [vmem:[%s3329] sm:$0xf]
        %v3331 = vld [vmem:[%s3329 + $0x4] sm:$0xf]
        %v3332 = vld [vmem:[%s3329 + $0x8] sm:$0xf]
        %v3333 = vld [vmem:[%s3329 + $0xc] sm:$0xf]
        %v3338 = vunpack.c.l.b16 %v3330
        %v3339 = vunpack.c.l.b16 %v3331
        %v3340 = vunpack.c.l.b16 %v3332
        %v3341 = vunpack.c.l.b16 %v3333
        %v3342 = vpack.c.b16 %v3339, %v3338
        %v3343 = vpack.c.b16 %v3341, %v3340
        %v3347 = vsel %vm2709, %v3321, 0
        %v3350 = vsel %vm2709, %v3322, 0
        %v3353 = vsel %vm2709, %v3323, 0
        %v3356 = vsel %vm2709, %v3324, 0
        %v3359 = vsel %vm2709, %v3325, 0
        %v3362 = vsel %vm2709, %v3326, 0
        %v3365 = vsel %vm2709, %v3327, 0
        %v3368 = vsel %vm2709, %v3328, 0
        %3370 = vmatprep.subr.bf16.mxu0 0
        %3371 = vmatpush1.bf16.msra.mxu0 %v3342
        %3372 = vmatprep.subr.bf16.mxu0 0
        %3373 = vmatpush1.bf16.msra.mxu0 %v3343
        %3374 = vmatprep.subr.bf16.mxu0 0
        %3375 = vmatpush1.bf16.msra.mxu0 0
        %3376 = vmatprep.subr.bf16.mxu0 0
        %3377 = vmatpush1.bf16.msra.mxu0 0
        %3378 = vmatprep.subr.bf16.mxu0 0
        %3379 = vmatpush1.bf16.msra.mxu0 0
        %3380 = vmatprep.subr.bf16.mxu0 0
        %3381 = vmatpush1.bf16.msra.mxu0 0
        %3382 = vmatprep.subr.bf16.mxu0 0
        %3383 = vmatpush1.bf16.msra.mxu0 0
        %3384 = vmatprep.subr.bf16.mxu0 0
        %3385 = vmatpush1.bf16.msra.mxu0 0
        %3386 = vmatprep.subr.bf16.mxu0 0
        %3387 = vmatpush1.bf16.msra.mxu0 0
        %3388 = vmatprep.subr.bf16.mxu0 0
        %3389 = vmatpush1.bf16.msra.mxu0 0
        %3390 = vmatprep.subr.bf16.mxu0 0
        %3391 = vmatpush1.bf16.msra.mxu0 0
        %3392 = vmatprep.subr.bf16.mxu0 0
        %3393 = vmatpush1.bf16.msra.mxu0 0
        %3394 = vmatprep.subr.bf16.mxu0 0
        %3395 = vmatpush1.bf16.msra.mxu0 0
        %3396 = vmatprep.subr.bf16.mxu0 0
        %3397 = vmatpush1.bf16.msra.mxu0 0
        %3398 = vmatprep.subr.bf16.mxu0 0
        %3399 = vmatpush1.bf16.msra.mxu0 0
        %3400 = vmatprep.subr.bf16.mxu0 0
        %3401 = vmatpush1.bf16.msra.mxu0 0
        %3402 = vmatprep.mubr.bf16.mxu0 0
        %3403 = vmatmul.mubr.bf16.gmra.mrb[0].mxu0 %v3347
        %v3404 = vpop.f32.mrb[0].mxu0
        %v3405 = vadd.f32 0.0, %v3404
        %v3406 = vpop.f32.mrb[0].mxu0
        %v3407 = vpop.f32.mrb[0].mxu0
        %v3408 = vadd.f32 0.0, %v3407
        %v3409 = vpop.f32.mrb[0].mxu0
        %3410 = vmatprep.mubr.bf16.mxu0 0
        %3411 = vmatmul.mubr.bf16.gmra.mrb[0].mxu0 %v3350
        %v3412 = vpop.f32.mrb[0].mxu0
        %v3413 = vadd.f32 0.0, %v3412
        %v3414 = vpop.f32.mrb[0].mxu0
        %v3415 = vpop.f32.mrb[0].mxu0
        %v3416 = vadd.f32 0.0, %v3415
        %v3417 = vpop.f32.mrb[0].mxu0
        %3418 = vmatprep.mubr.bf16.mxu0 0
        %3419 = vmatmul.mubr.bf16.gmra.mrb[0].mxu0 %v3353
        %v3420 = vpop.f32.mrb[0].mxu0
        %v3421 = vadd.f32 0.0, %v3420
        %v3422 = vpop.f32.mrb[0].mxu0
        %v3423 = vpop.f32.mrb[0].mxu0
        %v3424 = vadd.f32 0.0, %v3423
        %v3425 = vpop.f32.mrb[0].mxu0
        %3426 = vmatprep.mubr.bf16.mxu0 0
        %3427 = vmatmul.mubr.bf16.gmra.mrb[0].mxu0 %v3356
        %v3428 = vpop.f32.mrb[0].mxu0
        %v3429 = vadd.f32 0.0, %v3428
        %v3430 = vpop.f32.mrb[0].mxu0
        %v3431 = vpop.f32.mrb[0].mxu0
        %v3432 = vadd.f32 0.0, %v3431
        %v3433 = vpop.f32.mrb[0].mxu0
        %3434 = vmatprep.mubr.bf16.mxu0 0
        %3435 = vmatmul.mubr.bf16.gmra.mrb[0].mxu0 %v3359
        %v3436 = vpop.f32.mrb[0].mxu0
        %v3437 = vadd.f32 0.0, %v3436
        %v3438 = vpop.f32.mrb[0].mxu0
        %v3439 = vpop.f32.mrb[0].mxu0
        %v3440 = vadd.f32 0.0, %v3439
        %v3441 = vpop.f32.mrb[0].mxu0
        %3442 = vmatprep.mubr.bf16.mxu0 0
        %3443 = vmatmul.mubr.bf16.gmra.mrb[0].mxu0 %v3362
        %v3444 = vpop.f32.mrb[0].mxu0
        %v3445 = vadd.f32 0.0, %v3444
        %v3446 = vpop.f32.mrb[0].mxu0
        %v3447 = vpop.f32.mrb[0].mxu0
        %v3448 = vadd.f32 0.0, %v3447
        %v3449 = vpop.f32.mrb[0].mxu0
        %3450 = vmatprep.mubr.bf16.mxu0 0
        %3451 = vmatmul.mubr.bf16.gmra.mrb[0].mxu0 %v3365
        %v3452 = vpop.f32.mrb[0].mxu0
        %v3453 = vadd.f32 0.0, %v3452
        %v3454 = vpop.f32.mrb[0].mxu0
        %v3455 = vpop.f32.mrb[0].mxu0
        %v3456 = vadd.f32 0.0, %v3455
        %v3457 = vpop.f32.mrb[0].mxu0
        %3458 = vmatprep.mubr.bf16.mxu0 0
        %3459 = vmatmul.mubr.bf16.gmra.mrb[0].mxu0 %v3368
        %v3460 = vpop.f32.mrb[0].mxu0
        %v3461 = vadd.f32 0.0, %v3460
        %v3462 = vpop.f32.mrb[0].mxu0
        %v3463 = vpop.f32.mrb[0].mxu0
        %v3464 = vadd.f32 0.0, %v3463
        %v3465 = vpop.f32.mrb[0].mxu0
        %3466 = vdwg.mxu0
        %v3467 = vadd.f32 %v3305, %v3405
        %v3468 = vadd.f32 %v3306, %v3408
        %v3469 = vadd.f32 %v3307, %v3413
        %v3470 = vadd.f32 %v3308, %v3416
        %v3471 = vadd.f32 %v3309, %v3421
        %v3472 = vadd.f32 %v3310, %v3424
        %v3473 = vadd.f32 %v3311, %v3429
        %v3474 = vadd.f32 %v3312, %v3432
        %v3475 = vadd.f32 %v3313, %v3437
        %v3476 = vadd.f32 %v3314, %v3440
        %v3477 = vadd.f32 %v3315, %v3445
        %v3478 = vadd.f32 %v3316, %v3448
        %v3479 = vadd.f32 %v3317, %v3453
        %v3480 = vadd.f32 %v3318, %v3456
        %v3481 = vadd.f32 %v3319, %v3461
        %v3482 = vadd.f32 %v3320, %v3464
        %v3483 = vld [vmem:[#allocation2 + $0x28] sm:$0xff]
        %v3484 = vld [vmem:[#allocation2 + $0x30] sm:$0xff]
        %v3485 = vld [vmem:[#allocation2 + $0x38] sm:$0xff]
        %v3486 = vld [vmem:[#allocation2 + $0x40] sm:$0xff]
        %v3487 = vld [vmem:[#allocation2 + $0x48] sm:$0xff]
        %v3488 = vld [vmem:[#allocation2 + $0x50] sm:$0xff]
        %v3489 = vld [vmem:[#allocation2 + $0x58] sm:$0xff]
        %v3490 = vld [vmem:[#allocation2 + $0x60] sm:$0xff]
        %s3491 = scalar_lea.vmem %s4, 80
        %v3492 = vld [vmem:[%s3491] sm:$0xf]
        %v3493 = vld [vmem:[%s3491 + $0x4] sm:$0xf]
        %v3494 = vld [vmem:[%s3491 + $0x8] sm:$0xf]
        %v3495 = vld [vmem:[%s3491 + $0xc] sm:$0xf]
        %v3500 = vunpack.c.l.b16 %v3492
        %v3501 = vunpack.c.l.b16 %v3493
        %v3502 = vunpack.c.l.b16 %v3494
        %v3503 = vunpack.c.l.b16 %v3495
        %v3504 = vpack.c.b16 %v3501, %v3500
        %v3505 = vpack.c.b16 %v3503, %v3502
        %v3509 = vsel %vm2709, %v3483, 0
        %v3512 = vsel %vm2709, %v3484, 0
        %v3515 = vsel %vm2709, %v3485, 0
        %v3518 = vsel %vm2709, %v3486, 0
        %v3521 = vsel %vm2709, %v3487, 0
        %v3524 = vsel %vm2709, %v3488, 0
        %v3527 = vsel %vm2709, %v3489, 0
        %v3530 = vsel %vm2709, %v3490, 0
        %3532 = vmatprep.subr.bf16.mxu0 0
        %3533 = vmatpush1.bf16.msra.mxu0 %v3504
        %3534 = vmatprep.subr.bf16.mxu0 0
        %3535 = vmatpush1.bf16.msra.mxu0 %v3505
        %3536 = vmatprep.subr.bf16.mxu0 0
        %3537 = vmatpush1.bf16.msra.mxu0 0
        %3538 = vmatprep.subr.bf16.mxu0 0
        %3539 = vmatpush1.bf16.msra.mxu0 0
        %3540 = vmatprep.subr.bf16.mxu0 0
        %3541 = vmatpush1.bf16.msra.mxu0 0
        %3542 = vmatprep.subr.bf16.mxu0 0
        %3543 = vmatpush1.bf16.msra.mxu0 0
        %3544 = vmatprep.subr.bf16.mxu0 0
        %3545 = vmatpush1.bf16.msra.mxu0 0
        %3546 = vmatprep.subr.bf16.mxu0 0
        %3547 = vmatpush1.bf16.msra.mxu0 0
        %3548 = vmatprep.subr.bf16.mxu0 0
        %3549 = vmatpush1.bf16.msra.mxu0 0
        %3550 = vmatprep.subr.bf16.mxu0 0
        %3551 = vmatpush1.bf16.msra.mxu0 0
        %3552 = vmatprep.subr.bf16.mxu0 0
        %3553 = vmatpush1.bf16.msra.mxu0 0
        %3554 = vmatprep.subr.bf16.mxu0 0
        %3555 = vmatpush1.bf16.msra.mxu0 0
        %3556 = vmatprep.subr.bf16.mxu0 0
        %3557 = vmatpush1.bf16.msra.mxu0 0
        %3558 = vmatprep.subr.bf16.mxu0 0
        %3559 = vmatpush1.bf16.msra.mxu0 0
        %3560 = vmatprep.subr.bf16.mxu0 0
        %3561 = vmatpush1.bf16.msra.mxu0 0
        %3562 = vmatprep.subr.bf16.mxu0 0
        %3563 = vmatpush1.bf16.msra.mxu0 0
        %3564 = vmatprep.mubr.bf16.mxu0 0
        %3565 = vmatmul.mubr.bf16.gmra.mrb[0].mxu0 %v3509
        %v3566 = vpop.f32.mrb[0].mxu0
        %v3567 = vadd.f32 0.0, %v3566
        %v3568 = vpop.f32.mrb[0].mxu0
        %v3569 = vpop.f32.mrb[0].mxu0
        %v3570 = vadd.f32 0.0, %v3569
        %v3571 = vpop.f32.mrb[0].mxu0
        %3572 = vmatprep.mubr.bf16.mxu0 0
        %3573 = vmatmul.mubr.bf16.gmra.mrb[0].mxu0 %v3512
        %v3574 = vpop.f32.mrb[0].mxu0
        %v3575 = vadd.f32 0.0, %v3574
        %v3576 = vpop.f32.mrb[0].mxu0
        %v3577 = vpop.f32.mrb[0].mxu0
        %v3578 = vadd.f32 0.0, %v3577
        %v3579 = vpop.f32.mrb[0].mxu0
        %3580 = vmatprep.mubr.bf16.mxu0 0
        %3581 = vmatmul.mubr.bf16.gmra.mrb[0].mxu0 %v3515
        %v3582 = vpop.f32.mrb[0].mxu0
        %v3583 = vadd.f32 0.0, %v3582
        %v3584 = vpop.f32.mrb[0].mxu0
        %v3585 = vpop.f32.mrb[0].mxu0
        %v3586 = vadd.f32 0.0, %v3585
        %v3587 = vpop.f32.mrb[0].mxu0
        %3588 = vmatprep.mubr.bf16.mxu0 0
        %3589 = vmatmul.mubr.bf16.gmra.mrb[0].mxu0 %v3518
        %v3590 = vpop.f32.mrb[0].mxu0
        %v3591 = vadd.f32 0.0, %v3590
        %v3592 = vpop.f32.mrb[0].mxu0
        %v3593 = vpop.f32.mrb[0].mxu0
        %v3594 = vadd.f32 0.0, %v3593
        %v3595 = vpop.f32.mrb[0].mxu0
        %3596 = vmatprep.mubr.bf16.mxu0 0
        %3597 = vmatmul.mubr.bf16.gmra.mrb[0].mxu0 %v3521
        %v3598 = vpop.f32.mrb[0].mxu0
        %v3599 = vadd.f32 0.0, %v3598
        %v3600 = vpop.f32.mrb[0].mxu0
        %v3601 = vpop.f32.mrb[0].mxu0
        %v3602 = vadd.f32 0.0, %v3601
        %v3603 = vpop.f32.mrb[0].mxu0
        %3604 = vmatprep.mubr.bf16.mxu0 0
        %3605 = vmatmul.mubr.bf16.gmra.mrb[0].mxu0 %v3524
        %v3606 = vpop.f32.mrb[0].mxu0
        %v3607 = vadd.f32 0.0, %v3606
        %v3608 = vpop.f32.mrb[0].mxu0
        %v3609 = vpop.f32.mrb[0].mxu0
        %v3610 = vadd.f32 0.0, %v3609
        %v3611 = vpop.f32.mrb[0].mxu0
        %3612 = vmatprep.mubr.bf16.mxu0 0
        %3613 = vmatmul.mubr.bf16.gmra.mrb[0].mxu0 %v3527
        %v3614 = vpop.f32.mrb[0].mxu0
        %v3615 = vadd.f32 0.0, %v3614
        %v3616 = vpop.f32.mrb[0].mxu0
        %v3617 = vpop.f32.mrb[0].mxu0
        %v3618 = vadd.f32 0.0, %v3617
        %v3619 = vpop.f32.mrb[0].mxu0
        %3620 = vmatprep.mubr.bf16.mxu0 0
        %3621 = vmatmul.mubr.bf16.gmra.mrb[0].mxu0 %v3530
        %v3622 = vpop.f32.mrb[0].mxu0
        %v3623 = vadd.f32 0.0, %v3622
        %v3624 = vpop.f32.mrb[0].mxu0
        %v3625 = vpop.f32.mrb[0].mxu0
        %v3626 = vadd.f32 0.0, %v3625
        %v3627 = vpop.f32.mrb[0].mxu0
        %3628 = vdwg.mxu0
        %v3629 = vadd.f32 %v3467, %v3567
        %v3630 = vadd.f32 %v3468, %v3570
        %v3631 = vadd.f32 %v3469, %v3575
        %v3632 = vadd.f32 %v3470, %v3578
        %v3633 = vadd.f32 %v3471, %v3583
        %v3634 = vadd.f32 %v3472, %v3586
        %v3635 = vadd.f32 %v3473, %v3591
        %v3636 = vadd.f32 %v3474, %v3594
        %v3637 = vadd.f32 %v3475, %v3599
        %v3638 = vadd.f32 %v3476, %v3602
        %v3639 = vadd.f32 %v3477, %v3607
        %v3640 = vadd.f32 %v3478, %v3610
        %v3641 = vadd.f32 %v3479, %v3615
        %v3642 = vadd.f32 %v3480, %v3618
        %v3643 = vadd.f32 %v3481, %v3623
        %v3644 = vadd.f32 %v3482, %v3626
        %v3645 = vld [vmem:[#allocation2 + $0x30] sm:$0xff]
        %v3646 = vld [vmem:[#allocation2 + $0x38] sm:$0xff]
        %v3647 = vld [vmem:[#allocation2 + $0x40] sm:$0xff]
        %v3648 = vld [vmem:[#allocation2 + $0x48] sm:$0xff]
        %v3649 = vld [vmem:[#allocation2 + $0x50] sm:$0xff]
        %v3650 = vld [vmem:[#allocation2 + $0x58] sm:$0xff]
        %v3651 = vld [vmem:[#allocation2 + $0x60] sm:$0xff]
        %v3652 = vld [vmem:[#allocation2 + $0x68] sm:$0xff]
        %s3653 = scalar_lea.vmem %s4, 96
        %v3654 = vld [vmem:[%s3653] sm:$0xf]
        %v3655 = vld [vmem:[%s3653 + $0x4] sm:$0xf]
        %v3656 = vld [vmem:[%s3653 + $0x8] sm:$0xf]
        %v3657 = vld [vmem:[%s3653 + $0xc] sm:$0xf]
        %v3662 = vunpack.c.l.b16 %v3654
        %v3663 = vunpack.c.l.b16 %v3655
        %v3664 = vunpack.c.l.b16 %v3656
        %v3665 = vunpack.c.l.b16 %v3657
        %v3666 = vpack.c.b16 %v3663, %v3662
        %v3667 = vpack.c.b16 %v3665, %v3664
        %v3671 = vsel %vm2709, %v3645, 0
        %v3674 = vsel %vm2709, %v3646, 0
        %v3677 = vsel %vm2709, %v3647, 0
        %v3680 = vsel %vm2709, %v3648, 0
        %v3683 = vsel %vm2709, %v3649, 0
        %v3686 = vsel %vm2709, %v3650, 0
        %v3689 = vsel %vm2709, %v3651, 0
        %v3692 = vsel %vm2709, %v3652, 0
        %3694 = vmatprep.subr.bf16.mxu0 0
        %3695 = vmatpush1.bf16.msra.mxu0 %v3666
        %3696 = vmatprep.subr.bf16.mxu0 0
        %3697 = vmatpush1.bf16.msra.mxu0 %v3667
        %3698 = vmatprep.subr.bf16.mxu0 0
        %3699 = vmatpush1.bf16.msra.mxu0 0
        %3700 = vmatprep.subr.bf16.mxu0 0
        %3701 = vmatpush1.bf16.msra.mxu0 0
        %3702 = vmatprep.subr.bf16.mxu0 0
        %3703 = vmatpush1.bf16.msra.mxu0 0
        %3704 = vmatprep.subr.bf16.mxu0 0
        %3705 = vmatpush1.bf16.msra.mxu0 0
        %3706 = vmatprep.subr.bf16.mxu0 0
        %3707 = vmatpush1.bf16.msra.mxu0 0
        %3708 = vmatprep.subr.bf16.mxu0 0
        %3709 = vmatpush1.bf16.msra.mxu0 0
        %3710 = vmatprep.subr.bf16.mxu0 0
        %3711 = vmatpush1.bf16.msra.mxu0 0
        %3712 = vmatprep.subr.bf16.mxu0 0
        %3713 = vmatpush1.bf16.msra.mxu0 0
        %3714 = vmatprep.subr.bf16.mxu0 0
        %3715 = vmatpush1.bf16.msra.mxu0 0
        %3716 = vmatprep.subr.bf16.mxu0 0
        %3717 = vmatpush1.bf16.msra.mxu0 0
        %3718 = vmatprep.subr.bf16.mxu0 0
        %3719 = vmatpush1.bf16.msra.mxu0 0
        %3720 = vmatprep.subr.bf16.mxu0 0
        %3721 = vmatpush1.bf16.msra.mxu0 0
        %3722 = vmatprep.subr.bf16.mxu0 0
        %3723 = vmatpush1.bf16.msra.mxu0 0
        %3724 = vmatprep.subr.bf16.mxu0 0
        %3725 = vmatpush1.bf16.msra.mxu0 0
        %3726 = vmatprep.mubr.bf16.mxu0 0
        %3727 = vmatmul.mubr.bf16.gmra.mrb[0].mxu0 %v3671
        %v3728 = vpop.f32.mrb[0].mxu0
        %v3729 = vadd.f32 0.0, %v3728
        %v3730 = vpop.f32.mrb[0].mxu0
        %v3731 = vpop.f32.mrb[0].mxu0
        %v3732 = vadd.f32 0.0, %v3731
        %v3733 = vpop.f32.mrb[0].mxu0
        %3734 = vmatprep.mubr.bf16.mxu0 0
        %3735 = vmatmul.mubr.bf16.gmra.mrb[0].mxu0 %v3674
        %v3736 = vpop.f32.mrb[0].mxu0
        %v3737 = vadd.f32 0.0, %v3736
        %v3738 = vpop.f32.mrb[0].mxu0
        %v3739 = vpop.f32.mrb[0].mxu0
        %v3740 = vadd.f32 0.0, %v3739
        %v3741 = vpop.f32.mrb[0].mxu0
        %3742 = vmatprep.mubr.bf16.mxu0 0
        %3743 = vmatmul.mubr.bf16.gmra.mrb[0].mxu0 %v3677
        %v3744 = vpop.f32.mrb[0].mxu0
        %v3745 = vadd.f32 0.0, %v3744
        %v3746 = vpop.f32.mrb[0].mxu0
        %v3747 = vpop.f32.mrb[0].mxu0
        %v3748 = vadd.f32 0.0, %v3747
        %v3749 = vpop.f32.mrb[0].mxu0
        %3750 = vmatprep.mubr.bf16.mxu0 0
        %3751 = vmatmul.mubr.bf16.gmra.mrb[0].mxu0 %v3680
        %v3752 = vpop.f32.mrb[0].mxu0
        %v3753 = vadd.f32 0.0, %v3752
        %v3754 = vpop.f32.mrb[0].mxu0
        %v3755 = vpop.f32.mrb[0].mxu0
        %v3756 = vadd.f32 0.0, %v3755
        %v3757 = vpop.f32.mrb[0].mxu0
        %3758 = vmatprep.mubr.bf16.mxu0 0
        %3759 = vmatmul.mubr.bf16.gmra.mrb[0].mxu0 %v3683
        %v3760 = vpop.f32.mrb[0].mxu0
        %v3761 = vadd.f32 0.0, %v3760
        %v3762 = vpop.f32.mrb[0].mxu0
        %v3763 = vpop.f32.mrb[0].mxu0
        %v3764 = vadd.f32 0.0, %v3763
        %v3765 = vpop.f32.mrb[0].mxu0
        %3766 = vmatprep.mubr.bf16.mxu0 0
        %3767 = vmatmul.mubr.bf16.gmra.mrb[0].mxu0 %v3686
        %v3768 = vpop.f32.mrb[0].mxu0
        %v3769 = vadd.f32 0.0, %v3768
        %v3770 = vpop.f32.mrb[0].mxu0
        %v3771 = vpop.f32.mrb[0].mxu0
        %v3772 = vadd.f32 0.0, %v3771
        %v3773 = vpop.f32.mrb[0].mxu0
        %3774 = vmatprep.mubr.bf16.mxu0 0
        %3775 = vmatmul.mubr.bf16.gmra.mrb[0].mxu0 %v3689
        %v3776 = vpop.f32.mrb[0].mxu0
        %v3777 = vadd.f32 0.0, %v3776
        %v3778 = vpop.f32.mrb[0].mxu0
        %v3779 = vpop.f32.mrb[0].mxu0
        %v3780 = vadd.f32 0.0, %v3779
        %v3781 = vpop.f32.mrb[0].mxu0
        %3782 = vmatprep.mubr.bf16.mxu0 0
        %3783 = vmatmul.mubr.bf16.gmra.mrb[0].mxu0 %v3692
        %v3784 = vpop.f32.mrb[0].mxu0
        %v3785 = vadd.f32 0.0, %v3784
        %v3786 = vpop.f32.mrb[0].mxu0
        %v3787 = vpop.f32.mrb[0].mxu0
        %v3788 = vadd.f32 0.0, %v3787
        %v3789 = vpop.f32.mrb[0].mxu0
        %3790 = vdwg.mxu0
        %v3791 = vadd.f32 %v3629, %v3729
        %v3792 = vadd.f32 %v3630, %v3732
        %v3793 = vadd.f32 %v3631, %v3737
        %v3794 = vadd.f32 %v3632, %v3740
        %v3795 = vadd.f32 %v3633, %v3745
        %v3796 = vadd.f32 %v3634, %v3748
        %v3797 = vadd.f32 %v3635, %v3753
        %v3798 = vadd.f32 %v3636, %v3756
        %v3799 = vadd.f32 %v3637, %v3761
        %v3800 = vadd.f32 %v3638, %v3764
        %v3801 = vadd.f32 %v3639, %v3769
        %v3802 = vadd.f32 %v3640, %v3772
        %v3803 = vadd.f32 %v3641, %v3777
        %v3804 = vadd.f32 %v3642, %v3780
        %v3805 = vadd.f32 %v3643, %v3785
        %v3806 = vadd.f32 %v3644, %v3788
        %v3807 = vld [vmem:[#allocation2 + $0x38] sm:$0xff]
        %v3808 = vld [vmem:[#allocation2 + $0x40] sm:$0xff]
        %v3809 = vld [vmem:[#allocation2 + $0x48] sm:$0xff]
        %v3810 = vld [vmem:[#allocation2 + $0x50] sm:$0xff]
        %v3811 = vld [vmem:[#allocation2 + $0x58] sm:$0xff]
        %v3812 = vld [vmem:[#allocation2 + $0x60] sm:$0xff]
        %v3813 = vld [vmem:[#allocation2 + $0x68] sm:$0xff]
        %v3814 = vld [vmem:[#allocation2 + $0x70] sm:$0xff]
        %s3815 = scalar_lea.vmem %s4, 112
        %v3816 = vld [vmem:[%s3815] sm:$0xf]
        %v3817 = vld [vmem:[%s3815 + $0x4] sm:$0xf]
        %v3818 = vld [vmem:[%s3815 + $0x8] sm:$0xf]
        %v3819 = vld [vmem:[%s3815 + $0xc] sm:$0xf]
        %v3824 = vunpack.c.l.b16 %v3816
        %v3825 = vunpack.c.l.b16 %v3817
        %v3826 = vunpack.c.l.b16 %v3818
        %v3827 = vunpack.c.l.b16 %v3819
        %v3828 = vpack.c.b16 %v3825, %v3824
        %v3829 = vpack.c.b16 %v3827, %v3826
        %v3833 = vsel %vm2709, %v3807, 0
        %v3836 = vsel %vm2709, %v3808, 0
        %v3839 = vsel %vm2709, %v3809, 0
        %v3842 = vsel %vm2709, %v3810, 0
        %v3845 = vsel %vm2709, %v3811, 0
        %v3848 = vsel %vm2709, %v3812, 0
        %v3851 = vsel %vm2709, %v3813, 0
        %v3854 = vsel %vm2709, %v3814, 0
        %3856 = vmatprep.subr.bf16.mxu0 0
        %3857 = vmatpush1.bf16.msra.mxu0 %v3828
        %3858 = vmatprep.subr.bf16.mxu0 0
        %3859 = vmatpush1.bf16.msra.mxu0 %v3829
        %3860 = vmatprep.subr.bf16.mxu0 0
        %3861 = vmatpush1.bf16.msra.mxu0 0
        %3862 = vmatprep.subr.bf16.mxu0 0
        %3863 = vmatpush1.bf16.msra.mxu0 0
        %3864 = vmatprep.subr.bf16.mxu0 0
        %3865 = vmatpush1.bf16.msra.mxu0 0
        %3866 = vmatprep.subr.bf16.mxu0 0
        %3867 = vmatpush1.bf16.msra.mxu0 0
        %3868 = vmatprep.subr.bf16.mxu0 0
        %3869 = vmatpush1.bf16.msra.mxu0 0
        %3870 = vmatprep.subr.bf16.mxu0 0
        %3871 = vmatpush1.bf16.msra.mxu0 0
        %3872 = vmatprep.subr.bf16.mxu0 0
        %3873 = vmatpush1.bf16.msra.mxu0 0
        %3874 = vmatprep.subr.bf16.mxu0 0
        %3875 = vmatpush1.bf16.msra.mxu0 0
        %3876 = vmatprep.subr.bf16.mxu0 0
        %3877 = vmatpush1.bf16.msra.mxu0 0
        %3878 = vmatprep.subr.bf16.mxu0 0
        %3879 = vmatpush1.bf16.msra.mxu0 0
        %3880 = vmatprep.subr.bf16.mxu0 0
        %3881 = vmatpush1.bf16.msra.mxu0 0
        %3882 = vmatprep.subr.bf16.mxu0 0
        %3883 = vmatpush1.bf16.msra.mxu0 0
        %3884 = vmatprep.subr.bf16.mxu0 0
        %3885 = vmatpush1.bf16.msra.mxu0 0
        %3886 = vmatprep.subr.bf16.mxu0 0
        %3887 = vmatpush1.bf16.msra.mxu0 0
        %3888 = vmatprep.mubr.bf16.mxu0 0
        %3889 = vmatmul.mubr.bf16.gmra.mrb[0].mxu0 %v3833
        %v3890 = vpop.f32.mrb[0].mxu0
        %v3891 = vadd.f32 0.0, %v3890
        %v3892 = vpop.f32.mrb[0].mxu0
        %v3893 = vpop.f32.mrb[0].mxu0
        %v3894 = vadd.f32 0.0, %v3893
        %v3895 = vpop.f32.mrb[0].mxu0
        %3896 = vmatprep.mubr.bf16.mxu0 0
        %3897 = vmatmul.mubr.bf16.gmra.mrb[0].mxu0 %v3836
        %v3898 = vpop.f32.mrb[0].mxu0
        %v3899 = vadd.f32 0.0, %v3898
        %v3900 = vpop.f32.mrb[0].mxu0
        %v3901 = vpop.f32.mrb[0].mxu0
        %v3902 = vadd.f32 0.0, %v3901
        %v3903 = vpop.f32.mrb[0].mxu0
        %3904 = vmatprep.mubr.bf16.mxu0 0
        %3905 = vmatmul.mubr.bf16.gmra.mrb[0].mxu0 %v3839
        %v3906 = vpop.f32.mrb[0].mxu0
        %v3907 = vadd.f32 0.0, %v3906
        %v3908 = vpop.f32.mrb[0].mxu0
        %v3909 = vpop.f32.mrb[0].mxu0
        %v3910 = vadd.f32 0.0, %v3909
        %v3911 = vpop.f32.mrb[0].mxu0
        %3912 = vmatprep.mubr.bf16.mxu0 0
        %3913 = vmatmul.mubr.bf16.gmra.mrb[0].mxu0 %v3842
        %v3914 = vpop.f32.mrb[0].mxu0
        %v3915 = vadd.f32 0.0, %v3914
        %v3916 = vpop.f32.mrb[0].mxu0
        %v3917 = vpop.f32.mrb[0].mxu0
        %v3918 = vadd.f32 0.0, %v3917
        %v3919 = vpop.f32.mrb[0].mxu0
        %3920 = vmatprep.mubr.bf16.mxu0 0
        %3921 = vmatmul.mubr.bf16.gmra.mrb[0].mxu0 %v3845
        %v3922 = vpop.f32.mrb[0].mxu0
        %v3923 = vadd.f32 0.0, %v3922
        %v3924 = vpop.f32.mrb[0].mxu0
        %v3925 = vpop.f32.mrb[0].mxu0
        %v3926 = vadd.f32 0.0, %v3925
        %v3927 = vpop.f32.mrb[0].mxu0
        %3928 = vmatprep.mubr.bf16.mxu0 0
        %3929 = vmatmul.mubr.bf16.gmra.mrb[0].mxu0 %v3848
        %v3930 = vpop.f32.mrb[0].mxu0
        %v3931 = vadd.f32 0.0, %v3930
        %v3932 = vpop.f32.mrb[0].mxu0
        %v3933 = vpop.f32.mrb[0].mxu0
        %v3934 = vadd.f32 0.0, %v3933
        %v3935 = vpop.f32.mrb[0].mxu0
        %3936 = vmatprep.mubr.bf16.mxu0 0
        %3937 = vmatmul.mubr.bf16.gmra.mrb[0].mxu0 %v3851
        %v3938 = vpop.f32.mrb[0].mxu0
        %v3939 = vadd.f32 0.0, %v3938
        %v3940 = vpop.f32.mrb[0].mxu0
        %v3941 = vpop.f32.mrb[0].mxu0
        %v3942 = vadd.f32 0.0, %v3941
        %v3943 = vpop.f32.mrb[0].mxu0
        %3944 = vmatprep.mubr.bf16.mxu0 0
        %3945 = vmatmul.mubr.bf16.gmra.mrb[0].mxu0 %v3854
        %v3946 = vpop.f32.mrb[0].mxu0
        %v3947 = vadd.f32 0.0, %v3946
        %v3948 = vpop.f32.mrb[0].mxu0
        %v3949 = vpop.f32.mrb[0].mxu0
        %v3950 = vadd.f32 0.0, %v3949
        %v3951 = vpop.f32.mrb[0].mxu0
        %3952 = vdwg.mxu0
        %v3953 = vadd.f32 %v3791, %v3891
        %v3954 = vadd.f32 %v3792, %v3894
        %v3955 = vadd.f32 %v3793, %v3899
        %v3956 = vadd.f32 %v3794, %v3902
        %v3957 = vadd.f32 %v3795, %v3907
        %v3958 = vadd.f32 %v3796, %v3910
        %v3959 = vadd.f32 %v3797, %v3915
        %v3960 = vadd.f32 %v3798, %v3918
        %v3961 = vadd.f32 %v3799, %v3923
        %v3962 = vadd.f32 %v3800, %v3926
        %v3963 = vadd.f32 %v3801, %v3931
        %v3964 = vadd.f32 %v3802, %v3934
        %v3965 = vadd.f32 %v3803, %v3939
        %v3966 = vadd.f32 %v3804, %v3942
        %v3967 = vadd.f32 %v3805, %v3947
        %v3968 = vadd.f32 %v3806, %v3950
        %v3969 = vld [vmem:[#allocation2 + $0x40] sm:$0xff]
        %v3970 = vld [vmem:[#allocation2 + $0x48] sm:$0xff]
        %v3971 = vld [vmem:[#allocation2 + $0x50] sm:$0xff]
        %v3972 = vld [vmem:[#allocation2 + $0x58] sm:$0xff]
        %v3973 = vld [vmem:[#allocation2 + $0x60] sm:$0xff]
        %v3974 = vld [vmem:[#allocation2 + $0x68] sm:$0xff]
        %v3975 = vld [vmem:[#allocation2 + $0x70] sm:$0xff]
        %v3976 = vld [vmem:[#allocation2 + $0x78] sm:$0xff]
        %s3977 = scalar_lea.vmem %s4, 128
        %v3978 = vld [vmem:[%s3977] sm:$0xf]
        %v3979 = vld [vmem:[%s3977 + $0x4] sm:$0xf]
        %v3980 = vld [vmem:[%s3977 + $0x8] sm:$0xf]
        %v3981 = vld [vmem:[%s3977 + $0xc] sm:$0xf]
        %v3986 = vunpack.c.l.b16 %v3978
        %v3987 = vunpack.c.l.b16 %v3979
        %v3988 = vunpack.c.l.b16 %v3980
        %v3989 = vunpack.c.l.b16 %v3981
        %v3990 = vpack.c.b16 %v3987, %v3986
        %v3991 = vpack.c.b16 %v3989, %v3988
        %v3995 = vsel %vm2709, %v3969, 0
        %v3998 = vsel %vm2709, %v3970, 0
        %v4001 = vsel %vm2709, %v3971, 0
        %v4004 = vsel %vm2709, %v3972, 0
        %v4007 = vsel %vm2709, %v3973, 0
        %v4010 = vsel %vm2709, %v3974, 0
        %v4013 = vsel %vm2709, %v3975, 0
        %v4016 = vsel %vm2709, %v3976, 0
        %4018 = vmatprep.subr.bf16.mxu0 0
        %4019 = vmatpush1.bf16.msra.mxu0 %v3990
        %4020 = vmatprep.subr.bf16.mxu0 0
        %4021 = vmatpush1.bf16.msra.mxu0 %v3991
        %4022 = vmatprep.subr.bf16.mxu0 0
        %4023 = vmatpush1.bf16.msra.mxu0 0
        %4024 = vmatprep.subr.bf16.mxu0 0
        %4025 = vmatpush1.bf16.msra.mxu0 0
        %4026 = vmatprep.subr.bf16.mxu0 0
        %4027 = vmatpush1.bf16.msra.mxu0 0
        %4028 = vmatprep.subr.bf16.mxu0 0
        %4029 = vmatpush1.bf16.msra.mxu0 0
        %4030 = vmatprep.subr.bf16.mxu0 0
        %4031 = vmatpush1.bf16.msra.mxu0 0
        %4032 = vmatprep.subr.bf16.mxu0 0
        %4033 = vmatpush1.bf16.msra.mxu0 0
        %4034 = vmatprep.subr.bf16.mxu0 0
        %4035 = vmatpush1.bf16.msra.mxu0 0
        %4036 = vmatprep.subr.bf16.mxu0 0
        %4037 = vmatpush1.bf16.msra.mxu0 0
        %4038 = vmatprep.subr.bf16.mxu0 0
        %4039 = vmatpush1.bf16.msra.mxu0 0
        %4040 = vmatprep.subr.bf16.mxu0 0
        %4041 = vmatpush1.bf16.msra.mxu0 0
        %4042 = vmatprep.subr.bf16.mxu0 0
        %4043 = vmatpush1.bf16.msra.mxu0 0
        %4044 = vmatprep.subr.bf16.mxu0 0
        %4045 = vmatpush1.bf16.msra.mxu0 0
        %4046 = vmatprep.subr.bf16.mxu0 0
        %4047 = vmatpush1.bf16.msra.mxu0 0
        %4048 = vmatprep.subr.bf16.mxu0 0
        %4049 = vmatpush1.bf16.msra.mxu0 0
        %4050 = vmatprep.mubr.bf16.mxu0 0
        %4051 = vmatmul.mubr.bf16.gmra.mrb[0].mxu0 %v3995
        %v4052 = vpop.f32.mrb[0].mxu0
        %v4053 = vadd.f32 0.0, %v4052
        %v4054 = vpop.f32.mrb[0].mxu0
        %v4055 = vpop.f32.mrb[0].mxu0
        %v4056 = vadd.f32 0.0, %v4055
        %v4057 = vpop.f32.mrb[0].mxu0
        %4058 = vmatprep.mubr.bf16.mxu0 0
        %4059 = vmatmul.mubr.bf16.gmra.mrb[0].mxu0 %v3998
        %v4060 = vpop.f32.mrb[0].mxu0
        %v4061 = vadd.f32 0.0, %v4060
        %v4062 = vpop.f32.mrb[0].mxu0
        %v4063 = vpop.f32.mrb[0].mxu0
        %v4064 = vadd.f32 0.0, %v4063
        %v4065 = vpop.f32.mrb[0].mxu0
        %4066 = vmatprep.mubr.bf16.mxu0 0
        %4067 = vmatmul.mubr.bf16.gmra.mrb[0].mxu0 %v4001
        %v4068 = vpop.f32.mrb[0].mxu0
        %v4069 = vadd.f32 0.0, %v4068
        %v4070 = vpop.f32.mrb[0].mxu0
        %v4071 = vpop.f32.mrb[0].mxu0
        %v4072 = vadd.f32 0.0, %v4071
        %v4073 = vpop.f32.mrb[0].mxu0
        %4074 = vmatprep.mubr.bf16.mxu0 0
        %4075 = vmatmul.mubr.bf16.gmra.mrb[0].mxu0 %v4004
        %v4076 = vpop.f32.mrb[0].mxu0
        %v4077 = vadd.f32 0.0, %v4076
        %v4078 = vpop.f32.mrb[0].mxu0
        %v4079 = vpop.f32.mrb[0].mxu0
        %v4080 = vadd.f32 0.0, %v4079
        %v4081 = vpop.f32.mrb[0].mxu0
        %4082 = vmatprep.mubr.bf16.mxu0 0
        %4083 = vmatmul.mubr.bf16.gmra.mrb[0].mxu0 %v4007
        %v4084 = vpop.f32.mrb[0].mxu0
        %v4085 = vadd.f32 0.0, %v4084
        %v4086 = vpop.f32.mrb[0].mxu0
        %v4087 = vpop.f32.mrb[0].mxu0
        %v4088 = vadd.f32 0.0, %v4087
        %v4089 = vpop.f32.mrb[0].mxu0
        %4090 = vmatprep.mubr.bf16.mxu0 0
        %4091 = vmatmul.mubr.bf16.gmra.mrb[0].mxu0 %v4010
        %v4092 = vpop.f32.mrb[0].mxu0
        %v4093 = vadd.f32 0.0, %v4092
        %v4094 = vpop.f32.mrb[0].mxu0
        %v4095 = vpop.f32.mrb[0].mxu0
        %v4096 = vadd.f32 0.0, %v4095
        %v4097 = vpop.f32.mrb[0].mxu0
        %4098 = vmatprep.mubr.bf16.mxu0 0
        %4099 = vmatmul.mubr.bf16.gmra.mrb[0].mxu0 %v4013
        %v4100 = vpop.f32.mrb[0].mxu0
        %v4101 = vadd.f32 0.0, %v4100
        %v4102 = vpop.f32.mrb[0].mxu0
        %v4103 = vpop.f32.mrb[0].mxu0
        %v4104 = vadd.f32 0.0, %v4103
        %v4105 = vpop.f32.mrb[0].mxu0
        %4106 = vmatprep.mubr.bf16.mxu0 0
        %4107 = vmatmul.mubr.bf16.gmra.mrb[0].mxu0 %v4016
        %v4108 = vpop.f32.mrb[0].mxu0
        %v4109 = vadd.f32 0.0, %v4108
        %v4110 = vpop.f32.mrb[0].mxu0
        %v4111 = vpop.f32.mrb[0].mxu0
        %v4112 = vadd.f32 0.0, %v4111
        %v4113 = vpop.f32.mrb[0].mxu0
        %4114 = vdwg.mxu0
        %v4115 = vadd.f32 %v3953, %v4053
        %v4116 = vadd.f32 %v3954, %v4056
        %v4117 = vadd.f32 %v3955, %v4061
        %v4118 = vadd.f32 %v3956, %v4064
        %v4119 = vadd.f32 %v3957, %v4069
        %v4120 = vadd.f32 %v3958, %v4072
        %v4121 = vadd.f32 %v3959, %v4077
        %v4122 = vadd.f32 %v3960, %v4080
        %v4123 = vadd.f32 %v3961, %v4085
        %v4124 = vadd.f32 %v3962, %v4088
        %v4125 = vadd.f32 %v3963, %v4093
        %v4126 = vadd.f32 %v3964, %v4096
        %v4127 = vadd.f32 %v3965, %v4101
        %v4128 = vadd.f32 %v3966, %v4104
        %v4129 = vadd.f32 %v3967, %v4109
        %v4130 = vadd.f32 %v3968, %v4112
        %v4131 = vld [vmem:[%s5] sm:$0x1]
        %v4133 = vlaneseq
        %v4134 = vshrl.u32 %v4133, 7
        %v4135 = vsub.s32 0, %v4134
        %v4136 = vrot.slane %v4131, %v4135
        %v4138 = vadd.f32 %v4115, %v4136
        %v4139 = vadd.f32 %v4116, %v4136
        %v4140 = vadd.f32 %v4117, %v4136
        %v4141 = vadd.f32 %v4118, %v4136
        %v4142 = vadd.f32 %v4119, %v4136
        %v4143 = vadd.f32 %v4120, %v4136
        %v4144 = vadd.f32 %v4121, %v4136
        %v4145 = vadd.f32 %v4122, %v4136
        %v4146 = vadd.f32 %v4123, %v4136
        %v4147 = vadd.f32 %v4124, %v4136
        %v4148 = vadd.f32 %v4125, %v4136
        %v4149 = vadd.f32 %v4126, %v4136
        %v4150 = vadd.f32 %v4127, %v4136
        %v4151 = vadd.f32 %v4128, %v4136
        %v4152 = vadd.f32 %v4129, %v4136
        %v4153 = vadd.f32 %v4130, %v4136
        %v4154 = vmax.f32 %v4138, 0.0
        %v4155 = vmax.f32 %v4139, 0.0
        %v4156 = vmax.f32 %v4140, 0.0
        %v4157 = vmax.f32 %v4141, 0.0
        %v4158 = vmax.f32 %v4142, 0.0
        %v4159 = vmax.f32 %v4143, 0.0
        %v4160 = vmax.f32 %v4144, 0.0
        %v4161 = vmax.f32 %v4145, 0.0
        %v4162 = vmax.f32 %v4146, 0.0
        %v4163 = vmax.f32 %v4147, 0.0
        %v4164 = vmax.f32 %v4148, 0.0
        %v4165 = vmax.f32 %v4149, 0.0
        %v4166 = vmax.f32 %v4150, 0.0
        %v4167 = vmax.f32 %v4151, 0.0
        %v4168 = vmax.f32 %v4152, 0.0
        %v4169 = vmax.f32 %v4153, 0.0
        %v4170 = vld [vmem:[%s6] sm:$0x1]
        %4171 = vmatprep.subr.mxu0 0.0
        %4172 = vmatpush1.msra.mxu0 %v4154
        %4173 = vmatprep.subr.mxu0 0.0
        %4174 = vmatpush1.msra.mxu0 %v4155
        %4175 = vmatprep.subr.mxu0 0.0
        %4176 = vmatpush1.msra.mxu0 %v4156
        %4177 = vmatprep.subr.mxu0 0.0
        %4178 = vmatpush1.msra.mxu0 %v4157
        %4179 = vmatprep.subr.mxu0 0.0
        %4180 = vmatpush1.msra.mxu0 %v4158
        %4181 = vmatprep.subr.mxu0 0.0
        %4182 = vmatpush1.msra.mxu0 %v4159
        %4183 = vmatprep.subr.mxu0 0.0
        %4184 = vmatpush1.msra.mxu0 %v4160
        %4185 = vmatprep.subr.mxu0 0.0
        %4186 = vmatpush1.msra.mxu0 %v4161
        %4187 = vmatprep.subr.mxu0 0.0
        %4188 = vmatpush1.msra.mxu0 %v4162
        %4189 = vmatprep.subr.mxu0 0.0
        %4190 = vmatpush1.msra.mxu0 %v4163
        %4191 = vmatprep.subr.mxu0 0.0
        %4192 = vmatpush1.msra.mxu0 %v4164
        %4193 = vmatprep.subr.mxu0 0.0
        %4194 = vmatpush1.msra.mxu0 %v4165
        %4195 = vmatprep.subr.mxu0 0.0
        %4196 = vmatpush1.msra.mxu0 %v4166
        %4197 = vmatprep.subr.mxu0 0.0
        %4198 = vmatpush1.msra.mxu0 %v4167
        %4199 = vmatprep.subr.mxu0 0.0
        %4200 = vmatpush1.msra.mxu0 %v4168
        %4201 = vmatprep.subr.mxu0 0.0
        %4202 = vmatpush1.msra.mxu0 %v4169
        %4203 = vmatprep.subr.mxu0 0.0
        %4204 = vmatpush1.msra.mxu0 0.0
        %4205 = vmatprep.subr.mxu0 0.0
        %4206 = vmatpush1.msra.mxu0 0.0
        %4207 = vmatprep.subr.mxu0 0.0
        %4208 = vmatpush1.msra.mxu0 0.0
        %4209 = vmatprep.subr.mxu0 0.0
        %4210 = vmatpush1.msra.mxu0 0.0
        %4211 = vmatprep.subr.mxu0 0.0
        %4212 = vmatpush1.msra.mxu0 0.0
        %4213 = vmatprep.subr.mxu0 0.0
        %4214 = vmatpush1.msra.mxu0 0.0
        %4215 = vmatprep.subr.mxu0 0.0
        %4216 = vmatpush1.msra.mxu0 0.0
        %4217 = vmatprep.subr.mxu0 0.0
        %4218 = vmatpush1.msra.mxu0 0.0
        %4219 = vmatprep.subr.mxu0 0.0
        %4220 = vmatpush1.msra.mxu0 0.0
        %4221 = vmatprep.subr.mxu0 0.0
        %4222 = vmatpush1.msra.mxu0 0.0
        %4223 = vmatprep.subr.mxu0 0.0
        %4224 = vmatpush1.msra.mxu0 0.0
        %4225 = vmatprep.subr.mxu0 0.0
        %4226 = vmatpush1.msra.mxu0 0.0
        %4227 = vmatprep.subr.mxu0 0.0
        %4228 = vmatpush1.msra.mxu0 0.0
        %4229 = vmatprep.subr.mxu0 0.0
        %4230 = vmatpush1.msra.mxu0 0.0
        %4231 = vmatprep.subr.mxu0 0.0
        %4232 = vmatpush1.msra.mxu0 0.0
        %4233 = vmatprep.subr.mxu0 0.0
        %4234 = vmatpush1.msra.mxu0 0.0
        %4235 = vmatprep.mubr.f32.mxu0 0.0
        %4236 = vmatmul.mubr.f32.gmra.mrb[0].mxu0 %v4170
        %v4237 = vpop.f32.mrb[0].mxu0
        %v4238 = vadd.f32 0.0, %v4237
        %v4239 = vpop.f32.mrb[0].mxu0
        %4240 = vdwg.mxu0
        %s4241 = scalar_lea.vmem %s334, 52
        %v4242 = vld [vmem:[%s4241] sm:$0xf]
        %v4243 = vld [vmem:[%s4241 + $0x4] sm:$0xf]
        %v4244 = vld [vmem:[%s4241 + $0x8] sm:$0xf]
        %v4245 = vld [vmem:[%s4241 + $0xc] sm:$0xf]
        %v4246 = vld [vmem:[%s4241 + $0x10] sm:$0xf]
        %v4247 = vld [vmem:[%s4241 + $0x14] sm:$0xf]
        %v4248 = vld [vmem:[%s4241 + $0x18] sm:$0xf]
        %v4249 = vld [vmem:[%s4241 + $0x1c] sm:$0xf]
        %v4250 = vld [vmem:[%s4241 + $0x20] sm:$0xf]
        %v4251 = vld [vmem:[%s4241 + $0x24] sm:$0xf]
        %v4252 = vld [vmem:[%s4241 + $0x28] sm:$0xf]
        %v4253 = vld [vmem:[%s4241 + $0x2c] sm:$0xf]
        %v4254 = vld [vmem:[%s4241 + $0x30] sm:$0xf]
        %v4255 = vld [vmem:[%s3] sm:$0xff]
        %v4256 = vld [vmem:[%s3 + $0x8] sm:$0xff]
        %v4257 = vld [vmem:[%s3 + $0x10] sm:$0xff]
        %v4258 = vld [vmem:[%s3 + $0x18] sm:$0xff]
        %v4259 = vld [vmem:[%s3 + $0x20] sm:$0xff]
        %v4260 = vld [vmem:[%s3 + $0x28] sm:$0xff]
        %v4261 = vld [vmem:[%s3 + $0x30] sm:$0xff]
        %v4262 = vld [vmem:[%s3 + $0x38] sm:$0xff]
        %v4263 = vld [vmem:[%s3 + $0x40] sm:$0xff]
        %v4264 = vld [vmem:[%s3 + $0x48] sm:$0xff]
        %v4265 = vld [vmem:[%s3 + $0x50] sm:$0xff]
        %v4266 = vld [vmem:[%s3 + $0x58] sm:$0xff]
        %v4267 = vld [vmem:[%s3 + $0x60] sm:$0xff]
        %v4268 = vld [vmem:[%s3 + $0x68] sm:$0xff]
        %v4269 = vld [vmem:[%s3 + $0x70] sm:$0xff]
        %v4270 = vld [vmem:[%s3 + $0x78] sm:$0xff]
        %v4271 = vld [vmem:[%s1] sm:$0xf]
        %v4272 = vld [vmem:[%s1 + $0x4] sm:$0xf]
        %v4273 = vld [vmem:[%s1 + $0x8] sm:$0xf]
        %v4274 = vld [vmem:[%s1 + $0xc] sm:$0xf]
        %v4275 = vld [vmem:[%s1 + $0x10] sm:$0xf]
        %v4276 = vld [vmem:[%s1 + $0x14] sm:$0xf]
        %v4277 = vld [vmem:[%s1 + $0x18] sm:$0xf]
        %v4278 = vld [vmem:[%s1 + $0x1c] sm:$0xf]
        %v4279 = vld [vmem:[%s1 + $0x20] sm:$0xf]
        %v4280 = vld [vmem:[%s1 + $0x24] sm:$0xf]
        %v4281 = vld [vmem:[%s1 + $0x28] sm:$0xf]
        %v4282 = vld [vmem:[%s1 + $0x2c] sm:$0xf]
        %v4283 = vld [vmem:[%s1 + $0x30] sm:$0xf]
        %v4284 = vld [vmem:[%s1 + $0x34] sm:$0xf]
        %v4285 = vld [vmem:[%s1 + $0x38] sm:$0xf]
        %v4286 = vld [vmem:[%s1 + $0x3c] sm:$0xf]
        %v4303 = vunpack.c.l.b16 %v4271
        %v4304 = vunpack.c.l.b16 %v4272
        %v4305 = vunpack.c.l.b16 %v4273
        %v4306 = vunpack.c.l.b16 %v4274
        %v4307 = vunpack.c.l.b16 %v4275
        %v4308 = vunpack.c.l.b16 %v4276
        %v4309 = vunpack.c.l.b16 %v4277
        %v4310 = vunpack.c.l.b16 %v4278
        %v4311 = vunpack.c.l.b16 %v4279
        %v4312 = vunpack.c.l.b16 %v4280
        %v4313 = vunpack.c.l.b16 %v4281
        %v4314 = vunpack.c.l.b16 %v4282
        %v4315 = vunpack.c.l.b16 %v4283
        %v4316 = vunpack.c.l.b16 %v4284
        %v4317 = vunpack.c.l.b16 %v4285
        %v4318 = vunpack.c.l.b16 %v4286
        %v4319 = vpack.c.b16 %v4304, %v4303
        %v4320 = vpack.c.b16 %v4306, %v4305
        %v4321 = vpack.c.b16 %v4308, %v4307
        %v4322 = vpack.c.b16 %v4310, %v4309
        %v4323 = vpack.c.b16 %v4312, %v4311
        %v4324 = vpack.c.b16 %v4314, %v4313
        %v4325 = vpack.c.b16 %v4316, %v4315
        %v4326 = vpack.c.b16 %v4318, %v4317
        %v4340 = vunpack.c.l.b16 %v4242
        %v4341 = vunpack.c.l.b16 %v4243
        %v4342 = vunpack.c.l.b16 %v4244
        %v4343 = vunpack.c.l.b16 %v4245
        %v4344 = vunpack.c.l.b16 %v4246
        %v4345 = vunpack.c.l.b16 %v4247
        %v4346 = vunpack.c.l.b16 %v4248
        %v4347 = vunpack.c.l.b16 %v4249
        %v4348 = vunpack.c.l.b16 %v4250
        %v4349 = vunpack.c.l.b16 %v4251
        %v4350 = vunpack.c.l.b16 %v4252
        %v4351 = vunpack.c.l.b16 %v4253
        %v4352 = vunpack.c.l.b16 %v4254
        %v4353 = vpack.c.b16 %v4341, %v4340
        %v4354 = vpack.c.b16 %v4343, %v4342
        %v4355 = vpack.c.b16 %v4345, %v4344
        %v4356 = vpack.c.b16 %v4347, %v4346
        %v4357 = vpack.c.b16 %v4349, %v4348
        %v4358 = vpack.c.b16 %v4351, %v4350
        %v4359 = vpack.c.b16 %v4352, %v4352
        %v4367 = vsel %vm461, %v4319, 0
        %v4370 = vsel %vm461, %v4320, 0
        %v4373 = vsel %vm461, %v4321, 0
        %v4376 = vsel %vm461, %v4322, 0
        %v4379 = vsel %vm461, %v4323, 0
        %v4382 = vsel %vm461, %v4324, 0
        %v4385 = vsel %vm461, %v4325, 0
        %v4388 = vsel %vm461, %v4326, 0
        %v4391 = vsel %vm486, %v4359, 0
        %4393 = vmatprep.subr.bf16.mxu0 0
        %4394 = vmatpush1.bf16.msra.mxu0 %v4353
        %4395 = vmatprep.subr.bf16.mxu0 0
        %4396 = vmatpush1.bf16.msra.mxu0 %v4354
        %4397 = vmatprep.subr.bf16.mxu0 0
        %4398 = vmatpush1.bf16.msra.mxu0 %v4355
        %4399 = vmatprep.subr.bf16.mxu0 0
        %4400 = vmatpush1.bf16.msra.mxu0 %v4356
        %4401 = vmatprep.subr.bf16.mxu0 0
        %4402 = vmatpush1.bf16.msra.mxu0 %v4357
        %4403 = vmatprep.subr.bf16.mxu0 0
        %4404 = vmatpush1.bf16.msra.mxu0 %v4358
        %4405 = vmatprep.subr.bf16.mxu0 0
        %4406 = vmatpush1.bf16.msra.mxu0 %v4391
        %4407 = vmatprep.subr.bf16.mxu0 0
        %4408 = vmatpush1.bf16.msra.mxu0 0
        %4409 = vmatprep.subr.bf16.mxu0 0
        %4410 = vmatpush1.bf16.msra.mxu0 0
        %4411 = vmatprep.subr.bf16.mxu0 0
        %4412 = vmatpush1.bf16.msra.mxu0 0
        %4413 = vmatprep.subr.bf16.mxu0 0
        %4414 = vmatpush1.bf16.msra.mxu0 0
        %4415 = vmatprep.subr.bf16.mxu0 0
        %4416 = vmatpush1.bf16.msra.mxu0 0
        %4417 = vmatprep.subr.bf16.mxu0 0
        %4418 = vmatpush1.bf16.msra.mxu0 0
        %4419 = vmatprep.subr.bf16.mxu0 0
        %4420 = vmatpush1.bf16.msra.mxu0 0
        %4421 = vmatprep.subr.bf16.mxu0 0
        %4422 = vmatpush1.bf16.msra.mxu0 0
        %4423 = vmatprep.subr.bf16.mxu0 0
        %4424 = vmatpush1.bf16.msra.mxu0 0
        %4425 = vmatprep.mubr.bf16.mxu0 0
        %4426 = vmatmul.mubr.bf16.gmra.mrb[0].mxu0 %v4367
        %v4427 = vpop.f32.mrb[0].mxu0
        %v4428 = vadd.f32 0.0, %v4427
        %v4429 = vpop.f32.mrb[0].mxu0
        %v4430 = vpop.f32.mrb[0].mxu0
        %v4431 = vadd.f32 0.0, %v4430
        %v4432 = vpop.f32.mrb[0].mxu0
        %4433 = vmatprep.mubr.bf16.mxu0 0
        %4434 = vmatmul.mubr.bf16.gmra.mrb[0].mxu0 %v4370
        %v4435 = vpop.f32.mrb[0].mxu0
        %v4436 = vadd.f32 0.0, %v4435
        %v4437 = vpop.f32.mrb[0].mxu0
        %v4438 = vpop.f32.mrb[0].mxu0
        %v4439 = vadd.f32 0.0, %v4438
        %v4440 = vpop.f32.mrb[0].mxu0
        %4441 = vmatprep.mubr.bf16.mxu0 0
        %4442 = vmatmul.mubr.bf16.gmra.mrb[0].mxu0 %v4373
        %v4443 = vpop.f32.mrb[0].mxu0
        %v4444 = vadd.f32 0.0, %v4443
        %v4445 = vpop.f32.mrb[0].mxu0
        %v4446 = vpop.f32.mrb[0].mxu0
        %v4447 = vadd.f32 0.0, %v4446
        %v4448 = vpop.f32.mrb[0].mxu0
        %4449 = vmatprep.mubr.bf16.mxu0 0
        %4450 = vmatmul.mubr.bf16.gmra.mrb[0].mxu0 %v4376
        %v4451 = vpop.f32.mrb[0].mxu0
        %v4452 = vadd.f32 0.0, %v4451
        %v4453 = vpop.f32.mrb[0].mxu0
        %v4454 = vpop.f32.mrb[0].mxu0
        %v4455 = vadd.f32 0.0, %v4454
        %v4456 = vpop.f32.mrb[0].mxu0
        %4457 = vmatprep.mubr.bf16.mxu0 0
        %4458 = vmatmul.mubr.bf16.gmra.mrb[0].mxu0 %v4379
        %v4459 = vpop.f32.mrb[0].mxu0
        %v4460 = vadd.f32 0.0, %v4459
        %v4461 = vpop.f32.mrb[0].mxu0
        %v4462 = vpop.f32.mrb[0].mxu0
        %v4463 = vadd.f32 0.0, %v4462
        %v4464 = vpop.f32.mrb[0].mxu0
        %4465 = vmatprep.mubr.bf16.mxu0 0
        %4466 = vmatmul.mubr.bf16.gmra.mrb[0].mxu0 %v4382
        %v4467 = vpop.f32.mrb[0].mxu0
        %v4468 = vadd.f32 0.0, %v4467
        %v4469 = vpop.f32.mrb[0].mxu0
        %v4470 = vpop.f32.mrb[0].mxu0
        %v4471 = vadd.f32 0.0, %v4470
        %v4472 = vpop.f32.mrb[0].mxu0
        %4473 = vmatprep.mubr.bf16.mxu0 0
        %4474 = vmatmul.mubr.bf16.gmra.mrb[0].mxu0 %v4385
        %v4475 = vpop.f32.mrb[0].mxu0
        %v4476 = vadd.f32 0.0, %v4475
        %v4477 = vpop.f32.mrb[0].mxu0
        %v4478 = vpop.f32.mrb[0].mxu0
        %v4479 = vadd.f32 0.0, %v4478
        %v4480 = vpop.f32.mrb[0].mxu0
        %4481 = vmatprep.mubr.bf16.mxu0 0
        %4482 = vmatmul.mubr.bf16.gmra.mrb[0].mxu0 %v4388
        %v4483 = vpop.f32.mrb[0].mxu0
        %v4484 = vadd.f32 0.0, %v4483
        %v4485 = vpop.f32.mrb[0].mxu0
        %v4486 = vpop.f32.mrb[0].mxu0
        %v4487 = vadd.f32 0.0, %v4486
        %v4488 = vpop.f32.mrb[0].mxu0
        %4489 = vdwg.mxu0
        %v4490 = vpack.c.bf16 %v4431, %v4428
        %v4491 = vpack.c.bf16 %v4439, %v4436
        %v4492 = vpack.c.bf16 %v4447, %v4444
        %v4493 = vpack.c.bf16 %v4455, %v4452
        %v4494 = vpack.c.bf16 %v4463, %v4460
        %v4495 = vpack.c.bf16 %v4471, %v4468
        %v4496 = vpack.c.bf16 %v4479, %v4476
        %v4497 = vpack.c.bf16 %v4487, %v4484
        %v4498 = vld [vmem:[%s2] sm:$0x3]
        %v4500 = vsel %vm596, %v4490, 0
        %v4503 = vsel %vm596, %v4491, 0
        %v4506 = vsel %vm596, %v4492, 0
        %v4509 = vsel %vm596, %v4493, 0
        %v4512 = vsel %vm596, %v4494, 0
        %v4515 = vsel %vm596, %v4495, 0
        %v4518 = vsel %vm596, %v4496, 0
        %v4521 = vsel %vm596, %v4497, 0
        %v4524 = vand.u32 %v4498, %v624
        %4526 = vmatprep.subr.bf16.mxu0 0
        %4527 = vmatpush1.bf16.msra.mxu0 %v4524
        %4528 = vmatprep.subr.bf16.mxu0 0
        %4529 = vmatpush1.bf16.msra.mxu0 0
        %4530 = vmatprep.subr.bf16.mxu0 0
        %4531 = vmatpush1.bf16.msra.mxu0 0
        %4532 = vmatprep.subr.bf16.mxu0 0
        %4533 = vmatpush1.bf16.msra.mxu0 0
        %4534 = vmatprep.subr.bf16.mxu0 0
        %4535 = vmatpush1.bf16.msra.mxu0 0
        %4536 = vmatprep.subr.bf16.mxu0 0
        %4537 = vmatpush1.bf16.msra.mxu0 0
        %4538 = vmatprep.subr.bf16.mxu0 0
        %4539 = vmatpush1.bf16.msra.mxu0 0
        %4540 = vmatprep.subr.bf16.mxu0 0
        %4541 = vmatpush1.bf16.msra.mxu0 0
        %4542 = vmatprep.subr.bf16.mxu0 0
        %4543 = vmatpush1.bf16.msra.mxu0 0
        %4544 = vmatprep.subr.bf16.mxu0 0
        %4545 = vmatpush1.bf16.msra.mxu0 0
        %4546 = vmatprep.subr.bf16.mxu0 0
        %4547 = vmatpush1.bf16.msra.mxu0 0
        %4548 = vmatprep.subr.bf16.mxu0 0
        %4549 = vmatpush1.bf16.msra.mxu0 0
        %4550 = vmatprep.subr.bf16.mxu0 0
        %4551 = vmatpush1.bf16.msra.mxu0 0
        %4552 = vmatprep.subr.bf16.mxu0 0
        %4553 = vmatpush1.bf16.msra.mxu0 0
        %4554 = vmatprep.subr.bf16.mxu0 0
        %4555 = vmatpush1.bf16.msra.mxu0 0
        %4556 = vmatprep.subr.bf16.mxu0 0
        %4557 = vmatpush1.bf16.msra.mxu0 0
        %4558 = vmatprep.mubr.bf16.mxu0 0
        %4559 = vmatmul.mubr.bf16.gmra.mrb[0].mxu0 %v4500
        %v4560 = vpop.f32.mrb[0].mxu0
        %v4561 = vadd.f32 0.0, %v4560
        %v4562 = vpop.f32.mrb[0].mxu0
        %v4563 = vpop.f32.mrb[0].mxu0
        %v4564 = vadd.f32 0.0, %v4563
        %v4565 = vpop.f32.mrb[0].mxu0
        %4566 = vmatprep.mubr.bf16.mxu0 0
        %4567 = vmatmul.mubr.bf16.gmra.mrb[0].mxu0 %v4503
        %v4568 = vpop.f32.mrb[0].mxu0
        %v4569 = vadd.f32 0.0, %v4568
        %v4570 = vpop.f32.mrb[0].mxu0
        %v4571 = vpop.f32.mrb[0].mxu0
        %v4572 = vadd.f32 0.0, %v4571
        %v4573 = vpop.f32.mrb[0].mxu0
        %4574 = vmatprep.mubr.bf16.mxu0 0
        %4575 = vmatmul.mubr.bf16.gmra.mrb[0].mxu0 %v4506
        %v4576 = vpop.f32.mrb[0].mxu0
        %v4577 = vadd.f32 0.0, %v4576
        %v4578 = vpop.f32.mrb[0].mxu0
        %v4579 = vpop.f32.mrb[0].mxu0
        %v4580 = vadd.f32 0.0, %v4579
        %v4581 = vpop.f32.mrb[0].mxu0
        %4582 = vmatprep.mubr.bf16.mxu0 0
        %4583 = vmatmul.mubr.bf16.gmra.mrb[0].mxu0 %v4509
        %v4584 = vpop.f32.mrb[0].mxu0
        %v4585 = vadd.f32 0.0, %v4584
        %v4586 = vpop.f32.mrb[0].mxu0
        %v4587 = vpop.f32.mrb[0].mxu0
        %v4588 = vadd.f32 0.0, %v4587
        %v4589 = vpop.f32.mrb[0].mxu0
        %4590 = vmatprep.mubr.bf16.mxu0 0
        %4591 = vmatmul.mubr.bf16.gmra.mrb[0].mxu0 %v4512
        %v4592 = vpop.f32.mrb[0].mxu0
        %v4593 = vadd.f32 0.0, %v4592
        %v4594 = vpop.f32.mrb[0].mxu0
        %v4595 = vpop.f32.mrb[0].mxu0
        %v4596 = vadd.f32 0.0, %v4595
        %v4597 = vpop.f32.mrb[0].mxu0
        %4598 = vmatprep.mubr.bf16.mxu0 0
        %4599 = vmatmul.mubr.bf16.gmra.mrb[0].mxu0 %v4515
        %v4600 = vpop.f32.mrb[0].mxu0
        %v4601 = vadd.f32 0.0, %v4600
        %v4602 = vpop.f32.mrb[0].mxu0
        %v4603 = vpop.f32.mrb[0].mxu0
        %v4604 = vadd.f32 0.0, %v4603
        %v4605 = vpop.f32.mrb[0].mxu0
        %4606 = vmatprep.mubr.bf16.mxu0 0
        %4607 = vmatmul.mubr.bf16.gmra.mrb[0].mxu0 %v4518
        %v4608 = vpop.f32.mrb[0].mxu0
        %v4609 = vadd.f32 0.0, %v4608
        %v4610 = vpop.f32.mrb[0].mxu0
        %v4611 = vpop.f32.mrb[0].mxu0
        %v4612 = vadd.f32 0.0, %v4611
        %v4613 = vpop.f32.mrb[0].mxu0
        %4614 = vmatprep.mubr.bf16.mxu0 0
        %4615 = vmatmul.mubr.bf16.gmra.mrb[0].mxu0 %v4521
        %v4616 = vpop.f32.mrb[0].mxu0
        %v4617 = vadd.f32 0.0, %v4616
        %v4618 = vpop.f32.mrb[0].mxu0
        %v4619 = vpop.f32.mrb[0].mxu0
        %v4620 = vadd.f32 0.0, %v4619
        %v4621 = vpop.f32.mrb[0].mxu0
        %4622 = vdwg.mxu0
        %v4623 = vadd.f32 %v4255, %v4561
        %v4624 = vadd.f32 %v4256, %v4564
        %v4625 = vadd.f32 %v4257, %v4569
        %v4626 = vadd.f32 %v4258, %v4572
        %v4627 = vadd.f32 %v4259, %v4577
        %v4628 = vadd.f32 %v4260, %v4580
        %v4629 = vadd.f32 %v4261, %v4585
        %v4630 = vadd.f32 %v4262, %v4588
        %v4631 = vadd.f32 %v4263, %v4593
        %v4632 = vadd.f32 %v4264, %v4596
        %v4633 = vadd.f32 %v4265, %v4601
        %v4634 = vadd.f32 %v4266, %v4604
        %v4635 = vadd.f32 %v4267, %v4609
        %v4636 = vadd.f32 %v4268, %v4612
        %v4637 = vadd.f32 %v4269, %v4617
        %v4638 = vadd.f32 %v4270, %v4620
        %v4639 = vld [vmem:[%s741] sm:$0xf]
        %v4640 = vld [vmem:[%s741 + $0x4] sm:$0xf]
        %v4641 = vld [vmem:[%s741 + $0x8] sm:$0xf]
        %v4642 = vld [vmem:[%s741 + $0xc] sm:$0xf]
        %v4643 = vld [vmem:[%s741 + $0x10] sm:$0xf]
        %v4644 = vld [vmem:[%s741 + $0x14] sm:$0xf]
        %v4645 = vld [vmem:[%s741 + $0x18] sm:$0xf]
        %v4646 = vld [vmem:[%s741 + $0x1c] sm:$0xf]
        %v4647 = vld [vmem:[%s741 + $0x20] sm:$0xf]
        %v4648 = vld [vmem:[%s741 + $0x24] sm:$0xf]
        %v4649 = vld [vmem:[%s741 + $0x28] sm:$0xf]
        %v4650 = vld [vmem:[%s741 + $0x2c] sm:$0xf]
        %v4651 = vld [vmem:[%s741 + $0x30] sm:$0xf]
        %v4652 = vld [vmem:[%s741 + $0x34] sm:$0xf]
        %v4653 = vld [vmem:[%s741 + $0x38] sm:$0xf]
        %v4654 = vld [vmem:[%s741 + $0x3c] sm:$0xf]
        %v4671 = vunpack.c.l.b16 %v4639
        %v4672 = vunpack.c.l.b16 %v4640
        %v4673 = vunpack.c.l.b16 %v4641
        %v4674 = vunpack.c.l.b16 %v4642
        %v4675 = vunpack.c.l.b16 %v4643
        %v4676 = vunpack.c.l.b16 %v4644
        %v4677 = vunpack.c.l.b16 %v4645
        %v4678 = vunpack.c.l.b16 %v4646
        %v4679 = vunpack.c.l.b16 %v4647
        %v4680 = vunpack.c.l.b16 %v4648
        %v4681 = vunpack.c.l.b16 %v4649
        %v4682 = vunpack.c.l.b16 %v4650
        %v4683 = vunpack.c.l.b16 %v4651
        %v4684 = vunpack.c.l.b16 %v4652
        %v4685 = vunpack.c.l.b16 %v4653
        %v4686 = vunpack.c.l.b16 %v4654
        %v4687 = vpack.c.b16 %v4672, %v4671
        %v4688 = vpack.c.b16 %v4674, %v4673
        %v4689 = vpack.c.b16 %v4676, %v4675
        %v4690 = vpack.c.b16 %v4678, %v4677
        %v4691 = vpack.c.b16 %v4680, %v4679
        %v4692 = vpack.c.b16 %v4682, %v4681
        %v4693 = vpack.c.b16 %v4684, %v4683
        %v4694 = vpack.c.b16 %v4686, %v4685
        %v4696 = vsel %vm461, %v4687, 0
        %v4699 = vsel %vm461, %v4688, 0
        %v4702 = vsel %vm461, %v4689, 0
        %v4705 = vsel %vm461, %v4690, 0
        %v4708 = vsel %vm461, %v4691, 0
        %v4711 = vsel %vm461, %v4692, 0
        %v4714 = vsel %vm461, %v4693, 0
        %v4717 = vsel %vm461, %v4694, 0
        %4719 = vmatprep.subr.bf16.mxu0 0
        %4720 = vmatpush1.bf16.msra.mxu0 %v4353
        %4721 = vmatprep.subr.bf16.mxu0 0
        %4722 = vmatpush1.bf16.msra.mxu0 %v4354
        %4723 = vmatprep.subr.bf16.mxu0 0
        %4724 = vmatpush1.bf16.msra.mxu0 %v4355
        %4725 = vmatprep.subr.bf16.mxu0 0
        %4726 = vmatpush1.bf16.msra.mxu0 %v4356
        %4727 = vmatprep.subr.bf16.mxu0 0
        %4728 = vmatpush1.bf16.msra.mxu0 %v4357
        %4729 = vmatprep.subr.bf16.mxu0 0
        %4730 = vmatpush1.bf16.msra.mxu0 %v4358
        %4731 = vmatprep.subr.bf16.mxu0 0
        %4732 = vmatpush1.bf16.msra.mxu0 %v4391
        %4733 = vmatprep.subr.bf16.mxu0 0
        %4734 = vmatpush1.bf16.msra.mxu0 0
        %4735 = vmatprep.subr.bf16.mxu0 0
        %4736 = vmatpush1.bf16.msra.mxu0 0
        %4737 = vmatprep.subr.bf16.mxu0 0
        %4738 = vmatpush1.bf16.msra.mxu0 0
        %4739 = vmatprep.subr.bf16.mxu0 0
        %4740 = vmatpush1.bf16.msra.mxu0 0
        %4741 = vmatprep.subr.bf16.mxu0 0
        %4742 = vmatpush1.bf16.msra.mxu0 0
        %4743 = vmatprep.subr.bf16.mxu0 0
        %4744 = vmatpush1.bf16.msra.mxu0 0
        %4745 = vmatprep.subr.bf16.mxu0 0
        %4746 = vmatpush1.bf16.msra.mxu0 0
        %4747 = vmatprep.subr.bf16.mxu0 0
        %4748 = vmatpush1.bf16.msra.mxu0 0
        %4749 = vmatprep.subr.bf16.mxu0 0
        %4750 = vmatpush1.bf16.msra.mxu0 0
        %4751 = vmatprep.mubr.bf16.mxu0 0
        %4752 = vmatmul.mubr.bf16.gmra.mrb[0].mxu0 %v4696
        %v4753 = vpop.f32.mrb[0].mxu0
        %v4754 = vadd.f32 0.0, %v4753
        %v4755 = vpop.f32.mrb[0].mxu0
        %v4756 = vpop.f32.mrb[0].mxu0
        %v4757 = vadd.f32 0.0, %v4756
        %v4758 = vpop.f32.mrb[0].mxu0
        %4759 = vmatprep.mubr.bf16.mxu0 0
        %4760 = vmatmul.mubr.bf16.gmra.mrb[0].mxu0 %v4699
        %v4761 = vpop.f32.mrb[0].mxu0
        %v4762 = vadd.f32 0.0, %v4761
        %v4763 = vpop.f32.mrb[0].mxu0
        %v4764 = vpop.f32.mrb[0].mxu0
        %v4765 = vadd.f32 0.0, %v4764
        %v4766 = vpop.f32.mrb[0].mxu0
        %4767 = vmatprep.mubr.bf16.mxu0 0
        %4768 = vmatmul.mubr.bf16.gmra.mrb[0].mxu0 %v4702
        %v4769 = vpop.f32.mrb[0].mxu0
        %v4770 = vadd.f32 0.0, %v4769
        %v4771 = vpop.f32.mrb[0].mxu0
        %v4772 = vpop.f32.mrb[0].mxu0
        %v4773 = vadd.f32 0.0, %v4772
        %v4774 = vpop.f32.mrb[0].mxu0
        %4775 = vmatprep.mubr.bf16.mxu0 0
        %4776 = vmatmul.mubr.bf16.gmra.mrb[0].mxu0 %v4705
        %v4777 = vpop.f32.mrb[0].mxu0
        %v4778 = vadd.f32 0.0, %v4777
        %v4779 = vpop.f32.mrb[0].mxu0
        %v4780 = vpop.f32.mrb[0].mxu0
        %v4781 = vadd.f32 0.0, %v4780
        %v4782 = vpop.f32.mrb[0].mxu0
        %4783 = vmatprep.mubr.bf16.mxu0 0
        %4784 = vmatmul.mubr.bf16.gmra.mrb[0].mxu0 %v4708
        %v4785 = vpop.f32.mrb[0].mxu0
        %v4786 = vadd.f32 0.0, %v4785
        %v4787 = vpop.f32.mrb[0].mxu0
        %v4788 = vpop.f32.mrb[0].mxu0
        %v4789 = vadd.f32 0.0, %v4788
        %v4790 = vpop.f32.mrb[0].mxu0
        %4791 = vmatprep.mubr.bf16.mxu0 0
        %4792 = vmatmul.mubr.bf16.gmra.mrb[0].mxu0 %v4711
        %v4793 = vpop.f32.mrb[0].mxu0
        %v4794 = vadd.f32 0.0, %v4793
        %v4795 = vpop.f32.mrb[0].mxu0
        %v4796 = vpop.f32.mrb[0].mxu0
        %v4797 = vadd.f32 0.0, %v4796
        %v4798 = vpop.f32.mrb[0].mxu0
        %4799 = vmatprep.mubr.bf16.mxu0 0
        %4800 = vmatmul.mubr.bf16.gmra.mrb[0].mxu0 %v4714
        %v4801 = vpop.f32.mrb[0].mxu0
        %v4802 = vadd.f32 0.0, %v4801
        %v4803 = vpop.f32.mrb[0].mxu0
        %v4804 = vpop.f32.mrb[0].mxu0
        %v4805 = vadd.f32 0.0, %v4804
        %v4806 = vpop.f32.mrb[0].mxu0
        %4807 = vmatprep.mubr.bf16.mxu0 0
        %4808 = vmatmul.mubr.bf16.gmra.mrb[0].mxu0 %v4717
        %v4809 = vpop.f32.mrb[0].mxu0
        %v4810 = vadd.f32 0.0, %v4809
        %v4811 = vpop.f32.mrb[0].mxu0
        %v4812 = vpop.f32.mrb[0].mxu0
        %v4813 = vadd.f32 0.0, %v4812
        %v4814 = vpop.f32.mrb[0].mxu0
        %4815 = vdwg.mxu0
        %v4816 = vpack.c.bf16 %v4757, %v4754
        %v4817 = vpack.c.bf16 %v4765, %v4762
        %v4818 = vpack.c.bf16 %v4773, %v4770
        %v4819 = vpack.c.bf16 %v4781, %v4778
        %v4820 = vpack.c.bf16 %v4789, %v4786
        %v4821 = vpack.c.bf16 %v4797, %v4794
        %v4822 = vpack.c.bf16 %v4805, %v4802
        %v4823 = vpack.c.bf16 %v4813, %v4810
        %v4824 = vld [vmem:[%s927] sm:$0x3]
        %v4826 = vsel %vm596, %v4816, 0
        %v4829 = vsel %vm596, %v4817, 0
        %v4832 = vsel %vm596, %v4818, 0
        %v4835 = vsel %vm596, %v4819, 0
        %v4838 = vsel %vm596, %v4820, 0
        %v4841 = vsel %vm596, %v4821, 0
        %v4844 = vsel %vm596, %v4822, 0
        %v4847 = vsel %vm596, %v4823, 0
        %v4850 = vand.u32 %v4824, %v624
        %4852 = vmatprep.subr.bf16.mxu0 0
        %4853 = vmatpush1.bf16.msra.mxu0 %v4850
        %4854 = vmatprep.subr.bf16.mxu0 0
        %4855 = vmatpush1.bf16.msra.mxu0 0
        %4856 = vmatprep.subr.bf16.mxu0 0
        %4857 = vmatpush1.bf16.msra.mxu0 0
        %4858 = vmatprep.subr.bf16.mxu0 0
        %4859 = vmatpush1.bf16.msra.mxu0 0
        %4860 = vmatprep.subr.bf16.mxu0 0
        %4861 = vmatpush1.bf16.msra.mxu0 0
        %4862 = vmatprep.subr.bf16.mxu0 0
        %4863 = vmatpush1.bf16.msra.mxu0 0
        %4864 = vmatprep.subr.bf16.mxu0 0
        %4865 = vmatpush1.bf16.msra.mxu0 0
        %4866 = vmatprep.subr.bf16.mxu0 0
        %4867 = vmatpush1.bf16.msra.mxu0 0
        %4868 = vmatprep.subr.bf16.mxu0 0
        %4869 = vmatpush1.bf16.msra.mxu0 0
        %4870 = vmatprep.subr.bf16.mxu0 0
        %4871 = vmatpush1.bf16.msra.mxu0 0
        %4872 = vmatprep.subr.bf16.mxu0 0
        %4873 = vmatpush1.bf16.msra.mxu0 0
        %4874 = vmatprep.subr.bf16.mxu0 0
        %4875 = vmatpush1.bf16.msra.mxu0 0
        %4876 = vmatprep.subr.bf16.mxu0 0
        %4877 = vmatpush1.bf16.msra.mxu0 0
        %4878 = vmatprep.subr.bf16.mxu0 0
        %4879 = vmatpush1.bf16.msra.mxu0 0
        %4880 = vmatprep.subr.bf16.mxu0 0
        %4881 = vmatpush1.bf16.msra.mxu0 0
        %4882 = vmatprep.subr.bf16.mxu0 0
        %4883 = vmatpush1.bf16.msra.mxu0 0
        %4884 = vmatprep.mubr.bf16.mxu0 0
        %4885 = vmatmul.mubr.bf16.gmra.mrb[0].mxu0 %v4826
        %v4886 = vpop.f32.mrb[0].mxu0
        %v4887 = vadd.f32 0.0, %v4886
        %v4888 = vpop.f32.mrb[0].mxu0
        %v4889 = vpop.f32.mrb[0].mxu0
        %v4890 = vadd.f32 0.0, %v4889
        %v4891 = vpop.f32.mrb[0].mxu0
        %4892 = vmatprep.mubr.bf16.mxu0 0
        %4893 = vmatmul.mubr.bf16.gmra.mrb[0].mxu0 %v4829
        %v4894 = vpop.f32.mrb[0].mxu0
        %v4895 = vadd.f32 0.0, %v4894
        %v4896 = vpop.f32.mrb[0].mxu0
        %v4897 = vpop.f32.mrb[0].mxu0
        %v4898 = vadd.f32 0.0, %v4897
        %v4899 = vpop.f32.mrb[0].mxu0
        %4900 = vmatprep.mubr.bf16.mxu0 0
        %4901 = vmatmul.mubr.bf16.gmra.mrb[0].mxu0 %v4832
        %v4902 = vpop.f32.mrb[0].mxu0
        %v4903 = vadd.f32 0.0, %v4902
        %v4904 = vpop.f32.mrb[0].mxu0
        %v4905 = vpop.f32.mrb[0].mxu0
        %v4906 = vadd.f32 0.0, %v4905
        %v4907 = vpop.f32.mrb[0].mxu0
        %4908 = vmatprep.mubr.bf16.mxu0 0
        %4909 = vmatmul.mubr.bf16.gmra.mrb[0].mxu0 %v4835
        %v4910 = vpop.f32.mrb[0].mxu0
        %v4911 = vadd.f32 0.0, %v4910
        %v4912 = vpop.f32.mrb[0].mxu0
        %v4913 = vpop.f32.mrb[0].mxu0
        %v4914 = vadd.f32 0.0, %v4913
        %v4915 = vpop.f32.mrb[0].mxu0
        %4916 = vmatprep.mubr.bf16.mxu0 0
        %4917 = vmatmul.mubr.bf16.gmra.mrb[0].mxu0 %v4838
        %v4918 = vpop.f32.mrb[0].mxu0
        %v4919 = vadd.f32 0.0, %v4918
        %v4920 = vpop.f32.mrb[0].mxu0
        %v4921 = vpop.f32.mrb[0].mxu0
        %v4922 = vadd.f32 0.0, %v4921
        %v4923 = vpop.f32.mrb[0].mxu0
        %4924 = vmatprep.mubr.bf16.mxu0 0
        %4925 = vmatmul.mubr.bf16.gmra.mrb[0].mxu0 %v4841
        %v4926 = vpop.f32.mrb[0].mxu0
        %v4927 = vadd.f32 0.0, %v4926
        %v4928 = vpop.f32.mrb[0].mxu0
        %v4929 = vpop.f32.mrb[0].mxu0
        %v4930 = vadd.f32 0.0, %v4929
        %v4931 = vpop.f32.mrb[0].mxu0
        %4932 = vmatprep.mubr.bf16.mxu0 0
        %4933 = vmatmul.mubr.bf16.gmra.mrb[0].mxu0 %v4844
        %v4934 = vpop.f32.mrb[0].mxu0
        %v4935 = vadd.f32 0.0, %v4934
        %v4936 = vpop.f32.mrb[0].mxu0
        %v4937 = vpop.f32.mrb[0].mxu0
        %v4938 = vadd.f32 0.0, %v4937
        %v4939 = vpop.f32.mrb[0].mxu0
        %4940 = vmatprep.mubr.bf16.mxu0 0
        %4941 = vmatmul.mubr.bf16.gmra.mrb[0].mxu0 %v4847
        %v4942 = vpop.f32.mrb[0].mxu0
        %v4943 = vadd.f32 0.0, %v4942
        %v4944 = vpop.f32.mrb[0].mxu0
        %v4945 = vpop.f32.mrb[0].mxu0
        %v4946 = vadd.f32 0.0, %v4945
        %v4947 = vpop.f32.mrb[0].mxu0
        %4948 = vdwg.mxu0
        %v4949 = vadd.f32 %v4623, %v4887
        %v4950 = vadd.f32 %v4624, %v4890
        %v4951 = vadd.f32 %v4625, %v4895
        %v4952 = vadd.f32 %v4626, %v4898
        %v4953 = vadd.f32 %v4627, %v4903
        %v4954 = vadd.f32 %v4628, %v4906
        %v4955 = vadd.f32 %v4629, %v4911
        %v4956 = vadd.f32 %v4630, %v4914
        %v4957 = vadd.f32 %v4631, %v4919
        %v4958 = vadd.f32 %v4632, %v4922
        %v4959 = vadd.f32 %v4633, %v4927
        %v4960 = vadd.f32 %v4634, %v4930
        %v4961 = vadd.f32 %v4635, %v4935
        %v4962 = vadd.f32 %v4636, %v4938
        %v4963 = vadd.f32 %v4637, %v4943
        %v4964 = vadd.f32 %v4638, %v4946
        %v4965 = vld [vmem:[%s1069] sm:$0xf]
        %v4966 = vld [vmem:[%s1069 + $0x4] sm:$0xf]
        %v4967 = vld [vmem:[%s1069 + $0x8] sm:$0xf]
        %v4968 = vld [vmem:[%s1069 + $0xc] sm:$0xf]
        %v4969 = vld [vmem:[%s1069 + $0x10] sm:$0xf]
        %v4970 = vld [vmem:[%s1069 + $0x14] sm:$0xf]
        %v4971 = vld [vmem:[%s1069 + $0x18] sm:$0xf]
        %v4972 = vld [vmem:[%s1069 + $0x1c] sm:$0xf]
        %v4973 = vld [vmem:[%s1069 + $0x20] sm:$0xf]
        %v4974 = vld [vmem:[%s1069 + $0x24] sm:$0xf]
        %v4975 = vld [vmem:[%s1069 + $0x28] sm:$0xf]
        %v4976 = vld [vmem:[%s1069 + $0x2c] sm:$0xf]
        %v4977 = vld [vmem:[%s1069 + $0x30] sm:$0xf]
        %v4978 = vld [vmem:[%s1069 + $0x34] sm:$0xf]
        %v4979 = vld [vmem:[%s1069 + $0x38] sm:$0xf]
        %v4980 = vld [vmem:[%s1069 + $0x3c] sm:$0xf]
        %v4997 = vunpack.c.l.b16 %v4965
        %v4998 = vunpack.c.l.b16 %v4966
        %v4999 = vunpack.c.l.b16 %v4967
        %v5000 = vunpack.c.l.b16 %v4968
        %v5001 = vunpack.c.l.b16 %v4969
        %v5002 = vunpack.c.l.b16 %v4970
        %v5003 = vunpack.c.l.b16 %v4971
        %v5004 = vunpack.c.l.b16 %v4972
        %v5005 = vunpack.c.l.b16 %v4973
        %v5006 = vunpack.c.l.b16 %v4974
        %v5007 = vunpack.c.l.b16 %v4975
        %v5008 = vunpack.c.l.b16 %v4976
        %v5009 = vunpack.c.l.b16 %v4977
        %v5010 = vunpack.c.l.b16 %v4978
        %v5011 = vunpack.c.l.b16 %v4979
        %v5012 = vunpack.c.l.b16 %v4980
        %v5013 = vpack.c.b16 %v4998, %v4997
        %v5014 = vpack.c.b16 %v5000, %v4999
        %v5015 = vpack.c.b16 %v5002, %v5001
        %v5016 = vpack.c.b16 %v5004, %v5003
        %v5017 = vpack.c.b16 %v5006, %v5005
        %v5018 = vpack.c.b16 %v5008, %v5007
        %v5019 = vpack.c.b16 %v5010, %v5009
        %v5020 = vpack.c.b16 %v5012, %v5011
        %v5022 = vsel %vm461, %v5013, 0
        %v5025 = vsel %vm461, %v5014, 0
        %v5028 = vsel %vm461, %v5015, 0
        %v5031 = vsel %vm461, %v5016, 0
        %v5034 = vsel %vm461, %v5017, 0
        %v5037 = vsel %vm461, %v5018, 0
        %v5040 = vsel %vm461, %v5019, 0
        %v5043 = vsel %vm461, %v5020, 0
        %5045 = vmatprep.subr.bf16.mxu0 0
        %5046 = vmatpush1.bf16.msra.mxu0 %v4353
        %5047 = vmatprep.subr.bf16.mxu0 0
        %5048 = vmatpush1.bf16.msra.mxu0 %v4354
        %5049 = vmatprep.subr.bf16.mxu0 0
        %5050 = vmatpush1.bf16.msra.mxu0 %v4355
        %5051 = vmatprep.subr.bf16.mxu0 0
        %5052 = vmatpush1.bf16.msra.mxu0 %v4356
        %5053 = vmatprep.subr.bf16.mxu0 0
        %5054 = vmatpush1.bf16.msra.mxu0 %v4357
        %5055 = vmatprep.subr.bf16.mxu0 0
        %5056 = vmatpush1.bf16.msra.mxu0 %v4358
        %5057 = vmatprep.subr.bf16.mxu0 0
        %5058 = vmatpush1.bf16.msra.mxu0 %v4391
        %5059 = vmatprep.subr.bf16.mxu0 0
        %5060 = vmatpush1.bf16.msra.mxu0 0
        %5061 = vmatprep.subr.bf16.mxu0 0
        %5062 = vmatpush1.bf16.msra.mxu0 0
        %5063 = vmatprep.subr.bf16.mxu0 0
        %5064 = vmatpush1.bf16.msra.mxu0 0
        %5065 = vmatprep.subr.bf16.mxu0 0
        %5066 = vmatpush1.bf16.msra.mxu0 0
        %5067 = vmatprep.subr.bf16.mxu0 0
        %5068 = vmatpush1.bf16.msra.mxu0 0
        %5069 = vmatprep.subr.bf16.mxu0 0
        %5070 = vmatpush1.bf16.msra.mxu0 0
        %5071 = vmatprep.subr.bf16.mxu0 0
        %5072 = vmatpush1.bf16.msra.mxu0 0
        %5073 = vmatprep.subr.bf16.mxu0 0
        %5074 = vmatpush1.bf16.msra.mxu0 0
        %5075 = vmatprep.subr.bf16.mxu0 0
        %5076 = vmatpush1.bf16.msra.mxu0 0
        %5077 = vmatprep.mubr.bf16.mxu0 0
        %5078 = vmatmul.mubr.bf16.gmra.mrb[0].mxu0 %v5022
        %v5079 = vpop.f32.mrb[0].mxu0
        %v5080 = vadd.f32 0.0, %v5079
        %v5081 = vpop.f32.mrb[0].mxu0
        %v5082 = vpop.f32.mrb[0].mxu0
        %v5083 = vadd.f32 0.0, %v5082
        %v5084 = vpop.f32.mrb[0].mxu0
        %5085 = vmatprep.mubr.bf16.mxu0 0
        %5086 = vmatmul.mubr.bf16.gmra.mrb[0].mxu0 %v5025
        %v5087 = vpop.f32.mrb[0].mxu0
        %v5088 = vadd.f32 0.0, %v5087
        %v5089 = vpop.f32.mrb[0].mxu0
        %v5090 = vpop.f32.mrb[0].mxu0
        %v5091 = vadd.f32 0.0, %v5090
        %v5092 = vpop.f32.mrb[0].mxu0
        %5093 = vmatprep.mubr.bf16.mxu0 0
        %5094 = vmatmul.mubr.bf16.gmra.mrb[0].mxu0 %v5028
        %v5095 = vpop.f32.mrb[0].mxu0
        %v5096 = vadd.f32 0.0, %v5095
        %v5097 = vpop.f32.mrb[0].mxu0
        %v5098 = vpop.f32.mrb[0].mxu0
        %v5099 = vadd.f32 0.0, %v5098
        %v5100 = vpop.f32.mrb[0].mxu0
        %5101 = vmatprep.mubr.bf16.mxu0 0
        %5102 = vmatmul.mubr.bf16.gmra.mrb[0].mxu0 %v5031
        %v5103 = vpop.f32.mrb[0].mxu0
        %v5104 = vadd.f32 0.0, %v5103
        %v5105 = vpop.f32.mrb[0].mxu0
        %v5106 = vpop.f32.mrb[0].mxu0
        %v5107 = vadd.f32 0.0, %v5106
        %v5108 = vpop.f32.mrb[0].mxu0
        %5109 = vmatprep.mubr.bf16.mxu0 0
        %5110 = vmatmul.mubr.bf16.gmra.mrb[0].mxu0 %v5034
        %v5111 = vpop.f32.mrb[0].mxu0
        %v5112 = vadd.f32 0.0, %v5111
        %v5113 = vpop.f32.mrb[0].mxu0
        %v5114 = vpop.f32.mrb[0].mxu0
        %v5115 = vadd.f32 0.0, %v5114
        %v5116 = vpop.f32.mrb[0].mxu0
        %5117 = vmatprep.mubr.bf16.mxu0 0
        %5118 = vmatmul.mubr.bf16.gmra.mrb[0].mxu0 %v5037
        %v5119 = vpop.f32.mrb[0].mxu0
        %v5120 = vadd.f32 0.0, %v5119
        %v5121 = vpop.f32.mrb[0].mxu0
        %v5122 = vpop.f32.mrb[0].mxu0
        %v5123 = vadd.f32 0.0, %v5122
        %v5124 = vpop.f32.mrb[0].mxu0
        %5125 = vmatprep.mubr.bf16.mxu0 0
        %5126 = vmatmul.mubr.bf16.gmra.mrb[0].mxu0 %v5040
        %v5127 = vpop.f32.mrb[0].mxu0
        %v5128 = vadd.f32 0.0, %v5127
        %v5129 = vpop.f32.mrb[0].mxu0
        %v5130 = vpop.f32.mrb[0].mxu0
        %v5131 = vadd.f32 0.0, %v5130
        %v5132 = vpop.f32.mrb[0].mxu0
        %5133 = vmatprep.mubr.bf16.mxu0 0
        %5134 = vmatmul.mubr.bf16.gmra.mrb[0].mxu0 %v5043
        %v5135 = vpop.f32.mrb[0].mxu0
        %v5136 = vadd.f32 0.0, %v5135
        %v5137 = vpop.f32.mrb[0].mxu0
        %v5138 = vpop.f32.mrb[0].mxu0
        %v5139 = vadd.f32 0.0, %v5138
        %v5140 = vpop.f32.mrb[0].mxu0
        %5141 = vdwg.mxu0
        %v5142 = vpack.c.bf16 %v5083, %v5080
        %v5143 = vpack.c.bf16 %v5091, %v5088
        %v5144 = vpack.c.bf16 %v5099, %v5096
        %v5145 = vpack.c.bf16 %v5107, %v5104
        %v5146 = vpack.c.bf16 %v5115, %v5112
        %v5147 = vpack.c.bf16 %v5123, %v5120
        %v5148 = vpack.c.bf16 %v5131, %v5128
        %v5149 = vpack.c.bf16 %v5139, %v5136
        %v5150 = vld [vmem:[%s1255] sm:$0x3]
        %v5152 = vsel %vm596, %v5142, 0
        %v5155 = vsel %vm596, %v5143, 0
        %v5158 = vsel %vm596, %v5144, 0
        %v5161 = vsel %vm596, %v5145, 0
        %v5164 = vsel %vm596, %v5146, 0
        %v5167 = vsel %vm596, %v5147, 0
        %v5170 = vsel %vm596, %v5148, 0
        %v5173 = vsel %vm596, %v5149, 0
        %v5176 = vand.u32 %v5150, %v624
        %5178 = vmatprep.subr.bf16.mxu0 0
        %5179 = vmatpush1.bf16.msra.mxu0 %v5176
        %5180 = vmatprep.subr.bf16.mxu0 0
        %5181 = vmatpush1.bf16.msra.mxu0 0
        %5182 = vmatprep.subr.bf16.mxu0 0
        %5183 = vmatpush1.bf16.msra.mxu0 0
        %5184 = vmatprep.subr.bf16.mxu0 0
        %5185 = vmatpush1.bf16.msra.mxu0 0
        %5186 = vmatprep.subr.bf16.mxu0 0
        %5187 = vmatpush1.bf16.msra.mxu0 0
        %5188 = vmatprep.subr.bf16.mxu0 0
        %5189 = vmatpush1.bf16.msra.mxu0 0
        %5190 = vmatprep.subr.bf16.mxu0 0
        %5191 = vmatpush1.bf16.msra.mxu0 0
        %5192 = vmatprep.subr.bf16.mxu0 0
        %5193 = vmatpush1.bf16.msra.mxu0 0
        %5194 = vmatprep.subr.bf16.mxu0 0
        %5195 = vmatpush1.bf16.msra.mxu0 0
        %5196 = vmatprep.subr.bf16.mxu0 0
        %5197 = vmatpush1.bf16.msra.mxu0 0
        %5198 = vmatprep.subr.bf16.mxu0 0
        %5199 = vmatpush1.bf16.msra.mxu0 0
        %5200 = vmatprep.subr.bf16.mxu0 0
        %5201 = vmatpush1.bf16.msra.mxu0 0
        %5202 = vmatprep.subr.bf16.mxu0 0
        %5203 = vmatpush1.bf16.msra.mxu0 0
        %5204 = vmatprep.subr.bf16.mxu0 0
        %5205 = vmatpush1.bf16.msra.mxu0 0
        %5206 = vmatprep.subr.bf16.mxu0 0
        %5207 = vmatpush1.bf16.msra.mxu0 0
        %5208 = vmatprep.subr.bf16.mxu0 0
        %5209 = vmatpush1.bf16.msra.mxu0 0
        %5210 = vmatprep.mubr.bf16.mxu0 0
        %5211 = vmatmul.mubr.bf16.gmra.mrb[0].mxu0 %v5152
        %v5212 = vpop.f32.mrb[0].mxu0
        %v5213 = vadd.f32 0.0, %v5212
        %v5214 = vpop.f32.mrb[0].mxu0
        %v5215 = vpop.f32.mrb[0].mxu0
        %v5216 = vadd.f32 0.0, %v5215
        %v5217 = vpop.f32.mrb[0].mxu0
        %5218 = vmatprep.mubr.bf16.mxu0 0
        %5219 = vmatmul.mubr.bf16.gmra.mrb[0].mxu0 %v5155
        %v5220 = vpop.f32.mrb[0].mxu0
        %v5221 = vadd.f32 0.0, %v5220
        %v5222 = vpop.f32.mrb[0].mxu0
        %v5223 = vpop.f32.mrb[0].mxu0
        %v5224 = vadd.f32 0.0, %v5223
        %v5225 = vpop.f32.mrb[0].mxu0
        %5226 = vmatprep.mubr.bf16.mxu0 0
        %5227 = vmatmul.mubr.bf16.gmra.mrb[0].mxu0 %v5158
        %v5228 = vpop.f32.mrb[0].mxu0
        %v5229 = vadd.f32 0.0, %v5228
        %v5230 = vpop.f32.mrb[0].mxu0
        %v5231 = vpop.f32.mrb[0].mxu0
        %v5232 = vadd.f32 0.0, %v5231
        %v5233 = vpop.f32.mrb[0].mxu0
        %5234 = vmatprep.mubr.bf16.mxu0 0
        %5235 = vmatmul.mubr.bf16.gmra.mrb[0].mxu0 %v5161
        %v5236 = vpop.f32.mrb[0].mxu0
        %v5237 = vadd.f32 0.0, %v5236
        %v5238 = vpop.f32.mrb[0].mxu0
        %v5239 = vpop.f32.mrb[0].mxu0
        %v5240 = vadd.f32 0.0, %v5239
        %v5241 = vpop.f32.mrb[0].mxu0
        %5242 = vmatprep.mubr.bf16.mxu0 0
        %5243 = vmatmul.mubr.bf16.gmra.mrb[0].mxu0 %v5164
        %v5244 = vpop.f32.mrb[0].mxu0
        %v5245 = vadd.f32 0.0, %v5244
        %v5246 = vpop.f32.mrb[0].mxu0
        %v5247 = vpop.f32.mrb[0].mxu0
        %v5248 = vadd.f32 0.0, %v5247
        %v5249 = vpop.f32.mrb[0].mxu0
        %5250 = vmatprep.mubr.bf16.mxu0 0
        %5251 = vmatmul.mubr.bf16.gmra.mrb[0].mxu0 %v5167
        %v5252 = vpop.f32.mrb[0].mxu0
        %v5253 = vadd.f32 0.0, %v5252
        %v5254 = vpop.f32.mrb[0].mxu0
        %v5255 = vpop.f32.mrb[0].mxu0
        %v5256 = vadd.f32 0.0, %v5255
        %v5257 = vpop.f32.mrb[0].mxu0
        %5258 = vmatprep.mubr.bf16.mxu0 0
        %5259 = vmatmul.mubr.bf16.gmra.mrb[0].mxu0 %v5170
        %v5260 = vpop.f32.mrb[0].mxu0
        %v5261 = vadd.f32 0.0, %v5260
        %v5262 = vpop.f32.mrb[0].mxu0
        %v5263 = vpop.f32.mrb[0].mxu0
        %v5264 = vadd.f32 0.0, %v5263
        %v5265 = vpop.f32.mrb[0].mxu0
        %5266 = vmatprep.mubr.bf16.mxu0 0
        %5267 = vmatmul.mubr.bf16.gmra.mrb[0].mxu0 %v5173
        %v5268 = vpop.f32.mrb[0].mxu0
        %v5269 = vadd.f32 0.0, %v5268
        %v5270 = vpop.f32.mrb[0].mxu0
        %v5271 = vpop.f32.mrb[0].mxu0
        %v5272 = vadd.f32 0.0, %v5271
        %v5273 = vpop.f32.mrb[0].mxu0
        %5274 = vdwg.mxu0
        %v5275 = vadd.f32 %v4949, %v5213
        %v5276 = vadd.f32 %v4950, %v5216
        %v5277 = vadd.f32 %v4951, %v5221
        %v5278 = vadd.f32 %v4952, %v5224
        %v5279 = vadd.f32 %v4953, %v5229
        %v5280 = vadd.f32 %v4954, %v5232
        %v5281 = vadd.f32 %v4955, %v5237
        %v5282 = vadd.f32 %v4956, %v5240
        %v5283 = vadd.f32 %v4957, %v5245
        %v5284 = vadd.f32 %v4958, %v5248
        %v5285 = vadd.f32 %v4959, %v5253
        %v5286 = vadd.f32 %v4960, %v5256
        %v5287 = vadd.f32 %v4961, %v5261
        %v5288 = vadd.f32 %v4962, %v5264
        %v5289 = vadd.f32 %v4963, %v5269
        %v5290 = vadd.f32 %v4964, %v5272
        %v5291 = vld [vmem:[%s1397] sm:$0xf]
        %v5292 = vld [vmem:[%s1397 + $0x4] sm:$0xf]
        %v5293 = vld [vmem:[%s1397 + $0x8] sm:$0xf]
        %v5294 = vld [vmem:[%s1397 + $0xc] sm:$0xf]
        %v5295 = vld [vmem:[%s1397 + $0x10] sm:$0xf]
        %v5296 = vld [vmem:[%s1397 + $0x14] sm:$0xf]
        %v5297 = vld [vmem:[%s1397 + $0x18] sm:$0xf]
        %v5298 = vld [vmem:[%s1397 + $0x1c] sm:$0xf]
        %v5299 = vld [vmem:[%s1397 + $0x20] sm:$0xf]
        %v5300 = vld [vmem:[%s1397 + $0x24] sm:$0xf]
        %v5301 = vld [vmem:[%s1397 + $0x28] sm:$0xf]
        %v5302 = vld [vmem:[%s1397 + $0x2c] sm:$0xf]
        %v5303 = vld [vmem:[%s1397 + $0x30] sm:$0xf]
        %v5304 = vld [vmem:[%s1397 + $0x34] sm:$0xf]
        %v5305 = vld [vmem:[%s1397 + $0x38] sm:$0xf]
        %v5306 = vld [vmem:[%s1397 + $0x3c] sm:$0xf]
        %v5323 = vunpack.c.l.b16 %v5291
        %v5324 = vunpack.c.l.b16 %v5292
        %v5325 = vunpack.c.l.b16 %v5293
        %v5326 = vunpack.c.l.b16 %v5294
        %v5327 = vunpack.c.l.b16 %v5295
        %v5328 = vunpack.c.l.b16 %v5296
        %v5329 = vunpack.c.l.b16 %v5297
        %v5330 = vunpack.c.l.b16 %v5298
        %v5331 = vunpack.c.l.b16 %v5299
        %v5332 = vunpack.c.l.b16 %v5300
        %v5333 = vunpack.c.l.b16 %v5301
        %v5334 = vunpack.c.l.b16 %v5302
        %v5335 = vunpack.c.l.b16 %v5303
        %v5336 = vunpack.c.l.b16 %v5304
        %v5337 = vunpack.c.l.b16 %v5305
        %v5338 = vunpack.c.l.b16 %v5306
        %v5339 = vpack.c.b16 %v5324, %v5323
        %v5340 = vpack.c.b16 %v5326, %v5325
        %v5341 = vpack.c.b16 %v5328, %v5327
        %v5342 = vpack.c.b16 %v5330, %v5329
        %v5343 = vpack.c.b16 %v5332, %v5331
        %v5344 = vpack.c.b16 %v5334, %v5333
        %v5345 = vpack.c.b16 %v5336, %v5335
        %v5346 = vpack.c.b16 %v5338, %v5337
        %v5348 = vsel %vm461, %v5339, 0
        %v5351 = vsel %vm461, %v5340, 0
        %v5354 = vsel %vm461, %v5341, 0
        %v5357 = vsel %vm461, %v5342, 0
        %v5360 = vsel %vm461, %v5343, 0
        %v5363 = vsel %vm461, %v5344, 0
        %v5366 = vsel %vm461, %v5345, 0
        %v5369 = vsel %vm461, %v5346, 0
        %5371 = vmatprep.subr.bf16.mxu0 0
        %5372 = vmatpush1.bf16.msra.mxu0 %v4353
        %5373 = vmatprep.subr.bf16.mxu0 0
        %5374 = vmatpush1.bf16.msra.mxu0 %v4354
        %5375 = vmatprep.subr.bf16.mxu0 0
        %5376 = vmatpush1.bf16.msra.mxu0 %v4355
        %5377 = vmatprep.subr.bf16.mxu0 0
        %5378 = vmatpush1.bf16.msra.mxu0 %v4356
        %5379 = vmatprep.subr.bf16.mxu0 0
        %5380 = vmatpush1.bf16.msra.mxu0 %v4357
        %5381 = vmatprep.subr.bf16.mxu0 0
        %5382 = vmatpush1.bf16.msra.mxu0 %v4358
        %5383 = vmatprep.subr.bf16.mxu0 0
        %5384 = vmatpush1.bf16.msra.mxu0 %v4391
        %5385 = vmatprep.subr.bf16.mxu0 0
        %5386 = vmatpush1.bf16.msra.mxu0 0
        %5387 = vmatprep.subr.bf16.mxu0 0
        %5388 = vmatpush1.bf16.msra.mxu0 0
        %5389 = vmatprep.subr.bf16.mxu0 0
        %5390 = vmatpush1.bf16.msra.mxu0 0
        %5391 = vmatprep.subr.bf16.mxu0 0
        %5392 = vmatpush1.bf16.msra.mxu0 0
        %5393 = vmatprep.subr.bf16.mxu0 0
        %5394 = vmatpush1.bf16.msra.mxu0 0
        %5395 = vmatprep.subr.bf16.mxu0 0
        %5396 = vmatpush1.bf16.msra.mxu0 0
        %5397 = vmatprep.subr.bf16.mxu0 0
        %5398 = vmatpush1.bf16.msra.mxu0 0
        %5399 = vmatprep.subr.bf16.mxu0 0
        %5400 = vmatpush1.bf16.msra.mxu0 0
        %5401 = vmatprep.subr.bf16.mxu0 0
        %5402 = vmatpush1.bf16.msra.mxu0 0
        %5403 = vmatprep.mubr.bf16.mxu0 0
        %5404 = vmatmul.mubr.bf16.gmra.mrb[0].mxu0 %v5348
        %v5405 = vpop.f32.mrb[0].mxu0
        %v5406 = vadd.f32 0.0, %v5405
        %v5407 = vpop.f32.mrb[0].mxu0
        %v5408 = vpop.f32.mrb[0].mxu0
        %v5409 = vadd.f32 0.0, %v5408
        %v5410 = vpop.f32.mrb[0].mxu0
        %5411 = vmatprep.mubr.bf16.mxu0 0
        %5412 = vmatmul.mubr.bf16.gmra.mrb[0].mxu0 %v5351
        %v5413 = vpop.f32.mrb[0].mxu0
        %v5414 = vadd.f32 0.0, %v5413
        %v5415 = vpop.f32.mrb[0].mxu0
        %v5416 = vpop.f32.mrb[0].mxu0
        %v5417 = vadd.f32 0.0, %v5416
        %v5418 = vpop.f32.mrb[0].mxu0
        %5419 = vmatprep.mubr.bf16.mxu0 0
        %5420 = vmatmul.mubr.bf16.gmra.mrb[0].mxu0 %v5354
        %v5421 = vpop.f32.mrb[0].mxu0
        %v5422 = vadd.f32 0.0, %v5421
        %v5423 = vpop.f32.mrb[0].mxu0
        %v5424 = vpop.f32.mrb[0].mxu0
        %v5425 = vadd.f32 0.0, %v5424
        %v5426 = vpop.f32.mrb[0].mxu0
        %5427 = vmatprep.mubr.bf16.mxu0 0
        %5428 = vmatmul.mubr.bf16.gmra.mrb[0].mxu0 %v5357
        %v5429 = vpop.f32.mrb[0].mxu0
        %v5430 = vadd.f32 0.0, %v5429
        %v5431 = vpop.f32.mrb[0].mxu0
        %v5432 = vpop.f32.mrb[0].mxu0
        %v5433 = vadd.f32 0.0, %v5432
        %v5434 = vpop.f32.mrb[0].mxu0
        %5435 = vmatprep.mubr.bf16.mxu0 0
        %5436 = vmatmul.mubr.bf16.gmra.mrb[0].mxu0 %v5360
        %v5437 = vpop.f32.mrb[0].mxu0
        %v5438 = vadd.f32 0.0, %v5437
        %v5439 = vpop.f32.mrb[0].mxu0
        %v5440 = vpop.f32.mrb[0].mxu0
        %v5441 = vadd.f32 0.0, %v5440
        %v5442 = vpop.f32.mrb[0].mxu0
        %5443 = vmatprep.mubr.bf16.mxu0 0
        %5444 = vmatmul.mubr.bf16.gmra.mrb[0].mxu0 %v5363
        %v5445 = vpop.f32.mrb[0].mxu0
        %v5446 = vadd.f32 0.0, %v5445
        %v5447 = vpop.f32.mrb[0].mxu0
        %v5448 = vpop.f32.mrb[0].mxu0
        %v5449 = vadd.f32 0.0, %v5448
        %v5450 = vpop.f32.mrb[0].mxu0
        %5451 = vmatprep.mubr.bf16.mxu0 0
        %5452 = vmatmul.mubr.bf16.gmra.mrb[0].mxu0 %v5366
        %v5453 = vpop.f32.mrb[0].mxu0
        %v5454 = vadd.f32 0.0, %v5453
        %v5455 = vpop.f32.mrb[0].mxu0
        %v5456 = vpop.f32.mrb[0].mxu0
        %v5457 = vadd.f32 0.0, %v5456
        %v5458 = vpop.f32.mrb[0].mxu0
        %5459 = vmatprep.mubr.bf16.mxu0 0
        %5460 = vmatmul.mubr.bf16.gmra.mrb[0].mxu0 %v5369
        %v5461 = vpop.f32.mrb[0].mxu0
        %v5462 = vadd.f32 0.0, %v5461
        %v5463 = vpop.f32.mrb[0].mxu0
        %v5464 = vpop.f32.mrb[0].mxu0
        %v5465 = vadd.f32 0.0, %v5464
        %v5466 = vpop.f32.mrb[0].mxu0
        %5467 = vdwg.mxu0
        %v5468 = vpack.c.bf16 %v5409, %v5406
        %v5469 = vpack.c.bf16 %v5417, %v5414
        %v5470 = vpack.c.bf16 %v5425, %v5422
        %v5471 = vpack.c.bf16 %v5433, %v5430
        %v5472 = vpack.c.bf16 %v5441, %v5438
        %v5473 = vpack.c.bf16 %v5449, %v5446
        %v5474 = vpack.c.bf16 %v5457, %v5454
        %v5475 = vpack.c.bf16 %v5465, %v5462
        %v5476 = vld [vmem:[%s1583] sm:$0x3]
        %v5478 = vsel %vm596, %v5468, 0
        %v5481 = vsel %vm596, %v5469, 0
        %v5484 = vsel %vm596, %v5470, 0
        %v5487 = vsel %vm596, %v5471, 0
        %v5490 = vsel %vm596, %v5472, 0
        %v5493 = vsel %vm596, %v5473, 0
        %v5496 = vsel %vm596, %v5474, 0
        %v5499 = vsel %vm596, %v5475, 0
        %v5502 = vand.u32 %v5476, %v624
        %5504 = vmatprep.subr.bf16.mxu0 0
        %5505 = vmatpush1.bf16.msra.mxu0 %v5502
        %5506 = vmatprep.subr.bf16.mxu0 0
        %5507 = vmatpush1.bf16.msra.mxu0 0
        %5508 = vmatprep.subr.bf16.mxu0 0
        %5509 = vmatpush1.bf16.msra.mxu0 0
        %5510 = vmatprep.subr.bf16.mxu0 0
        %5511 = vmatpush1.bf16.msra.mxu0 0
        %5512 = vmatprep.subr.bf16.mxu0 0
        %5513 = vmatpush1.bf16.msra.mxu0 0
        %5514 = vmatprep.subr.bf16.mxu0 0
        %5515 = vmatpush1.bf16.msra.mxu0 0
        %5516 = vmatprep.subr.bf16.mxu0 0
        %5517 = vmatpush1.bf16.msra.mxu0 0
        %5518 = vmatprep.subr.bf16.mxu0 0
        %5519 = vmatpush1.bf16.msra.mxu0 0
        %5520 = vmatprep.subr.bf16.mxu0 0
        %5521 = vmatpush1.bf16.msra.mxu0 0
        %5522 = vmatprep.subr.bf16.mxu0 0
        %5523 = vmatpush1.bf16.msra.mxu0 0
        %5524 = vmatprep.subr.bf16.mxu0 0
        %5525 = vmatpush1.bf16.msra.mxu0 0
        %5526 = vmatprep.subr.bf16.mxu0 0
        %5527 = vmatpush1.bf16.msra.mxu0 0
        %5528 = vmatprep.subr.bf16.mxu0 0
        %5529 = vmatpush1.bf16.msra.mxu0 0
        %5530 = vmatprep.subr.bf16.mxu0 0
        %5531 = vmatpush1.bf16.msra.mxu0 0
        %5532 = vmatprep.subr.bf16.mxu0 0
        %5533 = vmatpush1.bf16.msra.mxu0 0
        %5534 = vmatprep.subr.bf16.mxu0 0
        %5535 = vmatpush1.bf16.msra.mxu0 0
        %5536 = vmatprep.mubr.bf16.mxu0 0
        %5537 = vmatmul.mubr.bf16.gmra.mrb[0].mxu0 %v5478
        %v5538 = vpop.f32.mrb[0].mxu0
        %v5539 = vadd.f32 0.0, %v5538
        %v5540 = vpop.f32.mrb[0].mxu0
        %v5541 = vpop.f32.mrb[0].mxu0
        %v5542 = vadd.f32 0.0, %v5541
        %v5543 = vpop.f32.mrb[0].mxu0
        %5544 = vmatprep.mubr.bf16.mxu0 0
        %5545 = vmatmul.mubr.bf16.gmra.mrb[0].mxu0 %v5481
        %v5546 = vpop.f32.mrb[0].mxu0
        %v5547 = vadd.f32 0.0, %v5546
        %v5548 = vpop.f32.mrb[0].mxu0
        %v5549 = vpop.f32.mrb[0].mxu0
        %v5550 = vadd.f32 0.0, %v5549
        %v5551 = vpop.f32.mrb[0].mxu0
        %5552 = vmatprep.mubr.bf16.mxu0 0
        %5553 = vmatmul.mubr.bf16.gmra.mrb[0].mxu0 %v5484
        %v5554 = vpop.f32.mrb[0].mxu0
        %v5555 = vadd.f32 0.0, %v5554
        %v5556 = vpop.f32.mrb[0].mxu0
        %v5557 = vpop.f32.mrb[0].mxu0
        %v5558 = vadd.f32 0.0, %v5557
        %v5559 = vpop.f32.mrb[0].mxu0
        %5560 = vmatprep.mubr.bf16.mxu0 0
        %5561 = vmatmul.mubr.bf16.gmra.mrb[0].mxu0 %v5487
        %v5562 = vpop.f32.mrb[0].mxu0
        %v5563 = vadd.f32 0.0, %v5562
        %v5564 = vpop.f32.mrb[0].mxu0
        %v5565 = vpop.f32.mrb[0].mxu0
        %v5566 = vadd.f32 0.0, %v5565
        %v5567 = vpop.f32.mrb[0].mxu0
        %5568 = vmatprep.mubr.bf16.mxu0 0
        %5569 = vmatmul.mubr.bf16.gmra.mrb[0].mxu0 %v5490
        %v5570 = vpop.f32.mrb[0].mxu0
        %v5571 = vadd.f32 0.0, %v5570
        %v5572 = vpop.f32.mrb[0].mxu0
        %v5573 = vpop.f32.mrb[0].mxu0
        %v5574 = vadd.f32 0.0, %v5573
        %v5575 = vpop.f32.mrb[0].mxu0
        %5576 = vmatprep.mubr.bf16.mxu0 0
        %5577 = vmatmul.mubr.bf16.gmra.mrb[0].mxu0 %v5493
        %v5578 = vpop.f32.mrb[0].mxu0
        %v5579 = vadd.f32 0.0, %v5578
        %v5580 = vpop.f32.mrb[0].mxu0
        %v5581 = vpop.f32.mrb[0].mxu0
        %v5582 = vadd.f32 0.0, %v5581
        %v5583 = vpop.f32.mrb[0].mxu0
        %5584 = vmatprep.mubr.bf16.mxu0 0
        %5585 = vmatmul.mubr.bf16.gmra.mrb[0].mxu0 %v5496
        %v5586 = vpop.f32.mrb[0].mxu0
        %v5587 = vadd.f32 0.0, %v5586
        %v5588 = vpop.f32.mrb[0].mxu0
        %v5589 = vpop.f32.mrb[0].mxu0
        %v5590 = vadd.f32 0.0, %v5589
        %v5591 = vpop.f32.mrb[0].mxu0
        %5592 = vmatprep.mubr.bf16.mxu0 0
        %5593 = vmatmul.mubr.bf16.gmra.mrb[0].mxu0 %v5499
        %v5594 = vpop.f32.mrb[0].mxu0
        %v5595 = vadd.f32 0.0, %v5594
        %v5596 = vpop.f32.mrb[0].mxu0
        %v5597 = vpop.f32.mrb[0].mxu0
        %v5598 = vadd.f32 0.0, %v5597
        %v5599 = vpop.f32.mrb[0].mxu0
        %5600 = vdwg.mxu0
        %v5601 = vadd.f32 %v5275, %v5539
        %v5602 = vadd.f32 %v5276, %v5542
        %v5603 = vadd.f32 %v5277, %v5547
        %v5604 = vadd.f32 %v5278, %v5550
        %v5605 = vadd.f32 %v5279, %v5555
        %v5606 = vadd.f32 %v5280, %v5558
        %v5607 = vadd.f32 %v5281, %v5563
        %v5608 = vadd.f32 %v5282, %v5566
        %v5609 = vadd.f32 %v5283, %v5571
        %v5610 = vadd.f32 %v5284, %v5574
        %v5611 = vadd.f32 %v5285, %v5579
        %v5612 = vadd.f32 %v5286, %v5582
        %v5613 = vadd.f32 %v5287, %v5587
        %v5614 = vadd.f32 %v5288, %v5590
        %v5615 = vadd.f32 %v5289, %v5595
        %v5616 = vadd.f32 %v5290, %v5598
        %v5617 = vld [vmem:[%s1725] sm:$0xf]
        %v5618 = vld [vmem:[%s1725 + $0x4] sm:$0xf]
        %v5619 = vld [vmem:[%s1725 + $0x8] sm:$0xf]
        %v5620 = vld [vmem:[%s1725 + $0xc] sm:$0xf]
        %v5621 = vld [vmem:[%s1725 + $0x10] sm:$0xf]
        %v5622 = vld [vmem:[%s1725 + $0x14] sm:$0xf]
        %v5623 = vld [vmem:[%s1725 + $0x18] sm:$0xf]
        %v5624 = vld [vmem:[%s1725 + $0x1c] sm:$0xf]
        %v5625 = vld [vmem:[%s1725 + $0x20] sm:$0xf]
        %v5626 = vld [vmem:[%s1725 + $0x24] sm:$0xf]
        %v5627 = vld [vmem:[%s1725 + $0x28] sm:$0xf]
        %v5628 = vld [vmem:[%s1725 + $0x2c] sm:$0xf]
        %v5629 = vld [vmem:[%s1725 + $0x30] sm:$0xf]
        %v5630 = vld [vmem:[%s1725 + $0x34] sm:$0xf]
        %v5631 = vld [vmem:[%s1725 + $0x38] sm:$0xf]
        %v5632 = vld [vmem:[%s1725 + $0x3c] sm:$0xf]
        %v5649 = vunpack.c.l.b16 %v5617
        %v5650 = vunpack.c.l.b16 %v5618
        %v5651 = vunpack.c.l.b16 %v5619
        %v5652 = vunpack.c.l.b16 %v5620
        %v5653 = vunpack.c.l.b16 %v5621
        %v5654 = vunpack.c.l.b16 %v5622
        %v5655 = vunpack.c.l.b16 %v5623
        %v5656 = vunpack.c.l.b16 %v5624
        %v5657 = vunpack.c.l.b16 %v5625
        %v5658 = vunpack.c.l.b16 %v5626
        %v5659 = vunpack.c.l.b16 %v5627
        %v5660 = vunpack.c.l.b16 %v5628
        %v5661 = vunpack.c.l.b16 %v5629
        %v5662 = vunpack.c.l.b16 %v5630
        %v5663 = vunpack.c.l.b16 %v5631
        %v5664 = vunpack.c.l.b16 %v5632
        %v5665 = vpack.c.b16 %v5650, %v5649
        %v5666 = vpack.c.b16 %v5652, %v5651
        %v5667 = vpack.c.b16 %v5654, %v5653
        %v5668 = vpack.c.b16 %v5656, %v5655
        %v5669 = vpack.c.b16 %v5658, %v5657
        %v5670 = vpack.c.b16 %v5660, %v5659
        %v5671 = vpack.c.b16 %v5662, %v5661
        %v5672 = vpack.c.b16 %v5664, %v5663
        %v5674 = vsel %vm461, %v5665, 0
        %v5677 = vsel %vm461, %v5666, 0
        %v5680 = vsel %vm461, %v5667, 0
        %v5683 = vsel %vm461, %v5668, 0
        %v5686 = vsel %vm461, %v5669, 0
        %v5689 = vsel %vm461, %v5670, 0
        %v5692 = vsel %vm461, %v5671, 0
        %v5695 = vsel %vm461, %v5672, 0
        %5697 = vmatprep.subr.bf16.mxu0 0
        %5698 = vmatpush1.bf16.msra.mxu0 %v4353
        %5699 = vmatprep.subr.bf16.mxu0 0
        %5700 = vmatpush1.bf16.msra.mxu0 %v4354
        %5701 = vmatprep.subr.bf16.mxu0 0
        %5702 = vmatpush1.bf16.msra.mxu0 %v4355
        %5703 = vmatprep.subr.bf16.mxu0 0
        %5704 = vmatpush1.bf16.msra.mxu0 %v4356
        %5705 = vmatprep.subr.bf16.mxu0 0
        %5706 = vmatpush1.bf16.msra.mxu0 %v4357
        %5707 = vmatprep.subr.bf16.mxu0 0
        %5708 = vmatpush1.bf16.msra.mxu0 %v4358
        %5709 = vmatprep.subr.bf16.mxu0 0
        %5710 = vmatpush1.bf16.msra.mxu0 %v4391
        %5711 = vmatprep.subr.bf16.mxu0 0
        %5712 = vmatpush1.bf16.msra.mxu0 0
        %5713 = vmatprep.subr.bf16.mxu0 0
        %5714 = vmatpush1.bf16.msra.mxu0 0
        %5715 = vmatprep.subr.bf16.mxu0 0
        %5716 = vmatpush1.bf16.msra.mxu0 0
        %5717 = vmatprep.subr.bf16.mxu0 0
        %5718 = vmatpush1.bf16.msra.mxu0 0
        %5719 = vmatprep.subr.bf16.mxu0 0
        %5720 = vmatpush1.bf16.msra.mxu0 0
        %5721 = vmatprep.subr.bf16.mxu0 0
        %5722 = vmatpush1.bf16.msra.mxu0 0
        %5723 = vmatprep.subr.bf16.mxu0 0
        %5724 = vmatpush1.bf16.msra.mxu0 0
        %5725 = vmatprep.subr.bf16.mxu0 0
        %5726 = vmatpush1.bf16.msra.mxu0 0
        %5727 = vmatprep.subr.bf16.mxu0 0
        %5728 = vmatpush1.bf16.msra.mxu0 0
        %5729 = vmatprep.mubr.bf16.mxu0 0
        %5730 = vmatmul.mubr.bf16.gmra.mrb[0].mxu0 %v5674
        %v5731 = vpop.f32.mrb[0].mxu0
        %v5732 = vadd.f32 0.0, %v5731
        %v5733 = vpop.f32.mrb[0].mxu0
        %v5734 = vpop.f32.mrb[0].mxu0
        %v5735 = vadd.f32 0.0, %v5734
        %v5736 = vpop.f32.mrb[0].mxu0
        %5737 = vmatprep.mubr.bf16.mxu0 0
        %5738 = vmatmul.mubr.bf16.gmra.mrb[0].mxu0 %v5677
        %v5739 = vpop.f32.mrb[0].mxu0
        %v5740 = vadd.f32 0.0, %v5739
        %v5741 = vpop.f32.mrb[0].mxu0
        %v5742 = vpop.f32.mrb[0].mxu0
        %v5743 = vadd.f32 0.0, %v5742
        %v5744 = vpop.f32.mrb[0].mxu0
        %5745 = vmatprep.mubr.bf16.mxu0 0
        %5746 = vmatmul.mubr.bf16.gmra.mrb[0].mxu0 %v5680
        %v5747 = vpop.f32.mrb[0].mxu0
        %v5748 = vadd.f32 0.0, %v5747
        %v5749 = vpop.f32.mrb[0].mxu0
        %v5750 = vpop.f32.mrb[0].mxu0
        %v5751 = vadd.f32 0.0, %v5750
        %v5752 = vpop.f32.mrb[0].mxu0
        %5753 = vmatprep.mubr.bf16.mxu0 0
        %5754 = vmatmul.mubr.bf16.gmra.mrb[0].mxu0 %v5683
        %v5755 = vpop.f32.mrb[0].mxu0
        %v5756 = vadd.f32 0.0, %v5755
        %v5757 = vpop.f32.mrb[0].mxu0
        %v5758 = vpop.f32.mrb[0].mxu0
        %v5759 = vadd.f32 0.0, %v5758
        %v5760 = vpop.f32.mrb[0].mxu0
        %5761 = vmatprep.mubr.bf16.mxu0 0
        %5762 = vmatmul.mubr.bf16.gmra.mrb[0].mxu0 %v5686
        %v5763 = vpop.f32.mrb[0].mxu0
        %v5764 = vadd.f32 0.0, %v5763
        %v5765 = vpop.f32.mrb[0].mxu0
        %v5766 = vpop.f32.mrb[0].mxu0
        %v5767 = vadd.f32 0.0, %v5766
        %v5768 = vpop.f32.mrb[0].mxu0
        %5769 = vmatprep.mubr.bf16.mxu0 0
        %5770 = vmatmul.mubr.bf16.gmra.mrb[0].mxu0 %v5689
        %v5771 = vpop.f32.mrb[0].mxu0
        %v5772 = vadd.f32 0.0, %v5771
        %v5773 = vpop.f32.mrb[0].mxu0
        %v5774 = vpop.f32.mrb[0].mxu0
        %v5775 = vadd.f32 0.0, %v5774
        %v5776 = vpop.f32.mrb[0].mxu0
        %5777 = vmatprep.mubr.bf16.mxu0 0
        %5778 = vmatmul.mubr.bf16.gmra.mrb[0].mxu0 %v5692
        %v5779 = vpop.f32.mrb[0].mxu0
        %v5780 = vadd.f32 0.0, %v5779
        %v5781 = vpop.f32.mrb[0].mxu0
        %v5782 = vpop.f32.mrb[0].mxu0
        %v5783 = vadd.f32 0.0, %v5782
        %v5784 = vpop.f32.mrb[0].mxu0
        %5785 = vmatprep.mubr.bf16.mxu0 0
        %5786 = vmatmul.mubr.bf16.gmra.mrb[0].mxu0 %v5695
        %v5787 = vpop.f32.mrb[0].mxu0
        %v5788 = vadd.f32 0.0, %v5787
        %v5789 = vpop.f32.mrb[0].mxu0
        %v5790 = vpop.f32.mrb[0].mxu0
        %v5791 = vadd.f32 0.0, %v5790
        %v5792 = vpop.f32.mrb[0].mxu0
        %5793 = vdwg.mxu0
        %v5794 = vpack.c.bf16 %v5735, %v5732
        %v5795 = vpack.c.bf16 %v5743, %v5740
        %v5796 = vpack.c.bf16 %v5751, %v5748
        %v5797 = vpack.c.bf16 %v5759, %v5756
        %v5798 = vpack.c.bf16 %v5767, %v5764
        %v5799 = vpack.c.bf16 %v5775, %v5772
        %v5800 = vpack.c.bf16 %v5783, %v5780
        %v5801 = vpack.c.bf16 %v5791, %v5788
        %v5802 = vld [vmem:[%s1911] sm:$0x3]
        %v5804 = vsel %vm596, %v5794, 0
        %v5807 = vsel %vm596, %v5795, 0
        %v5810 = vsel %vm596, %v5796, 0
        %v5813 = vsel %vm596, %v5797, 0
        %v5816 = vsel %vm596, %v5798, 0
        %v5819 = vsel %vm596, %v5799, 0
        %v5822 = vsel %vm596, %v5800, 0
        %v5825 = vsel %vm596, %v5801, 0
        %v5828 = vand.u32 %v5802, %v624
        %5830 = vmatprep.subr.bf16.mxu0 0
        %5831 = vmatpush1.bf16.msra.mxu0 %v5828
        %5832 = vmatprep.subr.bf16.mxu0 0
        %5833 = vmatpush1.bf16.msra.mxu0 0
        %5834 = vmatprep.subr.bf16.mxu0 0
        %5835 = vmatpush1.bf16.msra.mxu0 0
        %5836 = vmatprep.subr.bf16.mxu0 0
        %5837 = vmatpush1.bf16.msra.mxu0 0
        %5838 = vmatprep.subr.bf16.mxu0 0
        %5839 = vmatpush1.bf16.msra.mxu0 0
        %5840 = vmatprep.subr.bf16.mxu0 0
        %5841 = vmatpush1.bf16.msra.mxu0 0
        %5842 = vmatprep.subr.bf16.mxu0 0
        %5843 = vmatpush1.bf16.msra.mxu0 0
        %5844 = vmatprep.subr.bf16.mxu0 0
        %5845 = vmatpush1.bf16.msra.mxu0 0
        %5846 = vmatprep.subr.bf16.mxu0 0
        %5847 = vmatpush1.bf16.msra.mxu0 0
        %5848 = vmatprep.subr.bf16.mxu0 0
        %5849 = vmatpush1.bf16.msra.mxu0 0
        %5850 = vmatprep.subr.bf16.mxu0 0
        %5851 = vmatpush1.bf16.msra.mxu0 0
        %5852 = vmatprep.subr.bf16.mxu0 0
        %5853 = vmatpush1.bf16.msra.mxu0 0
        %5854 = vmatprep.subr.bf16.mxu0 0
        %5855 = vmatpush1.bf16.msra.mxu0 0
        %5856 = vmatprep.subr.bf16.mxu0 0
        %5857 = vmatpush1.bf16.msra.mxu0 0
        %5858 = vmatprep.subr.bf16.mxu0 0
        %5859 = vmatpush1.bf16.msra.mxu0 0
        %5860 = vmatprep.subr.bf16.mxu0 0
        %5861 = vmatpush1.bf16.msra.mxu0 0
        %5862 = vmatprep.mubr.bf16.mxu0 0
        %5863 = vmatmul.mubr.bf16.gmra.mrb[0].mxu0 %v5804
        %v5864 = vpop.f32.mrb[0].mxu0
        %v5865 = vadd.f32 0.0, %v5864
        %v5866 = vpop.f32.mrb[0].mxu0
        %v5867 = vpop.f32.mrb[0].mxu0
        %v5868 = vadd.f32 0.0, %v5867
        %v5869 = vpop.f32.mrb[0].mxu0
        %5870 = vmatprep.mubr.bf16.mxu0 0
        %5871 = vmatmul.mubr.bf16.gmra.mrb[0].mxu0 %v5807
        %v5872 = vpop.f32.mrb[0].mxu0
        %v5873 = vadd.f32 0.0, %v5872
        %v5874 = vpop.f32.mrb[0].mxu0
        %v5875 = vpop.f32.mrb[0].mxu0
        %v5876 = vadd.f32 0.0, %v5875
        %v5877 = vpop.f32.mrb[0].mxu0
        %5878 = vmatprep.mubr.bf16.mxu0 0
        %5879 = vmatmul.mubr.bf16.gmra.mrb[0].mxu0 %v5810
        %v5880 = vpop.f32.mrb[0].mxu0
        %v5881 = vadd.f32 0.0, %v5880
        %v5882 = vpop.f32.mrb[0].mxu0
        %v5883 = vpop.f32.mrb[0].mxu0
        %v5884 = vadd.f32 0.0, %v5883
        %v5885 = vpop.f32.mrb[0].mxu0
        %5886 = vmatprep.mubr.bf16.mxu0 0
        %5887 = vmatmul.mubr.bf16.gmra.mrb[0].mxu0 %v5813
        %v5888 = vpop.f32.mrb[0].mxu0
        %v5889 = vadd.f32 0.0, %v5888
        %v5890 = vpop.f32.mrb[0].mxu0
        %v5891 = vpop.f32.mrb[0].mxu0
        %v5892 = vadd.f32 0.0, %v5891
        %v5893 = vpop.f32.mrb[0].mxu0
        %5894 = vmatprep.mubr.bf16.mxu0 0
        %5895 = vmatmul.mubr.bf16.gmra.mrb[0].mxu0 %v5816
        %v5896 = vpop.f32.mrb[0].mxu0
        %v5897 = vadd.f32 0.0, %v5896
        %v5898 = vpop.f32.mrb[0].mxu0
        %v5899 = vpop.f32.mrb[0].mxu0
        %v5900 = vadd.f32 0.0, %v5899
        %v5901 = vpop.f32.mrb[0].mxu0
        %5902 = vmatprep.mubr.bf16.mxu0 0
        %5903 = vmatmul.mubr.bf16.gmra.mrb[0].mxu0 %v5819
        %v5904 = vpop.f32.mrb[0].mxu0
        %v5905 = vadd.f32 0.0, %v5904
        %v5906 = vpop.f32.mrb[0].mxu0
        %v5907 = vpop.f32.mrb[0].mxu0
        %v5908 = vadd.f32 0.0, %v5907
        %v5909 = vpop.f32.mrb[0].mxu0
        %5910 = vmatprep.mubr.bf16.mxu0 0
        %5911 = vmatmul.mubr.bf16.gmra.mrb[0].mxu0 %v5822
        %v5912 = vpop.f32.mrb[0].mxu0
        %v5913 = vadd.f32 0.0, %v5912
        %v5914 = vpop.f32.mrb[0].mxu0
        %v5915 = vpop.f32.mrb[0].mxu0
        %v5916 = vadd.f32 0.0, %v5915
        %v5917 = vpop.f32.mrb[0].mxu0
        %5918 = vmatprep.mubr.bf16.mxu0 0
        %5919 = vmatmul.mubr.bf16.gmra.mrb[0].mxu0 %v5825
        %v5920 = vpop.f32.mrb[0].mxu0
        %v5921 = vadd.f32 0.0, %v5920
        %v5922 = vpop.f32.mrb[0].mxu0
        %v5923 = vpop.f32.mrb[0].mxu0
        %v5924 = vadd.f32 0.0, %v5923
        %v5925 = vpop.f32.mrb[0].mxu0
        %5926 = vdwg.mxu0
        %v5927 = vadd.f32 %v5601, %v5865
        %v5928 = vadd.f32 %v5602, %v5868
        %v5929 = vadd.f32 %v5603, %v5873
        %v5930 = vadd.f32 %v5604, %v5876
        %v5931 = vadd.f32 %v5605, %v5881
        %v5932 = vadd.f32 %v5606, %v5884
        %v5933 = vadd.f32 %v5607, %v5889
        %v5934 = vadd.f32 %v5608, %v5892
        %v5935 = vadd.f32 %v5609, %v5897
        %v5936 = vadd.f32 %v5610, %v5900
        %v5937 = vadd.f32 %v5611, %v5905
        %v5938 = vadd.f32 %v5612, %v5908
        %v5939 = vadd.f32 %v5613, %v5913
        %v5940 = vadd.f32 %v5614, %v5916
        %v5941 = vadd.f32 %v5615, %v5921
        %v5942 = vadd.f32 %v5616, %v5924
        %v5943 = vld [vmem:[%s2053] sm:$0xf]
        %v5944 = vld [vmem:[%s2053 + $0x4] sm:$0xf]
        %v5945 = vld [vmem:[%s2053 + $0x8] sm:$0xf]
        %v5946 = vld [vmem:[%s2053 + $0xc] sm:$0xf]
        %v5947 = vld [vmem:[%s2053 + $0x10] sm:$0xf]
        %v5948 = vld [vmem:[%s2053 + $0x14] sm:$0xf]
        %v5949 = vld [vmem:[%s2053 + $0x18] sm:$0xf]
        %v5950 = vld [vmem:[%s2053 + $0x1c] sm:$0xf]
        %v5951 = vld [vmem:[%s2053 + $0x20] sm:$0xf]
        %v5952 = vld [vmem:[%s2053 + $0x24] sm:$0xf]
        %v5953 = vld [vmem:[%s2053 + $0x28] sm:$0xf]
        %v5954 = vld [vmem:[%s2053 + $0x2c] sm:$0xf]
        %v5955 = vld [vmem:[%s2053 + $0x30] sm:$0xf]
        %v5956 = vld [vmem:[%s2053 + $0x34] sm:$0xf]
        %v5957 = vld [vmem:[%s2053 + $0x38] sm:$0xf]
        %v5958 = vld [vmem:[%s2053 + $0x3c] sm:$0xf]
        %v5975 = vunpack.c.l.b16 %v5943
        %v5976 = vunpack.c.l.b16 %v5944
        %v5977 = vunpack.c.l.b16 %v5945
        %v5978 = vunpack.c.l.b16 %v5946
        %v5979 = vunpack.c.l.b16 %v5947
        %v5980 = vunpack.c.l.b16 %v5948
        %v5981 = vunpack.c.l.b16 %v5949
        %v5982 = vunpack.c.l.b16 %v5950
        %v5983 = vunpack.c.l.b16 %v5951
        %v5984 = vunpack.c.l.b16 %v5952
        %v5985 = vunpack.c.l.b16 %v5953
        %v5986 = vunpack.c.l.b16 %v5954
        %v5987 = vunpack.c.l.b16 %v5955
        %v5988 = vunpack.c.l.b16 %v5956
        %v5989 = vunpack.c.l.b16 %v5957
        %v5990 = vunpack.c.l.b16 %v5958
        %v5991 = vpack.c.b16 %v5976, %v5975
        %v5992 = vpack.c.b16 %v5978, %v5977
        %v5993 = vpack.c.b16 %v5980, %v5979
        %v5994 = vpack.c.b16 %v5982, %v5981
        %v5995 = vpack.c.b16 %v5984, %v5983
        %v5996 = vpack.c.b16 %v5986, %v5985
        %v5997 = vpack.c.b16 %v5988, %v5987
        %v5998 = vpack.c.b16 %v5990, %v5989
        %v6000 = vsel %vm461, %v5991, 0
        %v6003 = vsel %vm461, %v5992, 0
        %v6006 = vsel %vm461, %v5993, 0
        %v6009 = vsel %vm461, %v5994, 0
        %v6012 = vsel %vm461, %v5995, 0
        %v6015 = vsel %vm461, %v5996, 0
        %v6018 = vsel %vm461, %v5997, 0
        %v6021 = vsel %vm461, %v5998, 0
        %6023 = vmatprep.subr.bf16.mxu0 0
        %6024 = vmatpush1.bf16.msra.mxu0 %v4353
        %6025 = vmatprep.subr.bf16.mxu0 0
        %6026 = vmatpush1.bf16.msra.mxu0 %v4354
        %6027 = vmatprep.subr.bf16.mxu0 0
        %6028 = vmatpush1.bf16.msra.mxu0 %v4355
        %6029 = vmatprep.subr.bf16.mxu0 0
        %6030 = vmatpush1.bf16.msra.mxu0 %v4356
        %6031 = vmatprep.subr.bf16.mxu0 0
        %6032 = vmatpush1.bf16.msra.mxu0 %v4357
        %6033 = vmatprep.subr.bf16.mxu0 0
        %6034 = vmatpush1.bf16.msra.mxu0 %v4358
        %6035 = vmatprep.subr.bf16.mxu0 0
        %6036 = vmatpush1.bf16.msra.mxu0 %v4391
        %6037 = vmatprep.subr.bf16.mxu0 0
        %6038 = vmatpush1.bf16.msra.mxu0 0
        %6039 = vmatprep.subr.bf16.mxu0 0
        %6040 = vmatpush1.bf16.msra.mxu0 0
        %6041 = vmatprep.subr.bf16.mxu0 0
        %6042 = vmatpush1.bf16.msra.mxu0 0
        %6043 = vmatprep.subr.bf16.mxu0 0
        %6044 = vmatpush1.bf16.msra.mxu0 0
        %6045 = vmatprep.subr.bf16.mxu0 0
        %6046 = vmatpush1.bf16.msra.mxu0 0
        %6047 = vmatprep.subr.bf16.mxu0 0
        %6048 = vmatpush1.bf16.msra.mxu0 0
        %6049 = vmatprep.subr.bf16.mxu0 0
        %6050 = vmatpush1.bf16.msra.mxu0 0
        %6051 = vmatprep.subr.bf16.mxu0 0
        %6052 = vmatpush1.bf16.msra.mxu0 0
        %6053 = vmatprep.subr.bf16.mxu0 0
        %6054 = vmatpush1.bf16.msra.mxu0 0
        %6055 = vmatprep.mubr.bf16.mxu0 0
        %6056 = vmatmul.mubr.bf16.gmra.mrb[0].mxu0 %v6000
        %v6057 = vpop.f32.mrb[0].mxu0
        %v6058 = vadd.f32 0.0, %v6057
        %v6059 = vpop.f32.mrb[0].mxu0
        %v6060 = vpop.f32.mrb[0].mxu0
        %v6061 = vadd.f32 0.0, %v6060
        %v6062 = vpop.f32.mrb[0].mxu0
        %6063 = vmatprep.mubr.bf16.mxu0 0
        %6064 = vmatmul.mubr.bf16.gmra.mrb[0].mxu0 %v6003
        %v6065 = vpop.f32.mrb[0].mxu0
        %v6066 = vadd.f32 0.0, %v6065
        %v6067 = vpop.f32.mrb[0].mxu0
        %v6068 = vpop.f32.mrb[0].mxu0
        %v6069 = vadd.f32 0.0, %v6068
        %v6070 = vpop.f32.mrb[0].mxu0
        %6071 = vmatprep.mubr.bf16.mxu0 0
        %6072 = vmatmul.mubr.bf16.gmra.mrb[0].mxu0 %v6006
        %v6073 = vpop.f32.mrb[0].mxu0
        %v6074 = vadd.f32 0.0, %v6073
        %v6075 = vpop.f32.mrb[0].mxu0
        %v6076 = vpop.f32.mrb[0].mxu0
        %v6077 = vadd.f32 0.0, %v6076
        %v6078 = vpop.f32.mrb[0].mxu0
        %6079 = vmatprep.mubr.bf16.mxu0 0
        %6080 = vmatmul.mubr.bf16.gmra.mrb[0].mxu0 %v6009
        %v6081 = vpop.f32.mrb[0].mxu0
        %v6082 = vadd.f32 0.0, %v6081
        %v6083 = vpop.f32.mrb[0].mxu0
        %v6084 = vpop.f32.mrb[0].mxu0
        %v6085 = vadd.f32 0.0, %v6084
        %v6086 = vpop.f32.mrb[0].mxu0
        %6087 = vmatprep.mubr.bf16.mxu0 0
        %6088 = vmatmul.mubr.bf16.gmra.mrb[0].mxu0 %v6012
        %v6089 = vpop.f32.mrb[0].mxu0
        %v6090 = vadd.f32 0.0, %v6089
        %v6091 = vpop.f32.mrb[0].mxu0
        %v6092 = vpop.f32.mrb[0].mxu0
        %v6093 = vadd.f32 0.0, %v6092
        %v6094 = vpop.f32.mrb[0].mxu0
        %6095 = vmatprep.mubr.bf16.mxu0 0
        %6096 = vmatmul.mubr.bf16.gmra.mrb[0].mxu0 %v6015
        %v6097 = vpop.f32.mrb[0].mxu0
        %v6098 = vadd.f32 0.0, %v6097
        %v6099 = vpop.f32.mrb[0].mxu0
        %v6100 = vpop.f32.mrb[0].mxu0
        %v6101 = vadd.f32 0.0, %v6100
        %v6102 = vpop.f32.mrb[0].mxu0
        %6103 = vmatprep.mubr.bf16.mxu0 0
        %6104 = vmatmul.mubr.bf16.gmra.mrb[0].mxu0 %v6018
        %v6105 = vpop.f32.mrb[0].mxu0
        %v6106 = vadd.f32 0.0, %v6105
        %v6107 = vpop.f32.mrb[0].mxu0
        %v6108 = vpop.f32.mrb[0].mxu0
        %v6109 = vadd.f32 0.0, %v6108
        %v6110 = vpop.f32.mrb[0].mxu0
        %6111 = vmatprep.mubr.bf16.mxu0 0
        %6112 = vmatmul.mubr.bf16.gmra.mrb[0].mxu0 %v6021
        %v6113 = vpop.f32.mrb[0].mxu0
        %v6114 = vadd.f32 0.0, %v6113
        %v6115 = vpop.f32.mrb[0].mxu0
        %v6116 = vpop.f32.mrb[0].mxu0
        %v6117 = vadd.f32 0.0, %v6116
        %v6118 = vpop.f32.mrb[0].mxu0
        %6119 = vdwg.mxu0
        %v6120 = vpack.c.bf16 %v6061, %v6058
        %v6121 = vpack.c.bf16 %v6069, %v6066
        %v6122 = vpack.c.bf16 %v6077, %v6074
        %v6123 = vpack.c.bf16 %v6085, %v6082
        %v6124 = vpack.c.bf16 %v6093, %v6090
        %v6125 = vpack.c.bf16 %v6101, %v6098
        %v6126 = vpack.c.bf16 %v6109, %v6106
        %v6127 = vpack.c.bf16 %v6117, %v6114
        %v6128 = vld [vmem:[%s2239] sm:$0x3]
        %v6130 = vsel %vm596, %v6120, 0
        %v6133 = vsel %vm596, %v6121, 0
        %v6136 = vsel %vm596, %v6122, 0
        %v6139 = vsel %vm596, %v6123, 0
        %v6142 = vsel %vm596, %v6124, 0
        %v6145 = vsel %vm596, %v6125, 0
        %v6148 = vsel %vm596, %v6126, 0
        %v6151 = vsel %vm596, %v6127, 0
        %v6154 = vand.u32 %v6128, %v624
        %6156 = vmatprep.subr.bf16.mxu0 0
        %6157 = vmatpush1.bf16.msra.mxu0 %v6154
        %6158 = vmatprep.subr.bf16.mxu0 0
        %6159 = vmatpush1.bf16.msra.mxu0 0
        %6160 = vmatprep.subr.bf16.mxu0 0
        %6161 = vmatpush1.bf16.msra.mxu0 0
        %6162 = vmatprep.subr.bf16.mxu0 0
        %6163 = vmatpush1.bf16.msra.mxu0 0
        %6164 = vmatprep.subr.bf16.mxu0 0
        %6165 = vmatpush1.bf16.msra.mxu0 0
        %6166 = vmatprep.subr.bf16.mxu0 0
        %6167 = vmatpush1.bf16.msra.mxu0 0
        %6168 = vmatprep.subr.bf16.mxu0 0
        %6169 = vmatpush1.bf16.msra.mxu0 0
        %6170 = vmatprep.subr.bf16.mxu0 0
        %6171 = vmatpush1.bf16.msra.mxu0 0
        %6172 = vmatprep.subr.bf16.mxu0 0
        %6173 = vmatpush1.bf16.msra.mxu0 0
        %6174 = vmatprep.subr.bf16.mxu0 0
        %6175 = vmatpush1.bf16.msra.mxu0 0
        %6176 = vmatprep.subr.bf16.mxu0 0
        %6177 = vmatpush1.bf16.msra.mxu0 0
        %6178 = vmatprep.subr.bf16.mxu0 0
        %6179 = vmatpush1.bf16.msra.mxu0 0
        %6180 = vmatprep.subr.bf16.mxu0 0
        %6181 = vmatpush1.bf16.msra.mxu0 0
        %6182 = vmatprep.subr.bf16.mxu0 0
        %6183 = vmatpush1.bf16.msra.mxu0 0
        %6184 = vmatprep.subr.bf16.mxu0 0
        %6185 = vmatpush1.bf16.msra.mxu0 0
        %6186 = vmatprep.subr.bf16.mxu0 0
        %6187 = vmatpush1.bf16.msra.mxu0 0
        %6188 = vmatprep.mubr.bf16.mxu0 0
        %6189 = vmatmul.mubr.bf16.gmra.mrb[0].mxu0 %v6130
        %v6190 = vpop.f32.mrb[0].mxu0
        %v6191 = vadd.f32 0.0, %v6190
        %v6192 = vpop.f32.mrb[0].mxu0
        %v6193 = vpop.f32.mrb[0].mxu0
        %v6194 = vadd.f32 0.0, %v6193
        %v6195 = vpop.f32.mrb[0].mxu0
        %6196 = vmatprep.mubr.bf16.mxu0 0
        %6197 = vmatmul.mubr.bf16.gmra.mrb[0].mxu0 %v6133
        %v6198 = vpop.f32.mrb[0].mxu0
        %v6199 = vadd.f32 0.0, %v6198
        %v6200 = vpop.f32.mrb[0].mxu0
        %v6201 = vpop.f32.mrb[0].mxu0
        %v6202 = vadd.f32 0.0, %v6201
        %v6203 = vpop.f32.mrb[0].mxu0
        %6204 = vmatprep.mubr.bf16.mxu0 0
        %6205 = vmatmul.mubr.bf16.gmra.mrb[0].mxu0 %v6136
        %v6206 = vpop.f32.mrb[0].mxu0
        %v6207 = vadd.f32 0.0, %v6206
        %v6208 = vpop.f32.mrb[0].mxu0
        %v6209 = vpop.f32.mrb[0].mxu0
        %v6210 = vadd.f32 0.0, %v6209
        %v6211 = vpop.f32.mrb[0].mxu0
        %6212 = vmatprep.mubr.bf16.mxu0 0
        %6213 = vmatmul.mubr.bf16.gmra.mrb[0].mxu0 %v6139
        %v6214 = vpop.f32.mrb[0].mxu0
        %v6215 = vadd.f32 0.0, %v6214
        %v6216 = vpop.f32.mrb[0].mxu0
        %v6217 = vpop.f32.mrb[0].mxu0
        %v6218 = vadd.f32 0.0, %v6217
        %v6219 = vpop.f32.mrb[0].mxu0
        %6220 = vmatprep.mubr.bf16.mxu0 0
        %6221 = vmatmul.mubr.bf16.gmra.mrb[0].mxu0 %v6142
        %v6222 = vpop.f32.mrb[0].mxu0
        %v6223 = vadd.f32 0.0, %v6222
        %v6224 = vpop.f32.mrb[0].mxu0
        %v6225 = vpop.f32.mrb[0].mxu0
        %v6226 = vadd.f32 0.0, %v6225
        %v6227 = vpop.f32.mrb[0].mxu0
        %6228 = vmatprep.mubr.bf16.mxu0 0
        %6229 = vmatmul.mubr.bf16.gmra.mrb[0].mxu0 %v6145
        %v6230 = vpop.f32.mrb[0].mxu0
        %v6231 = vadd.f32 0.0, %v6230
        %v6232 = vpop.f32.mrb[0].mxu0
        %v6233 = vpop.f32.mrb[0].mxu0
        %v6234 = vadd.f32 0.0, %v6233
        %v6235 = vpop.f32.mrb[0].mxu0
        %6236 = vmatprep.mubr.bf16.mxu0 0
        %6237 = vmatmul.mubr.bf16.gmra.mrb[0].mxu0 %v6148
        %v6238 = vpop.f32.mrb[0].mxu0
        %v6239 = vadd.f32 0.0, %v6238
        %v6240 = vpop.f32.mrb[0].mxu0
        %v6241 = vpop.f32.mrb[0].mxu0
        %v6242 = vadd.f32 0.0, %v6241
        %v6243 = vpop.f32.mrb[0].mxu0
        %6244 = vmatprep.mubr.bf16.mxu0 0
        %6245 = vmatmul.mubr.bf16.gmra.mrb[0].mxu0 %v6151
        %v6246 = vpop.f32.mrb[0].mxu0
        %v6247 = vadd.f32 0.0, %v6246
        %v6248 = vpop.f32.mrb[0].mxu0
        %v6249 = vpop.f32.mrb[0].mxu0
        %v6250 = vadd.f32 0.0, %v6249
        %v6251 = vpop.f32.mrb[0].mxu0
        %6252 = vdwg.mxu0
        %v6253 = vadd.f32 %v5927, %v6191
        %v6254 = vadd.f32 %v5928, %v6194
        %v6255 = vadd.f32 %v5929, %v6199
        %v6256 = vadd.f32 %v5930, %v6202
        %v6257 = vadd.f32 %v5931, %v6207
        %v6258 = vadd.f32 %v5932, %v6210
        %v6259 = vadd.f32 %v5933, %v6215
        %v6260 = vadd.f32 %v5934, %v6218
        %v6261 = vadd.f32 %v5935, %v6223
        %v6262 = vadd.f32 %v5936, %v6226
        %v6263 = vadd.f32 %v5937, %v6231
        %v6264 = vadd.f32 %v5938, %v6234
        %v6265 = vadd.f32 %v5939, %v6239
        %v6266 = vadd.f32 %v5940, %v6242
        %v6267 = vadd.f32 %v5941, %v6247
        %v6268 = vadd.f32 %v5942, %v6250
        %v6269 = vld [vmem:[%s2381] sm:$0xf]
        %v6270 = vld [vmem:[%s2381 + $0x4] sm:$0xf]
        %v6271 = vld [vmem:[%s2381 + $0x8] sm:$0xf]
        %v6272 = vld [vmem:[%s2381 + $0xc] sm:$0xf]
        %v6273 = vld [vmem:[%s2381 + $0x10] sm:$0xf]
        %v6274 = vld [vmem:[%s2381 + $0x14] sm:$0xf]
        %v6275 = vld [vmem:[%s2381 + $0x18] sm:$0xf]
        %v6276 = vld [vmem:[%s2381 + $0x1c] sm:$0xf]
        %v6277 = vld [vmem:[%s2381 + $0x20] sm:$0xf]
        %v6278 = vld [vmem:[%s2381 + $0x24] sm:$0xf]
        %v6279 = vld [vmem:[%s2381 + $0x28] sm:$0xf]
        %v6280 = vld [vmem:[%s2381 + $0x2c] sm:$0xf]
        %v6281 = vld [vmem:[%s2381 + $0x30] sm:$0xf]
        %v6282 = vld [vmem:[%s2381 + $0x34] sm:$0xf]
        %v6283 = vld [vmem:[%s2381 + $0x38] sm:$0xf]
        %v6284 = vld [vmem:[%s2381 + $0x3c] sm:$0xf]
        %v6301 = vunpack.c.l.b16 %v6269
        %v6302 = vunpack.c.l.b16 %v6270
        %v6303 = vunpack.c.l.b16 %v6271
        %v6304 = vunpack.c.l.b16 %v6272
        %v6305 = vunpack.c.l.b16 %v6273
        %v6306 = vunpack.c.l.b16 %v6274
        %v6307 = vunpack.c.l.b16 %v6275
        %v6308 = vunpack.c.l.b16 %v6276
        %v6309 = vunpack.c.l.b16 %v6277
        %v6310 = vunpack.c.l.b16 %v6278
        %v6311 = vunpack.c.l.b16 %v6279
        %v6312 = vunpack.c.l.b16 %v6280
        %v6313 = vunpack.c.l.b16 %v6281
        %v6314 = vunpack.c.l.b16 %v6282
        %v6315 = vunpack.c.l.b16 %v6283
        %v6316 = vunpack.c.l.b16 %v6284
        %v6317 = vpack.c.b16 %v6302, %v6301
        %v6318 = vpack.c.b16 %v6304, %v6303
        %v6319 = vpack.c.b16 %v6306, %v6305
        %v6320 = vpack.c.b16 %v6308, %v6307
        %v6321 = vpack.c.b16 %v6310, %v6309
        %v6322 = vpack.c.b16 %v6312, %v6311
        %v6323 = vpack.c.b16 %v6314, %v6313
        %v6324 = vpack.c.b16 %v6316, %v6315
        %v6326 = vsel %vm461, %v6317, 0
        %v6329 = vsel %vm461, %v6318, 0
        %v6332 = vsel %vm461, %v6319, 0
        %v6335 = vsel %vm461, %v6320, 0
        %v6338 = vsel %vm461, %v6321, 0
        %v6341 = vsel %vm461, %v6322, 0
        %v6344 = vsel %vm461, %v6323, 0
        %v6347 = vsel %vm461, %v6324, 0
        %6349 = vmatprep.subr.bf16.mxu0 0
        %6350 = vmatpush1.bf16.msra.mxu0 %v4353
        %6351 = vmatprep.subr.bf16.mxu0 0
        %6352 = vmatpush1.bf16.msra.mxu0 %v4354
        %6353 = vmatprep.subr.bf16.mxu0 0
        %6354 = vmatpush1.bf16.msra.mxu0 %v4355
        %6355 = vmatprep.subr.bf16.mxu0 0
        %6356 = vmatpush1.bf16.msra.mxu0 %v4356
        %6357 = vmatprep.subr.bf16.mxu0 0
        %6358 = vmatpush1.bf16.msra.mxu0 %v4357
        %6359 = vmatprep.subr.bf16.mxu0 0
        %6360 = vmatpush1.bf16.msra.mxu0 %v4358
        %6361 = vmatprep.subr.bf16.mxu0 0
        %6362 = vmatpush1.bf16.msra.mxu0 %v4391
        %6363 = vmatprep.subr.bf16.mxu0 0
        %6364 = vmatpush1.bf16.msra.mxu0 0
        %6365 = vmatprep.subr.bf16.mxu0 0
        %6366 = vmatpush1.bf16.msra.mxu0 0
        %6367 = vmatprep.subr.bf16.mxu0 0
        %6368 = vmatpush1.bf16.msra.mxu0 0
        %6369 = vmatprep.subr.bf16.mxu0 0
        %6370 = vmatpush1.bf16.msra.mxu0 0
        %6371 = vmatprep.subr.bf16.mxu0 0
        %6372 = vmatpush1.bf16.msra.mxu0 0
        %6373 = vmatprep.subr.bf16.mxu0 0
        %6374 = vmatpush1.bf16.msra.mxu0 0
        %6375 = vmatprep.subr.bf16.mxu0 0
        %6376 = vmatpush1.bf16.msra.mxu0 0
        %6377 = vmatprep.subr.bf16.mxu0 0
        %6378 = vmatpush1.bf16.msra.mxu0 0
        %6379 = vmatprep.subr.bf16.mxu0 0
        %6380 = vmatpush1.bf16.msra.mxu0 0
        %6381 = vmatprep.mubr.bf16.mxu0 0
        %6382 = vmatmul.mubr.bf16.gmra.mrb[0].mxu0 %v6326
        %v6383 = vpop.f32.mrb[0].mxu0
        %v6384 = vadd.f32 0.0, %v6383
        %v6385 = vpop.f32.mrb[0].mxu0
        %v6386 = vpop.f32.mrb[0].mxu0
        %v6387 = vadd.f32 0.0, %v6386
        %v6388 = vpop.f32.mrb[0].mxu0
        %6389 = vmatprep.mubr.bf16.mxu0 0
        %6390 = vmatmul.mubr.bf16.gmra.mrb[0].mxu0 %v6329
        %v6391 = vpop.f32.mrb[0].mxu0
        %v6392 = vadd.f32 0.0, %v6391
        %v6393 = vpop.f32.mrb[0].mxu0
        %v6394 = vpop.f32.mrb[0].mxu0
        %v6395 = vadd.f32 0.0, %v6394
        %v6396 = vpop.f32.mrb[0].mxu0
        %6397 = vmatprep.mubr.bf16.mxu0 0
        %6398 = vmatmul.mubr.bf16.gmra.mrb[0].mxu0 %v6332
        %v6399 = vpop.f32.mrb[0].mxu0
        %v6400 = vadd.f32 0.0, %v6399
        %v6401 = vpop.f32.mrb[0].mxu0
        %v6402 = vpop.f32.mrb[0].mxu0
        %v6403 = vadd.f32 0.0, %v6402
        %v6404 = vpop.f32.mrb[0].mxu0
        %6405 = vmatprep.mubr.bf16.mxu0 0
        %6406 = vmatmul.mubr.bf16.gmra.mrb[0].mxu0 %v6335
        %v6407 = vpop.f32.mrb[0].mxu0
        %v6408 = vadd.f32 0.0, %v6407
        %v6409 = vpop.f32.mrb[0].mxu0
        %v6410 = vpop.f32.mrb[0].mxu0
        %v6411 = vadd.f32 0.0, %v6410
        %v6412 = vpop.f32.mrb[0].mxu0
        %6413 = vmatprep.mubr.bf16.mxu0 0
        %6414 = vmatmul.mubr.bf16.gmra.mrb[0].mxu0 %v6338
        %v6415 = vpop.f32.mrb[0].mxu0
        %v6416 = vadd.f32 0.0, %v6415
        %v6417 = vpop.f32.mrb[0].mxu0
        %v6418 = vpop.f32.mrb[0].mxu0
        %v6419 = vadd.f32 0.0, %v6418
        %v6420 = vpop.f32.mrb[0].mxu0
        %6421 = vmatprep.mubr.bf16.mxu0 0
        %6422 = vmatmul.mubr.bf16.gmra.mrb[0].mxu0 %v6341
        %v6423 = vpop.f32.mrb[0].mxu0
        %v6424 = vadd.f32 0.0, %v6423
        %v6425 = vpop.f32.mrb[0].mxu0
        %v6426 = vpop.f32.mrb[0].mxu0
        %v6427 = vadd.f32 0.0, %v6426
        %v6428 = vpop.f32.mrb[0].mxu0
        %6429 = vmatprep.mubr.bf16.mxu0 0
        %6430 = vmatmul.mubr.bf16.gmra.mrb[0].mxu0 %v6344
        %v6431 = vpop.f32.mrb[0].mxu0
        %v6432 = vadd.f32 0.0, %v6431
        %v6433 = vpop.f32.mrb[0].mxu0
        %v6434 = vpop.f32.mrb[0].mxu0
        %v6435 = vadd.f32 0.0, %v6434
        %v6436 = vpop.f32.mrb[0].mxu0
        %6437 = vmatprep.mubr.bf16.mxu0 0
        %6438 = vmatmul.mubr.bf16.gmra.mrb[0].mxu0 %v6347
        %v6439 = vpop.f32.mrb[0].mxu0
        %v6440 = vadd.f32 0.0, %v6439
        %v6441 = vpop.f32.mrb[0].mxu0
        %v6442 = vpop.f32.mrb[0].mxu0
        %v6443 = vadd.f32 0.0, %v6442
        %v6444 = vpop.f32.mrb[0].mxu0
        %6445 = vdwg.mxu0
        %v6446 = vpack.c.bf16 %v6387, %v6384
        %v6447 = vpack.c.bf16 %v6395, %v6392
        %v6448 = vpack.c.bf16 %v6403, %v6400
        %v6449 = vpack.c.bf16 %v6411, %v6408
        %v6450 = vpack.c.bf16 %v6419, %v6416
        %v6451 = vpack.c.bf16 %v6427, %v6424
        %v6452 = vpack.c.bf16 %v6435, %v6432
        %v6453 = vpack.c.bf16 %v6443, %v6440
        %v6454 = vld [vmem:[%s2567] sm:$0x3]
        %v6456 = vsel %vm596, %v6446, 0
        %v6459 = vsel %vm596, %v6447, 0
        %v6462 = vsel %vm596, %v6448, 0
        %v6465 = vsel %vm596, %v6449, 0
        %v6468 = vsel %vm596, %v6450, 0
        %v6471 = vsel %vm596, %v6451, 0
        %v6474 = vsel %vm596, %v6452, 0
        %v6477 = vsel %vm596, %v6453, 0
        %v6480 = vand.u32 %v6454, %v624
        %6482 = vmatprep.subr.bf16.mxu0 0
        %6483 = vmatpush1.bf16.msra.mxu0 %v6480
        %6484 = vmatprep.subr.bf16.mxu0 0
        %6485 = vmatpush1.bf16.msra.mxu0 0
        %6486 = vmatprep.subr.bf16.mxu0 0
        %6487 = vmatpush1.bf16.msra.mxu0 0
        %6488 = vmatprep.subr.bf16.mxu0 0
        %6489 = vmatpush1.bf16.msra.mxu0 0
        %6490 = vmatprep.subr.bf16.mxu0 0
        %6491 = vmatpush1.bf16.msra.mxu0 0
        %6492 = vmatprep.subr.bf16.mxu0 0
        %6493 = vmatpush1.bf16.msra.mxu0 0
        %6494 = vmatprep.subr.bf16.mxu0 0
        %6495 = vmatpush1.bf16.msra.mxu0 0
        %6496 = vmatprep.subr.bf16.mxu0 0
        %6497 = vmatpush1.bf16.msra.mxu0 0
        %6498 = vmatprep.subr.bf16.mxu0 0
        %6499 = vmatpush1.bf16.msra.mxu0 0
        %6500 = vmatprep.subr.bf16.mxu0 0
        %6501 = vmatpush1.bf16.msra.mxu0 0
        %6502 = vmatprep.subr.bf16.mxu0 0
        %6503 = vmatpush1.bf16.msra.mxu0 0
        %6504 = vmatprep.subr.bf16.mxu0 0
        %6505 = vmatpush1.bf16.msra.mxu0 0
        %6506 = vmatprep.subr.bf16.mxu0 0
        %6507 = vmatpush1.bf16.msra.mxu0 0
        %6508 = vmatprep.subr.bf16.mxu0 0
        %6509 = vmatpush1.bf16.msra.mxu0 0
        %6510 = vmatprep.subr.bf16.mxu0 0
        %6511 = vmatpush1.bf16.msra.mxu0 0
        %6512 = vmatprep.subr.bf16.mxu0 0
        %6513 = vmatpush1.bf16.msra.mxu0 0
        %6514 = vmatprep.mubr.bf16.mxu0 0
        %6515 = vmatmul.mubr.bf16.gmra.mrb[0].mxu0 %v6456
        %v6516 = vpop.f32.mrb[0].mxu0
        %v6517 = vadd.f32 0.0, %v6516
        %v6518 = vpop.f32.mrb[0].mxu0
        %v6519 = vpop.f32.mrb[0].mxu0
        %v6520 = vadd.f32 0.0, %v6519
        %v6521 = vpop.f32.mrb[0].mxu0
        %6522 = vmatprep.mubr.bf16.mxu0 0
        %6523 = vmatmul.mubr.bf16.gmra.mrb[0].mxu0 %v6459
        %v6524 = vpop.f32.mrb[0].mxu0
        %v6525 = vadd.f32 0.0, %v6524
        %v6526 = vpop.f32.mrb[0].mxu0
        %v6527 = vpop.f32.mrb[0].mxu0
        %v6528 = vadd.f32 0.0, %v6527
        %v6529 = vpop.f32.mrb[0].mxu0
        %6530 = vmatprep.mubr.bf16.mxu0 0
        %6531 = vmatmul.mubr.bf16.gmra.mrb[0].mxu0 %v6462
        %v6532 = vpop.f32.mrb[0].mxu0
        %v6533 = vadd.f32 0.0, %v6532
        %v6534 = vpop.f32.mrb[0].mxu0
        %v6535 = vpop.f32.mrb[0].mxu0
        %v6536 = vadd.f32 0.0, %v6535
        %v6537 = vpop.f32.mrb[0].mxu0
        %6538 = vmatprep.mubr.bf16.mxu0 0
        %6539 = vmatmul.mubr.bf16.gmra.mrb[0].mxu0 %v6465
        %v6540 = vpop.f32.mrb[0].mxu0
        %v6541 = vadd.f32 0.0, %v6540
        %v6542 = vpop.f32.mrb[0].mxu0
        %v6543 = vpop.f32.mrb[0].mxu0
        %v6544 = vadd.f32 0.0, %v6543
        %v6545 = vpop.f32.mrb[0].mxu0
        %6546 = vmatprep.mubr.bf16.mxu0 0
        %6547 = vmatmul.mubr.bf16.gmra.mrb[0].mxu0 %v6468
        %v6548 = vpop.f32.mrb[0].mxu0
        %v6549 = vadd.f32 0.0, %v6548
        %v6550 = vpop.f32.mrb[0].mxu0
        %v6551 = vpop.f32.mrb[0].mxu0
        %v6552 = vadd.f32 0.0, %v6551
        %v6553 = vpop.f32.mrb[0].mxu0
        %6554 = vmatprep.mubr.bf16.mxu0 0
        %6555 = vmatmul.mubr.bf16.gmra.mrb[0].mxu0 %v6471
        %v6556 = vpop.f32.mrb[0].mxu0
        %v6557 = vadd.f32 0.0, %v6556
        %v6558 = vpop.f32.mrb[0].mxu0
        %v6559 = vpop.f32.mrb[0].mxu0
        %v6560 = vadd.f32 0.0, %v6559
        %v6561 = vpop.f32.mrb[0].mxu0
        %6562 = vmatprep.mubr.bf16.mxu0 0
        %6563 = vmatmul.mubr.bf16.gmra.mrb[0].mxu0 %v6474
        %v6564 = vpop.f32.mrb[0].mxu0
        %v6565 = vadd.f32 0.0, %v6564
        %v6566 = vpop.f32.mrb[0].mxu0
        %v6567 = vpop.f32.mrb[0].mxu0
        %v6568 = vadd.f32 0.0, %v6567
        %v6569 = vpop.f32.mrb[0].mxu0
        %6570 = vmatprep.mubr.bf16.mxu0 0
        %6571 = vmatmul.mubr.bf16.gmra.mrb[0].mxu0 %v6477
        %v6572 = vpop.f32.mrb[0].mxu0
        %v6573 = vadd.f32 0.0, %v6572
        %v6574 = vpop.f32.mrb[0].mxu0
        %v6575 = vpop.f32.mrb[0].mxu0
        %v6576 = vadd.f32 0.0, %v6575
        %v6577 = vpop.f32.mrb[0].mxu0
        %6578 = vdwg.mxu0
        %v6579 = vadd.f32 %v6253, %v6517
        %v6580 = vadd.f32 %v6254, %v6520
        %v6581 = vadd.f32 %v6255, %v6525
        %v6582 = vadd.f32 %v6256, %v6528
        %v6583 = vadd.f32 %v6257, %v6533
        %v6584 = vadd.f32 %v6258, %v6536
        %v6585 = vadd.f32 %v6259, %v6541
        %v6586 = vadd.f32 %v6260, %v6544
        %v6587 = vadd.f32 %v6261, %v6549
        %v6588 = vadd.f32 %v6262, %v6552
        %v6589 = vadd.f32 %v6263, %v6557
        %v6590 = vadd.f32 %v6264, %v6560
        %v6591 = vadd.f32 %v6265, %v6565
        %v6592 = vadd.f32 %v6266, %v6568
        %v6593 = vadd.f32 %v6267, %v6573
        %v6594 = vadd.f32 %v6268, %v6576
        %6595 = vst.msk [vmem:[#allocation2 + $0x80] sm:$0xff] %vm2709, 0
        %6596 = vst.msk [vmem:[#allocation2 + $0x88] sm:$0xff] %vm2709, 0
        %6597 = vst.msk [vmem:[#allocation2 + $0x90] sm:$0xff] %vm2709, 0
        %6598 = vst.msk [vmem:[#allocation2 + $0x98] sm:$0xff] %vm2709, 0
        %6599 = vst.msk [vmem:[#allocation2 + $0xe0] sm:$0xff] %vm2709, 0
        %6600 = vst.msk [vmem:[#allocation2 + $0xe8] sm:$0xff] %vm2709, 0
        %6601 = vst.msk [vmem:[#allocation2 + $0xf0] sm:$0xff] %vm2709, 0
        %6602 = vst.msk [vmem:[#allocation2 + $0xf8] sm:$0xff] %vm2709, 0
        %v6603 = vpack.c.bf16 %v6580, %v6579
        %v6604 = vpack.c.bf16 %v6582, %v6581
        %v6605 = vpack.c.bf16 %v6584, %v6583
        %v6606 = vpack.c.bf16 %v6586, %v6585
        %v6607 = vpack.c.bf16 %v6588, %v6587
        %v6608 = vpack.c.bf16 %v6590, %v6589
        %v6609 = vpack.c.bf16 %v6592, %v6591
        %v6610 = vpack.c.bf16 %v6594, %v6593
        %6611 = vst.msk [vmem:[#allocation2 + $0xa0] sm:$0xff] %vm2709, %v6603
        %6612 = vst.msk [vmem:[#allocation2 + $0xa8] sm:$0xff] %vm2709, %v6604
        %6613 = vst.msk [vmem:[#allocation2 + $0xb0] sm:$0xff] %vm2709, %v6605
        %6614 = vst.msk [vmem:[#allocation2 + $0xb8] sm:$0xff] %vm2709, %v6606
        %6615 = vst.msk [vmem:[#allocation2 + $0xc0] sm:$0xff] %vm2709, %v6607
        %6616 = vst.msk [vmem:[#allocation2 + $0xc8] sm:$0xff] %vm2709, %v6608
        %6617 = vst.msk [vmem:[#allocation2 + $0xd0] sm:$0xff] %vm2709, %v6609
        %6618 = vst.msk [vmem:[#allocation2 + $0xd8] sm:$0xff] %vm2709, %v6610
        %v6619 = vld [vmem:[#allocation2 + $0x80] sm:$0xff]
        %v6620 = vld [vmem:[#allocation2 + $0x88] sm:$0xff]
        %v6621 = vld [vmem:[#allocation2 + $0x90] sm:$0xff]
        %v6622 = vld [vmem:[#allocation2 + $0x98] sm:$0xff]
        %v6623 = vld [vmem:[#allocation2 + $0xa0] sm:$0xff]
        %v6624 = vld [vmem:[#allocation2 + $0xa8] sm:$0xff]
        %v6625 = vld [vmem:[#allocation2 + $0xb0] sm:$0xff]
        %v6626 = vld [vmem:[#allocation2 + $0xb8] sm:$0xff]
        %v6627 = vld [vmem:[%s4] sm:$0xf]
        %v6628 = vld [vmem:[%s4 + $0x4] sm:$0xf]
        %v6629 = vld [vmem:[%s4 + $0x8] sm:$0xf]
        %v6630 = vld [vmem:[%s4 + $0xc] sm:$0xf]
        %v6631 = vld [vmem:[#allocation2 + $0xc0] sm:$0xff]
        %v6632 = vld [vmem:[%s2747] sm:$0xf]
        %v6633 = vld [vmem:[%s2747 + $0x4] sm:$0xf]
        %v6634 = vld [vmem:[%s2747 + $0x8] sm:$0xf]
        %v6635 = vld [vmem:[%s2747 + $0xc] sm:$0xf]
        %v6640 = vunpack.c.l.b16 %v6632
        %v6641 = vunpack.c.l.b16 %v6633
        %v6642 = vunpack.c.l.b16 %v6634
        %v6643 = vunpack.c.l.b16 %v6635
        %v6644 = vpack.c.b16 %v6641, %v6640
        %v6645 = vpack.c.b16 %v6643, %v6642
        %v6649 = vsel %vm2709, %v6620, 0
        %v6652 = vsel %vm2709, %v6621, 0
        %v6655 = vsel %vm2709, %v6622, 0
        %v6658 = vsel %vm2709, %v6623, 0
        %v6661 = vsel %vm2709, %v6624, 0
        %v6664 = vsel %vm2709, %v6625, 0
        %v6667 = vsel %vm2709, %v6626, 0
        %v6670 = vsel %vm2709, %v6631, 0
        %6672 = vmatprep.subr.bf16.mxu0 0
        %6673 = vmatpush1.bf16.msra.mxu0 %v6644
        %6674 = vmatprep.subr.bf16.mxu0 0
        %6675 = vmatpush1.bf16.msra.mxu0 %v6645
        %6676 = vmatprep.subr.bf16.mxu0 0
        %6677 = vmatpush1.bf16.msra.mxu0 0
        %6678 = vmatprep.subr.bf16.mxu0 0
        %6679 = vmatpush1.bf16.msra.mxu0 0
        %6680 = vmatprep.subr.bf16.mxu0 0
        %6681 = vmatpush1.bf16.msra.mxu0 0
        %6682 = vmatprep.subr.bf16.mxu0 0
        %6683 = vmatpush1.bf16.msra.mxu0 0
        %6684 = vmatprep.subr.bf16.mxu0 0
        %6685 = vmatpush1.bf16.msra.mxu0 0
        %6686 = vmatprep.subr.bf16.mxu0 0
        %6687 = vmatpush1.bf16.msra.mxu0 0
        %6688 = vmatprep.subr.bf16.mxu0 0
        %6689 = vmatpush1.bf16.msra.mxu0 0
        %6690 = vmatprep.subr.bf16.mxu0 0
        %6691 = vmatpush1.bf16.msra.mxu0 0
        %6692 = vmatprep.subr.bf16.mxu0 0
        %6693 = vmatpush1.bf16.msra.mxu0 0
        %6694 = vmatprep.subr.bf16.mxu0 0
        %6695 = vmatpush1.bf16.msra.mxu0 0
        %6696 = vmatprep.subr.bf16.mxu0 0
        %6697 = vmatpush1.bf16.msra.mxu0 0
        %6698 = vmatprep.subr.bf16.mxu0 0
        %6699 = vmatpush1.bf16.msra.mxu0 0
        %6700 = vmatprep.subr.bf16.mxu0 0
        %6701 = vmatpush1.bf16.msra.mxu0 0
        %6702 = vmatprep.subr.bf16.mxu0 0
        %6703 = vmatpush1.bf16.msra.mxu0 0
        %6704 = vmatprep.mubr.bf16.mxu0 0
        %6705 = vmatmul.mubr.bf16.gmra.mrb[0].mxu0 %v6649
        %v6706 = vpop.f32.mrb[0].mxu0
        %v6707 = vadd.f32 0.0, %v6706
        %v6708 = vpop.f32.mrb[0].mxu0
        %v6709 = vpop.f32.mrb[0].mxu0
        %v6710 = vadd.f32 0.0, %v6709
        %v6711 = vpop.f32.mrb[0].mxu0
        %6712 = vmatprep.mubr.bf16.mxu0 0
        %6713 = vmatmul.mubr.bf16.gmra.mrb[0].mxu0 %v6652
        %v6714 = vpop.f32.mrb[0].mxu0
        %v6715 = vadd.f32 0.0, %v6714
        %v6716 = vpop.f32.mrb[0].mxu0
        %v6717 = vpop.f32.mrb[0].mxu0
        %v6718 = vadd.f32 0.0, %v6717
        %v6719 = vpop.f32.mrb[0].mxu0
        %6720 = vmatprep.mubr.bf16.mxu0 0
        %6721 = vmatmul.mubr.bf16.gmra.mrb[0].mxu0 %v6655
        %v6722 = vpop.f32.mrb[0].mxu0
        %v6723 = vadd.f32 0.0, %v6722
        %v6724 = vpop.f32.mrb[0].mxu0
        %v6725 = vpop.f32.mrb[0].mxu0
        %v6726 = vadd.f32 0.0, %v6725
        %v6727 = vpop.f32.mrb[0].mxu0
        %6728 = vmatprep.mubr.bf16.mxu0 0
        %6729 = vmatmul.mubr.bf16.gmra.mrb[0].mxu0 %v6658
        %v6730 = vpop.f32.mrb[0].mxu0
        %v6731 = vadd.f32 0.0, %v6730
        %v6732 = vpop.f32.mrb[0].mxu0
        %v6733 = vpop.f32.mrb[0].mxu0
        %v6734 = vadd.f32 0.0, %v6733
        %v6735 = vpop.f32.mrb[0].mxu0
        %6736 = vmatprep.mubr.bf16.mxu0 0
        %6737 = vmatmul.mubr.bf16.gmra.mrb[0].mxu0 %v6661
        %v6738 = vpop.f32.mrb[0].mxu0
        %v6739 = vadd.f32 0.0, %v6738
        %v6740 = vpop.f32.mrb[0].mxu0
        %v6741 = vpop.f32.mrb[0].mxu0
        %v6742 = vadd.f32 0.0, %v6741
        %v6743 = vpop.f32.mrb[0].mxu0
        %6744 = vmatprep.mubr.bf16.mxu0 0
        %6745 = vmatmul.mubr.bf16.gmra.mrb[0].mxu0 %v6664
        %v6746 = vpop.f32.mrb[0].mxu0
        %v6747 = vadd.f32 0.0, %v6746
        %v6748 = vpop.f32.mrb[0].mxu0
        %v6749 = vpop.f32.mrb[0].mxu0
        %v6750 = vadd.f32 0.0, %v6749
        %v6751 = vpop.f32.mrb[0].mxu0
        %6752 = vmatprep.mubr.bf16.mxu0 0
        %6753 = vmatmul.mubr.bf16.gmra.mrb[0].mxu0 %v6667
        %v6754 = vpop.f32.mrb[0].mxu0
        %v6755 = vadd.f32 0.0, %v6754
        %v6756 = vpop.f32.mrb[0].mxu0
        %v6757 = vpop.f32.mrb[0].mxu0
        %v6758 = vadd.f32 0.0, %v6757
        %v6759 = vpop.f32.mrb[0].mxu0
        %6760 = vmatprep.mubr.bf16.mxu0 0
        %6761 = vmatmul.mubr.bf16.gmra.mrb[0].mxu0 %v6670
        %v6762 = vpop.f32.mrb[0].mxu0
        %v6763 = vadd.f32 0.0, %v6762
        %v6764 = vpop.f32.mrb[0].mxu0
        %v6765 = vpop.f32.mrb[0].mxu0
        %v6766 = vadd.f32 0.0, %v6765
        %v6767 = vpop.f32.mrb[0].mxu0
        %6768 = vdwg.mxu0
        %v6773 = vunpack.c.l.b16 %v6627
        %v6774 = vunpack.c.l.b16 %v6628
        %v6775 = vunpack.c.l.b16 %v6629
        %v6776 = vunpack.c.l.b16 %v6630
        %v6777 = vpack.c.b16 %v6774, %v6773
        %v6778 = vpack.c.b16 %v6776, %v6775
        %v6782 = vsel %vm2709, %v6619, 0
        %6784 = vmatprep.subr.bf16.mxu0 0
        %6785 = vmatpush1.bf16.msra.mxu0 %v6777
        %6786 = vmatprep.subr.bf16.mxu0 0
        %6787 = vmatpush1.bf16.msra.mxu0 %v6778
        %6788 = vmatprep.subr.bf16.mxu0 0
        %6789 = vmatpush1.bf16.msra.mxu0 0
        %6790 = vmatprep.subr.bf16.mxu0 0
        %6791 = vmatpush1.bf16.msra.mxu0 0
        %6792 = vmatprep.subr.bf16.mxu0 0
        %6793 = vmatpush1.bf16.msra.mxu0 0
        %6794 = vmatprep.subr.bf16.mxu0 0
        %6795 = vmatpush1.bf16.msra.mxu0 0
        %6796 = vmatprep.subr.bf16.mxu0 0
        %6797 = vmatpush1.bf16.msra.mxu0 0
        %6798 = vmatprep.subr.bf16.mxu0 0
        %6799 = vmatpush1.bf16.msra.mxu0 0
        %6800 = vmatprep.subr.bf16.mxu0 0
        %6801 = vmatpush1.bf16.msra.mxu0 0
        %6802 = vmatprep.subr.bf16.mxu0 0
        %6803 = vmatpush1.bf16.msra.mxu0 0
        %6804 = vmatprep.subr.bf16.mxu0 0
        %6805 = vmatpush1.bf16.msra.mxu0 0
        %6806 = vmatprep.subr.bf16.mxu0 0
        %6807 = vmatpush1.bf16.msra.mxu0 0
        %6808 = vmatprep.subr.bf16.mxu0 0
        %6809 = vmatpush1.bf16.msra.mxu0 0
        %6810 = vmatprep.subr.bf16.mxu0 0
        %6811 = vmatpush1.bf16.msra.mxu0 0
        %6812 = vmatprep.subr.bf16.mxu0 0
        %6813 = vmatpush1.bf16.msra.mxu0 0
        %6814 = vmatprep.subr.bf16.mxu0 0
        %6815 = vmatpush1.bf16.msra.mxu0 0
        %6816 = vmatprep.mubr.bf16.mxu0 0
        %6817 = vmatmul.mubr.bf16.gmra.mrb[0].mxu0 %v6782
        %v6818 = vpop.f32.mrb[0].mxu0
        %v6819 = vadd.f32 %v6707, %v6818
        %v6820 = vpop.f32.mrb[0].mxu0
        %v6821 = vpop.f32.mrb[0].mxu0
        %v6822 = vadd.f32 %v6710, %v6821
        %v6823 = vpop.f32.mrb[0].mxu0
        %6824 = vmatprep.mubr.bf16.mxu0 0
        %6825 = vmatmul.mubr.bf16.gmra.mrb[0].mxu0 %v6649
        %v6826 = vpop.f32.mrb[0].mxu0
        %v6827 = vadd.f32 %v6715, %v6826
        %v6828 = vpop.f32.mrb[0].mxu0
        %v6829 = vpop.f32.mrb[0].mxu0
        %v6830 = vadd.f32 %v6718, %v6829
        %v6831 = vpop.f32.mrb[0].mxu0
        %6832 = vmatprep.mubr.bf16.mxu0 0
        %6833 = vmatmul.mubr.bf16.gmra.mrb[0].mxu0 %v6652
        %v6834 = vpop.f32.mrb[0].mxu0
        %v6835 = vadd.f32 %v6723, %v6834
        %v6836 = vpop.f32.mrb[0].mxu0
        %v6837 = vpop.f32.mrb[0].mxu0
        %v6838 = vadd.f32 %v6726, %v6837
        %v6839 = vpop.f32.mrb[0].mxu0
        %6840 = vmatprep.mubr.bf16.mxu0 0
        %6841 = vmatmul.mubr.bf16.gmra.mrb[0].mxu0 %v6655
        %v6842 = vpop.f32.mrb[0].mxu0
        %v6843 = vadd.f32 %v6731, %v6842
        %v6844 = vpop.f32.mrb[0].mxu0
        %v6845 = vpop.f32.mrb[0].mxu0
        %v6846 = vadd.f32 %v6734, %v6845
        %v6847 = vpop.f32.mrb[0].mxu0
        %6848 = vmatprep.mubr.bf16.mxu0 0
        %6849 = vmatmul.mubr.bf16.gmra.mrb[0].mxu0 %v6658
        %v6850 = vpop.f32.mrb[0].mxu0
        %v6851 = vadd.f32 %v6739, %v6850
        %v6852 = vpop.f32.mrb[0].mxu0
        %v6853 = vpop.f32.mrb[0].mxu0
        %v6854 = vadd.f32 %v6742, %v6853
        %v6855 = vpop.f32.mrb[0].mxu0
        %6856 = vmatprep.mubr.bf16.mxu0 0
        %6857 = vmatmul.mubr.bf16.gmra.mrb[0].mxu0 %v6661
        %v6858 = vpop.f32.mrb[0].mxu0
        %v6859 = vadd.f32 %v6747, %v6858
        %v6860 = vpop.f32.mrb[0].mxu0
        %v6861 = vpop.f32.mrb[0].mxu0
        %v6862 = vadd.f32 %v6750, %v6861
        %v6863 = vpop.f32.mrb[0].mxu0
        %6864 = vmatprep.mubr.bf16.mxu0 0
        %6865 = vmatmul.mubr.bf16.gmra.mrb[0].mxu0 %v6664
        %v6866 = vpop.f32.mrb[0].mxu0
        %v6867 = vadd.f32 %v6755, %v6866
        %v6868 = vpop.f32.mrb[0].mxu0
        %v6869 = vpop.f32.mrb[0].mxu0
        %v6870 = vadd.f32 %v6758, %v6869
        %v6871 = vpop.f32.mrb[0].mxu0
        %6872 = vmatprep.mubr.bf16.mxu0 0
        %6873 = vmatmul.mubr.bf16.gmra.mrb[0].mxu0 %v6667
        %v6874 = vpop.f32.mrb[0].mxu0
        %v6875 = vadd.f32 %v6763, %v6874
        %v6876 = vpop.f32.mrb[0].mxu0
        %v6877 = vpop.f32.mrb[0].mxu0
        %v6878 = vadd.f32 %v6766, %v6877
        %v6879 = vpop.f32.mrb[0].mxu0
        %6880 = vdwg.mxu0
        %v6881 = vld [vmem:[#allocation2 + $0x90] sm:$0xff]
        %v6882 = vld [vmem:[#allocation2 + $0x98] sm:$0xff]
        %v6883 = vld [vmem:[#allocation2 + $0xa0] sm:$0xff]
        %v6884 = vld [vmem:[#allocation2 + $0xa8] sm:$0xff]
        %v6885 = vld [vmem:[#allocation2 + $0xb0] sm:$0xff]
        %v6886 = vld [vmem:[#allocation2 + $0xb8] sm:$0xff]
        %v6887 = vld [vmem:[#allocation2 + $0xc0] sm:$0xff]
        %v6888 = vld [vmem:[#allocation2 + $0xc8] sm:$0xff]
        %v6889 = vld [vmem:[%s3005] sm:$0xf]
        %v6890 = vld [vmem:[%s3005 + $0x4] sm:$0xf]
        %v6891 = vld [vmem:[%s3005 + $0x8] sm:$0xf]
        %v6892 = vld [vmem:[%s3005 + $0xc] sm:$0xf]
        %v6897 = vunpack.c.l.b16 %v6889
        %v6898 = vunpack.c.l.b16 %v6890
        %v6899 = vunpack.c.l.b16 %v6891
        %v6900 = vunpack.c.l.b16 %v6892
        %v6901 = vpack.c.b16 %v6898, %v6897
        %v6902 = vpack.c.b16 %v6900, %v6899
        %v6906 = vsel %vm2709, %v6881, 0
        %v6909 = vsel %vm2709, %v6882, 0
        %v6912 = vsel %vm2709, %v6883, 0
        %v6915 = vsel %vm2709, %v6884, 0
        %v6918 = vsel %vm2709, %v6885, 0
        %v6921 = vsel %vm2709, %v6886, 0
        %v6924 = vsel %vm2709, %v6887, 0
        %v6927 = vsel %vm2709, %v6888, 0
        %6929 = vmatprep.subr.bf16.mxu0 0
        %6930 = vmatpush1.bf16.msra.mxu0 %v6901
        %6931 = vmatprep.subr.bf16.mxu0 0
        %6932 = vmatpush1.bf16.msra.mxu0 %v6902
        %6933 = vmatprep.subr.bf16.mxu0 0
        %6934 = vmatpush1.bf16.msra.mxu0 0
        %6935 = vmatprep.subr.bf16.mxu0 0
        %6936 = vmatpush1.bf16.msra.mxu0 0
        %6937 = vmatprep.subr.bf16.mxu0 0
        %6938 = vmatpush1.bf16.msra.mxu0 0
        %6939 = vmatprep.subr.bf16.mxu0 0
        %6940 = vmatpush1.bf16.msra.mxu0 0
        %6941 = vmatprep.subr.bf16.mxu0 0
        %6942 = vmatpush1.bf16.msra.mxu0 0
        %6943 = vmatprep.subr.bf16.mxu0 0
        %6944 = vmatpush1.bf16.msra.mxu0 0
        %6945 = vmatprep.subr.bf16.mxu0 0
        %6946 = vmatpush1.bf16.msra.mxu0 0
        %6947 = vmatprep.subr.bf16.mxu0 0
        %6948 = vmatpush1.bf16.msra.mxu0 0
        %6949 = vmatprep.subr.bf16.mxu0 0
        %6950 = vmatpush1.bf16.msra.mxu0 0
        %6951 = vmatprep.subr.bf16.mxu0 0
        %6952 = vmatpush1.bf16.msra.mxu0 0
        %6953 = vmatprep.subr.bf16.mxu0 0
        %6954 = vmatpush1.bf16.msra.mxu0 0
        %6955 = vmatprep.subr.bf16.mxu0 0
        %6956 = vmatpush1.bf16.msra.mxu0 0
        %6957 = vmatprep.subr.bf16.mxu0 0
        %6958 = vmatpush1.bf16.msra.mxu0 0
        %6959 = vmatprep.subr.bf16.mxu0 0
        %6960 = vmatpush1.bf16.msra.mxu0 0
        %6961 = vmatprep.mubr.bf16.mxu0 0
        %6962 = vmatmul.mubr.bf16.gmra.mrb[0].mxu0 %v6906
        %v6963 = vpop.f32.mrb[0].mxu0
        %v6964 = vadd.f32 0.0, %v6963
        %v6965 = vpop.f32.mrb[0].mxu0
        %v6966 = vpop.f32.mrb[0].mxu0
        %v6967 = vadd.f32 0.0, %v6966
        %v6968 = vpop.f32.mrb[0].mxu0
        %6969 = vmatprep.mubr.bf16.mxu0 0
        %6970 = vmatmul.mubr.bf16.gmra.mrb[0].mxu0 %v6909
        %v6971 = vpop.f32.mrb[0].mxu0
        %v6972 = vadd.f32 0.0, %v6971
        %v6973 = vpop.f32.mrb[0].mxu0
        %v6974 = vpop.f32.mrb[0].mxu0
        %v6975 = vadd.f32 0.0, %v6974
        %v6976 = vpop.f32.mrb[0].mxu0
        %6977 = vmatprep.mubr.bf16.mxu0 0
        %6978 = vmatmul.mubr.bf16.gmra.mrb[0].mxu0 %v6912
        %v6979 = vpop.f32.mrb[0].mxu0
        %v6980 = vadd.f32 0.0, %v6979
        %v6981 = vpop.f32.mrb[0].mxu0
        %v6982 = vpop.f32.mrb[0].mxu0
        %v6983 = vadd.f32 0.0, %v6982
        %v6984 = vpop.f32.mrb[0].mxu0
        %6985 = vmatprep.mubr.bf16.mxu0 0
        %6986 = vmatmul.mubr.bf16.gmra.mrb[0].mxu0 %v6915
        %v6987 = vpop.f32.mrb[0].mxu0
        %v6988 = vadd.f32 0.0, %v6987
        %v6989 = vpop.f32.mrb[0].mxu0
        %v6990 = vpop.f32.mrb[0].mxu0
        %v6991 = vadd.f32 0.0, %v6990
        %v6992 = vpop.f32.mrb[0].mxu0
        %6993 = vmatprep.mubr.bf16.mxu0 0
        %6994 = vmatmul.mubr.bf16.gmra.mrb[0].mxu0 %v6918
        %v6995 = vpop.f32.mrb[0].mxu0
        %v6996 = vadd.f32 0.0, %v6995
        %v6997 = vpop.f32.mrb[0].mxu0
        %v6998 = vpop.f32.mrb[0].mxu0
        %v6999 = vadd.f32 0.0, %v6998
        %v7000 = vpop.f32.mrb[0].mxu0
        %7001 = vmatprep.mubr.bf16.mxu0 0
        %7002 = vmatmul.mubr.bf16.gmra.mrb[0].mxu0 %v6921
        %v7003 = vpop.f32.mrb[0].mxu0
        %v7004 = vadd.f32 0.0, %v7003
        %v7005 = vpop.f32.mrb[0].mxu0
        %v7006 = vpop.f32.mrb[0].mxu0
        %v7007 = vadd.f32 0.0, %v7006
        %v7008 = vpop.f32.mrb[0].mxu0
        %7009 = vmatprep.mubr.bf16.mxu0 0
        %7010 = vmatmul.mubr.bf16.gmra.mrb[0].mxu0 %v6924
        %v7011 = vpop.f32.mrb[0].mxu0
        %v7012 = vadd.f32 0.0, %v7011
        %v7013 = vpop.f32.mrb[0].mxu0
        %v7014 = vpop.f32.mrb[0].mxu0
        %v7015 = vadd.f32 0.0, %v7014
        %v7016 = vpop.f32.mrb[0].mxu0
        %7017 = vmatprep.mubr.bf16.mxu0 0
        %7018 = vmatmul.mubr.bf16.gmra.mrb[0].mxu0 %v6927
        %v7019 = vpop.f32.mrb[0].mxu0
        %v7020 = vadd.f32 0.0, %v7019
        %v7021 = vpop.f32.mrb[0].mxu0
        %v7022 = vpop.f32.mrb[0].mxu0
        %v7023 = vadd.f32 0.0, %v7022
        %v7024 = vpop.f32.mrb[0].mxu0
        %7025 = vdwg.mxu0
        %v7026 = vadd.f32 %v6819, %v6964
        %v7027 = vadd.f32 %v6822, %v6967
        %v7028 = vadd.f32 %v6827, %v6972
        %v7029 = vadd.f32 %v6830, %v6975
        %v7030 = vadd.f32 %v6835, %v6980
        %v7031 = vadd.f32 %v6838, %v6983
        %v7032 = vadd.f32 %v6843, %v6988
        %v7033 = vadd.f32 %v6846, %v6991
        %v7034 = vadd.f32 %v6851, %v6996
        %v7035 = vadd.f32 %v6854, %v6999
        %v7036 = vadd.f32 %v6859, %v7004
        %v7037 = vadd.f32 %v6862, %v7007
        %v7038 = vadd.f32 %v6867, %v7012
        %v7039 = vadd.f32 %v6870, %v7015
        %v7040 = vadd.f32 %v6875, %v7020
        %v7041 = vadd.f32 %v6878, %v7023
        %v7042 = vld [vmem:[#allocation2 + $0x98] sm:$0xff]
        %v7043 = vld [vmem:[#allocation2 + $0xa0] sm:$0xff]
        %v7044 = vld [vmem:[#allocation2 + $0xa8] sm:$0xff]
        %v7045 = vld [vmem:[#allocation2 + $0xb0] sm:$0xff]
        %v7046 = vld [vmem:[#allocation2 + $0xb8] sm:$0xff]
        %v7047 = vld [vmem:[#allocation2 + $0xc0] sm:$0xff]
        %v7048 = vld [vmem:[#allocation2 + $0xc8] sm:$0xff]
        %v7049 = vld [vmem:[#allocation2 + $0xd0] sm:$0xff]
        %v7050 = vld [vmem:[%s3167] sm:$0xf]
        %v7051 = vld [vmem:[%s3167 + $0x4] sm:$0xf]
        %v7052 = vld [vmem:[%s3167 + $0x8] sm:$0xf]
        %v7053 = vld [vmem:[%s3167 + $0xc] sm:$0xf]
        %v7058 = vunpack.c.l.b16 %v7050
        %v7059 = vunpack.c.l.b16 %v7051
        %v7060 = vunpack.c.l.b16 %v7052
        %v7061 = vunpack.c.l.b16 %v7053
        %v7062 = vpack.c.b16 %v7059, %v7058
        %v7063 = vpack.c.b16 %v7061, %v7060
        %v7067 = vsel %vm2709, %v7042, 0
        %v7070 = vsel %vm2709, %v7043, 0
        %v7073 = vsel %vm2709, %v7044, 0
        %v7076 = vsel %vm2709, %v7045, 0
        %v7079 = vsel %vm2709, %v7046, 0
        %v7082 = vsel %vm2709, %v7047, 0
        %v7085 = vsel %vm2709, %v7048, 0
        %v7088 = vsel %vm2709, %v7049, 0
        %7090 = vmatprep.subr.bf16.mxu0 0
        %7091 = vmatpush1.bf16.msra.mxu0 %v7062
        %7092 = vmatprep.subr.bf16.mxu0 0
        %7093 = vmatpush1.bf16.msra.mxu0 %v7063
        %7094 = vmatprep.subr.bf16.mxu0 0
        %7095 = vmatpush1.bf16.msra.mxu0 0
        %7096 = vmatprep.subr.bf16.mxu0 0
        %7097 = vmatpush1.bf16.msra.mxu0 0
        %7098 = vmatprep.subr.bf16.mxu0 0
        %7099 = vmatpush1.bf16.msra.mxu0 0
        %7100 = vmatprep.subr.bf16.mxu0 0
        %7101 = vmatpush1.bf16.msra.mxu0 0
        %7102 = vmatprep.subr.bf16.mxu0 0
        %7103 = vmatpush1.bf16.msra.mxu0 0
        %7104 = vmatprep.subr.bf16.mxu0 0
        %7105 = vmatpush1.bf16.msra.mxu0 0
        %7106 = vmatprep.subr.bf16.mxu0 0
        %7107 = vmatpush1.bf16.msra.mxu0 0
        %7108 = vmatprep.subr.bf16.mxu0 0
        %7109 = vmatpush1.bf16.msra.mxu0 0
        %7110 = vmatprep.subr.bf16.mxu0 0
        %7111 = vmatpush1.bf16.msra.mxu0 0
        %7112 = vmatprep.subr.bf16.mxu0 0
        %7113 = vmatpush1.bf16.msra.mxu0 0
        %7114 = vmatprep.subr.bf16.mxu0 0
        %7115 = vmatpush1.bf16.msra.mxu0 0
        %7116 = vmatprep.subr.bf16.mxu0 0
        %7117 = vmatpush1.bf16.msra.mxu0 0
        %7118 = vmatprep.subr.bf16.mxu0 0
        %7119 = vmatpush1.bf16.msra.mxu0 0
        %7120 = vmatprep.subr.bf16.mxu0 0
        %7121 = vmatpush1.bf16.msra.mxu0 0
        %7122 = vmatprep.mubr.bf16.mxu0 0
        %7123 = vmatmul.mubr.bf16.gmra.mrb[0].mxu0 %v7067
        %v7124 = vpop.f32.mrb[0].mxu0
        %v7125 = vadd.f32 0.0, %v7124
        %v7126 = vpop.f32.mrb[0].mxu0
        %v7127 = vpop.f32.mrb[0].mxu0
        %v7128 = vadd.f32 0.0, %v7127
        %v7129 = vpop.f32.mrb[0].mxu0
        %7130 = vmatprep.mubr.bf16.mxu0 0
        %7131 = vmatmul.mubr.bf16.gmra.mrb[0].mxu0 %v7070
        %v7132 = vpop.f32.mrb[0].mxu0
        %v7133 = vadd.f32 0.0, %v7132
        %v7134 = vpop.f32.mrb[0].mxu0
        %v7135 = vpop.f32.mrb[0].mxu0
        %v7136 = vadd.f32 0.0, %v7135
        %v7137 = vpop.f32.mrb[0].mxu0
        %7138 = vmatprep.mubr.bf16.mxu0 0
        %7139 = vmatmul.mubr.bf16.gmra.mrb[0].mxu0 %v7073
        %v7140 = vpop.f32.mrb[0].mxu0
        %v7141 = vadd.f32 0.0, %v7140
        %v7142 = vpop.f32.mrb[0].mxu0
        %v7143 = vpop.f32.mrb[0].mxu0
        %v7144 = vadd.f32 0.0, %v7143
        %v7145 = vpop.f32.mrb[0].mxu0
        %7146 = vmatprep.mubr.bf16.mxu0 0
        %7147 = vmatmul.mubr.bf16.gmra.mrb[0].mxu0 %v7076
        %v7148 = vpop.f32.mrb[0].mxu0
        %v7149 = vadd.f32 0.0, %v7148
        %v7150 = vpop.f32.mrb[0].mxu0
        %v7151 = vpop.f32.mrb[0].mxu0
        %v7152 = vadd.f32 0.0, %v7151
        %v7153 = vpop.f32.mrb[0].mxu0
        %7154 = vmatprep.mubr.bf16.mxu0 0
        %7155 = vmatmul.mubr.bf16.gmra.mrb[0].mxu0 %v7079
        %v7156 = vpop.f32.mrb[0].mxu0
        %v7157 = vadd.f32 0.0, %v7156
        %v7158 = vpop.f32.mrb[0].mxu0
        %v7159 = vpop.f32.mrb[0].mxu0
        %v7160 = vadd.f32 0.0, %v7159
        %v7161 = vpop.f32.mrb[0].mxu0
        %7162 = vmatprep.mubr.bf16.mxu0 0
        %7163 = vmatmul.mubr.bf16.gmra.mrb[0].mxu0 %v7082
        %v7164 = vpop.f32.mrb[0].mxu0
        %v7165 = vadd.f32 0.0, %v7164
        %v7166 = vpop.f32.mrb[0].mxu0
        %v7167 = vpop.f32.mrb[0].mxu0
        %v7168 = vadd.f32 0.0, %v7167
        %v7169 = vpop.f32.mrb[0].mxu0
        %7170 = vmatprep.mubr.bf16.mxu0 0
        %7171 = vmatmul.mubr.bf16.gmra.mrb[0].mxu0 %v7085
        %v7172 = vpop.f32.mrb[0].mxu0
        %v7173 = vadd.f32 0.0, %v7172
        %v7174 = vpop.f32.mrb[0].mxu0
        %v7175 = vpop.f32.mrb[0].mxu0
        %v7176 = vadd.f32 0.0, %v7175
        %v7177 = vpop.f32.mrb[0].mxu0
        %7178 = vmatprep.mubr.bf16.mxu0 0
        %7179 = vmatmul.mubr.bf16.gmra.mrb[0].mxu0 %v7088
        %v7180 = vpop.f32.mrb[0].mxu0
        %v7181 = vadd.f32 0.0, %v7180
        %v7182 = vpop.f32.mrb[0].mxu0
        %v7183 = vpop.f32.mrb[0].mxu0
        %v7184 = vadd.f32 0.0, %v7183
        %v7185 = vpop.f32.mrb[0].mxu0
        %7186 = vdwg.mxu0
        %v7187 = vadd.f32 %v7026, %v7125
        %v7188 = vadd.f32 %v7027, %v7128
        %v7189 = vadd.f32 %v7028, %v7133
        %v7190 = vadd.f32 %v7029, %v7136
        %v7191 = vadd.f32 %v7030, %v7141
        %v7192 = vadd.f32 %v7031, %v7144
        %v7193 = vadd.f32 %v7032, %v7149
        %v7194 = vadd.f32 %v7033, %v7152
        %v7195 = vadd.f32 %v7034, %v7157
        %v7196 = vadd.f32 %v7035, %v7160
        %v7197 = vadd.f32 %v7036, %v7165
        %v7198 = vadd.f32 %v7037, %v7168
        %v7199 = vadd.f32 %v7038, %v7173
        %v7200 = vadd.f32 %v7039, %v7176
        %v7201 = vadd.f32 %v7040, %v7181
        %v7202 = vadd.f32 %v7041, %v7184
        %v7203 = vld [vmem:[#allocation2 + $0xa0] sm:$0xff]
        %v7204 = vld [vmem:[#allocation2 + $0xa8] sm:$0xff]
        %v7205 = vld [vmem:[#allocation2 + $0xb0] sm:$0xff]
        %v7206 = vld [vmem:[#allocation2 + $0xb8] sm:$0xff]
        %v7207 = vld [vmem:[#allocation2 + $0xc0] sm:$0xff]
        %v7208 = vld [vmem:[#allocation2 + $0xc8] sm:$0xff]
        %v7209 = vld [vmem:[#allocation2 + $0xd0] sm:$0xff]
        %v7210 = vld [vmem:[#allocation2 + $0xd8] sm:$0xff]
        %v7211 = vld [vmem:[%s3329] sm:$0xf]
        %v7212 = vld [vmem:[%s3329 + $0x4] sm:$0xf]
        %v7213 = vld [vmem:[%s3329 + $0x8] sm:$0xf]
        %v7214 = vld [vmem:[%s3329 + $0xc] sm:$0xf]
        %v7219 = vunpack.c.l.b16 %v7211
        %v7220 = vunpack.c.l.b16 %v7212
        %v7221 = vunpack.c.l.b16 %v7213
        %v7222 = vunpack.c.l.b16 %v7214
        %v7223 = vpack.c.b16 %v7220, %v7219
        %v7224 = vpack.c.b16 %v7222, %v7221
        %v7228 = vsel %vm2709, %v7203, 0
        %v7231 = vsel %vm2709, %v7204, 0
        %v7234 = vsel %vm2709, %v7205, 0
        %v7237 = vsel %vm2709, %v7206, 0
        %v7240 = vsel %vm2709, %v7207, 0
        %v7243 = vsel %vm2709, %v7208, 0
        %v7246 = vsel %vm2709, %v7209, 0
        %v7249 = vsel %vm2709, %v7210, 0
        %7251 = vmatprep.subr.bf16.mxu0 0
        %7252 = vmatpush1.bf16.msra.mxu0 %v7223
        %7253 = vmatprep.subr.bf16.mxu0 0
        %7254 = vmatpush1.bf16.msra.mxu0 %v7224
        %7255 = vmatprep.subr.bf16.mxu0 0
        %7256 = vmatpush1.bf16.msra.mxu0 0
        %7257 = vmatprep.subr.bf16.mxu0 0
        %7258 = vmatpush1.bf16.msra.mxu0 0
        %7259 = vmatprep.subr.bf16.mxu0 0
        %7260 = vmatpush1.bf16.msra.mxu0 0
        %7261 = vmatprep.subr.bf16.mxu0 0
        %7262 = vmatpush1.bf16.msra.mxu0 0
        %7263 = vmatprep.subr.bf16.mxu0 0
        %7264 = vmatpush1.bf16.msra.mxu0 0
        %7265 = vmatprep.subr.bf16.mxu0 0
        %7266 = vmatpush1.bf16.msra.mxu0 0
        %7267 = vmatprep.subr.bf16.mxu0 0
        %7268 = vmatpush1.bf16.msra.mxu0 0
        %7269 = vmatprep.subr.bf16.mxu0 0
        %7270 = vmatpush1.bf16.msra.mxu0 0
        %7271 = vmatprep.subr.bf16.mxu0 0
        %7272 = vmatpush1.bf16.msra.mxu0 0
        %7273 = vmatprep.subr.bf16.mxu0 0
        %7274 = vmatpush1.bf16.msra.mxu0 0
        %7275 = vmatprep.subr.bf16.mxu0 0
        %7276 = vmatpush1.bf16.msra.mxu0 0
        %7277 = vmatprep.subr.bf16.mxu0 0
        %7278 = vmatpush1.bf16.msra.mxu0 0
        %7279 = vmatprep.subr.bf16.mxu0 0
        %7280 = vmatpush1.bf16.msra.mxu0 0
        %7281 = vmatprep.subr.bf16.mxu0 0
        %7282 = vmatpush1.bf16.msra.mxu0 0
        %7283 = vmatprep.mubr.bf16.mxu0 0
        %7284 = vmatmul.mubr.bf16.gmra.mrb[0].mxu0 %v7228
        %v7285 = vpop.f32.mrb[0].mxu0
        %v7286 = vadd.f32 0.0, %v7285
        %v7287 = vpop.f32.mrb[0].mxu0
        %v7288 = vpop.f32.mrb[0].mxu0
        %v7289 = vadd.f32 0.0, %v7288
        %v7290 = vpop.f32.mrb[0].mxu0
        %7291 = vmatprep.mubr.bf16.mxu0 0
        %7292 = vmatmul.mubr.bf16.gmra.mrb[0].mxu0 %v7231
        %v7293 = vpop.f32.mrb[0].mxu0
        %v7294 = vadd.f32 0.0, %v7293
        %v7295 = vpop.f32.mrb[0].mxu0
        %v7296 = vpop.f32.mrb[0].mxu0
        %v7297 = vadd.f32 0.0, %v7296
        %v7298 = vpop.f32.mrb[0].mxu0
        %7299 = vmatprep.mubr.bf16.mxu0 0
        %7300 = vmatmul.mubr.bf16.gmra.mrb[0].mxu0 %v7234
        %v7301 = vpop.f32.mrb[0].mxu0
        %v7302 = vadd.f32 0.0, %v7301
        %v7303 = vpop.f32.mrb[0].mxu0
        %v7304 = vpop.f32.mrb[0].mxu0
        %v7305 = vadd.f32 0.0, %v7304
        %v7306 = vpop.f32.mrb[0].mxu0
        %7307 = vmatprep.mubr.bf16.mxu0 0
        %7308 = vmatmul.mubr.bf16.gmra.mrb[0].mxu0 %v7237
        %v7309 = vpop.f32.mrb[0].mxu0
        %v7310 = vadd.f32 0.0, %v7309
        %v7311 = vpop.f32.mrb[0].mxu0
        %v7312 = vpop.f32.mrb[0].mxu0
        %v7313 = vadd.f32 0.0, %v7312
        %v7314 = vpop.f32.mrb[0].mxu0
        %7315 = vmatprep.mubr.bf16.mxu0 0
        %7316 = vmatmul.mubr.bf16.gmra.mrb[0].mxu0 %v7240
        %v7317 = vpop.f32.mrb[0].mxu0
        %v7318 = vadd.f32 0.0, %v7317
        %v7319 = vpop.f32.mrb[0].mxu0
        %v7320 = vpop.f32.mrb[0].mxu0
        %v7321 = vadd.f32 0.0, %v7320
        %v7322 = vpop.f32.mrb[0].mxu0
        %7323 = vmatprep.mubr.bf16.mxu0 0
        %7324 = vmatmul.mubr.bf16.gmra.mrb[0].mxu0 %v7243
        %v7325 = vpop.f32.mrb[0].mxu0
        %v7326 = vadd.f32 0.0, %v7325
        %v7327 = vpop.f32.mrb[0].mxu0
        %v7328 = vpop.f32.mrb[0].mxu0
        %v7329 = vadd.f32 0.0, %v7328
        %v7330 = vpop.f32.mrb[0].mxu0
        %7331 = vmatprep.mubr.bf16.mxu0 0
        %7332 = vmatmul.mubr.bf16.gmra.mrb[0].mxu0 %v7246
        %v7333 = vpop.f32.mrb[0].mxu0
        %v7334 = vadd.f32 0.0, %v7333
        %v7335 = vpop.f32.mrb[0].mxu0
        %v7336 = vpop.f32.mrb[0].mxu0
        %v7337 = vadd.f32 0.0, %v7336
        %v7338 = vpop.f32.mrb[0].mxu0
        %7339 = vmatprep.mubr.bf16.mxu0 0
        %7340 = vmatmul.mubr.bf16.gmra.mrb[0].mxu0 %v7249
        %v7341 = vpop.f32.mrb[0].mxu0
        %v7342 = vadd.f32 0.0, %v7341
        %v7343 = vpop.f32.mrb[0].mxu0
        %v7344 = vpop.f32.mrb[0].mxu0
        %v7345 = vadd.f32 0.0, %v7344
        %v7346 = vpop.f32.mrb[0].mxu0
        %7347 = vdwg.mxu0
        %v7348 = vadd.f32 %v7187, %v7286
        %v7349 = vadd.f32 %v7188, %v7289
        %v7350 = vadd.f32 %v7189, %v7294
        %v7351 = vadd.f32 %v7190, %v7297
        %v7352 = vadd.f32 %v7191, %v7302
        %v7353 = vadd.f32 %v7192, %v7305
        %v7354 = vadd.f32 %v7193, %v7310
        %v7355 = vadd.f32 %v7194, %v7313
        %v7356 = vadd.f32 %v7195, %v7318
        %v7357 = vadd.f32 %v7196, %v7321
        %v7358 = vadd.f32 %v7197, %v7326
        %v7359 = vadd.f32 %v7198, %v7329
        %v7360 = vadd.f32 %v7199, %v7334
        %v7361 = vadd.f32 %v7200, %v7337
        %v7362 = vadd.f32 %v7201, %v7342
        %v7363 = vadd.f32 %v7202, %v7345
        %v7364 = vld [vmem:[#allocation2 + $0xa8] sm:$0xff]
        %v7365 = vld [vmem:[#allocation2 + $0xb0] sm:$0xff]
        %v7366 = vld [vmem:[#allocation2 + $0xb8] sm:$0xff]
        %v7367 = vld [vmem:[#allocation2 + $0xc0] sm:$0xff]
        %v7368 = vld [vmem:[#allocation2 + $0xc8] sm:$0xff]
        %v7369 = vld [vmem:[#allocation2 + $0xd0] sm:$0xff]
        %v7370 = vld [vmem:[#allocation2 + $0xd8] sm:$0xff]
        %v7371 = vld [vmem:[#allocation2 + $0xe0] sm:$0xff]
        %v7372 = vld [vmem:[%s3491] sm:$0xf]
        %v7373 = vld [vmem:[%s3491 + $0x4] sm:$0xf]
        %v7374 = vld [vmem:[%s3491 + $0x8] sm:$0xf]
        %v7375 = vld [vmem:[%s3491 + $0xc] sm:$0xf]
        %v7380 = vunpack.c.l.b16 %v7372
        %v7381 = vunpack.c.l.b16 %v7373
        %v7382 = vunpack.c.l.b16 %v7374
        %v7383 = vunpack.c.l.b16 %v7375
        %v7384 = vpack.c.b16 %v7381, %v7380
        %v7385 = vpack.c.b16 %v7383, %v7382
        %v7389 = vsel %vm2709, %v7364, 0
        %v7392 = vsel %vm2709, %v7365, 0
        %v7395 = vsel %vm2709, %v7366, 0
        %v7398 = vsel %vm2709, %v7367, 0
        %v7401 = vsel %vm2709, %v7368, 0
        %v7404 = vsel %vm2709, %v7369, 0
        %v7407 = vsel %vm2709, %v7370, 0
        %v7410 = vsel %vm2709, %v7371, 0
        %7412 = vmatprep.subr.bf16.mxu0 0
        %7413 = vmatpush1.bf16.msra.mxu0 %v7384
        %7414 = vmatprep.subr.bf16.mxu0 0
        %7415 = vmatpush1.bf16.msra.mxu0 %v7385
        %7416 = vmatprep.subr.bf16.mxu0 0
        %7417 = vmatpush1.bf16.msra.mxu0 0
        %7418 = vmatprep.subr.bf16.mxu0 0
        %7419 = vmatpush1.bf16.msra.mxu0 0
        %7420 = vmatprep.subr.bf16.mxu0 0
        %7421 = vmatpush1.bf16.msra.mxu0 0
        %7422 = vmatprep.subr.bf16.mxu0 0
        %7423 = vmatpush1.bf16.msra.mxu0 0
        %7424 = vmatprep.subr.bf16.mxu0 0
        %7425 = vmatpush1.bf16.msra.mxu0 0
        %7426 = vmatprep.subr.bf16.mxu0 0
        %7427 = vmatpush1.bf16.msra.mxu0 0
        %7428 = vmatprep.subr.bf16.mxu0 0
        %7429 = vmatpush1.bf16.msra.mxu0 0
        %7430 = vmatprep.subr.bf16.mxu0 0
        %7431 = vmatpush1.bf16.msra.mxu0 0
        %7432 = vmatprep.subr.bf16.mxu0 0
        %7433 = vmatpush1.bf16.msra.mxu0 0
        %7434 = vmatprep.subr.bf16.mxu0 0
        %7435 = vmatpush1.bf16.msra.mxu0 0
        %7436 = vmatprep.subr.bf16.mxu0 0
        %7437 = vmatpush1.bf16.msra.mxu0 0
        %7438 = vmatprep.subr.bf16.mxu0 0
        %7439 = vmatpush1.bf16.msra.mxu0 0
        %7440 = vmatprep.subr.bf16.mxu0 0
        %7441 = vmatpush1.bf16.msra.mxu0 0
        %7442 = vmatprep.subr.bf16.mxu0 0
        %7443 = vmatpush1.bf16.msra.mxu0 0
        %7444 = vmatprep.mubr.bf16.mxu0 0
        %7445 = vmatmul.mubr.bf16.gmra.mrb[0].mxu0 %v7389
        %v7446 = vpop.f32.mrb[0].mxu0
        %v7447 = vadd.f32 0.0, %v7446
        %v7448 = vpop.f32.mrb[0].mxu0
        %v7449 = vpop.f32.mrb[0].mxu0
        %v7450 = vadd.f32 0.0, %v7449
        %v7451 = vpop.f32.mrb[0].mxu0
        %7452 = vmatprep.mubr.bf16.mxu0 0
        %7453 = vmatmul.mubr.bf16.gmra.mrb[0].mxu0 %v7392
        %v7454 = vpop.f32.mrb[0].mxu0
        %v7455 = vadd.f32 0.0, %v7454
        %v7456 = vpop.f32.mrb[0].mxu0
        %v7457 = vpop.f32.mrb[0].mxu0
        %v7458 = vadd.f32 0.0, %v7457
        %v7459 = vpop.f32.mrb[0].mxu0
        %7460 = vmatprep.mubr.bf16.mxu0 0
        %7461 = vmatmul.mubr.bf16.gmra.mrb[0].mxu0 %v7395
        %v7462 = vpop.f32.mrb[0].mxu0
        %v7463 = vadd.f32 0.0, %v7462
        %v7464 = vpop.f32.mrb[0].mxu0
        %v7465 = vpop.f32.mrb[0].mxu0
        %v7466 = vadd.f32 0.0, %v7465
        %v7467 = vpop.f32.mrb[0].mxu0
        %7468 = vmatprep.mubr.bf16.mxu0 0
        %7469 = vmatmul.mubr.bf16.gmra.mrb[0].mxu0 %v7398
        %v7470 = vpop.f32.mrb[0].mxu0
        %v7471 = vadd.f32 0.0, %v7470
        %v7472 = vpop.f32.mrb[0].mxu0
        %v7473 = vpop.f32.mrb[0].mxu0
        %v7474 = vadd.f32 0.0, %v7473
        %v7475 = vpop.f32.mrb[0].mxu0
        %7476 = vmatprep.mubr.bf16.mxu0 0
        %7477 = vmatmul.mubr.bf16.gmra.mrb[0].mxu0 %v7401
        %v7478 = vpop.f32.mrb[0].mxu0
        %v7479 = vadd.f32 0.0, %v7478
        %v7480 = vpop.f32.mrb[0].mxu0
        %v7481 = vpop.f32.mrb[0].mxu0
        %v7482 = vadd.f32 0.0, %v7481
        %v7483 = vpop.f32.mrb[0].mxu0
        %7484 = vmatprep.mubr.bf16.mxu0 0
        %7485 = vmatmul.mubr.bf16.gmra.mrb[0].mxu0 %v7404
        %v7486 = vpop.f32.mrb[0].mxu0
        %v7487 = vadd.f32 0.0, %v7486
        %v7488 = vpop.f32.mrb[0].mxu0
        %v7489 = vpop.f32.mrb[0].mxu0
        %v7490 = vadd.f32 0.0, %v7489
        %v7491 = vpop.f32.mrb[0].mxu0
        %7492 = vmatprep.mubr.bf16.mxu0 0
        %7493 = vmatmul.mubr.bf16.gmra.mrb[0].mxu0 %v7407
        %v7494 = vpop.f32.mrb[0].mxu0
        %v7495 = vadd.f32 0.0, %v7494
        %v7496 = vpop.f32.mrb[0].mxu0
        %v7497 = vpop.f32.mrb[0].mxu0
        %v7498 = vadd.f32 0.0, %v7497
        %v7499 = vpop.f32.mrb[0].mxu0
        %7500 = vmatprep.mubr.bf16.mxu0 0
        %7501 = vmatmul.mubr.bf16.gmra.mrb[0].mxu0 %v7410
        %v7502 = vpop.f32.mrb[0].mxu0
        %v7503 = vadd.f32 0.0, %v7502
        %v7504 = vpop.f32.mrb[0].mxu0
        %v7505 = vpop.f32.mrb[0].mxu0
        %v7506 = vadd.f32 0.0, %v7505
        %v7507 = vpop.f32.mrb[0].mxu0
        %7508 = vdwg.mxu0
        %v7509 = vadd.f32 %v7348, %v7447
        %v7510 = vadd.f32 %v7349, %v7450
        %v7511 = vadd.f32 %v7350, %v7455
        %v7512 = vadd.f32 %v7351, %v7458
        %v7513 = vadd.f32 %v7352, %v7463
        %v7514 = vadd.f32 %v7353, %v7466
        %v7515 = vadd.f32 %v7354, %v7471
        %v7516 = vadd.f32 %v7355, %v7474
        %v7517 = vadd.f32 %v7356, %v7479
        %v7518 = vadd.f32 %v7357, %v7482
        %v7519 = vadd.f32 %v7358, %v7487
        %v7520 = vadd.f32 %v7359, %v7490
        %v7521 = vadd.f32 %v7360, %v7495
        %v7522 = vadd.f32 %v7361, %v7498
        %v7523 = vadd.f32 %v7362, %v7503
        %v7524 = vadd.f32 %v7363, %v7506
        %v7525 = vld [vmem:[#allocation2 + $0xb0] sm:$0xff]
        %v7526 = vld [vmem:[#allocation2 + $0xb8] sm:$0xff]
        %v7527 = vld [vmem:[#allocation2 + $0xc0] sm:$0xff]
        %v7528 = vld [vmem:[#allocation2 + $0xc8] sm:$0xff]
        %v7529 = vld [vmem:[#allocation2 + $0xd0] sm:$0xff]
        %v7530 = vld [vmem:[#allocation2 + $0xd8] sm:$0xff]
        %v7531 = vld [vmem:[#allocation2 + $0xe0] sm:$0xff]
        %v7532 = vld [vmem:[#allocation2 + $0xe8] sm:$0xff]
        %v7533 = vld [vmem:[%s3653] sm:$0xf]
        %v7534 = vld [vmem:[%s3653 + $0x4] sm:$0xf]
        %v7535 = vld [vmem:[%s3653 + $0x8] sm:$0xf]
        %v7536 = vld [vmem:[%s3653 + $0xc] sm:$0xf]
        %v7541 = vunpack.c.l.b16 %v7533
        %v7542 = vunpack.c.l.b16 %v7534
        %v7543 = vunpack.c.l.b16 %v7535
        %v7544 = vunpack.c.l.b16 %v7536
        %v7545 = vpack.c.b16 %v7542, %v7541
        %v7546 = vpack.c.b16 %v7544, %v7543
        %v7550 = vsel %vm2709, %v7525, 0
        %v7553 = vsel %vm2709, %v7526, 0
        %v7556 = vsel %vm2709, %v7527, 0
        %v7559 = vsel %vm2709, %v7528, 0
        %v7562 = vsel %vm2709, %v7529, 0
        %v7565 = vsel %vm2709, %v7530, 0
        %v7568 = vsel %vm2709, %v7531, 0
        %v7571 = vsel %vm2709, %v7532, 0
        %7573 = vmatprep.subr.bf16.mxu0 0
        %7574 = vmatpush1.bf16.msra.mxu0 %v7545
        %7575 = vmatprep.subr.bf16.mxu0 0
        %7576 = vmatpush1.bf16.msra.mxu0 %v7546
        %7577 = vmatprep.subr.bf16.mxu0 0
        %7578 = vmatpush1.bf16.msra.mxu0 0
        %7579 = vmatprep.subr.bf16.mxu0 0
        %7580 = vmatpush1.bf16.msra.mxu0 0
        %7581 = vmatprep.subr.bf16.mxu0 0
        %7582 = vmatpush1.bf16.msra.mxu0 0
        %7583 = vmatprep.subr.bf16.mxu0 0
        %7584 = vmatpush1.bf16.msra.mxu0 0
        %7585 = vmatprep.subr.bf16.mxu0 0
        %7586 = vmatpush1.bf16.msra.mxu0 0
        %7587 = vmatprep.subr.bf16.mxu0 0
        %7588 = vmatpush1.bf16.msra.mxu0 0
        %7589 = vmatprep.subr.bf16.mxu0 0
        %7590 = vmatpush1.bf16.msra.mxu0 0
        %7591 = vmatprep.subr.bf16.mxu0 0
        %7592 = vmatpush1.bf16.msra.mxu0 0
        %7593 = vmatprep.subr.bf16.mxu0 0
        %7594 = vmatpush1.bf16.msra.mxu0 0
        %7595 = vmatprep.subr.bf16.mxu0 0
        %7596 = vmatpush1.bf16.msra.mxu0 0
        %7597 = vmatprep.subr.bf16.mxu0 0
        %7598 = vmatpush1.bf16.msra.mxu0 0
        %7599 = vmatprep.subr.bf16.mxu0 0
        %7600 = vmatpush1.bf16.msra.mxu0 0
        %7601 = vmatprep.subr.bf16.mxu0 0
        %7602 = vmatpush1.bf16.msra.mxu0 0
        %7603 = vmatprep.subr.bf16.mxu0 0
        %7604 = vmatpush1.bf16.msra.mxu0 0
        %7605 = vmatprep.mubr.bf16.mxu0 0
        %7606 = vmatmul.mubr.bf16.gmra.mrb[0].mxu0 %v7550
        %v7607 = vpop.f32.mrb[0].mxu0
        %v7608 = vadd.f32 0.0, %v7607
        %v7609 = vpop.f32.mrb[0].mxu0
        %v7610 = vpop.f32.mrb[0].mxu0
        %v7611 = vadd.f32 0.0, %v7610
        %v7612 = vpop.f32.mrb[0].mxu0
        %7613 = vmatprep.mubr.bf16.mxu0 0
        %7614 = vmatmul.mubr.bf16.gmra.mrb[0].mxu0 %v7553
        %v7615 = vpop.f32.mrb[0].mxu0
        %v7616 = vadd.f32 0.0, %v7615
        %v7617 = vpop.f32.mrb[0].mxu0
        %v7618 = vpop.f32.mrb[0].mxu0
        %v7619 = vadd.f32 0.0, %v7618
        %v7620 = vpop.f32.mrb[0].mxu0
        %7621 = vmatprep.mubr.bf16.mxu0 0
        %7622 = vmatmul.mubr.bf16.gmra.mrb[0].mxu0 %v7556
        %v7623 = vpop.f32.mrb[0].mxu0
        %v7624 = vadd.f32 0.0, %v7623
        %v7625 = vpop.f32.mrb[0].mxu0
        %v7626 = vpop.f32.mrb[0].mxu0
        %v7627 = vadd.f32 0.0, %v7626
        %v7628 = vpop.f32.mrb[0].mxu0
        %7629 = vmatprep.mubr.bf16.mxu0 0
        %7630 = vmatmul.mubr.bf16.gmra.mrb[0].mxu0 %v7559
        %v7631 = vpop.f32.mrb[0].mxu0
        %v7632 = vadd.f32 0.0, %v7631
        %v7633 = vpop.f32.mrb[0].mxu0
        %v7634 = vpop.f32.mrb[0].mxu0
        %v7635 = vadd.f32 0.0, %v7634
        %v7636 = vpop.f32.mrb[0].mxu0
        %7637 = vmatprep.mubr.bf16.mxu0 0
        %7638 = vmatmul.mubr.bf16.gmra.mrb[0].mxu0 %v7562
        %v7639 = vpop.f32.mrb[0].mxu0
        %v7640 = vadd.f32 0.0, %v7639
        %v7641 = vpop.f32.mrb[0].mxu0
        %v7642 = vpop.f32.mrb[0].mxu0
        %v7643 = vadd.f32 0.0, %v7642
        %v7644 = vpop.f32.mrb[0].mxu0
        %7645 = vmatprep.mubr.bf16.mxu0 0
        %7646 = vmatmul.mubr.bf16.gmra.mrb[0].mxu0 %v7565
        %v7647 = vpop.f32.mrb[0].mxu0
        %v7648 = vadd.f32 0.0, %v7647
        %v7649 = vpop.f32.mrb[0].mxu0
        %v7650 = vpop.f32.mrb[0].mxu0
        %v7651 = vadd.f32 0.0, %v7650
        %v7652 = vpop.f32.mrb[0].mxu0
        %7653 = vmatprep.mubr.bf16.mxu0 0
        %7654 = vmatmul.mubr.bf16.gmra.mrb[0].mxu0 %v7568
        %v7655 = vpop.f32.mrb[0].mxu0
        %v7656 = vadd.f32 0.0, %v7655
        %v7657 = vpop.f32.mrb[0].mxu0
        %v7658 = vpop.f32.mrb[0].mxu0
        %v7659 = vadd.f32 0.0, %v7658
        %v7660 = vpop.f32.mrb[0].mxu0
        %7661 = vmatprep.mubr.bf16.mxu0 0
        %7662 = vmatmul.mubr.bf16.gmra.mrb[0].mxu0 %v7571
        %v7663 = vpop.f32.mrb[0].mxu0
        %v7664 = vadd.f32 0.0, %v7663
        %v7665 = vpop.f32.mrb[0].mxu0
        %v7666 = vpop.f32.mrb[0].mxu0
        %v7667 = vadd.f32 0.0, %v7666
        %v7668 = vpop.f32.mrb[0].mxu0
        %7669 = vdwg.mxu0
        %v7670 = vadd.f32 %v7509, %v7608
        %v7671 = vadd.f32 %v7510, %v7611
        %v7672 = vadd.f32 %v7511, %v7616
        %v7673 = vadd.f32 %v7512, %v7619
        %v7674 = vadd.f32 %v7513, %v7624
        %v7675 = vadd.f32 %v7514, %v7627
        %v7676 = vadd.f32 %v7515, %v7632
        %v7677 = vadd.f32 %v7516, %v7635
        %v7678 = vadd.f32 %v7517, %v7640
        %v7679 = vadd.f32 %v7518, %v7643
        %v7680 = vadd.f32 %v7519, %v7648
        %v7681 = vadd.f32 %v7520, %v7651
        %v7682 = vadd.f32 %v7521, %v7656
        %v7683 = vadd.f32 %v7522, %v7659
        %v7684 = vadd.f32 %v7523, %v7664
        %v7685 = vadd.f32 %v7524, %v7667
        %v7686 = vld [vmem:[#allocation2 + $0xb8] sm:$0xff]
        %v7687 = vld [vmem:[#allocation2 + $0xc0] sm:$0xff]
        %v7688 = vld [vmem:[#allocation2 + $0xc8] sm:$0xff]
        %v7689 = vld [vmem:[#allocation2 + $0xd0] sm:$0xff]
        %v7690 = vld [vmem:[#allocation2 + $0xd8] sm:$0xff]
        %v7691 = vld [vmem:[#allocation2 + $0xe0] sm:$0xff]
        %v7692 = vld [vmem:[#allocation2 + $0xe8] sm:$0xff]
        %v7693 = vld [vmem:[#allocation2 + $0xf0] sm:$0xff]
        %v7694 = vld [vmem:[%s3815] sm:$0xf]
        %v7695 = vld [vmem:[%s3815 + $0x4] sm:$0xf]
        %v7696 = vld [vmem:[%s3815 + $0x8] sm:$0xf]
        %v7697 = vld [vmem:[%s3815 + $0xc] sm:$0xf]
        %v7702 = vunpack.c.l.b16 %v7694
        %v7703 = vunpack.c.l.b16 %v7695
        %v7704 = vunpack.c.l.b16 %v7696
        %v7705 = vunpack.c.l.b16 %v7697
        %v7706 = vpack.c.b16 %v7703, %v7702
        %v7707 = vpack.c.b16 %v7705, %v7704
        %v7711 = vsel %vm2709, %v7686, 0
        %v7714 = vsel %vm2709, %v7687, 0
        %v7717 = vsel %vm2709, %v7688, 0
        %v7720 = vsel %vm2709, %v7689, 0
        %v7723 = vsel %vm2709, %v7690, 0
        %v7726 = vsel %vm2709, %v7691, 0
        %v7729 = vsel %vm2709, %v7692, 0
        %v7732 = vsel %vm2709, %v7693, 0
        %7734 = vmatprep.subr.bf16.mxu0 0
        %7735 = vmatpush1.bf16.msra.mxu0 %v7706
        %7736 = vmatprep.subr.bf16.mxu0 0
        %7737 = vmatpush1.bf16.msra.mxu0 %v7707
        %7738 = vmatprep.subr.bf16.mxu0 0
        %7739 = vmatpush1.bf16.msra.mxu0 0
        %7740 = vmatprep.subr.bf16.mxu0 0
        %7741 = vmatpush1.bf16.msra.mxu0 0
        %7742 = vmatprep.subr.bf16.mxu0 0
        %7743 = vmatpush1.bf16.msra.mxu0 0
        %7744 = vmatprep.subr.bf16.mxu0 0
        %7745 = vmatpush1.bf16.msra.mxu0 0
        %7746 = vmatprep.subr.bf16.mxu0 0
        %7747 = vmatpush1.bf16.msra.mxu0 0
        %7748 = vmatprep.subr.bf16.mxu0 0
        %7749 = vmatpush1.bf16.msra.mxu0 0
        %7750 = vmatprep.subr.bf16.mxu0 0
        %7751 = vmatpush1.bf16.msra.mxu0 0
        %7752 = vmatprep.subr.bf16.mxu0 0
        %7753 = vmatpush1.bf16.msra.mxu0 0
        %7754 = vmatprep.subr.bf16.mxu0 0
        %7755 = vmatpush1.bf16.msra.mxu0 0
        %7756 = vmatprep.subr.bf16.mxu0 0
        %7757 = vmatpush1.bf16.msra.mxu0 0
        %7758 = vmatprep.subr.bf16.mxu0 0
        %7759 = vmatpush1.bf16.msra.mxu0 0
        %7760 = vmatprep.subr.bf16.mxu0 0
        %7761 = vmatpush1.bf16.msra.mxu0 0
        %7762 = vmatprep.subr.bf16.mxu0 0
        %7763 = vmatpush1.bf16.msra.mxu0 0
        %7764 = vmatprep.subr.bf16.mxu0 0
        %7765 = vmatpush1.bf16.msra.mxu0 0
        %7766 = vmatprep.mubr.bf16.mxu0 0
        %7767 = vmatmul.mubr.bf16.gmra.mrb[0].mxu0 %v7711
        %v7768 = vpop.f32.mrb[0].mxu0
        %v7769 = vadd.f32 0.0, %v7768
        %v7770 = vpop.f32.mrb[0].mxu0
        %v7771 = vpop.f32.mrb[0].mxu0
        %v7772 = vadd.f32 0.0, %v7771
        %v7773 = vpop.f32.mrb[0].mxu0
        %7774 = vmatprep.mubr.bf16.mxu0 0
        %7775 = vmatmul.mubr.bf16.gmra.mrb[0].mxu0 %v7714
        %v7776 = vpop.f32.mrb[0].mxu0
        %v7777 = vadd.f32 0.0, %v7776
        %v7778 = vpop.f32.mrb[0].mxu0
        %v7779 = vpop.f32.mrb[0].mxu0
        %v7780 = vadd.f32 0.0, %v7779
        %v7781 = vpop.f32.mrb[0].mxu0
        %7782 = vmatprep.mubr.bf16.mxu0 0
        %7783 = vmatmul.mubr.bf16.gmra.mrb[0].mxu0 %v7717
        %v7784 = vpop.f32.mrb[0].mxu0
        %v7785 = vadd.f32 0.0, %v7784
        %v7786 = vpop.f32.mrb[0].mxu0
        %v7787 = vpop.f32.mrb[0].mxu0
        %v7788 = vadd.f32 0.0, %v7787
        %v7789 = vpop.f32.mrb[0].mxu0
        %7790 = vmatprep.mubr.bf16.mxu0 0
        %7791 = vmatmul.mubr.bf16.gmra.mrb[0].mxu0 %v7720
        %v7792 = vpop.f32.mrb[0].mxu0
        %v7793 = vadd.f32 0.0, %v7792
        %v7794 = vpop.f32.mrb[0].mxu0
        %v7795 = vpop.f32.mrb[0].mxu0
        %v7796 = vadd.f32 0.0, %v7795
        %v7797 = vpop.f32.mrb[0].mxu0
        %7798 = vmatprep.mubr.bf16.mxu0 0
        %7799 = vmatmul.mubr.bf16.gmra.mrb[0].mxu0 %v7723
        %v7800 = vpop.f32.mrb[0].mxu0
        %v7801 = vadd.f32 0.0, %v7800
        %v7802 = vpop.f32.mrb[0].mxu0
        %v7803 = vpop.f32.mrb[0].mxu0
        %v7804 = vadd.f32 0.0, %v7803
        %v7805 = vpop.f32.mrb[0].mxu0
        %7806 = vmatprep.mubr.bf16.mxu0 0
        %7807 = vmatmul.mubr.bf16.gmra.mrb[0].mxu0 %v7726
        %v7808 = vpop.f32.mrb[0].mxu0
        %v7809 = vadd.f32 0.0, %v7808
        %v7810 = vpop.f32.mrb[0].mxu0
        %v7811 = vpop.f32.mrb[0].mxu0
        %v7812 = vadd.f32 0.0, %v7811
        %v7813 = vpop.f32.mrb[0].mxu0
        %7814 = vmatprep.mubr.bf16.mxu0 0
        %7815 = vmatmul.mubr.bf16.gmra.mrb[0].mxu0 %v7729
        %v7816 = vpop.f32.mrb[0].mxu0
        %v7817 = vadd.f32 0.0, %v7816
        %v7818 = vpop.f32.mrb[0].mxu0
        %v7819 = vpop.f32.mrb[0].mxu0
        %v7820 = vadd.f32 0.0, %v7819
        %v7821 = vpop.f32.mrb[0].mxu0
        %7822 = vmatprep.mubr.bf16.mxu0 0
        %7823 = vmatmul.mubr.bf16.gmra.mrb[0].mxu0 %v7732
        %v7824 = vpop.f32.mrb[0].mxu0
        %v7825 = vadd.f32 0.0, %v7824
        %v7826 = vpop.f32.mrb[0].mxu0
        %v7827 = vpop.f32.mrb[0].mxu0
        %v7828 = vadd.f32 0.0, %v7827
        %v7829 = vpop.f32.mrb[0].mxu0
        %7830 = vdwg.mxu0
        %v7831 = vadd.f32 %v7670, %v7769
        %v7832 = vadd.f32 %v7671, %v7772
        %v7833 = vadd.f32 %v7672, %v7777
        %v7834 = vadd.f32 %v7673, %v7780
        %v7835 = vadd.f32 %v7674, %v7785
        %v7836 = vadd.f32 %v7675, %v7788
        %v7837 = vadd.f32 %v7676, %v7793
        %v7838 = vadd.f32 %v7677, %v7796
        %v7839 = vadd.f32 %v7678, %v7801
        %v7840 = vadd.f32 %v7679, %v7804
        %v7841 = vadd.f32 %v7680, %v7809
        %v7842 = vadd.f32 %v7681, %v7812
        %v7843 = vadd.f32 %v7682, %v7817
        %v7844 = vadd.f32 %v7683, %v7820
        %v7845 = vadd.f32 %v7684, %v7825
        %v7846 = vadd.f32 %v7685, %v7828
        %v7847 = vld [vmem:[#allocation2 + $0xc0] sm:$0xff]
        %v7848 = vld [vmem:[#allocation2 + $0xc8] sm:$0xff]
        %v7849 = vld [vmem:[#allocation2 + $0xd0] sm:$0xff]
        %v7850 = vld [vmem:[#allocation2 + $0xd8] sm:$0xff]
        %v7851 = vld [vmem:[#allocation2 + $0xe0] sm:$0xff]
        %v7852 = vld [vmem:[#allocation2 + $0xe8] sm:$0xff]
        %v7853 = vld [vmem:[#allocation2 + $0xf0] sm:$0xff]
        %v7854 = vld [vmem:[#allocation2 + $0xf8] sm:$0xff]
        %v7855 = vld [vmem:[%s3977] sm:$0xf]
        %v7856 = vld [vmem:[%s3977 + $0x4] sm:$0xf]
        %v7857 = vld [vmem:[%s3977 + $0x8] sm:$0xf]
        %v7858 = vld [vmem:[%s3977 + $0xc] sm:$0xf]
        %v7863 = vunpack.c.l.b16 %v7855
        %v7864 = vunpack.c.l.b16 %v7856
        %v7865 = vunpack.c.l.b16 %v7857
        %v7866 = vunpack.c.l.b16 %v7858
        %v7867 = vpack.c.b16 %v7864, %v7863
        %v7868 = vpack.c.b16 %v7866, %v7865
        %v7872 = vsel %vm2709, %v7847, 0
        %v7875 = vsel %vm2709, %v7848, 0
        %v7878 = vsel %vm2709, %v7849, 0
        %v7881 = vsel %vm2709, %v7850, 0
        %v7884 = vsel %vm2709, %v7851, 0
        %v7887 = vsel %vm2709, %v7852, 0
        %v7890 = vsel %vm2709, %v7853, 0
        %v7893 = vsel %vm2709, %v7854, 0
        %7895 = vmatprep.subr.bf16.mxu0 0
        %7896 = vmatpush1.bf16.msra.mxu0 %v7867
        %7897 = vmatprep.subr.bf16.mxu0 0
        %7898 = vmatpush1.bf16.msra.mxu0 %v7868
        %7899 = vmatprep.subr.bf16.mxu0 0
        %7900 = vmatpush1.bf16.msra.mxu0 0
        %7901 = vmatprep.subr.bf16.mxu0 0
        %7902 = vmatpush1.bf16.msra.mxu0 0
        %7903 = vmatprep.subr.bf16.mxu0 0
        %7904 = vmatpush1.bf16.msra.mxu0 0
        %7905 = vmatprep.subr.bf16.mxu0 0
        %7906 = vmatpush1.bf16.msra.mxu0 0
        %7907 = vmatprep.subr.bf16.mxu0 0
        %7908 = vmatpush1.bf16.msra.mxu0 0
        %7909 = vmatprep.subr.bf16.mxu0 0
        %7910 = vmatpush1.bf16.msra.mxu0 0
        %7911 = vmatprep.subr.bf16.mxu0 0
        %7912 = vmatpush1.bf16.msra.mxu0 0
        %7913 = vmatprep.subr.bf16.mxu0 0
        %7914 = vmatpush1.bf16.msra.mxu0 0
        %7915 = vmatprep.subr.bf16.mxu0 0
        %7916 = vmatpush1.bf16.msra.mxu0 0
        %7917 = vmatprep.subr.bf16.mxu0 0
        %7918 = vmatpush1.bf16.msra.mxu0 0
        %7919 = vmatprep.subr.bf16.mxu0 0
        %7920 = vmatpush1.bf16.msra.mxu0 0
        %7921 = vmatprep.subr.bf16.mxu0 0
        %7922 = vmatpush1.bf16.msra.mxu0 0
        %7923 = vmatprep.subr.bf16.mxu0 0
        %7924 = vmatpush1.bf16.msra.mxu0 0
        %7925 = vmatprep.subr.bf16.mxu0 0
        %7926 = vmatpush1.bf16.msra.mxu0 0
        %7927 = vmatprep.mubr.bf16.mxu0 0
        %7928 = vmatmul.mubr.bf16.gmra.mrb[0].mxu0 %v7872
        %v7929 = vpop.f32.mrb[0].mxu0
        %v7930 = vadd.f32 0.0, %v7929
        %v7931 = vpop.f32.mrb[0].mxu0
        %v7932 = vpop.f32.mrb[0].mxu0
        %v7933 = vadd.f32 0.0, %v7932
        %v7934 = vpop.f32.mrb[0].mxu0
        %7935 = vmatprep.mubr.bf16.mxu0 0
        %7936 = vmatmul.mubr.bf16.gmra.mrb[0].mxu0 %v7875
        %v7937 = vpop.f32.mrb[0].mxu0
        %v7938 = vadd.f32 0.0, %v7937
        %v7939 = vpop.f32.mrb[0].mxu0
        %v7940 = vpop.f32.mrb[0].mxu0
        %v7941 = vadd.f32 0.0, %v7940
        %v7942 = vpop.f32.mrb[0].mxu0
        %7943 = vmatprep.mubr.bf16.mxu0 0
        %7944 = vmatmul.mubr.bf16.gmra.mrb[0].mxu0 %v7878
        %v7945 = vpop.f32.mrb[0].mxu0
        %v7946 = vadd.f32 0.0, %v7945
        %v7947 = vpop.f32.mrb[0].mxu0
        %v7948 = vpop.f32.mrb[0].mxu0
        %v7949 = vadd.f32 0.0, %v7948
        %v7950 = vpop.f32.mrb[0].mxu0
        %7951 = vmatprep.mubr.bf16.mxu0 0
        %7952 = vmatmul.mubr.bf16.gmra.mrb[0].mxu0 %v7881
        %v7953 = vpop.f32.mrb[0].mxu0
        %v7954 = vadd.f32 0.0, %v7953
        %v7955 = vpop.f32.mrb[0].mxu0
        %v7956 = vpop.f32.mrb[0].mxu0
        %v7957 = vadd.f32 0.0, %v7956
        %v7958 = vpop.f32.mrb[0].mxu0
        %7959 = vmatprep.mubr.bf16.mxu0 0
        %7960 = vmatmul.mubr.bf16.gmra.mrb[0].mxu0 %v7884
        %v7961 = vpop.f32.mrb[0].mxu0
        %v7962 = vadd.f32 0.0, %v7961
        %v7963 = vpop.f32.mrb[0].mxu0
        %v7964 = vpop.f32.mrb[0].mxu0
        %v7965 = vadd.f32 0.0, %v7964
        %v7966 = vpop.f32.mrb[0].mxu0
        %7967 = vmatprep.mubr.bf16.mxu0 0
        %7968 = vmatmul.mubr.bf16.gmra.mrb[0].mxu0 %v7887
        %v7969 = vpop.f32.mrb[0].mxu0
        %v7970 = vadd.f32 0.0, %v7969
        %v7971 = vpop.f32.mrb[0].mxu0
        %v7972 = vpop.f32.mrb[0].mxu0
        %v7973 = vadd.f32 0.0, %v7972
        %v7974 = vpop.f32.mrb[0].mxu0
        %7975 = vmatprep.mubr.bf16.mxu0 0
        %7976 = vmatmul.mubr.bf16.gmra.mrb[0].mxu0 %v7890
        %v7977 = vpop.f32.mrb[0].mxu0
        %v7978 = vadd.f32 0.0, %v7977
        %v7979 = vpop.f32.mrb[0].mxu0
        %v7980 = vpop.f32.mrb[0].mxu0
        %v7981 = vadd.f32 0.0, %v7980
        %v7982 = vpop.f32.mrb[0].mxu0
        %7983 = vmatprep.mubr.bf16.mxu0 0
        %7984 = vmatmul.mubr.bf16.gmra.mrb[0].mxu0 %v7893
        %v7985 = vpop.f32.mrb[0].mxu0
        %v7986 = vadd.f32 0.0, %v7985
        %v7987 = vpop.f32.mrb[0].mxu0
        %v7988 = vpop.f32.mrb[0].mxu0
        %v7989 = vadd.f32 0.0, %v7988
        %v7990 = vpop.f32.mrb[0].mxu0
        %7991 = vdwg.mxu0
        %v7992 = vadd.f32 %v7831, %v7930
        %v7993 = vadd.f32 %v7832, %v7933
        %v7994 = vadd.f32 %v7833, %v7938
        %v7995 = vadd.f32 %v7834, %v7941
        %v7996 = vadd.f32 %v7835, %v7946
        %v7997 = vadd.f32 %v7836, %v7949
        %v7998 = vadd.f32 %v7837, %v7954
        %v7999 = vadd.f32 %v7838, %v7957
        %v8000 = vadd.f32 %v7839, %v7962
        %v8001 = vadd.f32 %v7840, %v7965
        %v8002 = vadd.f32 %v7841, %v7970
        %v8003 = vadd.f32 %v7842, %v7973
        %v8004 = vadd.f32 %v7843, %v7978
        %v8005 = vadd.f32 %v7844, %v7981
        %v8006 = vadd.f32 %v7845, %v7986
        %v8007 = vadd.f32 %v7846, %v7989
        %v8008 = vld [vmem:[%s5] sm:$0x1]
        %v8010 = vlaneseq
        %v8011 = vshrl.u32 %v8010, 7
        %v8012 = vsub.s32 0, %v8011
        %v8013 = vrot.slane %v8008, %v8012
        %v8015 = vadd.f32 %v7992, %v8013
        %v8016 = vadd.f32 %v7993, %v8013
        %v8017 = vadd.f32 %v7994, %v8013
        %v8018 = vadd.f32 %v7995, %v8013
        %v8019 = vadd.f32 %v7996, %v8013
        %v8020 = vadd.f32 %v7997, %v8013
        %v8021 = vadd.f32 %v7998, %v8013
        %v8022 = vadd.f32 %v7999, %v8013
        %v8023 = vadd.f32 %v8000, %v8013
        %v8024 = vadd.f32 %v8001, %v8013
        %v8025 = vadd.f32 %v8002, %v8013
        %v8026 = vadd.f32 %v8003, %v8013
        %v8027 = vadd.f32 %v8004, %v8013
        %v8028 = vadd.f32 %v8005, %v8013
        %v8029 = vadd.f32 %v8006, %v8013
        %v8030 = vadd.f32 %v8007, %v8013
        %v8031 = vmax.f32 %v8015, 0.0
        %v8032 = vmax.f32 %v8016, 0.0
        %v8033 = vmax.f32 %v8017, 0.0
        %v8034 = vmax.f32 %v8018, 0.0
        %v8035 = vmax.f32 %v8019, 0.0
        %v8036 = vmax.f32 %v8020, 0.0
        %v8037 = vmax.f32 %v8021, 0.0
        %v8038 = vmax.f32 %v8022, 0.0
        %v8039 = vmax.f32 %v8023, 0.0
        %v8040 = vmax.f32 %v8024, 0.0
        %v8041 = vmax.f32 %v8025, 0.0
        %v8042 = vmax.f32 %v8026, 0.0
        %v8043 = vmax.f32 %v8027, 0.0
        %v8044 = vmax.f32 %v8028, 0.0
        %v8045 = vmax.f32 %v8029, 0.0
        %v8046 = vmax.f32 %v8030, 0.0
        %v8047 = vld [vmem:[%s6] sm:$0x1]
        %8048 = vmatprep.subr.mxu0 0.0
        %8049 = vmatpush1.msra.mxu0 %v8031
        %8050 = vmatprep.subr.mxu0 0.0
        %8051 = vmatpush1.msra.mxu0 %v8032
        %8052 = vmatprep.subr.mxu0 0.0
        %8053 = vmatpush1.msra.mxu0 %v8033
        %8054 = vmatprep.subr.mxu0 0.0
        %8055 = vmatpush1.msra.mxu0 %v8034
        %8056 = vmatprep.subr.mxu0 0.0
        %8057 = vmatpush1.msra.mxu0 %v8035
        %8058 = vmatprep.subr.mxu0 0.0
        %8059 = vmatpush1.msra.mxu0 %v8036
        %8060 = vmatprep.subr.mxu0 0.0
        %8061 = vmatpush1.msra.mxu0 %v8037
        %8062 = vmatprep.subr.mxu0 0.0
        %8063 = vmatpush1.msra.mxu0 %v8038
        %8064 = vmatprep.subr.mxu0 0.0
        %8065 = vmatpush1.msra.mxu0 %v8039
        %8066 = vmatprep.subr.mxu0 0.0
        %8067 = vmatpush1.msra.mxu0 %v8040
        %8068 = vmatprep.subr.mxu0 0.0
        %8069 = vmatpush1.msra.mxu0 %v8041
        %8070 = vmatprep.subr.mxu0 0.0
        %8071 = vmatpush1.msra.mxu0 %v8042
        %8072 = vmatprep.subr.mxu0 0.0
        %8073 = vmatpush1.msra.mxu0 %v8043
        %8074 = vmatprep.subr.mxu0 0.0
        %8075 = vmatpush1.msra.mxu0 %v8044
        %8076 = vmatprep.subr.mxu0 0.0
        %8077 = vmatpush1.msra.mxu0 %v8045
        %8078 = vmatprep.subr.mxu0 0.0
        %8079 = vmatpush1.msra.mxu0 %v8046
        %8080 = vmatprep.subr.mxu0 0.0
        %8081 = vmatpush1.msra.mxu0 0.0
        %8082 = vmatprep.subr.mxu0 0.0
        %8083 = vmatpush1.msra.mxu0 0.0
        %8084 = vmatprep.subr.mxu0 0.0
        %8085 = vmatpush1.msra.mxu0 0.0
        %8086 = vmatprep.subr.mxu0 0.0
        %8087 = vmatpush1.msra.mxu0 0.0
        %8088 = vmatprep.subr.mxu0 0.0
        %8089 = vmatpush1.msra.mxu0 0.0
        %8090 = vmatprep.subr.mxu0 0.0
        %8091 = vmatpush1.msra.mxu0 0.0
        %8092 = vmatprep.subr.mxu0 0.0
        %8093 = vmatpush1.msra.mxu0 0.0
        %8094 = vmatprep.subr.mxu0 0.0
        %8095 = vmatpush1.msra.mxu0 0.0
        %8096 = vmatprep.subr.mxu0 0.0
        %8097 = vmatpush1.msra.mxu0 0.0
        %8098 = vmatprep.subr.mxu0 0.0
        %8099 = vmatpush1.msra.mxu0 0.0
        %8100 = vmatprep.subr.mxu0 0.0
        %8101 = vmatpush1.msra.mxu0 0.0
        %8102 = vmatprep.subr.mxu0 0.0
        %8103 = vmatpush1.msra.mxu0 0.0
        %8104 = vmatprep.subr.mxu0 0.0
        %8105 = vmatpush1.msra.mxu0 0.0
        %8106 = vmatprep.subr.mxu0 0.0
        %8107 = vmatpush1.msra.mxu0 0.0
        %8108 = vmatprep.subr.mxu0 0.0
        %8109 = vmatpush1.msra.mxu0 0.0
        %8110 = vmatprep.subr.mxu0 0.0
        %8111 = vmatpush1.msra.mxu0 0.0
        %8112 = vmatprep.mubr.f32.mxu0 0.0
        %8113 = vmatmul.mubr.f32.gmra.mrb[0].mxu0 %v8047
        %v8114 = vpop.f32.mrb[0].mxu0
        %v8115 = vadd.f32 0.0, %v8114
        %v8116 = vpop.f32.mrb[0].mxu0
        %8117 = vdwg.mxu0
        %v8119 = vrot.slane %v8115, 7
        %v8121 = vsel %vm621, %v4238, %v8119
        %v8122 = vld [vmem:[%s7] sm:$0xff]
        %v8123 = vld [vmem:[%s7 + $0x8] sm:$0xff]
        %v8124 = vld [vmem:[%s7 + $0x10] sm:$0xff]
        %v8125 = vld [vmem:[%s7 + $0x18] sm:$0xff]
        %v8126 = vld [vmem:[%s8] sm:$0x1]
        %v8128 = vlaneseq
        %v8129 = vshrl.u32 %v8128, 7
        %v8130 = vsub.s32 0, %v8129
        %v8131 = vrot.slane %v8126, %v8130
        %v8134 = vsel %vm2709, %v8121, 0
        %8136 = vmatprep.subr.mxu0 0.0
        %8137 = vmatpush1.msra.mxu0 %v8122
        %8138 = vmatprep.subr.mxu0 0.0
        %8139 = vmatpush1.msra.mxu0 %v8123
        %8140 = vmatprep.subr.mxu0 0.0
        %8141 = vmatpush1.msra.mxu0 %v8124
        %8142 = vmatprep.subr.mxu0 0.0
        %8143 = vmatpush1.msra.mxu0 %v8125
        %8144 = vmatprep.subr.mxu0 0.0
        %8145 = vmatpush1.msra.mxu0 0.0
        %8146 = vmatprep.subr.mxu0 0.0
        %8147 = vmatpush1.msra.mxu0 0.0
        %8148 = vmatprep.subr.mxu0 0.0
        %8149 = vmatpush1.msra.mxu0 0.0
        %8150 = vmatprep.subr.mxu0 0.0
        %8151 = vmatpush1.msra.mxu0 0.0
        %8152 = vmatprep.subr.mxu0 0.0
        %8153 = vmatpush1.msra.mxu0 0.0
        %8154 = vmatprep.subr.mxu0 0.0
        %8155 = vmatpush1.msra.mxu0 0.0
        %8156 = vmatprep.subr.mxu0 0.0
        %8157 = vmatpush1.msra.mxu0 0.0
        %8158 = vmatprep.subr.mxu0 0.0
        %8159 = vmatpush1.msra.mxu0 0.0
        %8160 = vmatprep.subr.mxu0 0.0
        %8161 = vmatpush1.msra.mxu0 0.0
        %8162 = vmatprep.subr.mxu0 0.0
        %8163 = vmatpush1.msra.mxu0 0.0
        %8164 = vmatprep.subr.mxu0 0.0
        %8165 = vmatpush1.msra.mxu0 0.0
        %8166 = vmatprep.subr.mxu0 0.0
        %8167 = vmatpush1.msra.mxu0 0.0
        %8168 = vmatprep.subr.mxu0 0.0
        %8169 = vmatpush1.msra.mxu0 0.0
        %8170 = vmatprep.subr.mxu0 0.0
        %8171 = vmatpush1.msra.mxu0 0.0
        %8172 = vmatprep.subr.mxu0 0.0
        %8173 = vmatpush1.msra.mxu0 0.0
        %8174 = vmatprep.subr.mxu0 0.0
        %8175 = vmatpush1.msra.mxu0 0.0
        %8176 = vmatprep.subr.mxu0 0.0
        %8177 = vmatpush1.msra.mxu0 0.0
        %8178 = vmatprep.subr.mxu0 0.0
        %8179 = vmatpush1.msra.mxu0 0.0
        %8180 = vmatprep.subr.mxu0 0.0
        %8181 = vmatpush1.msra.mxu0 0.0
        %8182 = vmatprep.subr.mxu0 0.0
        %8183 = vmatpush1.msra.mxu0 0.0
        %8184 = vmatprep.subr.mxu0 0.0
        %8185 = vmatpush1.msra.mxu0 0.0
        %8186 = vmatprep.subr.mxu0 0.0
        %8187 = vmatpush1.msra.mxu0 0.0
        %8188 = vmatprep.subr.mxu0 0.0
        %8189 = vmatpush1.msra.mxu0 0.0
        %8190 = vmatprep.subr.mxu0 0.0
        %8191 = vmatpush1.msra.mxu0 0.0
        %8192 = vmatprep.subr.mxu0 0.0
        %8193 = vmatpush1.msra.mxu0 0.0
        %8194 = vmatprep.subr.mxu0 0.0
        %8195 = vmatpush1.msra.mxu0 0.0
        %8196 = vmatprep.subr.mxu0 0.0
        %8197 = vmatpush1.msra.mxu0 0.0
        %8198 = vmatprep.subr.mxu0 0.0
        %8199 = vmatpush1.msra.mxu0 0.0
        %8200 = vmatprep.mubr.f32.mxu0 0.0
        %8201 = vmatmul.mubr.f32.gmra.mrb[0].mxu0 %v8134
        %v8202 = vpop.f32.mrb[0].mxu0
        %v8203 = vadd.f32 %v8131, %v8202
        %v8204 = vpop.f32.mrb[0].mxu0
        %8205 = vdwg.mxu0
        %vm8206 = vcmask 148480
        %8207 = vst.msk [vmem:[%s328] sm:$0x3] %vm8206, %v8203
        %s8208 = sand.u32 %s225, 1
        %s8209 = scalar_lea.sflag [#allocation4], %s8208
        %s8210 = sand.u32 %s225, 1
        %s8211 = smul.addr %s8210, 2
        %s8212 = scalar_lea.vmem [#allocation3], %s8211
        // Predicated region
        $region57: #{tpu_custom_call.1} parent=55 // pred_check
          %p8213 = pneg %p235
        $region58: #{tpu_custom_call.1} parent=55 // pred_check_branch
          %8215 = sbr.rel (%p8213) target = $region60
        $region59: #{tpu_custom_call.1} parent=55 // pred_region
          %s8217 = ssub.s32 32, 32
          %8218 = vsyncadd %s8209, %s8217
          %s8219 = smul.addr %s23, 32
          %s8220 = scalar_lea.hbm %s9, %s8219
          %s8222 = sshll.u32 %s8212, 4
          %s8223 = int_to_ptr.vmem [resolvable:$true] %s8222
          %8225 = dma.vmem_to_hbm [thread:$0]  %s8223, 32, %s8220, %s8209
        $region60: #{tpu_custom_call.1} parent=55 // pred_fallthru
          _
      $region56: #{tpu_custom_call.1} parent=5 // pred_fallthru
        _
      %p8226 = scmp.le.s32.totalorder 2, %s18
      // Predicated region
      $region61: #{tpu_custom_call.1} parent=5 // pred_check
        %p8227 = pneg %p8226
      $region62: #{tpu_custom_call.1} parent=5 // pred_check_branch
        %8229 = sbr.rel (%p8227) target = $region64
      $region63: #{tpu_custom_call.1} parent=5 // pred_region
        %s8230 = ssub.s32 %s18, 2
        // Predicated region
        $region65: #{tpu_custom_call.1} parent=63 // pred_check
          %p8231 = pneg %p241
        $region66: #{tpu_custom_call.1} parent=63 // pred_check_branch
          %8233 = sbr.rel (%p8231) target = $region68
        $region67: #{tpu_custom_call.1} parent=63 // pred_region
          %s8234 = sand.u32 %s226, 1
          %s8235 = scalar_lea.sflag [#allocation4], %s8234
          %s8236 = sand.u32 %s226, 1
          %s8237 = smul.addr %s8236, 2
          %s8238 = scalar_lea.vmem [#allocation3], %s8237
          %8239 = dma.done %s8235, 32
        $region68: #{tpu_custom_call.1} parent=63 // pred_fallthru
          _
      $region64: #{tpu_custom_call.1} parent=5 // pred_fallthru
        _
    $region6: #{tpu_custom_call.1} parent=1 // loop_footer
      %s22 = sadd.s32 1, %s18
    $region7: #{tpu_custom_call.1} parent=1 // loop_footer_branch
      %17 = sbr.rel target = $region3
    $region8: #{tpu_custom_call.1} parent=1 // loop_exit
      _
    %8240 = vsyncpa [#allocation4], 1
    %s8241 = scalar_lea.sflag [#allocation4], 1
    %8242 = vsyncpa %s8241, 1

</llo_original>
